<compile_context>
chip_gen: v7x
topology: tpu7x:2x2x1
jax: 0.10.0
libtpu: 0.0.40
codegen_flags: <defaults>
</compile_context>

<pallas_src>
import functools
from types import SimpleNamespace

import jax
import jax.numpy as jnp
from jax.experimental import pallas as pl
from jax.experimental.pallas import tpu as pltpu


def _round_up(x, m):
    return (x + m - 1) // m * m


# --------------------- fused batched (per-phase) matmul -----------------------

def _mm_kernel(*refs, act, with_stats, nk):
    a_ref, b_ref, o_ref = refs[0], refs[1], refs[2]
    stats_ref = refs[3] if with_stats else None

    def finish(y):
        if with_stats:
            tn = y.shape[-1]
            ssum = jnp.sum(y, axis=0, keepdims=True)          # (1, tn)
            ssq = jnp.sum(y * y, axis=0, keepdims=True)       # (1, tn)
            row = jax.lax.broadcasted_iota(jnp.int32, (8, tn), 0)
            # single unmasked (8, tn) store: row0 = sum, row1 = sum of squares
            stats_ref[...] = jnp.where(
                row == 0, jnp.broadcast_to(ssum, (8, tn)),
                jnp.where(row == 1, jnp.broadcast_to(ssq, (8, tn)), 0.0))
        if act == "relu":
            return jnp.maximum(y, 0.0)
        if act == "tanh":
            return jnp.tanh(y)
        return y

    if nk == 1:
        # single-K fast path: compute in registers, store output exactly once.
        y = jnp.dot(a_ref[...], b_ref[...], preferred_element_type=jnp.float32)
        o_ref[...] = finish(y)
    else:
        k = pl.program_id(3)

        @pl.when(k == 0)
        def _():
            o_ref[...] = jnp.zeros_like(o_ref)

        o_ref[...] += jnp.dot(a_ref[...], b_ref[...],
                              preferred_element_type=jnp.float32)

        @pl.when(k == nk - 1)
        def _():
            y = finish(o_ref[...])
            if act is not None:
                o_ref[...] = y


def pallas_matmul_batched(a, b, *, act=None, with_stats=False):
    """Batched [G,M,K] @ [G,K,N] on the MXU (bf16 operands, f32 accumulation).

    `b` may already be padded (to 128-multiples) and cast to bf16 at param-prep
    time.  Returns the PADDED output [G, Mp, Np] (callers slice), plus fused
    per-column batch statistics (sum, sum-of-squares over all phases and rows)
    when with_stats=True.  Optional fused activation (relu / tanh).
    """
    assert not (with_stats and act is not None), \
        "BN stats must be taken on the pre-activation matmul output"
    G, M, K = a.shape
    Gb, Kb, Nb = b.shape
    assert G == Gb and K <= Kb

    Kp = _round_up(Kb, 128)
    Np = _round_up(Nb, 128)
    tk = 256 if (Kp >= 256 and Kp % 256 == 0) else 128
    tn = 256 if (Np >= 256 and Np % 256 == 0) else 128
    tm = 256 if M >= 256 else _round_up(max(M, 8), 8)
    Mp = _round_up(M, tm)
    ni, nj, nk = Mp // tm, Np // tn, Kp // tk

    a_p = a if a.dtype == jnp.bfloat16 else a.astype(jnp.bfloat16)
    if (M, K) != (Mp, Kp):
        a_p = jnp.pad(a_p, ((0, 0), (0, Mp - M), (0, Kp - K)))
    b_p = b if b.dtype == jnp.bfloat16 else b.astype(jnp.bfloat16)
    if (Kb, Nb) != (Kp, Np):
        b_p = jnp.pad(b_p, ((0, 0), (0, Kp - Kb), (0, Np - Nb)))

    in_specs = [pl.BlockSpec((None, tm, tk), lambda g, j, i, k: (g, i, k)),
                pl.BlockSpec((None, tk, tn), lambda g, j, i, k: (g, k, j))]
    out_shapes = [jax.ShapeDtypeStruct((G, Mp, Np), jnp.float32)]
    out_specs = [pl.BlockSpec((None, tm, tn), lambda g, j, i, k: (g, i, j))]
    if with_stats:
        out_shapes.append(jax.ShapeDtypeStruct((G, 8 * ni, Np), jnp.float32))
        out_specs.append(pl.BlockSpec((None, 8, tn), lambda g, j, i, k: (g, i, j)))

    kernel = functools.partial(_mm_kernel, act=act, with_stats=with_stats, nk=nk)
    res = pl.pallas_call(
        kernel,
        out_shape=tuple(out_shapes) if with_stats else out_shapes[0],
        grid_spec=pltpu.PrefetchScalarGridSpec(
            num_scalar_prefetch=0,
            grid=(G, nj, ni, nk),
            in_specs=in_specs,
            out_specs=out_specs if with_stats else out_specs[0]),
        compiler_params=pltpu.CompilerParams(
            dimension_semantics=("parallel", "parallel", "parallel",
                                 "arbitrary")),
    )(a_p, b_p)

    if with_stats:
        out, stats = res
        stats = stats.reshape(G, ni, 8, Np)
        col_sum = stats[:, :, 0, :].sum(axis=(0, 1))
        col_sq = stats[:, :, 1, :].sum(axis=(0, 1))
        return out, col_sum, col_sq
    return res


# -------------------- elementwise affine + activation ------------------------

def _affine_act_kernel(x_ref, s_ref, t_ref, o_ref, *, act):
    y = x_ref[...] * s_ref[...] + t_ref[...]
    if act == "relu":
        y = jnp.maximum(y, 0.0)
    elif act == "tanh":
        y = jnp.tanh(y)
    o_ref[...] = y.astype(o_ref.dtype)


def pallas_affine_act(x, scale, shift, act, out_dtype=jnp.float32):
    """y = act(x * scale[col] + shift[col]) over an [M, C] slab (mem-bound).

    Folds rows into the lane axis (lane width up to 512) so loads/stores stay
    wide and unmasked, and uses large row tiles to amortize grid-step overhead.
    """
    M, C = x.shape
    scale = scale.astype(jnp.float32)
    shift = shift.astype(jnp.float32)

    k = 1
    if C < 128 and 128 % C == 0 and M % (128 // C) == 0:
        k = 128 // C
    if (C * k) % 128 == 0:
        while C * k * 2 <= 512 and M % (k * 2) == 0:
            k *= 2
    if k > 1:
        x = x.reshape(M // k, C * k)
        scale = jnp.tile(scale, k)
        shift = jnp.tile(shift, k)
    Mr, Cr = x.shape

    Crp = _round_up(Cr, 128)
    if Crp != Cr:
        x = jnp.pad(x, ((0, 0), (0, Crp - Cr)))
        scale = jnp.pad(scale, (0, Crp - Cr))
        shift = jnp.pad(shift, (0, Crp - Cr))

    tm = Mr if Mr <= 1024 else 1024
    Mrp = _round_up(Mr, tm)
    if Mrp != Mr:
        x = jnp.pad(x, ((0, Mrp - Mr), (0, 0)))

    out = pl.pallas_call(
        functools.partial(_affine_act_kernel, act=act),
        out_shape=jax.ShapeDtypeStruct((Mrp, Crp), out_dtype),
        grid_spec=pltpu.PrefetchScalarGridSpec(
            num_scalar_prefetch=0,
            grid=(Mrp // tm,),
            in_specs=[pl.BlockSpec((tm, Crp), lambda i: (i, 0)),
                      pl.BlockSpec((1, Crp), lambda i: (0, 0)),
                      pl.BlockSpec((1, Crp), lambda i: (0, 0))],
            out_specs=pl.BlockSpec((tm, Crp), lambda i: (i, 0))),
        compiler_params=pltpu.CompilerParams(
            dimension_semantics=("parallel",)),
    )(x, scale.reshape(1, Crp), shift.reshape(1, Crp))

    out = out[:Mr, :Cr]
    if k > 1:
        out = out.reshape(M, C)
    return out


def _bn_scale_shift(col_sum, col_sq, count, gamma, beta, eps):
    # Training-mode BatchNorm2d from fused batch statistics.
    mean = col_sum / count
    var = jnp.maximum(col_sq / count - mean * mean, 0.0)
    scale = gamma * jax.lax.rsqrt(var + eps)
    shift = beta - mean * scale
    return scale, shift


# ---------- ConvTranspose2d (k=4, s=2, p=1) via 4-phase decomposition --------

# Output parity r (rows): r=0 -> kernel rows {1,3} with input shift {0,-1};
#                         r=1 -> kernel rows {0,2} with input shift {+1, 0}.
_PARITY_TAPS = {0: ((1, 0), (3, -1)), 1: ((0, 1), (2, 0))}


def _phase_weights(w_t):
    """w_t: [Cin, Cout, 4, 4] -> bf16 [4, 4*Cin, Cout_pad128] (phase-major)."""
    cin, cout = w_t.shape[0], w_t.shape[1]
    mats = []
    for r in (0, 1):
        for s in (0, 1):
            rows = []
            for (kh, _dh) in _PARITY_TAPS[r]:
                for (kw, _dw) in _PARITY_TAPS[s]:
                    rows.append(w_t[:, :, kh, kw])            # [Cin, Cout]
            mats.append(jnp.stack(rows, axis=0).reshape(4 * cin, cout))
    w = jnp.stack(mats, axis=0)                               # [4, 4*Cin, Cout]
    kp = _round_up(4 * cin, 128)
    np_ = _round_up(cout, 128)
    w = jnp.pad(w, ((0, 0), (0, kp - 4 * cin), (0, np_ - cout)))
    return w.astype(jnp.bfloat16)


def _phase_patches(x_nhwc):
    """x: [B,H,W,Cin] (bf16) -> [4, B*H*W, 4*Cin] per-phase im2col patches."""
    B, H, W, Cin = x_nhwc.shape
    xp = jnp.pad(x_nhwc, ((0, 0), (1, 1), (1, 1), (0, 0)))    # layout glue (bf16)
    phases = []
    for r in (0, 1):
        for s in (0, 1):
            cols = []
            for (_kh, dh) in _PARITY_TAPS[r]:
                for (_kw, dw) in _PARITY_TAPS[s]:
                    cols.append(xp[:, 1 + dh:1 + dh + H, 1 + dw:1 + dw + W, :])
            phases.append(jnp.stack(cols, axis=3).reshape(B * H * W, 4 * Cin))
    return jnp.stack(phases, axis=0)                          # [4, M, 4*Cin]


def _interleave_phases(z):
    """z: [4, B, H, W, C] (phase order (r,s)) -> [B, 2H, 2W, C]."""
    _, B, H, W, C = z.shape
    z = z.reshape(2, 2, B, H, W, C)
    z = z.transpose(2, 3, 0, 4, 1, 5)                         # [B, H, r, W, s, C]
    return z.reshape(B, 2 * H, 2 * W, C)


# ----------------------------- parameters ------------------------------------

def spectral_normalize(w, dim, n_iter=30):
    """w / sigma(w) via power iteration (torch: dim=0 Linear, dim=1 ConvT)."""
    # TODO(synk): spectral-norm power iteration is init-time parameter prep;
    # it runs in plain JAX, not in a Pallas kernel.
    perm = (dim,) + tuple(i for i in range(w.ndim) if i != dim)
    w_mat = jnp.transpose(w, perm).reshape(w.shape[dim], -1)
    u = jnp.ones((w_mat.shape[0],), jnp.float32)
    u = u / jnp.linalg.norm(u)
    for _ in range(n_iter):
        v = w_mat.T @ u
        v = v / (jnp.linalg.norm(v) + 1e-12)
        u = w_mat @ v
        u = u / (jnp.linalg.norm(u) + 1e-12)
    sigma = jnp.dot(u, w_mat @ v)
    return w / sigma


def init_params(config, key):
    keys = jax.random.split(key, 4 + config.g_layers + 2)
    p = {}
    p["w_enc"] = spectral_normalize(
        0.02 * jax.random.normal(keys[0],
                                 (config.encoding_dim, config.label_dim),
                                 jnp.float32), dim=0)
    p["b_enc"] = 0.01 * jax.random.normal(keys[1], (config.encoding_dim,),
                                          jnp.float32)
    channel = config.g_dim * 8
    cin = config.z_dim + config.encoding_dim
    w_convs, bn = [], []
    # ConvTranspose2d(cin, channel, k=4, s=1, p=0)
    w = 0.02 * jax.random.normal(keys[2], (cin, channel, 4, 4), jnp.float32)
    w_convs.append(spectral_normalize(w, dim=1))
    bn.append((jnp.ones((channel,), jnp.float32),
               jnp.zeros((channel,), jnp.float32)))
    # g_layers x ConvTranspose2d(channel, channel//2, k=4, s=2, p=1)
    for i in range(config.g_layers):
        w = 0.02 * jax.random.normal(keys[3 + i],
                                     (channel, channel // 2, 4, 4), jnp.float32)
        w_convs.append(spectral_normalize(w, dim=1))
        channel = channel // 2
        bn.append((jnp.ones((channel,), jnp.float32),
                   jnp.zeros((channel,), jnp.float32)))
    # final ConvTranspose2d(g_dim, 3, k=4, s=2, p=1)
    w = 0.02 * jax.random.normal(keys[3 + config.g_layers],
                                 (config.g_dim, 3, 4, 4), jnp.float32)
    w_convs.append(spectral_normalize(w, dim=1))
    p["w_convs"] = w_convs
    p["bn"] = bn
    return p


def prepare_params(params):
    """One-time prep: matmul layouts, bf16 cast, 128-padding (drops out of the
    steady-state forward entirely)."""
    prep = {"w_enc": params["w_enc"], "b_enc": params["b_enc"],
            "bn": params["bn"]}
    w0 = params["w_convs"][0]                                 # [Cin, C0, 4, 4]
    cin0, c0 = w0.shape[0], w0.shape[1]
    w0m = jnp.transpose(w0, (0, 2, 3, 1)).reshape(cin0, 16 * c0)
    kp = _round_up(cin0, 128)
    prep["w0m"] = jnp.pad(w0m, ((0, kp - cin0), (0, 0))).astype(jnp.bfloat16)
    prep["w_phases"] = [_phase_weights(w) for w in params["w_convs"][1:]]
    return prep


# ------------------------------ forward ---------------------------------------

def generator_forward(noise, label, prep, eps=1e-5):
    B = noise.shape[0]
    # tiny encoder Linear + ReLU: plain XLA (padding it to 128^3 MXU tiles would
    # waste ~64x work for sub-microsecond math).
    enc = jax.nn.relu(label @ prep["w_enc"].T + prep["b_enc"])
    net = jnp.concatenate([noise, enc], axis=1).astype(jnp.bfloat16)  # [B, cin0]

    # first ConvT(k=4, s=1, p=0) on a 1x1 input == one matmul; BN stats fused.
    c0 = prep["bn"][0][0].shape[0]
    y, csum, csq = pallas_matmul_batched(net[None], prep["w0m"][None],
                                         with_stats=True)     # [1, Bp, 16*C0]
    y = y[0]
    ch_sum = csum.reshape(16, c0).sum(axis=0)
    ch_sq = csq.reshape(16, c0).sum(axis=0)
    gamma, beta = prep["bn"][0]
    scale, shift = _bn_scale_shift(ch_sum, ch_sq, B * 16, gamma, beta, eps)
    flat = pallas_affine_act(y, jnp.tile(scale, 16), jnp.tile(shift, 16),
                             "relu", out_dtype=jnp.bfloat16)
    x = flat[:B].reshape(B, 4, 4, c0)                         # NHWC bf16

    # upsampling ConvT(k4,s2,p1)+BN+ReLU blocks: one batched-phase pallas_call
    # per layer (stats fused), BN applied on the phase-major slab BEFORE the
    # parity interleave, all glue in bf16.
    n_up = len(prep["w_phases"])
    for i in range(n_up - 1):
        gamma, beta = prep["bn"][i + 1]
        C = gamma.shape[0]
        Bx, H, W, _ = x.shape
        M = Bx * H * W
        patches = _phase_patches(x)                           # [4, M, 4*Cin] bf16
        y, csum, csq = pallas_matmul_batched(patches, prep["w_phases"][i],
                                             with_stats=True)  # [4, Mp, Np] f32
        _, Mp, Np = y.shape
        scale, shift = _bn_scale_shift(csum[:C], csq[:C], 4 * M, gamma, beta, eps)
        scale = jnp.pad(scale, (0, Np - C))
        shift = jnp.pad(shift, (0, Np - C))
        z = pallas_affine_act(y.reshape(4 * Mp, Np), scale, shift, "relu",
                              out_dtype=jnp.bfloat16)
        z = z.reshape(4, Mp, Np)[:, :M, :C]
        x = _interleave_phases(z.reshape(4, Bx, H, W, C))     # [B, 2H, 2W, C]

    # final ConvT(k4,s2,p1) with Tanh fused into the matmul epilogue
    Bx, H, W, _ = x.shape
    M = Bx * H * W
    patches = _phase_patches(x)
    y = pallas_matmul_batched(patches, prep["w_phases"][-1], act="tanh")
    z = y[:, :M, :3]
    out = _interleave_phases(z.reshape(4, Bx, H, W, 3))
    return out.transpose(0, 3, 1, 2)                          # NCHW like PyTorch


# --------------------------- pure-JAX reference -------------------------------

def _convt_ref(x_nchw, w_t):
    w_conv = jnp.transpose(w_t, (1, 0, 2, 3))[:, :, ::-1, ::-1]
    return jax.lax.conv_general_dilated(
        x_nchw, w_conv, window_strides=(1, 1), padding=[(2, 2), (2, 2)],
        lhs_dilation=(2, 2), dimension_numbers=("NCHW", "OIHW", "NCHW"),
        precision=jax.lax.Precision.HIGHEST)


def reference_forward(noise, label, params, eps=1e-5):
    enc = jax.nn.relu(label @ params["w_enc"].T + params["b_enc"])
    net = jnp.concatenate([noise, enc], axis=1)
    x = jnp.einsum("bc,cokl->bokl", net, params["w_convs"][0],
                   precision=jax.lax.Precision.HIGHEST)

    def bn_relu(x, g, b):
        m = x.mean(axis=(0, 2, 3), keepdims=True)
        v = x.var(axis=(0, 2, 3), keepdims=True)
        y = (x - m) / jnp.sqrt(v + eps) * g[None, :, None, None] \
            + b[None, :, None, None]
        return jax.nn.relu(y)

    x = bn_relu(x, *params["bn"][0])
    n_conv = len(params["w_convs"])
    for i in range(1, n_conv - 1):
        x = _convt_ref(x, params["w_convs"][i])
        x = bn_relu(x, *params["bn"][i])
    x = _convt_ref(x, params["w_convs"][-1])
    return jnp.tanh(x)


# --------------------------------- main ----------------------------------------

if __name__ == "__main__":
    # Small config consistent with the module; g_layers=3 so the last upsampling
    # block ends at g_dim channels (as the PyTorch module assumes).
    config = SimpleNamespace(label_dim=8, encoding_dim=16, z_dim=16,
                             g_dim=8, g_layers=3)
    assert (config.g_dim * 8) // (2 ** config.g_layers) == config.g_dim

    key = jax.random.PRNGKey(0)
    k_param, k_noise, k_label = jax.random.split(key, 3)
    params = init_params(config, k_param)
    prep = prepare_params(params)

    B = 2
    noise = jax.random.normal(k_noise, (B, config.z_dim), jnp.float32)
    label = jax.random.normal(k_label, (B, config.label_dim), jnp.float32)

    fwd = jax.jit(generator_forward)
    out = jax.block_until_ready(fwd(noise, label, prep))
    side = 4 * (2 ** (config.g_layers + 1))
    assert out.shape == (B, 3, side, side), out.shape

    ref = jax.block_until_ready(jax.jit(reference_forward)(noise, label, params))
    max_diff = float(jnp.max(jnp.abs(out - ref)))
    # bf16 MXU operands vs f32/HIGHEST reference, compounded through 4 BN layers.
    assert max_diff < 1e-1, f"mismatch vs reference: max_diff={max_diff}"
    print("KERNEL_OK")
</pallas_src>

<mosaic_0001>
module attributes {stable_mosaic.version = 11 : i64} {
  func.func @_mm_kernel(%arg0: i32, %arg1: i32, %arg2: i32, %arg3: i32, %arg4: memref<1x8x128xbf16, #tpu.memory_space<vmem>>, %arg5: memref<1x128x256xbf16, #tpu.memory_space<vmem>>, %arg6: memref<1x8x256xf32, #tpu.memory_space<vmem>>, %arg7: memref<1x8x256xf32, #tpu.memory_space<vmem>>) attributes {dimension_semantics = [#tpu.dimension_semantics<parallel>, #tpu.dimension_semantics<parallel>, #tpu.dimension_semantics<parallel>, #tpu.dimension_semantics<arbitrary>], iteration_bounds = array<i64: 1, 4, 1, 1>, scalar_prefetch = 0 : i64, scratch_operands = 0 : i64, tpu.core_type = #tpu.core_type<tc>, window_params = [{transform_indices = @transform_0, window_bounds = array<i64: 1, 8, 128>}, {transform_indices = @transform_1, window_bounds = array<i64: 1, 128, 256>}, {transform_indices = @transform_2, window_bounds = array<i64: 1, 8, 256>}, {transform_indices = @transform_3, window_bounds = array<i64: 1, 8, 256>}]} {
    %c0 = arith.constant 0 : index
    %c0_0 = arith.constant 0 : index
    %c0_1 = arith.constant 0 : index
    %0 = vector.load %arg4[%c0, %c0_0, %c0_1] : memref<1x8x128xbf16, #tpu.memory_space<vmem>>, vector<1x8x128xbf16>
    %1 = vector.shape_cast %0 : vector<1x8x128xbf16> to vector<8x128xbf16>
    %c0_2 = arith.constant 0 : index
    %c0_3 = arith.constant 0 : index
    %c0_4 = arith.constant 0 : index
    %2 = vector.load %arg5[%c0_2, %c0_3, %c0_4] : memref<1x128x256xbf16, #tpu.memory_space<vmem>>, vector<1x128x256xbf16>
    %3 = vector.shape_cast %2 : vector<1x128x256xbf16> to vector<128x256xbf16>
    %cst = arith.constant dense<0.000000e+00> : vector<8x256xf32>
    %4 = tpu.matmul %1, %3, %cst {dimension_numbers = #tpu.dot_dimension_numbers<[1], [0], [0], [1], [0, 0, 1, 1], [], []>} : vector<8x128xbf16>, vector<128x256xbf16>, vector<8x256xf32> -> vector<8x256xf32>
    %cst_5 = arith.constant dense<0.000000e+00> : vector<256xf32>
    %5 = vector.multi_reduction <add>, %4, %cst_5 [0] : vector<8x256xf32> to vector<256xf32>
    %6 = vector.shape_cast %5 : vector<256xf32> to vector<1x256xf32>
    %7 = arith.mulf %4, %4 : vector<8x256xf32>
    %cst_6 = arith.constant dense<0.000000e+00> : vector<256xf32>
    %8 = vector.multi_reduction <add>, %7, %cst_6 [0] : vector<8x256xf32> to vector<256xf32>
    %9 = vector.shape_cast %8 : vector<256xf32> to vector<1x256xf32>
    %10 = tpu.iota {dimensions = array<i32: 0>} : vector<8x256xi32>
    %c0_i32 = arith.constant 0 : i32
    %11 = vector.broadcast %c0_i32 : i32 to vector<8x256xi32>
    %12 = arith.cmpi eq, %10, %11 : vector<8x256xi32>
    %13 = vector.shape_cast %6 : vector<1x256xf32> to vector<1x256xf32>
    %14 = vector.broadcast %13 : vector<1x256xf32> to vector<8x256xf32>
    %c1_i32 = arith.constant 1 : i32
    %15 = vector.broadcast %c1_i32 : i32 to vector<8x256xi32>
    %16 = arith.cmpi eq, %10, %15 : vector<8x256xi32>
    %17 = vector.shape_cast %9 : vector<1x256xf32> to vector<1x256xf32>
    %18 = vector.broadcast %17 : vector<1x256xf32> to vector<8x256xf32>
    %cst_7 = arith.constant 0.000000e+00 : f32
    %19 = vector.broadcast %cst_7 : f32 to vector<8x256xf32>
    %20 = arith.select %16, %18, %19 : vector<8x256xi1>, vector<8x256xf32>
    %21 = arith.select %12, %14, %20 : vector<8x256xi1>, vector<8x256xf32>
    %c0_8 = arith.constant 0 : index
    %c0_9 = arith.constant 0 : index
    %c0_10 = arith.constant 0 : index
    %22 = vector.load %arg7[%c0_8, %c0_9, %c0_10] : memref<1x8x256xf32, #tpu.memory_space<vmem>>, vector<1x8x256xf32>
    %23 = vector.shape_cast %22 : vector<1x8x256xf32> to vector<8x256xf32>
    %24 = vector.shape_cast %21 : vector<8x256xf32> to vector<1x8x256xf32>
    tpu.vector_store %arg7[%c0_8, %c0_9, %c0_10], %24 {strides = array<i32>} : memref<1x8x256xf32, #tpu.memory_space<vmem>>, vector<1x8x256xf32>,
    %c0_11 = arith.constant 0 : index
    %c0_12 = arith.constant 0 : index
    %c0_13 = arith.constant 0 : index
    %25 = vector.load %arg6[%c0_11, %c0_12, %c0_13] : memref<1x8x256xf32, #tpu.memory_space<vmem>>, vector<1x8x256xf32>
    %26 = vector.shape_cast %25 : vector<1x8x256xf32> to vector<8x256xf32>
    %27 = vector.shape_cast %4 : vector<8x256xf32> to vector<1x8x256xf32>
    tpu.vector_store %arg6[%c0_11, %c0_12, %c0_13], %27 {strides = array<i32>} : memref<1x8x256xf32, #tpu.memory_space<vmem>>, vector<1x8x256xf32>,
    return
  }
  func.func @transform_0(%arg0: i32, %arg1: i32, %arg2: i32, %arg3: i32) -> (i32, i32, i32) {
    %c0_i32 = arith.constant 0 : i32
    return %arg0, %arg2, %arg3 : i32, i32, i32
  }
  func.func @transform_1(%arg0: i32, %arg1: i32, %arg2: i32, %arg3: i32) -> (i32, i32, i32) {
    %c0_i32 = arith.constant 0 : i32
    return %arg0, %arg3, %arg1 : i32, i32, i32
  }
  func.func @transform_2(%arg0: i32, %arg1: i32, %arg2: i32, %arg3: i32) -> (i32, i32, i32) {
    %c0_i32 = arith.constant 0 : i32
    return %arg0, %arg2, %arg1 : i32, i32, i32
  }
  func.func @transform_3(%arg0: i32, %arg1: i32, %arg2: i32, %arg3: i32) -> (i32, i32, i32) {
    %c0_i32 = arith.constant 0 : i32
    return %arg0, %arg2, %arg1 : i32, i32, i32
  }
}

module attributes {stable_mosaic.version = 11 : i64} {
  func.func @_affine_act_kernel(%arg0: i32, %arg1: memref<8x1024xf32, #tpu.memory_space<vmem>>, %arg2: memref<1x1024xf32, #tpu.memory_space<vmem>>, %arg3: memref<1x1024xf32, #tpu.memory_space<vmem>>, %arg4: memref<8x1024xbf16, #tpu.memory_space<vmem>>) attributes {dimension_semantics = [#tpu.dimension_semantics<parallel>], iteration_bounds = array<i64: 1>, scalar_prefetch = 0 : i64, scratch_operands = 0 : i64, tpu.core_type = #tpu.core_type<tc>, window_params = [{transform_indices = @transform_0, window_bounds = array<i64: 8, 1024>}, {pipeline_mode = #tpu.pipeline_mode<synchronous>, transform_indices = @transform_1, window_bounds = array<i64: 1, 1024>}, {pipeline_mode = #tpu.pipeline_mode<synchronous>, transform_indices = @transform_2, window_bounds = array<i64: 1, 1024>}, {transform_indices = @transform_3, window_bounds = array<i64: 8, 1024>}]} {
    %c0 = arith.constant 0 : index
    %c0_0 = arith.constant 0 : index
    %0 = vector.load %arg1[%c0, %c0_0] : memref<8x1024xf32, #tpu.memory_space<vmem>>, vector<8x1024xf32>
    %c0_1 = arith.constant 0 : index
    %c0_2 = arith.constant 0 : index
    %1 = vector.load %arg2[%c0_1, %c0_2] : memref<1x1024xf32, #tpu.memory_space<vmem>>, vector<1x1024xf32>
    %2 = vector.broadcast %1 : vector<1x1024xf32> to vector<8x1024xf32>
    %3 = arith.mulf %0, %2 : vector<8x1024xf32>
    %c0_3 = arith.constant 0 : index
    %c0_4 = arith.constant 0 : index
    %4 = vector.load %arg3[%c0_3, %c0_4] : memref<1x1024xf32, #tpu.memory_space<vmem>>, vector<1x1024xf32>
    %5 = vector.broadcast %4 : vector<1x1024xf32> to vector<8x1024xf32>
    %6 = arith.addf %3, %5 : vector<8x1024xf32>
    %cst = arith.constant 0.000000e+00 : f32
    %7 = vector.broadcast %cst : f32 to vector<8x1024xf32>
    %8 = arith.maximumf %6, %7 : vector<8x1024xf32>
    %9 = arith.truncf %8 : vector<8x1024xf32> to vector<8x1024xbf16>
    %c0_5 = arith.constant 0 : index
    %c0_6 = arith.constant 0 : index
    %10 = vector.load %arg4[%c0_5, %c0_6] : memref<8x1024xbf16, #tpu.memory_space<vmem>>, vector<8x1024xbf16>
    tpu.vector_store %arg4[%c0_5, %c0_6], %9 {strides = array<i32>} : memref<8x1024xbf16, #tpu.memory_space<vmem>>, vector<8x1024xbf16>,
    return
  }
  func.func @transform_0(%arg0: i32) -> (i32, i32) {
    %c0_i32 = arith.constant 0 : i32
    %c0_i32_0 = arith.constant 0 : i32
    return %arg0, %c0_i32 : i32, i32
  }
  func.func @transform_1(%arg0: i32) -> (i32, i32) {
    %c0_i32 = arith.constant 0 : i32
    %c0_i32_0 = arith.constant 0 : i32
    %c0_i32_1 = arith.constant 0 : i32
    return %c0_i32, %c0_i32_0 : i32, i32
  }
  func.func @transform_2(%arg0: i32) -> (i32, i32) {
    %c0_i32 = arith.constant 0 : i32
    %c0_i32_0 = arith.constant 0 : i32
    %c0_i32_1 = arith.constant 0 : i32
    return %c0_i32, %c0_i32_0 : i32, i32
  }
  func.func @transform_3(%arg0: i32) -> (i32, i32) {
    %c0_i32 = arith.constant 0 : i32
    %c0_i32_0 = arith.constant 0 : i32
    return %arg0, %c0_i32 : i32, i32
  }
}

module attributes {stable_mosaic.version = 11 : i64} {
  func.func @_mm_kernel(%arg0: i32, %arg1: i32, %arg2: i32, %arg3: i32, %arg4: memref<1x32x256xbf16, #tpu.memory_space<vmem>>, %arg5: memref<1x256x128xbf16, #tpu.memory_space<vmem>>, %arg6: memref<1x32x128xf32, #tpu.memory_space<vmem>>, %arg7: memref<1x8x128xf32, #tpu.memory_space<vmem>>) attributes {dimension_semantics = [#tpu.dimension_semantics<parallel>, #tpu.dimension_semantics<parallel>, #tpu.dimension_semantics<parallel>, #tpu.dimension_semantics<arbitrary>], iteration_bounds = array<i64: 4, 1, 1, 1>, scalar_prefetch = 0 : i64, scratch_operands = 0 : i64, tpu.core_type = #tpu.core_type<tc>, window_params = [{transform_indices = @transform_0, window_bounds = array<i64: 1, 32, 256>}, {transform_indices = @transform_1, window_bounds = array<i64: 1, 256, 128>}, {transform_indices = @transform_2, window_bounds = array<i64: 1, 32, 128>}, {transform_indices = @transform_3, window_bounds = array<i64: 1, 8, 128>}]} {
    %c0 = arith.constant 0 : index
    %c0_0 = arith.constant 0 : index
    %c0_1 = arith.constant 0 : index
    %0 = vector.load %arg4[%c0, %c0_0, %c0_1] : memref<1x32x256xbf16, #tpu.memory_space<vmem>>, vector<1x32x256xbf16>
    %1 = vector.shape_cast %0 : vector<1x32x256xbf16> to vector<32x256xbf16>
    %c0_2 = arith.constant 0 : index
    %c0_3 = arith.constant 0 : index
    %c0_4 = arith.constant 0 : index
    %2 = vector.load %arg5[%c0_2, %c0_3, %c0_4] : memref<1x256x128xbf16, #tpu.memory_space<vmem>>, vector<1x256x128xbf16>
    %3 = vector.shape_cast %2 : vector<1x256x128xbf16> to vector<256x128xbf16>
    %cst = arith.constant dense<0.000000e+00> : vector<32x128xf32>
    %4 = tpu.matmul %1, %3, %cst {dimension_numbers = #tpu.dot_dimension_numbers<[1], [0], [0], [1], [0, 0, 1, 1], [], []>} : vector<32x256xbf16>, vector<256x128xbf16>, vector<32x128xf32> -> vector<32x128xf32>
    %cst_5 = arith.constant dense<0.000000e+00> : vector<128xf32>
    %5 = vector.multi_reduction <add>, %4, %cst_5 [0] : vector<32x128xf32> to vector<128xf32>
    %6 = vector.shape_cast %5 : vector<128xf32> to vector<1x128xf32>
    %7 = arith.mulf %4, %4 : vector<32x128xf32>
    %cst_6 = arith.constant dense<0.000000e+00> : vector<128xf32>
    %8 = vector.multi_reduction <add>, %7, %cst_6 [0] : vector<32x128xf32> to vector<128xf32>
    %9 = vector.shape_cast %8 : vector<128xf32> to vector<1x128xf32>
    %10 = tpu.iota {dimensions = array<i32: 0>} : vector<8x128xi32>
    %c0_i32 = arith.constant 0 : i32
    %11 = vector.broadcast %c0_i32 : i32 to vector<8x128xi32>
    %12 = arith.cmpi eq, %10, %11 : vector<8x128xi32>
    %13 = vector.shape_cast %6 : vector<1x128xf32> to vector<1x128xf32>
    %14 = vector.broadcast %13 : vector<1x128xf32> to vector<8x128xf32>
    %c1_i32 = arith.constant 1 : i32
    %15 = vector.broadcast %c1_i32 : i32 to vector<8x128xi32>
    %16 = arith.cmpi eq, %10, %15 : vector<8x128xi32>
    %17 = vector.shape_cast %9 : vector<1x128xf32> to vector<1x128xf32>
    %18 = vector.broadcast %17 : vector<1x128xf32> to vector<8x128xf32>
    %cst_7 = arith.constant 0.000000e+00 : f32
    %19 = vector.broadcast %cst_7 : f32 to vector<8x128xf32>
    %20 = arith.select %16, %18, %19 : vector<8x128xi1>, vector<8x128xf32>
    %21 = arith.select %12, %14, %20 : vector<8x128xi1>, vector<8x128xf32>
    %c0_8 = arith.constant 0 : index
    %c0_9 = arith.constant 0 : index
    %c0_10 = arith.constant 0 : index
    %22 = vector.load %arg7[%c0_8, %c0_9, %c0_10] : memref<1x8x128xf32, #tpu.memory_space<vmem>>, vector<1x8x128xf32>
    %23 = vector.shape_cast %22 : vector<1x8x128xf32> to vector<8x128xf32>
    %24 = vector.shape_cast %21 : vector<8x128xf32> to vector<1x8x128xf32>
    tpu.vector_store %arg7[%c0_8, %c0_9, %c0_10], %24 {strides = array<i32>} : memref<1x8x128xf32, #tpu.memory_space<vmem>>, vector<1x8x128xf32>,
    %c0_11 = arith.constant 0 : index
    %c0_12 = arith.constant 0 : index
    %c0_13 = arith.constant 0 : index
    %25 = vector.load %arg6[%c0_11, %c0_12, %c0_13] : memref<1x32x128xf32, #tpu.memory_space<vmem>>, vector<1x32x128xf32>
    %26 = vector.shape_cast %25 : vector<1x32x128xf32> to vector<32x128xf32>
    %27 = vector.shape_cast %4 : vector<32x128xf32> to vector<1x32x128xf32>
    tpu.vector_store %arg6[%c0_11, %c0_12, %c0_13], %27 {strides = array<i32>} : memref<1x32x128xf32, #tpu.memory_space<vmem>>, vector<1x32x128xf32>,
    return
  }
  func.func @transform_0(%arg0: i32, %arg1: i32, %arg2: i32, %arg3: i32) -> (i32, i32, i32) {
    %c0_i32 = arith.constant 0 : i32
    return %arg0, %arg2, %arg3 : i32, i32, i32
  }
  func.func @transform_1(%arg0: i32, %arg1: i32, %arg2: i32, %arg3: i32) -> (i32, i32, i32) {
    %c0_i32 = arith.constant 0 : i32
    return %arg0, %arg3, %arg1 : i32, i32, i32
  }
  func.func @transform_2(%arg0: i32, %arg1: i32, %arg2: i32, %arg3: i32) -> (i32, i32, i32) {
    %c0_i32 = arith.constant 0 : i32
    return %arg0, %arg2, %arg1 : i32, i32, i32
  }
  func.func @transform_3(%arg0: i32, %arg1: i32, %arg2: i32, %arg3: i32) -> (i32, i32, i32) {
    %c0_i32 = arith.constant 0 : i32
    return %arg0, %arg2, %arg1 : i32, i32, i32
  }
}

module attributes {stable_mosaic.version = 11 : i64} {
  func.func @_affine_act_kernel(%arg0: i32, %arg1: memref<32x512xf32, #tpu.memory_space<vmem>>, %arg2: memref<1x512xf32, #tpu.memory_space<vmem>>, %arg3: memref<1x512xf32, #tpu.memory_space<vmem>>, %arg4: memref<32x512xbf16, #tpu.memory_space<vmem>>) attributes {dimension_semantics = [#tpu.dimension_semantics<parallel>], iteration_bounds = array<i64: 1>, scalar_prefetch = 0 : i64, scratch_operands = 0 : i64, tpu.core_type = #tpu.core_type<tc>, window_params = [{transform_indices = @transform_0, window_bounds = array<i64: 32, 512>}, {pipeline_mode = #tpu.pipeline_mode<synchronous>, transform_indices = @transform_1, window_bounds = array<i64: 1, 512>}, {pipeline_mode = #tpu.pipeline_mode<synchronous>, transform_indices = @transform_2, window_bounds = array<i64: 1, 512>}, {transform_indices = @transform_3, window_bounds = array<i64: 32, 512>}]} {
    %c0 = arith.constant 0 : index
    %c0_0 = arith.constant 0 : index
    %0 = vector.load %arg1[%c0, %c0_0] : memref<32x512xf32, #tpu.memory_space<vmem>>, vector<32x512xf32>
    %c0_1 = arith.constant 0 : index
    %c0_2 = arith.constant 0 : index
    %1 = vector.load %arg2[%c0_1, %c0_2] : memref<1x512xf32, #tpu.memory_space<vmem>>, vector<1x512xf32>
    %2 = vector.broadcast %1 : vector<1x512xf32> to vector<32x512xf32>
    %3 = arith.mulf %0, %2 : vector<32x512xf32>
    %c0_3 = arith.constant 0 : index
    %c0_4 = arith.constant 0 : index
    %4 = vector.load %arg3[%c0_3, %c0_4] : memref<1x512xf32, #tpu.memory_space<vmem>>, vector<1x512xf32>
    %5 = vector.broadcast %4 : vector<1x512xf32> to vector<32x512xf32>
    %6 = arith.addf %3, %5 : vector<32x512xf32>
    %cst = arith.constant 0.000000e+00 : f32
    %7 = vector.broadcast %cst : f32 to vector<32x512xf32>
    %8 = arith.maximumf %6, %7 : vector<32x512xf32>
    %9 = arith.truncf %8 : vector<32x512xf32> to vector<32x512xbf16>
    %c0_5 = arith.constant 0 : index
    %c0_6 = arith.constant 0 : index
    %10 = vector.load %arg4[%c0_5, %c0_6] : memref<32x512xbf16, #tpu.memory_space<vmem>>, vector<32x512xbf16>
    tpu.vector_store %arg4[%c0_5, %c0_6], %9 {strides = array<i32>} : memref<32x512xbf16, #tpu.memory_space<vmem>>, vector<32x512xbf16>,
    return
  }
  func.func @transform_0(%arg0: i32) -> (i32, i32) {
    %c0_i32 = arith.constant 0 : i32
    %c0_i32_0 = arith.constant 0 : i32
    return %arg0, %c0_i32 : i32, i32
  }
  func.func @transform_1(%arg0: i32) -> (i32, i32) {
    %c0_i32 = arith.constant 0 : i32
    %c0_i32_0 = arith.constant 0 : i32
    %c0_i32_1 = arith.constant 0 : i32
    return %c0_i32, %c0_i32_0 : i32, i32
  }
  func.func @transform_2(%arg0: i32) -> (i32, i32) {
    %c0_i32 = arith.constant 0 : i32
    %c0_i32_0 = arith.constant 0 : i32
    %c0_i32_1 = arith.constant 0 : i32
    return %c0_i32, %c0_i32_0 : i32, i32
  }
  func.func @transform_3(%arg0: i32) -> (i32, i32) {
    %c0_i32 = arith.constant 0 : i32
    %c0_i32_0 = arith.constant 0 : i32
    return %arg0, %c0_i32 : i32, i32
  }
}

module attributes {stable_mosaic.version = 11 : i64} {
  func.func @_mm_kernel(%arg0: i32, %arg1: i32, %arg2: i32, %arg3: i32, %arg4: memref<1x128x128xbf16, #tpu.memory_space<vmem>>, %arg5: memref<1x128x128xbf16, #tpu.memory_space<vmem>>, %arg6: memref<1x128x128xf32, #tpu.memory_space<vmem>>, %arg7: memref<1x8x128xf32, #tpu.memory_space<vmem>>) attributes {dimension_semantics = [#tpu.dimension_semantics<parallel>, #tpu.dimension_semantics<parallel>, #tpu.dimension_semantics<parallel>, #tpu.dimension_semantics<arbitrary>], iteration_bounds = array<i64: 4, 1, 1, 1>, scalar_prefetch = 0 : i64, scratch_operands = 0 : i64, tpu.core_type = #tpu.core_type<tc>, window_params = [{transform_indices = @transform_0, window_bounds = array<i64: 1, 128, 128>}, {transform_indices = @transform_1, window_bounds = array<i64: 1, 128, 128>}, {transform_indices = @transform_2, window_bounds = array<i64: 1, 128, 128>}, {transform_indices = @transform_3, window_bounds = array<i64: 1, 8, 128>}]} {
    %c0 = arith.constant 0 : index
    %c0_0 = arith.constant 0 : index
    %c0_1 = arith.constant 0 : index
    %0 = vector.load %arg4[%c0, %c0_0, %c0_1] : memref<1x128x128xbf16, #tpu.memory_space<vmem>>, vector<1x128x128xbf16>
    %1 = vector.shape_cast %0 : vector<1x128x128xbf16> to vector<128x128xbf16>
    %c0_2 = arith.constant 0 : index
    %c0_3 = arith.constant 0 : index
    %c0_4 = arith.constant 0 : index
    %2 = vector.load %arg5[%c0_2, %c0_3, %c0_4] : memref<1x128x128xbf16, #tpu.memory_space<vmem>>, vector<1x128x128xbf16>
    %3 = vector.shape_cast %2 : vector<1x128x128xbf16> to vector<128x128xbf16>
    %cst = arith.constant dense<0.000000e+00> : vector<128x128xf32>
    %4 = tpu.matmul %1, %3, %cst {dimension_numbers = #tpu.dot_dimension_numbers<[1], [0], [0], [1], [0, 0, 1, 1], [], []>} : vector<128x128xbf16>, vector<128x128xbf16>, vector<128x128xf32> -> vector<128x128xf32>
    %cst_5 = arith.constant dense<0.000000e+00> : vector<128xf32>
    %5 = vector.multi_reduction <add>, %4, %cst_5 [0] : vector<128x128xf32> to vector<128xf32>
    %6 = vector.shape_cast %5 : vector<128xf32> to vector<1x128xf32>
    %7 = arith.mulf %4, %4 : vector<128x128xf32>
    %cst_6 = arith.constant dense<0.000000e+00> : vector<128xf32>
    %8 = vector.multi_reduction <add>, %7, %cst_6 [0] : vector<128x128xf32> to vector<128xf32>
    %9 = vector.shape_cast %8 : vector<128xf32> to vector<1x128xf32>
    %10 = tpu.iota {dimensions = array<i32: 0>} : vector<8x128xi32>
    %c0_i32 = arith.constant 0 : i32
    %11 = vector.broadcast %c0_i32 : i32 to vector<8x128xi32>
    %12 = arith.cmpi eq, %10, %11 : vector<8x128xi32>
    %13 = vector.shape_cast %6 : vector<1x128xf32> to vector<1x128xf32>
    %14 = vector.broadcast %13 : vector<1x128xf32> to vector<8x128xf32>
    %c1_i32 = arith.constant 1 : i32
    %15 = vector.broadcast %c1_i32 : i32 to vector<8x128xi32>
    %16 = arith.cmpi eq, %10, %15 : vector<8x128xi32>
    %17 = vector.shape_cast %9 : vector<1x128xf32> to vector<1x128xf32>
    %18 = vector.broadcast %17 : vector<1x128xf32> to vector<8x128xf32>
    %cst_7 = arith.constant 0.000000e+00 : f32
    %19 = vector.broadcast %cst_7 : f32 to vector<8x128xf32>
    %20 = arith.select %16, %18, %19 : vector<8x128xi1>, vector<8x128xf32>
    %21 = arith.select %12, %14, %20 : vector<8x128xi1>, vector<8x128xf32>
    %c0_8 = arith.constant 0 : index
    %c0_9 = arith.constant 0 : index
    %c0_10 = arith.constant 0 : index
    %22 = vector.load %arg7[%c0_8, %c0_9, %c0_10] : memref<1x8x128xf32, #tpu.memory_space<vmem>>, vector<1x8x128xf32>
    %23 = vector.shape_cast %22 : vector<1x8x128xf32> to vector<8x128xf32>
    %24 = vector.shape_cast %21 : vector<8x128xf32> to vector<1x8x128xf32>
    tpu.vector_store %arg7[%c0_8, %c0_9, %c0_10], %24 {strides = array<i32>} : memref<1x8x128xf32, #tpu.memory_space<vmem>>, vector<1x8x128xf32>,
    %c0_11 = arith.constant 0 : index
    %c0_12 = arith.constant 0 : index
    %c0_13 = arith.constant 0 : index
    %25 = vector.load %arg6[%c0_11, %c0_12, %c0_13] : memref<1x128x128xf32, #tpu.memory_space<vmem>>, vector<1x128x128xf32>
    %26 = vector.shape_cast %25 : vector<1x128x128xf32> to vector<128x128xf32>
    %27 = vector.shape_cast %4 : vector<128x128xf32> to vector<1x128x128xf32>
    tpu.vector_store %arg6[%c0_11, %c0_12, %c0_13], %27 {strides = array<i32>} : memref<1x128x128xf32, #tpu.memory_space<vmem>>, vector<1x128x128xf32>,
    return
  }
  func.func @transform_0(%arg0: i32, %arg1: i32, %arg2: i32, %arg3: i32) -> (i32, i32, i32) {
    %c0_i32 = arith.constant 0 : i32
    return %arg0, %arg2, %arg3 : i32, i32, i32
  }
  func.func @transform_1(%arg0: i32, %arg1: i32, %arg2: i32, %arg3: i32) -> (i32, i32, i32) {
    %c0_i32 = arith.constant 0 : i32
    return %arg0, %arg3, %arg1 : i32, i32, i32
  }
  func.func @transform_2(%arg0: i32, %arg1: i32, %arg2: i32, %arg3: i32) -> (i32, i32, i32) {
    %c0_i32 = arith.constant 0 : i32
    return %arg0, %arg2, %arg1 : i32, i32, i32
  }
  func.func @transform_3(%arg0: i32, %arg1: i32, %arg2: i32, %arg3: i32) -> (i32, i32, i32) {
    %c0_i32 = arith.constant 0 : i32
    return %arg0, %arg2, %arg1 : i32, i32, i32
  }
}

module attributes {stable_mosaic.version = 11 : i64} {
  func.func @_affine_act_kernel(%arg0: i32, %arg1: memref<128x512xf32, #tpu.memory_space<vmem>>, %arg2: memref<1x512xf32, #tpu.memory_space<vmem>>, %arg3: memref<1x512xf32, #tpu.memory_space<vmem>>, %arg4: memref<128x512xbf16, #tpu.memory_space<vmem>>) attributes {dimension_semantics = [#tpu.dimension_semantics<parallel>], iteration_bounds = array<i64: 1>, scalar_prefetch = 0 : i64, scratch_operands = 0 : i64, tpu.core_type = #tpu.core_type<tc>, window_params = [{transform_indices = @transform_0, window_bounds = array<i64: 128, 512>}, {pipeline_mode = #tpu.pipeline_mode<synchronous>, transform_indices = @transform_1, window_bounds = array<i64: 1, 512>}, {pipeline_mode = #tpu.pipeline_mode<synchronous>, transform_indices = @transform_2, window_bounds = array<i64: 1, 512>}, {transform_indices = @transform_3, window_bounds = array<i64: 128, 512>}]} {
    %c0 = arith.constant 0 : index
    %c0_0 = arith.constant 0 : index
    %0 = vector.load %arg1[%c0, %c0_0] : memref<128x512xf32, #tpu.memory_space<vmem>>, vector<128x512xf32>
    %c0_1 = arith.constant 0 : index
    %c0_2 = arith.constant 0 : index
    %1 = vector.load %arg2[%c0_1, %c0_2] : memref<1x512xf32, #tpu.memory_space<vmem>>, vector<1x512xf32>
    %2 = vector.broadcast %1 : vector<1x512xf32> to vector<128x512xf32>
    %3 = arith.mulf %0, %2 : vector<128x512xf32>
    %c0_3 = arith.constant 0 : index
    %c0_4 = arith.constant 0 : index
    %4 = vector.load %arg3[%c0_3, %c0_4] : memref<1x512xf32, #tpu.memory_space<vmem>>, vector<1x512xf32>
    %5 = vector.broadcast %4 : vector<1x512xf32> to vector<128x512xf32>
    %6 = arith.addf %3, %5 : vector<128x512xf32>
    %cst = arith.constant 0.000000e+00 : f32
    %7 = vector.broadcast %cst : f32 to vector<128x512xf32>
    %8 = arith.maximumf %6, %7 : vector<128x512xf32>
    %9 = arith.truncf %8 : vector<128x512xf32> to vector<128x512xbf16>
    %c0_5 = arith.constant 0 : index
    %c0_6 = arith.constant 0 : index
    %10 = vector.load %arg4[%c0_5, %c0_6] : memref<128x512xbf16, #tpu.memory_space<vmem>>, vector<128x512xbf16>
    tpu.vector_store %arg4[%c0_5, %c0_6], %9 {strides = array<i32>} : memref<128x512xbf16, #tpu.memory_space<vmem>>, vector<128x512xbf16>,
    return
  }
  func.func @transform_0(%arg0: i32) -> (i32, i32) {
    %c0_i32 = arith.constant 0 : i32
    %c0_i32_0 = arith.constant 0 : i32
    return %arg0, %c0_i32 : i32, i32
  }
  func.func @transform_1(%arg0: i32) -> (i32, i32) {
    %c0_i32 = arith.constant 0 : i32
    %c0_i32_0 = arith.constant 0 : i32
    %c0_i32_1 = arith.constant 0 : i32
    return %c0_i32, %c0_i32_0 : i32, i32
  }
  func.func @transform_2(%arg0: i32) -> (i32, i32) {
    %c0_i32 = arith.constant 0 : i32
    %c0_i32_0 = arith.constant 0 : i32
    %c0_i32_1 = arith.constant 0 : i32
    return %c0_i32, %c0_i32_0 : i32, i32
  }
  func.func @transform_3(%arg0: i32) -> (i32, i32) {
    %c0_i32 = arith.constant 0 : i32
    %c0_i32_0 = arith.constant 0 : i32
    return %arg0, %c0_i32 : i32, i32
  }
}

module attributes {stable_mosaic.version = 11 : i64} {
  func.func @_mm_kernel(%arg0: i32, %arg1: i32, %arg2: i32, %arg3: i32, %arg4: memref<1x256x128xbf16, #tpu.memory_space<vmem>>, %arg5: memref<1x128x128xbf16, #tpu.memory_space<vmem>>, %arg6: memref<1x256x128xf32, #tpu.memory_space<vmem>>, %arg7: memref<1x8x128xf32, #tpu.memory_space<vmem>>) attributes {dimension_semantics = [#tpu.dimension_semantics<parallel>, #tpu.dimension_semantics<parallel>, #tpu.dimension_semantics<parallel>, #tpu.dimension_semantics<arbitrary>], iteration_bounds = array<i64: 4, 1, 2, 1>, scalar_prefetch = 0 : i64, scratch_operands = 0 : i64, tpu.core_type = #tpu.core_type<tc>, window_params = [{transform_indices = @transform_0, window_bounds = array<i64: 1, 256, 128>}, {transform_indices = @transform_1, window_bounds = array<i64: 1, 128, 128>}, {transform_indices = @transform_2, window_bounds = array<i64: 1, 256, 128>}, {transform_indices = @transform_3, window_bounds = array<i64: 1, 8, 128>}]} {
    %c0 = arith.constant 0 : index
    %c0_0 = arith.constant 0 : index
    %c0_1 = arith.constant 0 : index
    %0 = vector.load %arg4[%c0, %c0_0, %c0_1] : memref<1x256x128xbf16, #tpu.memory_space<vmem>>, vector<1x256x128xbf16>
    %1 = vector.shape_cast %0 : vector<1x256x128xbf16> to vector<256x128xbf16>
    %c0_2 = arith.constant 0 : index
    %c0_3 = arith.constant 0 : index
    %c0_4 = arith.constant 0 : index
    %2 = vector.load %arg5[%c0_2, %c0_3, %c0_4] : memref<1x128x128xbf16, #tpu.memory_space<vmem>>, vector<1x128x128xbf16>
    %3 = vector.shape_cast %2 : vector<1x128x128xbf16> to vector<128x128xbf16>
    %cst = arith.constant dense<0.000000e+00> : vector<256x128xf32>
    %4 = tpu.matmul %1, %3, %cst {dimension_numbers = #tpu.dot_dimension_numbers<[1], [0], [0], [1], [0, 0, 1, 1], [], []>} : vector<256x128xbf16>, vector<128x128xbf16>, vector<256x128xf32> -> vector<256x128xf32>
    %cst_5 = arith.constant dense<0.000000e+00> : vector<128xf32>
    %5 = vector.multi_reduction <add>, %4, %cst_5 [0] : vector<256x128xf32> to vector<128xf32>
    %6 = vector.shape_cast %5 : vector<128xf32> to vector<1x128xf32>
    %7 = arith.mulf %4, %4 : vector<256x128xf32>
    %cst_6 = arith.constant dense<0.000000e+00> : vector<128xf32>
    %8 = vector.multi_reduction <add>, %7, %cst_6 [0] : vector<256x128xf32> to vector<128xf32>
    %9 = vector.shape_cast %8 : vector<128xf32> to vector<1x128xf32>
    %10 = tpu.iota {dimensions = array<i32: 0>} : vector<8x128xi32>
    %c0_i32 = arith.constant 0 : i32
    %11 = vector.broadcast %c0_i32 : i32 to vector<8x128xi32>
    %12 = arith.cmpi eq, %10, %11 : vector<8x128xi32>
    %13 = vector.shape_cast %6 : vector<1x128xf32> to vector<1x128xf32>
    %14 = vector.broadcast %13 : vector<1x128xf32> to vector<8x128xf32>
    %c1_i32 = arith.constant 1 : i32
    %15 = vector.broadcast %c1_i32 : i32 to vector<8x128xi32>
    %16 = arith.cmpi eq, %10, %15 : vector<8x128xi32>
    %17 = vector.shape_cast %9 : vector<1x128xf32> to vector<1x128xf32>
    %18 = vector.broadcast %17 : vector<1x128xf32> to vector<8x128xf32>
    %cst_7 = arith.constant 0.000000e+00 : f32
    %19 = vector.broadcast %cst_7 : f32 to vector<8x128xf32>
    %20 = arith.select %16, %18, %19 : vector<8x128xi1>, vector<8x128xf32>
    %21 = arith.select %12, %14, %20 : vector<8x128xi1>, vector<8x128xf32>
    %c0_8 = arith.constant 0 : index
    %c0_9 = arith.constant 0 : index
    %c0_10 = arith.constant 0 : index
    %22 = vector.load %arg7[%c0_8, %c0_9, %c0_10] : memref<1x8x128xf32, #tpu.memory_space<vmem>>, vector<1x8x128xf32>
    %23 = vector.shape_cast %22 : vector<1x8x128xf32> to vector<8x128xf32>
    %24 = vector.shape_cast %21 : vector<8x128xf32> to vector<1x8x128xf32>
    tpu.vector_store %arg7[%c0_8, %c0_9, %c0_10], %24 {strides = array<i32>} : memref<1x8x128xf32, #tpu.memory_space<vmem>>, vector<1x8x128xf32>,
    %c0_11 = arith.constant 0 : index
    %c0_12 = arith.constant 0 : index
    %c0_13 = arith.constant 0 : index
    %25 = vector.load %arg6[%c0_11, %c0_12, %c0_13] : memref<1x256x128xf32, #tpu.memory_space<vmem>>, vector<1x256x128xf32>
    %26 = vector.shape_cast %25 : vector<1x256x128xf32> to vector<256x128xf32>
    %27 = vector.shape_cast %4 : vector<256x128xf32> to vector<1x256x128xf32>
    tpu.vector_store %arg6[%c0_11, %c0_12, %c0_13], %27 {strides = array<i32>} : memref<1x256x128xf32, #tpu.memory_space<vmem>>, vector<1x256x128xf32>,
    return
  }
  func.func @transform_0(%arg0: i32, %arg1: i32, %arg2: i32, %arg3: i32) -> (i32, i32, i32) {
    %c0_i32 = arith.constant 0 : i32
    return %arg0, %arg2, %arg3 : i32, i32, i32
  }
  func.func @transform_1(%arg0: i32, %arg1: i32, %arg2: i32, %arg3: i32) -> (i32, i32, i32) {
    %c0_i32 = arith.constant 0 : i32
    return %arg0, %arg3, %arg1 : i32, i32, i32
  }
  func.func @transform_2(%arg0: i32, %arg1: i32, %arg2: i32, %arg3: i32) -> (i32, i32, i32) {
    %c0_i32 = arith.constant 0 : i32
    return %arg0, %arg2, %arg1 : i32, i32, i32
  }
  func.func @transform_3(%arg0: i32, %arg1: i32, %arg2: i32, %arg3: i32) -> (i32, i32, i32) {
    %c0_i32 = arith.constant 0 : i32
    return %arg0, %arg2, %arg1 : i32, i32, i32
  }
}

module attributes {stable_mosaic.version = 11 : i64} {
  func.func @_affine_act_kernel(%arg0: i32, %arg1: memref<512x512xf32, #tpu.memory_space<vmem>>, %arg2: memref<1x512xf32, #tpu.memory_space<vmem>>, %arg3: memref<1x512xf32, #tpu.memory_space<vmem>>, %arg4: memref<512x512xbf16, #tpu.memory_space<vmem>>) attributes {dimension_semantics = [#tpu.dimension_semantics<parallel>], iteration_bounds = array<i64: 1>, scalar_prefetch = 0 : i64, scratch_operands = 0 : i64, tpu.core_type = #tpu.core_type<tc>, window_params = [{transform_indices = @transform_0, window_bounds = array<i64: 512, 512>}, {pipeline_mode = #tpu.pipeline_mode<synchronous>, transform_indices = @transform_1, window_bounds = array<i64: 1, 512>}, {pipeline_mode = #tpu.pipeline_mode<synchronous>, transform_indices = @transform_2, window_bounds = array<i64: 1, 512>}, {transform_indices = @transform_3, window_bounds = array<i64: 512, 512>}]} {
    %c0 = arith.constant 0 : index
    %c0_0 = arith.constant 0 : index
    %0 = vector.load %arg1[%c0, %c0_0] : memref<512x512xf32, #tpu.memory_space<vmem>>, vector<512x512xf32>
    %c0_1 = arith.constant 0 : index
    %c0_2 = arith.constant 0 : index
    %1 = vector.load %arg2[%c0_1, %c0_2] : memref<1x512xf32, #tpu.memory_space<vmem>>, vector<1x512xf32>
    %2 = vector.broadcast %1 : vector<1x512xf32> to vector<512x512xf32>
    %3 = arith.mulf %0, %2 : vector<512x512xf32>
    %c0_3 = arith.constant 0 : index
    %c0_4 = arith.constant 0 : index
    %4 = vector.load %arg3[%c0_3, %c0_4] : memref<1x512xf32, #tpu.memory_space<vmem>>, vector<1x512xf32>
    %5 = vector.broadcast %4 : vector<1x512xf32> to vector<512x512xf32>
    %6 = arith.addf %3, %5 : vector<512x512xf32>
    %cst = arith.constant 0.000000e+00 : f32
    %7 = vector.broadcast %cst : f32 to vector<512x512xf32>
    %8 = arith.maximumf %6, %7 : vector<512x512xf32>
    %9 = arith.truncf %8 : vector<512x512xf32> to vector<512x512xbf16>
    %c0_5 = arith.constant 0 : index
    %c0_6 = arith.constant 0 : index
    %10 = vector.load %arg4[%c0_5, %c0_6] : memref<512x512xbf16, #tpu.memory_space<vmem>>, vector<512x512xbf16>
    tpu.vector_store %arg4[%c0_5, %c0_6], %9 {strides = array<i32>} : memref<512x512xbf16, #tpu.memory_space<vmem>>, vector<512x512xbf16>,
    return
  }
  func.func @transform_0(%arg0: i32) -> (i32, i32) {
    %c0_i32 = arith.constant 0 : i32
    %c0_i32_0 = arith.constant 0 : i32
    return %arg0, %c0_i32 : i32, i32
  }
  func.func @transform_1(%arg0: i32) -> (i32, i32) {
    %c0_i32 = arith.constant 0 : i32
    %c0_i32_0 = arith.constant 0 : i32
    %c0_i32_1 = arith.constant 0 : i32
    return %c0_i32, %c0_i32_0 : i32, i32
  }
  func.func @transform_2(%arg0: i32) -> (i32, i32) {
    %c0_i32 = arith.constant 0 : i32
    %c0_i32_0 = arith.constant 0 : i32
    %c0_i32_1 = arith.constant 0 : i32
    return %c0_i32, %c0_i32_0 : i32, i32
  }
  func.func @transform_3(%arg0: i32) -> (i32, i32) {
    %c0_i32 = arith.constant 0 : i32
    %c0_i32_0 = arith.constant 0 : i32
    return %arg0, %c0_i32 : i32, i32
  }
}

module attributes {stable_mosaic.version = 11 : i64} {
  func.func @_mm_kernel(%arg0: i32, %arg1: i32, %arg2: i32, %arg3: i32, %arg4: memref<1x256x128xbf16, #tpu.memory_space<vmem>>, %arg5: memref<1x128x128xbf16, #tpu.memory_space<vmem>>, %arg6: memref<1x256x128xf32, #tpu.memory_space<vmem>>) attributes {dimension_semantics = [#tpu.dimension_semantics<parallel>, #tpu.dimension_semantics<parallel>, #tpu.dimension_semantics<parallel>, #tpu.dimension_semantics<arbitrary>], iteration_bounds = array<i64: 4, 1, 8, 1>, scalar_prefetch = 0 : i64, scratch_operands = 0 : i64, tpu.core_type = #tpu.core_type<tc>, window_params = [{transform_indices = @transform_0, window_bounds = array<i64: 1, 256, 128>}, {transform_indices = @transform_1, window_bounds = array<i64: 1, 128, 128>}, {transform_indices = @transform_2, window_bounds = array<i64: 1, 256, 128>}]} {
    %c0 = arith.constant 0 : index
    %c0_0 = arith.constant 0 : index
    %c0_1 = arith.constant 0 : index
    %0 = vector.load %arg4[%c0, %c0_0, %c0_1] : memref<1x256x128xbf16, #tpu.memory_space<vmem>>, vector<1x256x128xbf16>
    %1 = vector.shape_cast %0 : vector<1x256x128xbf16> to vector<256x128xbf16>
    %c0_2 = arith.constant 0 : index
    %c0_3 = arith.constant 0 : index
    %c0_4 = arith.constant 0 : index
    %2 = vector.load %arg5[%c0_2, %c0_3, %c0_4] : memref<1x128x128xbf16, #tpu.memory_space<vmem>>, vector<1x128x128xbf16>
    %3 = vector.shape_cast %2 : vector<1x128x128xbf16> to vector<128x128xbf16>
    %cst = arith.constant dense<0.000000e+00> : vector<256x128xf32>
    %4 = tpu.matmul %1, %3, %cst {dimension_numbers = #tpu.dot_dimension_numbers<[1], [0], [0], [1], [0, 0, 1, 1], [], []>} : vector<256x128xbf16>, vector<128x128xbf16>, vector<256x128xf32> -> vector<256x128xf32>
    %5 = math.tanh %4 : vector<256x128xf32>
    %c0_5 = arith.constant 0 : index
    %c0_6 = arith.constant 0 : index
    %c0_7 = arith.constant 0 : index
    %6 = vector.load %arg6[%c0_5, %c0_6, %c0_7] : memref<1x256x128xf32, #tpu.memory_space<vmem>>, vector<1x256x128xf32>
    %7 = vector.shape_cast %6 : vector<1x256x128xf32> to vector<256x128xf32>
    %8 = vector.shape_cast %5 : vector<256x128xf32> to vector<1x256x128xf32>
    tpu.vector_store %arg6[%c0_5, %c0_6, %c0_7], %8 {strides = array<i32>} : memref<1x256x128xf32, #tpu.memory_space<vmem>>, vector<1x256x128xf32>,
    return
  }
  func.func @transform_0(%arg0: i32, %arg1: i32, %arg2: i32, %arg3: i32) -> (i32, i32, i32) {
    %c0_i32 = arith.constant 0 : i32
    return %arg0, %arg2, %arg3 : i32, i32, i32
  }
  func.func @transform_1(%arg0: i32, %arg1: i32, %arg2: i32, %arg3: i32) -> (i32, i32, i32) {
    %c0_i32 = arith.constant 0 : i32
    return %arg0, %arg3, %arg1 : i32, i32, i32
  }
  func.func @transform_2(%arg0: i32, %arg1: i32, %arg2: i32, %arg3: i32) -> (i32, i32, i32) {
    %c0_i32 = arith.constant 0 : i32
    return %arg0, %arg2, %arg1 : i32, i32, i32
  }
}

</mosaic_0001>

<llo_original>
// kernel: tile.47
$region0: #{tile.47}
  #allocation0 [shape = 's32[1]{0}', space=sflag, size = 0x4, scoped, tag = 'scoped memory for tile.47']
  %s0 = inlined_call_operand.vmem [shape: f32[64], index: 0, kind: input, shape index: {}]
  %s1 = inlined_call_operand.vmem [shape: f32[16,64], index: 1, kind: output, shape index: {}]
  // Predicated region
  $region2: #{tile.47} parent=0 // pred_check
    _
  $region3: #{tile.47} parent=0 // pred_check_branch
    %3 = sbr.rel (0) target = $region5
  $region4: #{tile.47} parent=0 // pred_region
    _
  $region5: #{tile.47} parent=0 // pred_fallthru
    _
  %v4 = vld [vmem:[%s0] ss:$0 sm:$0xff]
  %5 = vst [vmem:[%s1] sm:$0xff] %v4
  %s6 = scalar_lea.vmem %s1, 8
  %7 = vst [vmem:[%s6] sm:$0xff] %v4

// kernel: tile.49
$region0: #{tile.49}
  %s0 = inlined_call_operand.vmem [shape: f32[16,64], index: 0, kind: input, shape index: {}]
  %s1 = inlined_call_operand.vmem [shape: f32[1,1024], index: 1, kind: output, shape index: {}]
  $region1: #{tile.49} parent=0
    #allocation0 [shape = 'u8[32768]{0}', space=vmem, size = 0x8000, scoped, tag = 'scoped mem for output reshape']
    %v2 = vld [vmem:[%s0] ss:$2 sm:$0xff]
    %vm3 = vcmask 523264
    %4 = vst.msk [vmem:[#allocation0] ss:$8 sm:$0xf] %vm3, %v2
    %5 = vst.msk [vmem:[#allocation0] ss:$8 sm:$0xf0] %vm3, %v2
    %s6 = scalar_lea.vmem %s0, 1
    %v7 = vld [vmem:[%s6] ss:$2 sm:$0xff]
    %8 = vrot.lane.b32.xlu0 %v7, 64
    %v9 = vpop.permute.xlu0 %8
    %vm10 = vcmask 1048064
    %11 = vst.msk [vmem:[#allocation0] ss:$8 sm:$0xf] %vm10, %v9
    %12 = vst.msk [vmem:[#allocation0] ss:$8 sm:$0xf0] %vm10, %v9
    %s14 = sshllo.u32 0, 1
    %v16 = vld [vmem:[#allocation0] sm:%s14]
    %s17 = sshllo.u32 0, 1
    %18 = vst [vmem:[%s1] sm:%s17] %v16
    %s19 = scalar_lea.vmem [#allocation0], 8
    %v20 = vld [vmem:[%s19] sm:%s14]
    %s21 = sshllo.u32 0, 1
    %s22 = scalar_lea.vmem %s1, 1
    %23 = vst [vmem:[%s22] sm:%s21] %v20
    %s24 = scalar_lea.vmem [#allocation0], 16
    %v25 = vld [vmem:[%s24] sm:%s14]
    %s26 = sshllo.u32 0, 1
    %s27 = smul.addr 1, 2
    %s28 = scalar_lea.vmem %s1, %s27
    %29 = vst [vmem:[%s28] sm:%s26] %v25
    %s30 = scalar_lea.vmem [#allocation0], 24
    %v31 = vld [vmem:[%s30] sm:%s14]
    %s32 = sshllo.u32 0, 1
    %s33 = smul.addr 1, 3
    %s34 = scalar_lea.vmem %s1, %s33
    %35 = vst [vmem:[%s34] sm:%s32] %v31
    %s36 = scalar_lea.vmem [#allocation0], 32
    %v37 = vld [vmem:[%s36] sm:%s14]
    %s38 = sshllo.u32 0, 1
    %s39 = smul.addr 1, 4
    %s40 = scalar_lea.vmem %s1, %s39
    %41 = vst [vmem:[%s40] sm:%s38] %v37
    %s42 = scalar_lea.vmem [#allocation0], 40
    %v43 = vld [vmem:[%s42] sm:%s14]
    %s44 = sshllo.u32 0, 1
    %s45 = smul.addr 1, 5
    %s46 = scalar_lea.vmem %s1, %s45
    %47 = vst [vmem:[%s46] sm:%s44] %v43
    %s48 = scalar_lea.vmem [#allocation0], 48
    %v49 = vld [vmem:[%s48] sm:%s14]
    %s50 = sshllo.u32 0, 1
    %s51 = smul.addr 1, 6
    %s52 = scalar_lea.vmem %s1, %s51
    %53 = vst [vmem:[%s52] sm:%s50] %v49
    %s54 = scalar_lea.vmem [#allocation0], 56
    %v55 = vld [vmem:[%s54] sm:%s14]
    %s56 = sshllo.u32 0, 1
    %s57 = smul.addr 1, 7
    %s58 = scalar_lea.vmem %s1, %s57
    %59 = vst [vmem:[%s58] sm:%s56] %v55

// kernel: generator_forward.10
$region0: #{generator_forward.10}
  #allocation0 [shape = 'u32[]', space=smem, size = 0x4, offset = 0x4, fixed_abs, tag = 'smem constant byte address 0x4 - core index']
  #allocation1 [shape = 'u32[144,128]{1,0:T(1,128)}', space=vmem, size = 0x12000, scoped, tag = 'internal scratch']
  %s0 = inlined_call_operand.vmem [shape: f32[8,1024], index: 0, kind: input, shape index: {}]
  %s1 = inlined_call_operand.vmem [shape: f32[1,1024], index: 1, kind: input, shape index: {}]
  %s2 = inlined_call_operand.vmem [shape: f32[1,1024], index: 2, kind: input, shape index: {}]
  %s3 = inlined_call_operand.vmem [shape: bf16[8,1024], index: 3, kind: output, shape index: {}]
  %s4 = sld [smem:[#allocation0]]
  $region22: #{generator_forward.10} parent=0
    _
  %s6 = ssub.s32 1, %s4
  %s7 = scalar_select 0, %s6, %s4
  // Predicated region
  $region2: #{generator_forward.10} parent=0 // pred_check
    _
  $region3: #{generator_forward.10} parent=0 // pred_check_branch
    %9 = sbr.rel (0) target = $region5
  $region4: #{generator_forward.10} parent=0 // pred_region
    _
  $region5: #{generator_forward.10} parent=0 // pred_fallthru
    _
  // Predicated region
  $region6: #{generator_forward.10} parent=0 // pred_check
    _
  $region7: #{generator_forward.10} parent=0 // pred_check_branch
    %11 = sbr.rel (0) target = $region9
  $region8: #{generator_forward.10} parent=0 // pred_region
    _
  $region9: #{generator_forward.10} parent=0 // pred_fallthru
    _
  // Predicated region
  $region10: #{generator_forward.10} parent=0 // pred_check
    _
  $region11: #{generator_forward.10} parent=0 // pred_check_branch
    %13 = sbr.rel (0) target = $region13
  $region12: #{generator_forward.10} parent=0 // pred_region
    _
  $region13: #{generator_forward.10} parent=0 // pred_fallthru
    _
  %v14 = vld [vmem:[%s0] sm:$0xff]
  %v15 = vld [vmem:[%s0 + $0x8] sm:$0xff]
  %v16 = vld [vmem:[%s0 + $0x10] sm:$0xff]
  %v17 = vld [vmem:[%s0 + $0x18] sm:$0xff]
  %v18 = vld [vmem:[%s0 + $0x20] sm:$0xff]
  %v19 = vld [vmem:[%s0 + $0x28] sm:$0xff]
  %v20 = vld [vmem:[%s0 + $0x30] sm:$0xff]
  %v21 = vld [vmem:[%s0 + $0x38] sm:$0xff]
  %v22 = vld [vmem:[%s1] sm:$0xff]
  %v24 = vlaneseq
  %v25 = vshrl.u32 %v24, 7
  %v26 = vsub.s32 0, %v25
  %v27 = vrot.slane %v22, %v26
  %v28 = vlaneseq
  %v29 = vshrl.u32 %v28, 7
  %v30 = vsub.s32 1, %v29
  %v31 = vrot.slane %v22, %v30
  %v32 = vlaneseq
  %v33 = vshrl.u32 %v32, 7
  %v34 = vsub.s32 2, %v33
  %v35 = vrot.slane %v22, %v34
  %v36 = vlaneseq
  %v37 = vshrl.u32 %v36, 7
  %v38 = vsub.s32 3, %v37
  %v39 = vrot.slane %v22, %v38
  %v40 = vlaneseq
  %v41 = vshrl.u32 %v40, 7
  %v42 = vsub.s32 4, %v41
  %v43 = vrot.slane %v22, %v42
  %v44 = vlaneseq
  %v45 = vshrl.u32 %v44, 7
  %v46 = vsub.s32 5, %v45
  %v47 = vrot.slane %v22, %v46
  %v48 = vlaneseq
  %v49 = vshrl.u32 %v48, 7
  %v50 = vsub.s32 6, %v49
  %v51 = vrot.slane %v22, %v50
  %v52 = vlaneseq
  %v53 = vshrl.u32 %v52, 7
  %v54 = vsub.s32 7, %v53
  %v55 = vrot.slane %v22, %v54
  %v64 = vmul.f32 %v14, %v27
  %v65 = vmul.f32 %v15, %v31
  %v66 = vmul.f32 %v16, %v35
  %v67 = vmul.f32 %v17, %v39
  %v68 = vmul.f32 %v18, %v43
  %v69 = vmul.f32 %v19, %v47
  %v70 = vmul.f32 %v20, %v51
  %v71 = vmul.f32 %v21, %v55
  %v72 = vld [vmem:[%s2] sm:$0xff]
  %v74 = vlaneseq
  %v75 = vshrl.u32 %v74, 7
  %v76 = vsub.s32 0, %v75
  %v77 = vrot.slane %v72, %v76
  %v78 = vlaneseq
  %v79 = vshrl.u32 %v78, 7
  %v80 = vsub.s32 1, %v79
  %v81 = vrot.slane %v72, %v80
  %v82 = vlaneseq
  %v83 = vshrl.u32 %v82, 7
  %v84 = vsub.s32 2, %v83
  %v85 = vrot.slane %v72, %v84
  %v86 = vlaneseq
  %v87 = vshrl.u32 %v86, 7
  %v88 = vsub.s32 3, %v87
  %v89 = vrot.slane %v72, %v88
  %v90 = vlaneseq
  %v91 = vshrl.u32 %v90, 7
  %v92 = vsub.s32 4, %v91
  %v93 = vrot.slane %v72, %v92
  %v94 = vlaneseq
  %v95 = vshrl.u32 %v94, 7
  %v96 = vsub.s32 5, %v95
  %v97 = vrot.slane %v72, %v96
  %v98 = vlaneseq
  %v99 = vshrl.u32 %v98, 7
  %v100 = vsub.s32 6, %v99
  %v101 = vrot.slane %v72, %v100
  %v102 = vlaneseq
  %v103 = vshrl.u32 %v102, 7
  %v104 = vsub.s32 7, %v103
  %v105 = vrot.slane %v72, %v104
  %v114 = vadd.f32 %v64, %v77
  %v115 = vadd.f32 %v65, %v81
  %v116 = vadd.f32 %v66, %v85
  %v117 = vadd.f32 %v67, %v89
  %v118 = vadd.f32 %v68, %v93
  %v119 = vadd.f32 %v69, %v97
  %v120 = vadd.f32 %v70, %v101
  %v121 = vadd.f32 %v71, %v105
  %v122 = vmax.f32 %v114, 0.0
  %v123 = vmax.f32 %v115, 0.0
  %v124 = vmax.f32 %v116, 0.0
  %v125 = vmax.f32 %v117, 0.0
  %v126 = vmax.f32 %v118, 0.0
  %v127 = vmax.f32 %v119, 0.0
  %v128 = vmax.f32 %v120, 0.0
  %v129 = vmax.f32 %v121, 0.0
  %v130 = vpack.c.bf16 %v122, %v122
  %v131 = vpack.c.bf16 %v123, %v123
  %v132 = vpack.c.bf16 %v124, %v124
  %v133 = vpack.c.bf16 %v125, %v125
  %v134 = vpack.c.bf16 %v126, %v126
  %v135 = vpack.c.bf16 %v127, %v127
  %v136 = vpack.c.bf16 %v128, %v128
  %v137 = vpack.c.bf16 %v129, %v129
  %v146 = vunpack.c.l.b16 %v130
  %v147 = vunpack.c.l.b16 %v131
  %v148 = vunpack.c.l.b16 %v132
  %v149 = vunpack.c.l.b16 %v133
  %v150 = vunpack.c.l.b16 %v134
  %v151 = vunpack.c.l.b16 %v135
  %v152 = vunpack.c.l.b16 %v136
  %v153 = vunpack.c.l.b16 %v137
  %v154 = vpack.c.b16 %v147, %v146
  %v155 = vpack.c.b16 %v149, %v148
  %v156 = vpack.c.b16 %v151, %v150
  %v157 = vpack.c.b16 %v153, %v152
  %162 = vst [vmem:[%s3] sm:$0xff] %v154
  %163 = vst [vmem:[%s3 + $0x8] sm:$0xff] %v155
  %164 = vst [vmem:[%s3 + $0x10] sm:$0xff] %v156
  %165 = vst [vmem:[%s3 + $0x18] sm:$0xff] %v157
  // Predicated region
  $region14: #{generator_forward.10} parent=0 // pred_check
    _
  $region15: #{generator_forward.10} parent=0 // pred_check_branch
    %167 = sbr.rel (0) target = $region17
  $region16: #{generator_forward.10} parent=0 // pred_region
    _
  $region17: #{generator_forward.10} parent=0 // pred_fallthru
    _
  // Predicated region
  $region18: #{generator_forward.10} parent=0 // pred_check
    _
  $region19: #{generator_forward.10} parent=0 // pred_check_branch
    %169 = sbr.rel (0) target = $region21
  $region20: #{generator_forward.10} parent=0 // pred_region
    _
  $region21: #{generator_forward.10} parent=0 // pred_fallthru
    _

// kernel: generator_forward.9
$region0: #{generator_forward.9}
  #allocation0 [shape = 'u32[]', space=smem, size = 0x4, offset = 0x4, fixed_abs, tag = 'smem constant byte address 0x4 - core index']
  #allocation1 [shape = 'u32[144,128]{1,0:T(1,128)}', space=vmem, size = 0x12000, scoped, tag = 'internal scratch']
  %s0 = inlined_call_operand.vmem [shape: bf16[1,8,128], index: 0, kind: input, shape index: {}]
  %s1 = inlined_call_operand.hbm [shape: bf16[1,128,1024], index: 1, kind: input, shape index: {}]
  %s2 = inlined_call_operand.vmem [shape: f32[1,8,1024], index: 2, kind: output, shape index: {0}]
  %s3 = inlined_call_operand.vmem [shape: f32[1,8,1024], index: 3, kind: output, shape index: {1}]
  %4 = xla_tuple %s2, %s3
  %s5 = sld [smem:[#allocation0]]
  $region53: #{generator_forward.9} parent=0
    _
  %s7 = ssub.s32 1, %s5
  %s8 = scalar_select 0, %s7, %s5
  $region1: #{generator_forward.9} parent=0
    #allocation2 [shape = 'u8[131072]{0}', space=vmem, size = 0x20000, scoped, tag = 'input window, operand 1']
    #allocation3 [shape = 's32[2]{0}', space=sflag, size = 0x8, scoped, tag = 'scoped memory for generator_forward.9']
    %9 = vsyncpa [#allocation3], 0
    %s10 = scalar_lea.sflag [#allocation3], 1
    %11 = vsyncpa %s10, 0
    loop: start=0, step=1, limit=6
    $region2: #{generator_forward.9} parent=1 // loop_pre_header
      _
    $region3: #{generator_forward.9} parent=1 // loop_header
      %s13 = sphi 0, %s17
      %p14 = scmp.ge.s32.totalorder %s13, 6
      %s20 = sphi 0, %s46
      %s21 = sphi 0, %s42
      %s22 = sphi 0, %s38
      %s23 = sphi 0, %s34
      %s24 = sphi 0, %s20
      %s25 = sphi 0, %s21
      %s26 = sphi 0, %s22
      %s27 = sphi 0, %s23
      %s28 = sphi 0, %s24
      %s29 = sphi 0, %s25
      %s30 = sphi 0, %s26
      %s31 = sphi 0, %s27
      %s53 = sphi 0, %s55
      %s56 = sphi 0, %s53
      %s57 = sphi 0, %s56
      %s73 = sphi 0, %s57
      %s83 = sphi 0, %s85
      %s86 = sphi 0, %s83
      %s87 = sphi 0, %s86
      %s103 = sphi 0, %s87
      %s113 = sphi 0, %s115
      %s116 = sphi 0, %s113
      %s117 = sphi 0, %s116
      %s133 = sphi 0, %s117
      %s143 = sphi 0, %s145
      %s146 = sphi 0, %s143
      %s147 = sphi 0, %s146
      %s163 = sphi 0, %s147
    $region4: #{generator_forward.9} parent=1 // loop_header_branch
      %16 = sbr.rel (%p14) target = $region8
    $region5: #{generator_forward.9} parent=1 // loop_body
      %s18 = ssub.s32 %s13, 1
      %s19 = ssub.s32 %s13, 2
      %s32 = sadd.s32 1, %s23
      %p33 = scmp.ge.s32.totalorder %s32, 1
      %s34 = scalar_select %p33, 0, %s32
      %s35 = sadd.s32 1, %s22
      %s36 = scalar_select %p33, %s35, %s22
      %p37 = scmp.ge.s32.totalorder %s36, 1
      %s38 = scalar_select %p37, 0, %s36
      %s39 = sadd.s32 1, %s21
      %s40 = scalar_select %p37, %s39, %s21
      %p41 = scmp.ge.s32.totalorder %s40, 4
      %s42 = scalar_select %p41, 0, %s40
      %s43 = sadd.s32 1, %s20
      %s44 = scalar_select %p41, %s43, %s20
      %p45 = scmp.ge.s32.totalorder %s44, 1
      %s46 = scalar_select %p45, 0, %s44
      %s47 = ssub.s32 %s20, %s46
      %s48 = ssub.s32 %s22, %s38
      %s49 = sor.u32 %s47, %s48
      %s50 = ssub.s32 %s23, %s34
      %s51 = sor.u32 %s49, %s50
      %p52 = scmp.eq.s32.totalorder %s51, 0
      %s54 = sadd.s32 %s53, 1
      %s55 = scalar_select %p52, %s53, %s54
      %p58 = pneg %p52
      %p59 = scmp.eq.s32.totalorder %s13, 3
      %p60 = por %p58, %p59
      %p61 = scmp.ne.s32.totalorder %s53, %s56
      %p62 = scmp.eq.s32.totalorder %s13, 0
      %p63 = por %p61, %p62
      %p64 = scmp.ne.s32.totalorder %s53, %s56
      %p65 = scmp.eq.s32.totalorder %s18, 3
      %p66 = por %p64, %p65
      %p67 = scmp.ne.s32.totalorder %s56, %s57
      %p68 = scmp.eq.s32.totalorder %s18, 0
      %p69 = por %p67, %p68
      %p70 = scmp.ne.s32.totalorder %s56, %s57
      %p71 = scmp.eq.s32.totalorder %s19, 3
      %p72 = por %p70, %p71
      %p74 = scmp.ne.s32.totalorder %s57, %s73
      %p75 = scmp.eq.s32.totalorder %s19, 0
      %p76 = por %p74, %p75
      %s77 = ssub.s32 %s20, %s46
      %s78 = ssub.s32 %s23, %s34
      %s79 = sor.u32 %s77, %s78
      %s80 = ssub.s32 %s21, %s42
      %s81 = sor.u32 %s79, %s80
      %p82 = scmp.eq.s32.totalorder %s81, 0
      %s84 = sadd.s32 %s83, 1
      %s85 = scalar_select %p82, %s83, %s84
      %p88 = pneg %p82
      %p89 = scmp.eq.s32.totalorder %s13, 3
      %p90 = por %p88, %p89
      %p91 = scmp.ne.s32.totalorder %s83, %s86
      %p92 = scmp.eq.s32.totalorder %s13, 0
      %p93 = por %p91, %p92
      %p94 = scmp.ne.s32.totalorder %s83, %s86
      %p95 = scmp.eq.s32.totalorder %s18, 3
      %p96 = por %p94, %p95
      %p97 = scmp.ne.s32.totalorder %s86, %s87
      %p98 = scmp.eq.s32.totalorder %s18, 0
      %p99 = por %p97, %p98
      %p100 = scmp.ne.s32.totalorder %s86, %s87
      %p101 = scmp.eq.s32.totalorder %s19, 3
      %p102 = por %p100, %p101
      %p104 = scmp.ne.s32.totalorder %s87, %s103
      %p105 = scmp.eq.s32.totalorder %s19, 0
      %p106 = por %p104, %p105
      %s107 = ssub.s32 %s20, %s46
      %s108 = ssub.s32 %s22, %s38
      %s109 = sor.u32 %s107, %s108
      %s110 = ssub.s32 %s21, %s42
      %s111 = sor.u32 %s109, %s110
      %p112 = scmp.eq.s32.totalorder %s111, 0
      %s114 = sadd.s32 %s113, 1
      %s115 = scalar_select %p112, %s113, %s114
      %p118 = pneg %p112
      %p119 = scmp.eq.s32.totalorder %s13, 3
      %p120 = por %p118, %p119
      %p121 = scmp.ne.s32.totalorder %s113, %s116
      %p122 = scmp.eq.s32.totalorder %s13, 0
      %p123 = por %p121, %p122
      %p124 = scmp.ne.s32.totalorder %s113, %s116
      %p125 = scmp.eq.s32.totalorder %s18, 3
      %p126 = por %p124, %p125
      %p127 = scmp.ne.s32.totalorder %s116, %s117
      %p128 = scmp.eq.s32.totalorder %s18, 0
      %p129 = por %p127, %p128
      %p130 = scmp.ne.s32.totalorder %s116, %s117
      %p131 = scmp.eq.s32.totalorder %s19, 3
      %p132 = por %p130, %p131
      %p134 = scmp.ne.s32.totalorder %s117, %s133
      %p135 = scmp.eq.s32.totalorder %s19, 0
      %p136 = por %p134, %p135
      %s137 = ssub.s32 %s20, %s46
      %s138 = ssub.s32 %s22, %s38
      %s139 = sor.u32 %s137, %s138
      %s140 = ssub.s32 %s21, %s42
      %s141 = sor.u32 %s139, %s140
      %p142 = scmp.eq.s32.totalorder %s141, 0
      %s144 = sadd.s32 %s143, 1
      %s145 = scalar_select %p142, %s143, %s144
      %p148 = pneg %p142
      %p149 = scmp.eq.s32.totalorder %s13, 3
      %p150 = por %p148, %p149
      %p151 = scmp.ne.s32.totalorder %s143, %s146
      %p152 = scmp.eq.s32.totalorder %s13, 0
      %p153 = por %p151, %p152
      %p154 = scmp.ne.s32.totalorder %s143, %s146
      %p155 = scmp.eq.s32.totalorder %s18, 3
      %p156 = por %p154, %p155
      %p157 = scmp.ne.s32.totalorder %s146, %s147
      %p158 = scmp.eq.s32.totalorder %s18, 0
      %p159 = por %p157, %p158
      %p160 = scmp.ne.s32.totalorder %s146, %s147
      %p161 = scmp.eq.s32.totalorder %s19, 3
      %p162 = por %p160, %p161
      %p164 = scmp.ne.s32.totalorder %s147, %s163
      %p165 = scmp.eq.s32.totalorder %s19, 0
      %p166 = por %p164, %p165
      %p167 = scmp.le.s32.totalorder 1, %s13
      %p168 = scmp.lt.s32.totalorder %s13, 5
      %p169 = pnand %p167, %p168
      %p170 = pneg %p169
      // Predicated region
      $region9: #{generator_forward.9} parent=5 // pred_check
        _
      $region10: #{generator_forward.9} parent=5 // pred_check_branch
        %172 = sbr.rel (%p169) target = $region12
      $region11: #{generator_forward.9} parent=5 // pred_region
        %s173 = ssub.s32 %s13, 1
        // Predicated region
        $region13: #{generator_forward.9} parent=11 // pred_check
          %p174 = pneg %p69
        $region14: #{generator_forward.9} parent=11 // pred_check_branch
          %176 = sbr.rel (%p174) target = $region16
        $region15: #{generator_forward.9} parent=11 // pred_region
          %p177 = scmp.lt.s32.totalorder %s24, 0
          %s178 = scalar_select %p177, %s24, 0
          %p179 = scmp.lt.s32.totalorder %s26, 0
          %s180 = scalar_select %p179, %s26, 0
          %p181 = scmp.lt.s32.totalorder %s27, 0
          %s182 = scalar_select %p181, %s27, 0
          %s183 = sadd.s32 %s182, %s180
          %s184 = sadd.s32 %s183, %s178
          %s185 = smul.addr %s184, 4
          %s186 = scalar_lea.vmem %s0, %s185
        $region16: #{generator_forward.9} parent=11 // pred_fallthru
          _
      $region12: #{generator_forward.9} parent=5 // pred_fallthru
        _
      %p187 = scmp.lt.s32.totalorder %s13, 4
      // Predicated region
      $region17: #{generator_forward.9} parent=5 // pred_check
        %p188 = pneg %p187
      $region18: #{generator_forward.9} parent=5 // pred_check_branch
        %190 = sbr.rel (%p188) target = $region20
      $region19: #{generator_forward.9} parent=5 // pred_region
        // Predicated region
        $region21: #{generator_forward.9} parent=19 // pred_check
          %p191 = pneg %p93
        $region22: #{generator_forward.9} parent=19 // pred_check_branch
          %193 = sbr.rel (%p191) target = $region24
        $region23: #{generator_forward.9} parent=19 // pred_region
          %s194 = sand.u32 %s83, 1
          %s195 = scalar_lea.sflag [#allocation3], %s194
          %s196 = sand.u32 %s83, 1
          %s197 = smul.addr %s196, 128
          %s198 = scalar_lea.vmem [#allocation2], %s197
          %s199 = smul.u32 16, %s23
          %s200 = smul.u32 2, %s21
          %s202 = ssub.s32 2048, 2048
          %203 = vsyncadd %s195, %s202
          %s204 = smul.addr %s199, 8
          %s205 = sadd.s32 %s200, %s204
          %s206 = smul.addr %s20, 128
          %s207 = sadd.s32 %s205, %s206
          %s208 = smul.addr %s207, 64
          %s209 = scalar_lea.hbm %s1, %s208
          %s210 = sshll.u32 %s198, 4
          %s211 = int_to_ptr.vmem [resolvable:$true] %s210
          %216 = dma.hbm_to_vmem [thread:$0]  %s209, 2048, %s211, %s195, 512, 128, 8
        $region24: #{generator_forward.9} parent=19 // pred_fallthru
          _
      $region20: #{generator_forward.9} parent=5 // pred_fallthru
        _
      %p217 = scmp.le.s32.totalorder 1, %s13
      %p218 = scmp.lt.s32.totalorder %s13, 5
      %p219 = pnand %p217, %p218
      %p220 = pneg %p219
      // Predicated region
      $region25: #{generator_forward.9} parent=5 // pred_check
        _
      $region26: #{generator_forward.9} parent=5 // pred_check_branch
        %222 = sbr.rel (%p219) target = $region28
      $region27: #{generator_forward.9} parent=5 // pred_region
        %s223 = ssub.s32 %s13, 1
        %s224 = sand.u32 %s86, 1
        %s225 = scalar_lea.sflag [#allocation3], %s224
        %s226 = sand.u32 %s86, 1
        %s227 = smul.addr %s226, 128
        %s228 = scalar_lea.vmem [#allocation2], %s227
        // Predicated region
        $region29: #{generator_forward.9} parent=27 // pred_check
          %p229 = pneg %p99
        $region30: #{generator_forward.9} parent=27 // pred_check_branch
          %231 = sbr.rel (%p229) target = $region32
        $region31: #{generator_forward.9} parent=27 // pred_region
          %232 = dma.done %s225, 2048
        $region32: #{generator_forward.9} parent=27 // pred_fallthru
          _
        %p233 = scmp.lt.s32.totalorder %s24, 0
        %s234 = scalar_select %p233, %s24, 0
        %p235 = scmp.lt.s32.totalorder %s26, 0
        %s236 = scalar_select %p235, %s26, 0
        %p237 = scmp.lt.s32.totalorder %s27, 0
        %s238 = scalar_select %p237, %s27, 0
        %s239 = sadd.s32 %s238, %s236
        %s240 = sadd.s32 %s239, %s234
        %s241 = smul.addr %s240, 4
        %s242 = scalar_lea.vmem %s0, %s241
        %p243 = pneg %p69
        %p244 = pneg %p66
        %s245 = sand.u32 %s86, 1
        %s246 = scalar_lea.sflag [#allocation3], %s245
        %s247 = sand.u32 %s86, 1
        %s248 = smul.addr %s247, 128
        %s249 = scalar_lea.vmem [#allocation2], %s248
        %p250 = pneg %p99
        %p251 = pneg %p96
        %p252 = pneg %p129
        %p253 = pneg %p126
        %s254 = smul.u32 2, %s25
        %p255 = scmp.lt.s32.totalorder %s24, 0
        %s256 = scalar_select %p255, %s24, 0
        %p257 = scmp.lt.s32.totalorder %s26, 0
        %s258 = scalar_select %p257, %s26, 0
        %p259 = scmp.lt.s32.totalorder %s254, 7
        %s260 = scalar_select %p259, %s254, 7
        %s261 = smul.addr %s258, 8
        %s262 = sadd.s32 %s260, %s261
        %s263 = smul.addr %s256, 8
        %s264 = sadd.s32 %s262, %s263
        %s265 = smul.addr %s264, 8
        %s266 = scalar_lea.vmem %s2, %s265
        %p267 = pneg %p159
        %p268 = pneg %p156
        %s269 = smul.u32 2, %s25
        %p270 = scmp.lt.s32.totalorder %s24, 0
        %s271 = scalar_select %p270, %s24, 0
        %p272 = scmp.lt.s32.totalorder %s26, 0
        %s273 = scalar_select %p272, %s26, 0
        %p274 = scmp.lt.s32.totalorder %s269, 7
        %s275 = scalar_select %p274, %s269, 7
        %s276 = smul.addr %s273, 8
        %s277 = sadd.s32 %s275, %s276
        %s278 = smul.addr %s271, 8
        %s279 = sadd.s32 %s277, %s278
        %s280 = smul.addr %s279, 8
        %s281 = scalar_lea.vmem %s3, %s280
        %p282 = scmp.lt.s32.totalorder %s24, 0
        %s283 = scalar_select %p282, %s24, 0
        %p284 = scmp.lt.s32.totalorder %s26, 0
        %s285 = scalar_select %p284, %s26, 0
        %p286 = scmp.lt.s32.totalorder %s27, 0
        %s287 = scalar_select %p286, %s27, 0
        %s288 = sadd.s32 %s287, %s285
        %s289 = sadd.s32 %s288, %s283
        %s290 = smul.addr %s289, 4
        %s291 = scalar_lea.vmem %s0, %s290
        %s292 = smul.u32 16, %s27
        %s293 = smul.u32 2, %s25
        %s294 = smul.u32 2, %s25
        %p295 = scmp.lt.s32.totalorder %s24, 0
        %s296 = scalar_select %p295, %s24, 0
        %p297 = scmp.lt.s32.totalorder %s26, 0
        %s298 = scalar_select %p297, %s26, 0
        %p299 = scmp.lt.s32.totalorder %s294, 7
        %s300 = scalar_select %p299, %s294, 7
        %s301 = smul.addr %s298, 8
        %s302 = sadd.s32 %s300, %s301
        %s303 = smul.addr %s296, 8
        %s304 = sadd.s32 %s302, %s303
        %s305 = smul.addr %s304, 8
        %s306 = scalar_lea.vmem %s2, %s305
        %s307 = smul.u32 2, %s25
        %s308 = smul.u32 2, %s25
        %p309 = scmp.lt.s32.totalorder %s24, 0
        %s310 = scalar_select %p309, %s24, 0
        %p311 = scmp.lt.s32.totalorder %s26, 0
        %s312 = scalar_select %p311, %s26, 0
        %p313 = scmp.lt.s32.totalorder %s308, 7
        %s314 = scalar_select %p313, %s308, 7
        %s315 = smul.addr %s312, 8
        %s316 = sadd.s32 %s314, %s315
        %s317 = smul.addr %s310, 8
        %s318 = sadd.s32 %s316, %s317
        %s319 = smul.addr %s318, 8
        %s320 = scalar_lea.vmem %s3, %s319
        %s321 = smul.u32 2, %s25
        %v323 = vld [vmem:[%s291] sm:$0xf]
        %v324 = vld [vmem:[%s228] sm:$0xff]
        %v325 = vld [vmem:[%s228 + $0x8] sm:$0xff]
        %v326 = vld [vmem:[%s228 + $0x10] sm:$0xff]
        %v327 = vld [vmem:[%s228 + $0x18] sm:$0xff]
        %v328 = vld [vmem:[%s228 + $0x20] sm:$0xff]
        %v329 = vld [vmem:[%s228 + $0x28] sm:$0xff]
        %v330 = vld [vmem:[%s228 + $0x30] sm:$0xff]
        %v331 = vld [vmem:[%s228 + $0x38] sm:$0xff]
        %v332 = vld [vmem:[%s228 + $0x40] sm:$0xff]
        %v333 = vld [vmem:[%s228 + $0x48] sm:$0xff]
        %v334 = vld [vmem:[%s228 + $0x50] sm:$0xff]
        %v335 = vld [vmem:[%s228 + $0x58] sm:$0xff]
        %v336 = vld [vmem:[%s228 + $0x60] sm:$0xff]
        %v337 = vld [vmem:[%s228 + $0x68] sm:$0xff]
        %v338 = vld [vmem:[%s228 + $0x70] sm:$0xff]
        %v339 = vld [vmem:[%s228 + $0x78] sm:$0xff]
        %v356 = vunpack.c.l.b16 %v324
        %v357 = vunpack.c.h.b16 %v324
        %v358 = vunpack.c.l.b16 %v325
        %v359 = vunpack.c.h.b16 %v325
        %v360 = vunpack.c.l.b16 %v326
        %v361 = vunpack.c.h.b16 %v326
        %v362 = vunpack.c.l.b16 %v327
        %v363 = vunpack.c.h.b16 %v327
        %v364 = vunpack.c.l.b16 %v328
        %v365 = vunpack.c.h.b16 %v328
        %v366 = vunpack.c.l.b16 %v329
        %v367 = vunpack.c.h.b16 %v329
        %v368 = vunpack.c.l.b16 %v330
        %v369 = vunpack.c.h.b16 %v330
        %v370 = vunpack.c.l.b16 %v331
        %v371 = vunpack.c.h.b16 %v331
        %v372 = vunpack.c.l.b16 %v332
        %v373 = vunpack.c.h.b16 %v332
        %v374 = vunpack.c.l.b16 %v333
        %v375 = vunpack.c.h.b16 %v333
        %v376 = vunpack.c.l.b16 %v334
        %v377 = vunpack.c.h.b16 %v334
        %v378 = vunpack.c.l.b16 %v335
        %v379 = vunpack.c.h.b16 %v335
        %v380 = vunpack.c.l.b16 %v336
        %v381 = vunpack.c.h.b16 %v336
        %v382 = vunpack.c.l.b16 %v337
        %v383 = vunpack.c.h.b16 %v337
        %v384 = vunpack.c.l.b16 %v338
        %v385 = vunpack.c.h.b16 %v338
        %v386 = vunpack.c.l.b16 %v339
        %v387 = vunpack.c.h.b16 %v339
        %v388 = vpack.c.b16 %v358, %v356
        %v389 = vpack.c.b16 %v359, %v357
        %v390 = vpack.c.b16 %v362, %v360
        %v391 = vpack.c.b16 %v363, %v361
        %v392 = vpack.c.b16 %v366, %v364
        %v393 = vpack.c.b16 %v367, %v365
        %v394 = vpack.c.b16 %v370, %v368
        %v395 = vpack.c.b16 %v371, %v369
        %v396 = vpack.c.b16 %v374, %v372
        %v397 = vpack.c.b16 %v375, %v373
        %v398 = vpack.c.b16 %v378, %v376
        %v399 = vpack.c.b16 %v379, %v377
        %v400 = vpack.c.b16 %v382, %v380
        %v401 = vpack.c.b16 %v383, %v381
        %v402 = vpack.c.b16 %v386, %v384
        %v403 = vpack.c.b16 %v387, %v385
        %420 = vmatprep.subr.bf16.mxu0 %v389
        %421 = vmatpush1.bf16.msra.mxu0 %v388
        %422 = vmatprep.subr.bf16.mxu0 %v391
        %423 = vmatpush1.bf16.msra.mxu0 %v390
        %424 = vmatprep.subr.bf16.mxu0 %v393
        %425 = vmatpush1.bf16.msra.mxu0 %v392
        %426 = vmatprep.subr.bf16.mxu0 %v395
        %427 = vmatpush1.bf16.msra.mxu0 %v394
        %428 = vmatprep.subr.bf16.mxu0 %v397
        %429 = vmatpush1.bf16.msra.mxu0 %v396
        %430 = vmatprep.subr.bf16.mxu0 %v399
        %431 = vmatpush1.bf16.msra.mxu0 %v398
        %432 = vmatprep.subr.bf16.mxu0 %v401
        %433 = vmatpush1.bf16.msra.mxu0 %v400
        %434 = vmatprep.subr.bf16.mxu0 %v403
        %435 = vmatpush1.bf16.msra.mxu0 %v402
        %436 = vmatprep.subr.bf16.mxu0 0
        %437 = vmatpush1.bf16.msra.mxu0 0
        %438 = vmatprep.subr.bf16.mxu0 0
        %439 = vmatpush1.bf16.msra.mxu0 0
        %440 = vmatprep.subr.bf16.mxu0 0
        %441 = vmatpush1.bf16.msra.mxu0 0
        %442 = vmatprep.subr.bf16.mxu0 0
        %443 = vmatpush1.bf16.msra.mxu0 0
        %444 = vmatprep.subr.bf16.mxu0 0
        %445 = vmatpush1.bf16.msra.mxu0 0
        %446 = vmatprep.subr.bf16.mxu0 0
        %447 = vmatpush1.bf16.msra.mxu0 0
        %448 = vmatprep.subr.bf16.mxu0 0
        %449 = vmatpush1.bf16.msra.mxu0 0
        %450 = vmatprep.subr.bf16.mxu0 0
        %451 = vmatpush1.bf16.msra.mxu0 0
        %452 = vmatprep.mubr.bf16.mxu0 0
        %453 = vmatmul.mubr.bf16.gmra.mrb[0].mxu0 %v323
        %v454 = vpop.f32.mrb[0].mxu0
        %v455 = vadd.f32 0.0, %v454
        %v456 = vpop.f32.mrb[0].mxu0
        %v457 = vadd.f32 0.0, %v456
        %v458 = vpop.f32.mrb[0].mxu0
        %v459 = vpop.f32.mrb[0].mxu0
        %460 = vdwg.mxu0
        %v461 = vrot.slane %v455, 4
        %v462 = vadd.f32 %v455, %v461
        %v463 = vrot.slane %v462, 2
        %v464 = vadd.f32 %v462, %v463
        %v465 = vrot.slane %v464, 1
        %v466 = vadd.f32 %v464, %v465
        %v467 = vrot.slane %v457, 4
        %v468 = vadd.f32 %v457, %v467
        %v469 = vrot.slane %v468, 2
        %v470 = vadd.f32 %v468, %v469
        %v471 = vrot.slane %v470, 1
        %v472 = vadd.f32 %v470, %v471
        %v473 = vmul.f32 %v455, %v455
        %v474 = vmul.f32 %v457, %v457
        %v475 = vrot.slane %v473, 4
        %v476 = vadd.f32 %v473, %v475
        %v477 = vrot.slane %v476, 2
        %v478 = vadd.f32 %v476, %v477
        %v479 = vrot.slane %v478, 1
        %v480 = vadd.f32 %v478, %v479
        %v481 = vrot.slane %v474, 4
        %v482 = vadd.f32 %v474, %v481
        %v483 = vrot.slane %v482, 2
        %v484 = vadd.f32 %v482, %v483
        %v485 = vrot.slane %v484, 1
        %v486 = vadd.f32 %v484, %v485
        %v487 = vlaneseq
        %v488 = vshrl.u32 %v487, 7
        %vm489 = vcmp.eq.s32.totalorder %v488, 0
        %vm490 = vcmp.eq.s32.totalorder %v488, 1
        %v491 = vsel %vm490, %v480, 0.0
        %v492 = vsel %vm490, %v486, 0.0
        %v493 = vsel %vm489, %v466, %v491
        %v494 = vsel %vm489, %v472, %v492
        %495 = vst [vmem:[%s320] sm:$0xff] %v493
        %496 = vst [vmem:[%s320 + $0x8] sm:$0xff] %v494
        %497 = vst [vmem:[%s306] sm:$0xff] %v455
        %498 = vst [vmem:[%s306 + $0x8] sm:$0xff] %v457
        %s499 = smul.u32 2, %s25
        %p500 = scmp.lt.s32.totalorder %s24, 0
        %s501 = scalar_select %p500, %s24, 0
        %p502 = scmp.lt.s32.totalorder %s26, 0
        %s503 = scalar_select %p502, %s26, 0
        %p504 = scmp.lt.s32.totalorder %s499, 7
        %s505 = scalar_select %p504, %s499, 7
        %s506 = smul.addr %s503, 8
        %s507 = sadd.s32 %s505, %s506
        %s508 = smul.addr %s501, 8
        %s509 = sadd.s32 %s507, %s508
        %s510 = smul.addr %s509, 8
        %s511 = scalar_lea.vmem %s2, %s510
        %s512 = smul.u32 2, %s25
        %p513 = scmp.lt.s32.totalorder %s24, 0
        %s514 = scalar_select %p513, %s24, 0
        %p515 = scmp.lt.s32.totalorder %s26, 0
        %s516 = scalar_select %p515, %s26, 0
        %p517 = scmp.lt.s32.totalorder %s512, 7
        %s518 = scalar_select %p517, %s512, 7
        %s519 = smul.addr %s516, 8
        %s520 = sadd.s32 %s518, %s519
        %s521 = smul.addr %s514, 8
        %s522 = sadd.s32 %s520, %s521
        %s523 = smul.addr %s522, 8
        %s524 = scalar_lea.vmem %s3, %s523
        // Predicated region
        $region33: #{generator_forward.9} parent=27 // pred_check
          %p525 = pneg %p126
        $region34: #{generator_forward.9} parent=27 // pred_check_branch
          %527 = sbr.rel (%p525) target = $region36
        $region35: #{generator_forward.9} parent=27 // pred_region
          %s528 = smul.u32 2, %s25
        $region36: #{generator_forward.9} parent=27 // pred_fallthru
          _
        // Predicated region
        $region37: #{generator_forward.9} parent=27 // pred_check
          %p529 = pneg %p156
        $region38: #{generator_forward.9} parent=27 // pred_check_branch
          %531 = sbr.rel (%p529) target = $region40
        $region39: #{generator_forward.9} parent=27 // pred_region
          %s532 = smul.u32 2, %s25
        $region40: #{generator_forward.9} parent=27 // pred_fallthru
          _
      $region28: #{generator_forward.9} parent=5 // pred_fallthru
        _
      %p533 = scmp.le.s32.totalorder 2, %s13
      // Predicated region
      $region41: #{generator_forward.9} parent=5 // pred_check
        %p534 = pneg %p533
      $region42: #{generator_forward.9} parent=5 // pred_check_branch
        %536 = sbr.rel (%p534) target = $region44
      $region43: #{generator_forward.9} parent=5 // pred_region
        %s537 = ssub.s32 %s13, 2
        // Predicated region
        $region45: #{generator_forward.9} parent=43 // pred_check
          %p538 = pneg %p132
        $region46: #{generator_forward.9} parent=43 // pred_check_branch
          %540 = sbr.rel (%p538) target = $region48
        $region47: #{generator_forward.9} parent=43 // pred_region
          %s541 = smul.u32 2, %s29
          %p542 = scmp.lt.s32.totalorder %s28, 0
          %s543 = scalar_select %p542, %s28, 0
          %p544 = scmp.lt.s32.totalorder %s30, 0
          %s545 = scalar_select %p544, %s30, 0
          %p546 = scmp.lt.s32.totalorder %s541, 7
          %s547 = scalar_select %p546, %s541, 7
          %s548 = smul.addr %s545, 8
          %s549 = sadd.s32 %s547, %s548
          %s550 = smul.addr %s543, 8
          %s551 = sadd.s32 %s549, %s550
          %s552 = smul.addr %s551, 8
          %s553 = scalar_lea.vmem %s2, %s552
        $region48: #{generator_forward.9} parent=43 // pred_fallthru
          _
        // Predicated region
        $region49: #{generator_forward.9} parent=43 // pred_check
          %p554 = pneg %p162
        $region50: #{generator_forward.9} parent=43 // pred_check_branch
          %556 = sbr.rel (%p554) target = $region52
        $region51: #{generator_forward.9} parent=43 // pred_region
          %s557 = smul.u32 2, %s29
          %p558 = scmp.lt.s32.totalorder %s28, 0
          %s559 = scalar_select %p558, %s28, 0
          %p560 = scmp.lt.s32.totalorder %s30, 0
          %s561 = scalar_select %p560, %s30, 0
          %p562 = scmp.lt.s32.totalorder %s557, 7
          %s563 = scalar_select %p562, %s557, 7
          %s564 = smul.addr %s561, 8
          %s565 = sadd.s32 %s563, %s564
          %s566 = smul.addr %s559, 8
          %s567 = sadd.s32 %s565, %s566
          %s568 = smul.addr %s567, 8
          %s569 = scalar_lea.vmem %s3, %s568
        $region52: #{generator_forward.9} parent=43 // pred_fallthru
          _
      $region44: #{generator_forward.9} parent=5 // pred_fallthru
        _
    $region6: #{generator_forward.9} parent=1 // loop_footer
      %s17 = sadd.s32 1, %s13
    $region7: #{generator_forward.9} parent=1 // loop_footer_branch
      %12 = sbr.rel target = $region3
    $region8: #{generator_forward.9} parent=1 // loop_exit
      _
    %570 = vsyncpa [#allocation3], 1
    %s571 = scalar_lea.sflag [#allocation3], 1
    %572 = vsyncpa %s571, 1

// kernel: tile.53
$region0: #{tile.53}
  #allocation0 [shape = 's32[1]{0}', space=sflag, size = 0x4, scoped, tag = 'scoped memory for tile.53']
  %s0 = inlined_call_operand.vmem [shape: f32[128], index: 0, kind: input, shape index: {}]
  %s1 = inlined_call_operand.vmem [shape: f32[4,128], index: 1, kind: output, shape index: {}]
  // Predicated region
  $region2: #{tile.53} parent=0 // pred_check
    _
  $region3: #{tile.53} parent=0 // pred_check_branch
    %3 = sbr.rel (0) target = $region5
  $region4: #{tile.53} parent=0 // pred_region
    _
  $region5: #{tile.53} parent=0 // pred_fallthru
    _
  %v4 = vld [vmem:[%s0] ss:$0 sm:$0xff]
  %5 = vst [vmem:[%s1] sm:$0xf] %v4

// kernel: generator_forward.11
$region0: #{generator_forward.11}
  #allocation0 [shape = 'u32[]', space=smem, size = 0x4, offset = 0x4, fixed_abs, tag = 'smem constant byte address 0x4 - core index']
  #allocation1 [shape = 'u32[144,128]{1,0:T(1,128)}', space=vmem, size = 0x12000, scoped, tag = 'internal scratch']
  %s0 = inlined_call_operand.vmem [shape: bf16[4,32,256], index: 0, kind: input, shape index: {}]
  %s1 = inlined_call_operand.hbm [shape: bf16[4,256,128], index: 1, kind: input, shape index: {}]
  %s2 = inlined_call_operand.vmem [shape: f32[4,32,128], index: 2, kind: output, shape index: {0}]
  %s3 = inlined_call_operand.vmem [shape: f32[4,8,128], index: 3, kind: output, shape index: {1}]
  %4 = xla_tuple %s2, %s3
  %s5 = sld [smem:[#allocation0]]
  $region53: #{generator_forward.11} parent=0
    _
  %s7 = ssub.s32 1, %s5
  %s8 = scalar_select 0, %s7, %s5
  $region1: #{generator_forward.11} parent=0
    #allocation2 [shape = 'u8[131072]{0}', space=vmem, size = 0x20000, scoped, tag = 'input window, operand 1']
    #allocation3 [shape = 's32[2]{0}', space=sflag, size = 0x8, scoped, tag = 'scoped memory for generator_forward.11']
    %9 = vsyncpa [#allocation3], 0
    %s10 = scalar_lea.sflag [#allocation3], 1
    %11 = vsyncpa %s10, 0
    loop: start=0, step=1, limit=6
    $region2: #{generator_forward.11} parent=1 // loop_pre_header
      _
    $region3: #{generator_forward.11} parent=1 // loop_header
      %s13 = sphi 0, %s17
      %p14 = scmp.ge.s32.totalorder %s13, 6
      %s20 = sphi 0, %s46
      %s21 = sphi 0, %s42
      %s22 = sphi 0, %s38
      %s23 = sphi 0, %s34
      %s24 = sphi 0, %s20
      %s25 = sphi 0, %s21
      %s26 = sphi 0, %s22
      %s27 = sphi 0, %s23
      %s28 = sphi 0, %s24
      %s29 = sphi 0, %s25
      %s30 = sphi 0, %s26
      %s31 = sphi 0, %s27
      %s53 = sphi 0, %s55
      %s56 = sphi 0, %s53
      %s57 = sphi 0, %s56
      %s73 = sphi 0, %s57
      %s83 = sphi 0, %s85
      %s86 = sphi 0, %s83
      %s87 = sphi 0, %s86
      %s103 = sphi 0, %s87
      %s113 = sphi 0, %s115
      %s116 = sphi 0, %s113
      %s117 = sphi 0, %s116
      %s133 = sphi 0, %s117
      %s143 = sphi 0, %s145
      %s146 = sphi 0, %s143
      %s147 = sphi 0, %s146
      %s163 = sphi 0, %s147
    $region4: #{generator_forward.11} parent=1 // loop_header_branch
      %16 = sbr.rel (%p14) target = $region8
    $region5: #{generator_forward.11} parent=1 // loop_body
      %s18 = ssub.s32 %s13, 1
      %s19 = ssub.s32 %s13, 2
      %s32 = sadd.s32 1, %s23
      %p33 = scmp.ge.s32.totalorder %s32, 1
      %s34 = scalar_select %p33, 0, %s32
      %s35 = sadd.s32 1, %s22
      %s36 = scalar_select %p33, %s35, %s22
      %p37 = scmp.ge.s32.totalorder %s36, 1
      %s38 = scalar_select %p37, 0, %s36
      %s39 = sadd.s32 1, %s21
      %s40 = scalar_select %p37, %s39, %s21
      %p41 = scmp.ge.s32.totalorder %s40, 1
      %s42 = scalar_select %p41, 0, %s40
      %s43 = sadd.s32 1, %s20
      %s44 = scalar_select %p41, %s43, %s20
      %p45 = scmp.ge.s32.totalorder %s44, 4
      %s46 = scalar_select %p45, 0, %s44
      %s47 = ssub.s32 %s20, %s46
      %s48 = ssub.s32 %s22, %s38
      %s49 = sor.u32 %s47, %s48
      %s50 = ssub.s32 %s23, %s34
      %s51 = sor.u32 %s49, %s50
      %p52 = scmp.eq.s32.totalorder %s51, 0
      %s54 = sadd.s32 %s53, 1
      %s55 = scalar_select %p52, %s53, %s54
      %p58 = pneg %p52
      %p59 = scmp.eq.s32.totalorder %s13, 3
      %p60 = por %p58, %p59
      %p61 = scmp.ne.s32.totalorder %s53, %s56
      %p62 = scmp.eq.s32.totalorder %s13, 0
      %p63 = por %p61, %p62
      %p64 = scmp.ne.s32.totalorder %s53, %s56
      %p65 = scmp.eq.s32.totalorder %s18, 3
      %p66 = por %p64, %p65
      %p67 = scmp.ne.s32.totalorder %s56, %s57
      %p68 = scmp.eq.s32.totalorder %s18, 0
      %p69 = por %p67, %p68
      %p70 = scmp.ne.s32.totalorder %s56, %s57
      %p71 = scmp.eq.s32.totalorder %s19, 3
      %p72 = por %p70, %p71
      %p74 = scmp.ne.s32.totalorder %s57, %s73
      %p75 = scmp.eq.s32.totalorder %s19, 0
      %p76 = por %p74, %p75
      %s77 = ssub.s32 %s20, %s46
      %s78 = ssub.s32 %s23, %s34
      %s79 = sor.u32 %s77, %s78
      %s80 = ssub.s32 %s21, %s42
      %s81 = sor.u32 %s79, %s80
      %p82 = scmp.eq.s32.totalorder %s81, 0
      %s84 = sadd.s32 %s83, 1
      %s85 = scalar_select %p82, %s83, %s84
      %p88 = pneg %p82
      %p89 = scmp.eq.s32.totalorder %s13, 3
      %p90 = por %p88, %p89
      %p91 = scmp.ne.s32.totalorder %s83, %s86
      %p92 = scmp.eq.s32.totalorder %s13, 0
      %p93 = por %p91, %p92
      %p94 = scmp.ne.s32.totalorder %s83, %s86
      %p95 = scmp.eq.s32.totalorder %s18, 3
      %p96 = por %p94, %p95
      %p97 = scmp.ne.s32.totalorder %s86, %s87
      %p98 = scmp.eq.s32.totalorder %s18, 0
      %p99 = por %p97, %p98
      %p100 = scmp.ne.s32.totalorder %s86, %s87
      %p101 = scmp.eq.s32.totalorder %s19, 3
      %p102 = por %p100, %p101
      %p104 = scmp.ne.s32.totalorder %s87, %s103
      %p105 = scmp.eq.s32.totalorder %s19, 0
      %p106 = por %p104, %p105
      %s107 = ssub.s32 %s20, %s46
      %s108 = ssub.s32 %s22, %s38
      %s109 = sor.u32 %s107, %s108
      %s110 = ssub.s32 %s21, %s42
      %s111 = sor.u32 %s109, %s110
      %p112 = scmp.eq.s32.totalorder %s111, 0
      %s114 = sadd.s32 %s113, 1
      %s115 = scalar_select %p112, %s113, %s114
      %p118 = pneg %p112
      %p119 = scmp.eq.s32.totalorder %s13, 3
      %p120 = por %p118, %p119
      %p121 = scmp.ne.s32.totalorder %s113, %s116
      %p122 = scmp.eq.s32.totalorder %s13, 0
      %p123 = por %p121, %p122
      %p124 = scmp.ne.s32.totalorder %s113, %s116
      %p125 = scmp.eq.s32.totalorder %s18, 3
      %p126 = por %p124, %p125
      %p127 = scmp.ne.s32.totalorder %s116, %s117
      %p128 = scmp.eq.s32.totalorder %s18, 0
      %p129 = por %p127, %p128
      %p130 = scmp.ne.s32.totalorder %s116, %s117
      %p131 = scmp.eq.s32.totalorder %s19, 3
      %p132 = por %p130, %p131
      %p134 = scmp.ne.s32.totalorder %s117, %s133
      %p135 = scmp.eq.s32.totalorder %s19, 0
      %p136 = por %p134, %p135
      %s137 = ssub.s32 %s20, %s46
      %s138 = ssub.s32 %s22, %s38
      %s139 = sor.u32 %s137, %s138
      %s140 = ssub.s32 %s21, %s42
      %s141 = sor.u32 %s139, %s140
      %p142 = scmp.eq.s32.totalorder %s141, 0
      %s144 = sadd.s32 %s143, 1
      %s145 = scalar_select %p142, %s143, %s144
      %p148 = pneg %p142
      %p149 = scmp.eq.s32.totalorder %s13, 3
      %p150 = por %p148, %p149
      %p151 = scmp.ne.s32.totalorder %s143, %s146
      %p152 = scmp.eq.s32.totalorder %s13, 0
      %p153 = por %p151, %p152
      %p154 = scmp.ne.s32.totalorder %s143, %s146
      %p155 = scmp.eq.s32.totalorder %s18, 3
      %p156 = por %p154, %p155
      %p157 = scmp.ne.s32.totalorder %s146, %s147
      %p158 = scmp.eq.s32.totalorder %s18, 0
      %p159 = por %p157, %p158
      %p160 = scmp.ne.s32.totalorder %s146, %s147
      %p161 = scmp.eq.s32.totalorder %s19, 3
      %p162 = por %p160, %p161
      %p164 = scmp.ne.s32.totalorder %s147, %s163
      %p165 = scmp.eq.s32.totalorder %s19, 0
      %p166 = por %p164, %p165
      %p167 = scmp.le.s32.totalorder 1, %s13
      %p168 = scmp.lt.s32.totalorder %s13, 5
      %p169 = pnand %p167, %p168
      %p170 = pneg %p169
      // Predicated region
      $region9: #{generator_forward.11} parent=5 // pred_check
        _
      $region10: #{generator_forward.11} parent=5 // pred_check_branch
        %172 = sbr.rel (%p169) target = $region12
      $region11: #{generator_forward.11} parent=5 // pred_region
        %s173 = ssub.s32 %s13, 1
      $region12: #{generator_forward.11} parent=5 // pred_fallthru
        _
      %p174 = scmp.lt.s32.totalorder %s13, 4
      // Predicated region
      $region13: #{generator_forward.11} parent=5 // pred_check
        %p175 = pneg %p174
      $region14: #{generator_forward.11} parent=5 // pred_check_branch
        %177 = sbr.rel (%p175) target = $region16
      $region15: #{generator_forward.11} parent=5 // pred_region
        // Predicated region
        $region17: #{generator_forward.11} parent=15 // pred_check
          %p178 = pneg %p63
        $region18: #{generator_forward.11} parent=15 // pred_check_branch
          %180 = sbr.rel (%p178) target = $region20
        $region19: #{generator_forward.11} parent=15 // pred_region
          %s181 = smul.u32 4, %s22
          %s182 = smul.u32 2, %s23
          %p183 = scmp.lt.s32.totalorder %s20, 3
          %s184 = scalar_select %p183, %s20, 3
          %p185 = scmp.lt.s32.totalorder %s181, 3
          %s186 = scalar_select %p185, %s181, 3
          %p187 = scmp.lt.s32.totalorder %s182, 1
          %s188 = scalar_select %p187, %s182, 1
          %s189 = smul.addr %s186, 2
          %s190 = sadd.s32 %s188, %s189
          %s191 = smul.addr %s184, 8
          %s192 = sadd.s32 %s190, %s191
          %s193 = smul.addr %s192, 4
          %s194 = scalar_lea.vmem %s0, %s193
          %s195 = smul.u32 4, %s22
          %s196 = smul.u32 2, %s23
        $region20: #{generator_forward.11} parent=15 // pred_fallthru
          _
        // Predicated region
        $region21: #{generator_forward.11} parent=15 // pred_check
          %p197 = pneg %p93
        $region22: #{generator_forward.11} parent=15 // pred_check_branch
          %199 = sbr.rel (%p197) target = $region24
        $region23: #{generator_forward.11} parent=15 // pred_region
          %s200 = sand.u32 %s83, 1
          %s201 = scalar_lea.sflag [#allocation3], %s200
          %s202 = sand.u32 %s83, 1
          %s203 = smul.addr %s202, 128
          %s204 = scalar_lea.vmem [#allocation2], %s203
          %s205 = smul.u32 32, %s23
          %s207 = ssub.s32 2048, 2048
          %208 = vsyncadd %s201, %s207
          %s209 = sadd.s32 %s21, %s205
          %s210 = smul.addr %s20, 32
          %s211 = sadd.s32 %s209, %s210
          %s212 = smul.addr %s211, 64
          %s213 = scalar_lea.hbm %s1, %s212
          %s214 = sshll.u32 %s204, 4
          %s215 = int_to_ptr.vmem [resolvable:$true] %s214
          %220 = dma.hbm_to_vmem [thread:$0]  %s213, 2048, %s215, %s201, 64, 64, 4
        $region24: #{generator_forward.11} parent=15 // pred_fallthru
          _
      $region16: #{generator_forward.11} parent=5 // pred_fallthru
        _
      %p221 = scmp.le.s32.totalorder 1, %s13
      %p222 = scmp.lt.s32.totalorder %s13, 5
      %p223 = pnand %p221, %p222
      %p224 = pneg %p223
      // Predicated region
      $region25: #{generator_forward.11} parent=5 // pred_check
        _
      $region26: #{generator_forward.11} parent=5 // pred_check_branch
        %226 = sbr.rel (%p223) target = $region28
      $region27: #{generator_forward.11} parent=5 // pred_region
        %s227 = ssub.s32 %s13, 1
        %s228 = sand.u32 %s86, 1
        %s229 = scalar_lea.sflag [#allocation3], %s228
        %s230 = sand.u32 %s86, 1
        %s231 = smul.addr %s230, 128
        %s232 = scalar_lea.vmem [#allocation2], %s231
        // Predicated region
        $region29: #{generator_forward.11} parent=27 // pred_check
          %p233 = pneg %p99
        $region30: #{generator_forward.11} parent=27 // pred_check_branch
          %235 = sbr.rel (%p233) target = $region32
        $region31: #{generator_forward.11} parent=27 // pred_region
          %236 = dma.done %s229, 2048
        $region32: #{generator_forward.11} parent=27 // pred_fallthru
          _
        %s237 = smul.u32 4, %s26
        %s238 = smul.u32 2, %s27
        %p239 = scmp.lt.s32.totalorder %s24, 3
        %s240 = scalar_select %p239, %s24, 3
        %p241 = scmp.lt.s32.totalorder %s237, 3
        %s242 = scalar_select %p241, %s237, 3
        %p243 = scmp.lt.s32.totalorder %s238, 1
        %s244 = scalar_select %p243, %s238, 1
        %s245 = smul.addr %s242, 2
        %s246 = sadd.s32 %s244, %s245
        %s247 = smul.addr %s240, 8
        %s248 = sadd.s32 %s246, %s247
        %s249 = smul.addr %s248, 4
        %s250 = scalar_lea.vmem %s0, %s249
        %p251 = pneg %p69
        %p252 = pneg %p66
        %s253 = sand.u32 %s86, 1
        %s254 = scalar_lea.sflag [#allocation3], %s253
        %s255 = sand.u32 %s86, 1
        %s256 = smul.addr %s255, 128
        %s257 = scalar_lea.vmem [#allocation2], %s256
        %p258 = pneg %p99
        %p259 = pneg %p96
        %p260 = pneg %p129
        %p261 = pneg %p126
        %s262 = smul.u32 4, %s26
        %p263 = scmp.lt.s32.totalorder %s24, 3
        %s264 = scalar_select %p263, %s24, 3
        %p265 = scmp.lt.s32.totalorder %s262, 3
        %s266 = scalar_select %p265, %s262, 3
        %p267 = scmp.lt.s32.totalorder %s25, 0
        %s268 = scalar_select %p267, %s25, 0
        %s269 = sadd.s32 %s268, %s266
        %s270 = smul.addr %s264, 4
        %s271 = sadd.s32 %s269, %s270
        %s272 = smul.addr %s271, 8
        %s273 = scalar_lea.vmem %s2, %s272
        %p274 = pneg %p159
        %p275 = pneg %p156
        %p276 = scmp.lt.s32.totalorder %s24, 3
        %s277 = scalar_select %p276, %s24, 3
        %p278 = scmp.lt.s32.totalorder %s26, 0
        %s279 = scalar_select %p278, %s26, 0
        %p280 = scmp.lt.s32.totalorder %s25, 0
        %s281 = scalar_select %p280, %s25, 0
        %s282 = sadd.s32 %s281, %s279
        %s283 = sadd.s32 %s282, %s277
        %s284 = smul.addr %s283, 8
        %s285 = scalar_lea.vmem %s3, %s284
        %s286 = smul.u32 4, %s26
        %s287 = smul.u32 2, %s27
        %p288 = scmp.lt.s32.totalorder %s24, 3
        %s289 = scalar_select %p288, %s24, 3
        %p290 = scmp.lt.s32.totalorder %s286, 3
        %s291 = scalar_select %p290, %s286, 3
        %p292 = scmp.lt.s32.totalorder %s287, 1
        %s293 = scalar_select %p292, %s287, 1
        %s294 = smul.addr %s291, 2
        %s295 = sadd.s32 %s293, %s294
        %s296 = smul.addr %s289, 8
        %s297 = sadd.s32 %s295, %s296
        %s298 = smul.addr %s297, 4
        %s299 = scalar_lea.vmem %s0, %s298
        %s300 = smul.u32 4, %s26
        %s301 = smul.u32 2, %s27
        %s302 = smul.u32 32, %s27
        %s303 = smul.u32 4, %s26
        %p304 = scmp.lt.s32.totalorder %s24, 3
        %s305 = scalar_select %p304, %s24, 3
        %p306 = scmp.lt.s32.totalorder %s303, 3
        %s307 = scalar_select %p306, %s303, 3
        %p308 = scmp.lt.s32.totalorder %s25, 0
        %s309 = scalar_select %p308, %s25, 0
        %s310 = sadd.s32 %s309, %s307
        %s311 = smul.addr %s305, 4
        %s312 = sadd.s32 %s310, %s311
        %s313 = smul.addr %s312, 8
        %s314 = scalar_lea.vmem %s2, %s313
        %s315 = smul.u32 4, %s26
        %p316 = scmp.lt.s32.totalorder %s24, 3
        %s317 = scalar_select %p316, %s24, 3
        %p318 = scmp.lt.s32.totalorder %s26, 0
        %s319 = scalar_select %p318, %s26, 0
        %p320 = scmp.lt.s32.totalorder %s25, 0
        %s321 = scalar_select %p320, %s25, 0
        %s322 = sadd.s32 %s321, %s319
        %s323 = sadd.s32 %s322, %s317
        %s324 = smul.addr %s323, 8
        %s325 = scalar_lea.vmem %s3, %s324
        %v327 = vld [vmem:[%s299] sm:$0xff]
        %v328 = vld [vmem:[%s299 + $0x8] sm:$0xff]
        %v329 = vld [vmem:[%s299 + $0x10] sm:$0xff]
        %v330 = vld [vmem:[%s299 + $0x18] sm:$0xff]
        %v331 = vld [vmem:[%s232] sm:$0xf]
        %v332 = vld [vmem:[%s232 + $0x4] sm:$0xf]
        %v333 = vld [vmem:[%s232 + $0x8] sm:$0xf]
        %v334 = vld [vmem:[%s232 + $0xc] sm:$0xf]
        %v335 = vld [vmem:[%s232 + $0x10] sm:$0xf]
        %v336 = vld [vmem:[%s232 + $0x14] sm:$0xf]
        %v337 = vld [vmem:[%s232 + $0x18] sm:$0xf]
        %v338 = vld [vmem:[%s232 + $0x1c] sm:$0xf]
        %v339 = vld [vmem:[%s232 + $0x20] sm:$0xf]
        %v340 = vld [vmem:[%s232 + $0x24] sm:$0xf]
        %v341 = vld [vmem:[%s232 + $0x28] sm:$0xf]
        %v342 = vld [vmem:[%s232 + $0x2c] sm:$0xf]
        %v343 = vld [vmem:[%s232 + $0x30] sm:$0xf]
        %v344 = vld [vmem:[%s232 + $0x34] sm:$0xf]
        %v345 = vld [vmem:[%s232 + $0x38] sm:$0xf]
        %v346 = vld [vmem:[%s232 + $0x3c] sm:$0xf]
        %v347 = vld [vmem:[%s232 + $0x40] sm:$0xf]
        %v348 = vld [vmem:[%s232 + $0x44] sm:$0xf]
        %v349 = vld [vmem:[%s232 + $0x48] sm:$0xf]
        %v350 = vld [vmem:[%s232 + $0x4c] sm:$0xf]
        %v351 = vld [vmem:[%s232 + $0x50] sm:$0xf]
        %v352 = vld [vmem:[%s232 + $0x54] sm:$0xf]
        %v353 = vld [vmem:[%s232 + $0x58] sm:$0xf]
        %v354 = vld [vmem:[%s232 + $0x5c] sm:$0xf]
        %v355 = vld [vmem:[%s232 + $0x60] sm:$0xf]
        %v356 = vld [vmem:[%s232 + $0x64] sm:$0xf]
        %v357 = vld [vmem:[%s232 + $0x68] sm:$0xf]
        %v358 = vld [vmem:[%s232 + $0x6c] sm:$0xf]
        %v359 = vld [vmem:[%s232 + $0x70] sm:$0xf]
        %v360 = vld [vmem:[%s232 + $0x74] sm:$0xf]
        %v361 = vld [vmem:[%s232 + $0x78] sm:$0xf]
        %v362 = vld [vmem:[%s232 + $0x7c] sm:$0xf]
        %v367 = vunpack.c.l.b16 %v327
        %v368 = vunpack.c.h.b16 %v327
        %v369 = vunpack.c.l.b16 %v328
        %v370 = vunpack.c.h.b16 %v328
        %v371 = vunpack.c.l.b16 %v329
        %v372 = vunpack.c.h.b16 %v329
        %v373 = vunpack.c.l.b16 %v330
        %v374 = vunpack.c.h.b16 %v330
        %v375 = vpack.c.b16 %v369, %v367
        %v376 = vpack.c.b16 %v370, %v368
        %v377 = vpack.c.b16 %v373, %v371
        %v378 = vpack.c.b16 %v374, %v372
        %v415 = vunpack.c.l.b16 %v331
        %v416 = vunpack.c.l.b16 %v332
        %v417 = vunpack.c.l.b16 %v333
        %v418 = vunpack.c.l.b16 %v334
        %v419 = vunpack.c.l.b16 %v335
        %v420 = vunpack.c.l.b16 %v336
        %v421 = vunpack.c.l.b16 %v337
        %v422 = vunpack.c.l.b16 %v338
        %v423 = vunpack.c.l.b16 %v339
        %v424 = vunpack.c.l.b16 %v340
        %v425 = vunpack.c.l.b16 %v341
        %v426 = vunpack.c.l.b16 %v342
        %v427 = vunpack.c.l.b16 %v343
        %v428 = vunpack.c.l.b16 %v344
        %v429 = vunpack.c.l.b16 %v345
        %v430 = vunpack.c.l.b16 %v346
        %v431 = vunpack.c.l.b16 %v347
        %v432 = vunpack.c.l.b16 %v348
        %v433 = vunpack.c.l.b16 %v349
        %v434 = vunpack.c.l.b16 %v350
        %v435 = vunpack.c.l.b16 %v351
        %v436 = vunpack.c.l.b16 %v352
        %v437 = vunpack.c.l.b16 %v353
        %v438 = vunpack.c.l.b16 %v354
        %v439 = vunpack.c.l.b16 %v355
        %v440 = vunpack.c.l.b16 %v356
        %v441 = vunpack.c.l.b16 %v357
        %v442 = vunpack.c.l.b16 %v358
        %v443 = vunpack.c.l.b16 %v359
        %v444 = vunpack.c.l.b16 %v360
        %v445 = vunpack.c.l.b16 %v361
        %v446 = vunpack.c.l.b16 %v362
        %v447 = vpack.c.b16 %v416, %v415
        %v448 = vpack.c.b16 %v418, %v417
        %v449 = vpack.c.b16 %v420, %v419
        %v450 = vpack.c.b16 %v422, %v421
        %v451 = vpack.c.b16 %v424, %v423
        %v452 = vpack.c.b16 %v426, %v425
        %v453 = vpack.c.b16 %v428, %v427
        %v454 = vpack.c.b16 %v430, %v429
        %v455 = vpack.c.b16 %v432, %v431
        %v456 = vpack.c.b16 %v434, %v433
        %v457 = vpack.c.b16 %v436, %v435
        %v458 = vpack.c.b16 %v438, %v437
        %v459 = vpack.c.b16 %v440, %v439
        %v460 = vpack.c.b16 %v442, %v441
        %v461 = vpack.c.b16 %v444, %v443
        %v462 = vpack.c.b16 %v446, %v445
        %479 = vmatprep.subr.bf16.mxu0 0
        %480 = vmatpush1.bf16.msra.mxu0 %v447
        %481 = vmatprep.subr.bf16.mxu0 0
        %482 = vmatpush1.bf16.msra.mxu0 %v448
        %483 = vmatprep.subr.bf16.mxu0 0
        %484 = vmatpush1.bf16.msra.mxu0 %v449
        %485 = vmatprep.subr.bf16.mxu0 0
        %486 = vmatpush1.bf16.msra.mxu0 %v450
        %487 = vmatprep.subr.bf16.mxu0 0
        %488 = vmatpush1.bf16.msra.mxu0 %v451
        %489 = vmatprep.subr.bf16.mxu0 0
        %490 = vmatpush1.bf16.msra.mxu0 %v452
        %491 = vmatprep.subr.bf16.mxu0 0
        %492 = vmatpush1.bf16.msra.mxu0 %v453
        %493 = vmatprep.subr.bf16.mxu0 0
        %494 = vmatpush1.bf16.msra.mxu0 %v454
        %495 = vmatprep.subr.bf16.mxu0 0
        %496 = vmatpush1.bf16.msra.mxu0 %v455
        %497 = vmatprep.subr.bf16.mxu0 0
        %498 = vmatpush1.bf16.msra.mxu0 %v456
        %499 = vmatprep.subr.bf16.mxu0 0
        %500 = vmatpush1.bf16.msra.mxu0 %v457
        %501 = vmatprep.subr.bf16.mxu0 0
        %502 = vmatpush1.bf16.msra.mxu0 %v458
        %503 = vmatprep.subr.bf16.mxu0 0
        %504 = vmatpush1.bf16.msra.mxu0 %v459
        %505 = vmatprep.subr.bf16.mxu0 0
        %506 = vmatpush1.bf16.msra.mxu0 %v460
        %507 = vmatprep.subr.bf16.mxu0 0
        %508 = vmatpush1.bf16.msra.mxu0 %v461
        %509 = vmatprep.subr.bf16.mxu0 0
        %510 = vmatpush1.bf16.msra.mxu0 %v462
        %511 = vmatprep.mubr.bf16.mxu0 %v376
        %512 = vmatmul.mubr.bf16.gmra.mrb[0].mxu0 %v375
        %v513 = vpop.f32.mrb[0].mxu0
        %v514 = vadd.f32 0.0, %v513
        %v515 = vpop.f32.mrb[0].mxu0
        %v516 = vpop.f32.mrb[0].mxu0
        %v517 = vadd.f32 0.0, %v516
        %v518 = vpop.f32.mrb[0].mxu0
        %519 = vmatprep.mubr.bf16.mxu0 %v378
        %520 = vmatmul.mubr.bf16.gmra.mrb[0].mxu0 %v377
        %v521 = vpop.f32.mrb[0].mxu0
        %v522 = vadd.f32 0.0, %v521
        %v523 = vpop.f32.mrb[0].mxu0
        %v524 = vpop.f32.mrb[0].mxu0
        %v525 = vadd.f32 0.0, %v524
        %v526 = vpop.f32.mrb[0].mxu0
        %527 = vdwg.mxu0
        %v528 = vadd.f32 %v514, %v517
        %v529 = vadd.f32 %v528, %v522
        %v530 = vadd.f32 %v529, %v525
        %v531 = vrot.slane %v530, 4
        %v532 = vadd.f32 %v530, %v531
        %v533 = vrot.slane %v532, 2
        %v534 = vadd.f32 %v532, %v533
        %v535 = vrot.slane %v534, 1
        %v536 = vadd.f32 %v534, %v535
        %v537 = vmul.f32 %v514, %v514
        %v538 = vmul.f32 %v517, %v517
        %v539 = vmul.f32 %v522, %v522
        %v540 = vmul.f32 %v525, %v525
        %v541 = vadd.f32 %v537, %v538
        %v542 = vadd.f32 %v541, %v539
        %v543 = vadd.f32 %v542, %v540
        %v544 = vrot.slane %v543, 4
        %v545 = vadd.f32 %v543, %v544
        %v546 = vrot.slane %v545, 2
        %v547 = vadd.f32 %v545, %v546
        %v548 = vrot.slane %v547, 1
        %v549 = vadd.f32 %v547, %v548
        %v550 = vlaneseq
        %v551 = vshrl.u32 %v550, 7
        %vm552 = vcmp.eq.s32.totalorder %v551, 0
        %vm553 = vcmp.eq.s32.totalorder %v551, 1
        %v554 = vsel %vm553, %v549, 0.0
        %v555 = vsel %vm552, %v536, %v554
        %556 = vst [vmem:[%s325] sm:$0xff] %v555
        %557 = vst [vmem:[%s314] sm:$0xff] %v514
        %558 = vst [vmem:[%s314 + $0x8] sm:$0xff] %v517
        %559 = vst [vmem:[%s314 + $0x10] sm:$0xff] %v522
        %560 = vst [vmem:[%s314 + $0x18] sm:$0xff] %v525
        %s561 = smul.u32 4, %s26
        %p562 = scmp.lt.s32.totalorder %s24, 3
        %s563 = scalar_select %p562, %s24, 3
        %p564 = scmp.lt.s32.totalorder %s561, 3
        %s565 = scalar_select %p564, %s561, 3
        %p566 = scmp.lt.s32.totalorder %s25, 0
        %s567 = scalar_select %p566, %s25, 0
        %s568 = sadd.s32 %s567, %s565
        %s569 = smul.addr %s563, 4
        %s570 = sadd.s32 %s568, %s569
        %s571 = smul.addr %s570, 8
        %s572 = scalar_lea.vmem %s2, %s571
        %p573 = scmp.lt.s32.totalorder %s24, 3
        %s574 = scalar_select %p573, %s24, 3
        %p575 = scmp.lt.s32.totalorder %s26, 0
        %s576 = scalar_select %p575, %s26, 0
        %p577 = scmp.lt.s32.totalorder %s25, 0
        %s578 = scalar_select %p577, %s25, 0
        %s579 = sadd.s32 %s578, %s576
        %s580 = sadd.s32 %s579, %s574
        %s581 = smul.addr %s580, 8
        %s582 = scalar_lea.vmem %s3, %s581
        // Predicated region
        $region33: #{generator_forward.11} parent=27 // pred_check
          %p583 = pneg %p126
        $region34: #{generator_forward.11} parent=27 // pred_check_branch
          %585 = sbr.rel (%p583) target = $region36
        $region35: #{generator_forward.11} parent=27 // pred_region
          %s586 = smul.u32 4, %s26
        $region36: #{generator_forward.11} parent=27 // pred_fallthru
          _
        // Predicated region
        $region37: #{generator_forward.11} parent=27 // pred_check
          %p587 = pneg %p156
        $region38: #{generator_forward.11} parent=27 // pred_check_branch
          %589 = sbr.rel (%p587) target = $region40
        $region39: #{generator_forward.11} parent=27 // pred_region
          _
        $region40: #{generator_forward.11} parent=27 // pred_fallthru
          _
      $region28: #{generator_forward.11} parent=5 // pred_fallthru
        _
      %p590 = scmp.le.s32.totalorder 2, %s13
      // Predicated region
      $region41: #{generator_forward.11} parent=5 // pred_check
        %p591 = pneg %p590
      $region42: #{generator_forward.11} parent=5 // pred_check_branch
        %593 = sbr.rel (%p591) target = $region44
      $region43: #{generator_forward.11} parent=5 // pred_region
        %s594 = ssub.s32 %s13, 2
        // Predicated region
        $region45: #{generator_forward.11} parent=43 // pred_check
          %p595 = pneg %p132
        $region46: #{generator_forward.11} parent=43 // pred_check_branch
          %597 = sbr.rel (%p595) target = $region48
        $region47: #{generator_forward.11} parent=43 // pred_region
          %s598 = smul.u32 4, %s30
          %p599 = scmp.lt.s32.totalorder %s28, 3
          %s600 = scalar_select %p599, %s28, 3
          %p601 = scmp.lt.s32.totalorder %s598, 3
          %s602 = scalar_select %p601, %s598, 3
          %p603 = scmp.lt.s32.totalorder %s29, 0
          %s604 = scalar_select %p603, %s29, 0
          %s605 = sadd.s32 %s604, %s602
          %s606 = smul.addr %s600, 4
          %s607 = sadd.s32 %s605, %s606
          %s608 = smul.addr %s607, 8
          %s609 = scalar_lea.vmem %s2, %s608
        $region48: #{generator_forward.11} parent=43 // pred_fallthru
          _
        // Predicated region
        $region49: #{generator_forward.11} parent=43 // pred_check
          %p610 = pneg %p162
        $region50: #{generator_forward.11} parent=43 // pred_check_branch
          %612 = sbr.rel (%p610) target = $region52
        $region51: #{generator_forward.11} parent=43 // pred_region
          %p613 = scmp.lt.s32.totalorder %s28, 3
          %s614 = scalar_select %p613, %s28, 3
          %p615 = scmp.lt.s32.totalorder %s30, 0
          %s616 = scalar_select %p615, %s30, 0
          %p617 = scmp.lt.s32.totalorder %s29, 0
          %s618 = scalar_select %p617, %s29, 0
          %s619 = sadd.s32 %s618, %s616
          %s620 = sadd.s32 %s619, %s614
          %s621 = smul.addr %s620, 8
          %s622 = scalar_lea.vmem %s3, %s621
        $region52: #{generator_forward.11} parent=43 // pred_fallthru
          _
      $region44: #{generator_forward.11} parent=5 // pred_fallthru
        _
    $region6: #{generator_forward.11} parent=1 // loop_footer
      %s17 = sadd.s32 1, %s13
    $region7: #{generator_forward.11} parent=1 // loop_footer_branch
      %12 = sbr.rel target = $region3
    $region8: #{generator_forward.11} parent=1 // loop_exit
      _
    %623 = vsyncpa [#allocation3], 1
    %s624 = scalar_lea.sflag [#allocation3], 1
    %625 = vsyncpa %s624, 1

// kernel: generator_forward.12
$region0: #{generator_forward.12}
  #allocation0 [shape = 'u32[]', space=smem, size = 0x4, offset = 0x4, fixed_abs, tag = 'smem constant byte address 0x4 - core index']
  #allocation1 [shape = 'u32[144,128]{1,0:T(1,128)}', space=vmem, size = 0x12000, scoped, tag = 'internal scratch']
  %s0 = inlined_call_operand.vmem [shape: f32[32,512], index: 0, kind: input, shape index: {}]
  %s1 = inlined_call_operand.vmem [shape: f32[1,512], index: 1, kind: input, shape index: {}]
  %s2 = inlined_call_operand.vmem [shape: f32[1,512], index: 2, kind: input, shape index: {}]
  %s3 = inlined_call_operand.vmem [shape: bf16[32,512], index: 3, kind: output, shape index: {}]
  %s4 = sld [smem:[#allocation0]]
  $region22: #{generator_forward.12} parent=0
    _
  %s6 = ssub.s32 1, %s4
  %s7 = scalar_select 0, %s6, %s4
  // Predicated region
  $region2: #{generator_forward.12} parent=0 // pred_check
    _
  $region3: #{generator_forward.12} parent=0 // pred_check_branch
    %9 = sbr.rel (0) target = $region5
  $region4: #{generator_forward.12} parent=0 // pred_region
    _
  $region5: #{generator_forward.12} parent=0 // pred_fallthru
    _
  // Predicated region
  $region6: #{generator_forward.12} parent=0 // pred_check
    _
  $region7: #{generator_forward.12} parent=0 // pred_check_branch
    %11 = sbr.rel (0) target = $region9
  $region8: #{generator_forward.12} parent=0 // pred_region
    _
  $region9: #{generator_forward.12} parent=0 // pred_fallthru
    _
  // Predicated region
  $region10: #{generator_forward.12} parent=0 // pred_check
    _
  $region11: #{generator_forward.12} parent=0 // pred_check_branch
    %13 = sbr.rel (0) target = $region13
  $region12: #{generator_forward.12} parent=0 // pred_region
    _
  $region13: #{generator_forward.12} parent=0 // pred_fallthru
    _
  %v14 = vld [vmem:[%s0] sm:$0xff]
  %v15 = vld [vmem:[%s0 + $0x8] sm:$0xff]
  %v16 = vld [vmem:[%s0 + $0x10] sm:$0xff]
  %v17 = vld [vmem:[%s0 + $0x18] sm:$0xff]
  %v18 = vld [vmem:[%s0 + $0x20] sm:$0xff]
  %v19 = vld [vmem:[%s0 + $0x28] sm:$0xff]
  %v20 = vld [vmem:[%s0 + $0x30] sm:$0xff]
  %v21 = vld [vmem:[%s0 + $0x38] sm:$0xff]
  %v22 = vld [vmem:[%s0 + $0x40] sm:$0xff]
  %v23 = vld [vmem:[%s0 + $0x48] sm:$0xff]
  %v24 = vld [vmem:[%s0 + $0x50] sm:$0xff]
  %v25 = vld [vmem:[%s0 + $0x58] sm:$0xff]
  %v26 = vld [vmem:[%s0 + $0x60] sm:$0xff]
  %v27 = vld [vmem:[%s0 + $0x68] sm:$0xff]
  %v28 = vld [vmem:[%s0 + $0x70] sm:$0xff]
  %v29 = vld [vmem:[%s0 + $0x78] sm:$0xff]
  %v30 = vld [vmem:[%s1] sm:$0xf]
  %v32 = vlaneseq
  %v33 = vshrl.u32 %v32, 7
  %v34 = vsub.s32 0, %v33
  %v35 = vrot.slane %v30, %v34
  %v36 = vlaneseq
  %v37 = vshrl.u32 %v36, 7
  %v38 = vsub.s32 1, %v37
  %v39 = vrot.slane %v30, %v38
  %v40 = vlaneseq
  %v41 = vshrl.u32 %v40, 7
  %v42 = vsub.s32 2, %v41
  %v43 = vrot.slane %v30, %v42
  %v44 = vlaneseq
  %v45 = vshrl.u32 %v44, 7
  %v46 = vsub.s32 3, %v45
  %v47 = vrot.slane %v30, %v46
  %v52 = vmul.f32 %v14, %v35
  %v53 = vmul.f32 %v15, %v39
  %v54 = vmul.f32 %v16, %v43
  %v55 = vmul.f32 %v17, %v47
  %v56 = vmul.f32 %v18, %v35
  %v57 = vmul.f32 %v19, %v39
  %v58 = vmul.f32 %v20, %v43
  %v59 = vmul.f32 %v21, %v47
  %v60 = vmul.f32 %v22, %v35
  %v61 = vmul.f32 %v23, %v39
  %v62 = vmul.f32 %v24, %v43
  %v63 = vmul.f32 %v25, %v47
  %v64 = vmul.f32 %v26, %v35
  %v65 = vmul.f32 %v27, %v39
  %v66 = vmul.f32 %v28, %v43
  %v67 = vmul.f32 %v29, %v47
  %v68 = vld [vmem:[%s2] sm:$0xf]
  %v70 = vlaneseq
  %v71 = vshrl.u32 %v70, 7
  %v72 = vsub.s32 0, %v71
  %v73 = vrot.slane %v68, %v72
  %v74 = vlaneseq
  %v75 = vshrl.u32 %v74, 7
  %v76 = vsub.s32 1, %v75
  %v77 = vrot.slane %v68, %v76
  %v78 = vlaneseq
  %v79 = vshrl.u32 %v78, 7
  %v80 = vsub.s32 2, %v79
  %v81 = vrot.slane %v68, %v80
  %v82 = vlaneseq
  %v83 = vshrl.u32 %v82, 7
  %v84 = vsub.s32 3, %v83
  %v85 = vrot.slane %v68, %v84
  %v90 = vadd.f32 %v52, %v73
  %v91 = vadd.f32 %v53, %v77
  %v92 = vadd.f32 %v54, %v81
  %v93 = vadd.f32 %v55, %v85
  %v94 = vadd.f32 %v56, %v73
  %v95 = vadd.f32 %v57, %v77
  %v96 = vadd.f32 %v58, %v81
  %v97 = vadd.f32 %v59, %v85
  %v98 = vadd.f32 %v60, %v73
  %v99 = vadd.f32 %v61, %v77
  %v100 = vadd.f32 %v62, %v81
  %v101 = vadd.f32 %v63, %v85
  %v102 = vadd.f32 %v64, %v73
  %v103 = vadd.f32 %v65, %v77
  %v104 = vadd.f32 %v66, %v81
  %v105 = vadd.f32 %v67, %v85
  %v106 = vmax.f32 %v90, 0.0
  %v107 = vmax.f32 %v91, 0.0
  %v108 = vmax.f32 %v92, 0.0
  %v109 = vmax.f32 %v93, 0.0
  %v110 = vmax.f32 %v94, 0.0
  %v111 = vmax.f32 %v95, 0.0
  %v112 = vmax.f32 %v96, 0.0
  %v113 = vmax.f32 %v97, 0.0
  %v114 = vmax.f32 %v98, 0.0
  %v115 = vmax.f32 %v99, 0.0
  %v116 = vmax.f32 %v100, 0.0
  %v117 = vmax.f32 %v101, 0.0
  %v118 = vmax.f32 %v102, 0.0
  %v119 = vmax.f32 %v103, 0.0
  %v120 = vmax.f32 %v104, 0.0
  %v121 = vmax.f32 %v105, 0.0
  %v122 = vpack.c.bf16 %v110, %v106
  %v123 = vpack.c.bf16 %v111, %v107
  %v124 = vpack.c.bf16 %v112, %v108
  %v125 = vpack.c.bf16 %v113, %v109
  %v126 = vpack.c.bf16 %v118, %v114
  %v127 = vpack.c.bf16 %v119, %v115
  %v128 = vpack.c.bf16 %v120, %v116
  %v129 = vpack.c.bf16 %v121, %v117
  %v138 = vunpack.c.l.b16 %v122
  %v139 = vunpack.c.l.b16 %v123
  %v140 = vunpack.c.l.b16 %v124
  %v141 = vunpack.c.l.b16 %v125
  %v142 = vunpack.c.h.b16 %v122
  %v143 = vunpack.c.h.b16 %v123
  %v144 = vunpack.c.h.b16 %v124
  %v145 = vunpack.c.h.b16 %v125
  %v146 = vunpack.c.l.b16 %v126
  %v147 = vunpack.c.l.b16 %v127
  %v148 = vunpack.c.l.b16 %v128
  %v149 = vunpack.c.l.b16 %v129
  %v150 = vunpack.c.h.b16 %v126
  %v151 = vunpack.c.h.b16 %v127
  %v152 = vunpack.c.h.b16 %v128
  %v153 = vunpack.c.h.b16 %v129
  %v154 = vpack.c.b16 %v139, %v138
  %v155 = vpack.c.b16 %v141, %v140
  %v156 = vpack.c.b16 %v143, %v142
  %v157 = vpack.c.b16 %v145, %v144
  %v158 = vpack.c.b16 %v147, %v146
  %v159 = vpack.c.b16 %v149, %v148
  %v160 = vpack.c.b16 %v151, %v150
  %v161 = vpack.c.b16 %v153, %v152
  %170 = vst [vmem:[%s3] sm:$0xff] %v154
  %171 = vst [vmem:[%s3 + $0x8] sm:$0xff] %v155
  %172 = vst [vmem:[%s3 + $0x10] sm:$0xff] %v156
  %173 = vst [vmem:[%s3 + $0x18] sm:$0xff] %v157
  %174 = vst [vmem:[%s3 + $0x20] sm:$0xff] %v158
  %175 = vst [vmem:[%s3 + $0x28] sm:$0xff] %v159
  %176 = vst [vmem:[%s3 + $0x30] sm:$0xff] %v160
  %177 = vst [vmem:[%s3 + $0x38] sm:$0xff] %v161
  // Predicated region
  $region14: #{generator_forward.12} parent=0 // pred_check
    _
  $region15: #{generator_forward.12} parent=0 // pred_check_branch
    %179 = sbr.rel (0) target = $region17
  $region16: #{generator_forward.12} parent=0 // pred_region
    _
  $region17: #{generator_forward.12} parent=0 // pred_fallthru
    _
  // Predicated region
  $region18: #{generator_forward.12} parent=0 // pred_check
    _
  $region19: #{generator_forward.12} parent=0 // pred_check_branch
    %181 = sbr.rel (0) target = $region21
  $region20: #{generator_forward.12} parent=0 // pred_region
    _
  $region21: #{generator_forward.12} parent=0 // pred_fallthru
    _

// kernel: generator_forward.13
$region0: #{generator_forward.13}
  #allocation0 [shape = 'u32[]', space=smem, size = 0x4, offset = 0x4, fixed_abs, tag = 'smem constant byte address 0x4 - core index']
  #allocation1 [shape = 'u32[144,128]{1,0:T(1,128)}', space=vmem, size = 0x12000, scoped, tag = 'internal scratch']
  %s0 = inlined_call_operand.vmem [shape: bf16[4,128,128], index: 0, kind: input, shape index: {}]
  %s1 = inlined_call_operand.vmem [shape: bf16[4,128,128], index: 1, kind: input, shape index: {}]
  %s2 = inlined_call_operand.vmem [shape: f32[4,128,128], index: 2, kind: output, shape index: {0}]
  %s3 = inlined_call_operand.vmem [shape: f32[4,8,128], index: 3, kind: output, shape index: {1}]
  %4 = xla_tuple %s2, %s3
  %s5 = sld [smem:[#allocation0]]
  $region49: #{generator_forward.13} parent=0
    _
  %s7 = ssub.s32 1, %s5
  %s8 = scalar_select 0, %s7, %s5
  loop: start=0, step=1, limit=6
  $region2: #{generator_forward.13} parent=0 // loop_pre_header
    _
  $region3: #{generator_forward.13} parent=0 // loop_header
    %s10 = sphi 0, %s14
    %p11 = scmp.ge.s32.totalorder %s10, 6
    %s17 = sphi 0, %s43
    %s18 = sphi 0, %s39
    %s19 = sphi 0, %s35
    %s20 = sphi 0, %s31
    %s21 = sphi 0, %s17
    %s22 = sphi 0, %s18
    %s23 = sphi 0, %s19
    %s24 = sphi 0, %s20
    %s25 = sphi 0, %s21
    %s26 = sphi 0, %s22
    %s27 = sphi 0, %s23
    %s28 = sphi 0, %s24
    %s50 = sphi 0, %s52
    %s53 = sphi 0, %s50
    %s54 = sphi 0, %s53
    %s70 = sphi 0, %s54
    %s80 = sphi 0, %s82
    %s83 = sphi 0, %s80
    %s84 = sphi 0, %s83
    %s100 = sphi 0, %s84
    %s110 = sphi 0, %s112
    %s113 = sphi 0, %s110
    %s114 = sphi 0, %s113
    %s130 = sphi 0, %s114
    %s140 = sphi 0, %s142
    %s143 = sphi 0, %s140
    %s144 = sphi 0, %s143
    %s160 = sphi 0, %s144
  $region4: #{generator_forward.13} parent=0 // loop_header_branch
    %13 = sbr.rel (%p11) target = $region8
  $region5: #{generator_forward.13} parent=0 // loop_body
    %s15 = ssub.s32 %s10, 1
    %s16 = ssub.s32 %s10, 2
    %s29 = sadd.s32 1, %s20
    %p30 = scmp.ge.s32.totalorder %s29, 1
    %s31 = scalar_select %p30, 0, %s29
    %s32 = sadd.s32 1, %s19
    %s33 = scalar_select %p30, %s32, %s19
    %p34 = scmp.ge.s32.totalorder %s33, 1
    %s35 = scalar_select %p34, 0, %s33
    %s36 = sadd.s32 1, %s18
    %s37 = scalar_select %p34, %s36, %s18
    %p38 = scmp.ge.s32.totalorder %s37, 1
    %s39 = scalar_select %p38, 0, %s37
    %s40 = sadd.s32 1, %s17
    %s41 = scalar_select %p38, %s40, %s17
    %p42 = scmp.ge.s32.totalorder %s41, 4
    %s43 = scalar_select %p42, 0, %s41
    %s44 = ssub.s32 %s17, %s43
    %s45 = ssub.s32 %s19, %s35
    %s46 = sor.u32 %s44, %s45
    %s47 = ssub.s32 %s20, %s31
    %s48 = sor.u32 %s46, %s47
    %p49 = scmp.eq.s32.totalorder %s48, 0
    %s51 = sadd.s32 %s50, 1
    %s52 = scalar_select %p49, %s50, %s51
    %p55 = pneg %p49
    %p56 = scmp.eq.s32.totalorder %s10, 3
    %p57 = por %p55, %p56
    %p58 = scmp.ne.s32.totalorder %s50, %s53
    %p59 = scmp.eq.s32.totalorder %s10, 0
    %p60 = por %p58, %p59
    %p61 = scmp.ne.s32.totalorder %s50, %s53
    %p62 = scmp.eq.s32.totalorder %s15, 3
    %p63 = por %p61, %p62
    %p64 = scmp.ne.s32.totalorder %s53, %s54
    %p65 = scmp.eq.s32.totalorder %s15, 0
    %p66 = por %p64, %p65
    %p67 = scmp.ne.s32.totalorder %s53, %s54
    %p68 = scmp.eq.s32.totalorder %s16, 3
    %p69 = por %p67, %p68
    %p71 = scmp.ne.s32.totalorder %s54, %s70
    %p72 = scmp.eq.s32.totalorder %s16, 0
    %p73 = por %p71, %p72
    %s74 = ssub.s32 %s17, %s43
    %s75 = ssub.s32 %s20, %s31
    %s76 = sor.u32 %s74, %s75
    %s77 = ssub.s32 %s18, %s39
    %s78 = sor.u32 %s76, %s77
    %p79 = scmp.eq.s32.totalorder %s78, 0
    %s81 = sadd.s32 %s80, 1
    %s82 = scalar_select %p79, %s80, %s81
    %p85 = pneg %p79
    %p86 = scmp.eq.s32.totalorder %s10, 3
    %p87 = por %p85, %p86
    %p88 = scmp.ne.s32.totalorder %s80, %s83
    %p89 = scmp.eq.s32.totalorder %s10, 0
    %p90 = por %p88, %p89
    %p91 = scmp.ne.s32.totalorder %s80, %s83
    %p92 = scmp.eq.s32.totalorder %s15, 3
    %p93 = por %p91, %p92
    %p94 = scmp.ne.s32.totalorder %s83, %s84
    %p95 = scmp.eq.s32.totalorder %s15, 0
    %p96 = por %p94, %p95
    %p97 = scmp.ne.s32.totalorder %s83, %s84
    %p98 = scmp.eq.s32.totalorder %s16, 3
    %p99 = por %p97, %p98
    %p101 = scmp.ne.s32.totalorder %s84, %s100
    %p102 = scmp.eq.s32.totalorder %s16, 0
    %p103 = por %p101, %p102
    %s104 = ssub.s32 %s17, %s43
    %s105 = ssub.s32 %s19, %s35
    %s106 = sor.u32 %s104, %s105
    %s107 = ssub.s32 %s18, %s39
    %s108 = sor.u32 %s106, %s107
    %p109 = scmp.eq.s32.totalorder %s108, 0
    %s111 = sadd.s32 %s110, 1
    %s112 = scalar_select %p109, %s110, %s111
    %p115 = pneg %p109
    %p116 = scmp.eq.s32.totalorder %s10, 3
    %p117 = por %p115, %p116
    %p118 = scmp.ne.s32.totalorder %s110, %s113
    %p119 = scmp.eq.s32.totalorder %s10, 0
    %p120 = por %p118, %p119
    %p121 = scmp.ne.s32.totalorder %s110, %s113
    %p122 = scmp.eq.s32.totalorder %s15, 3
    %p123 = por %p121, %p122
    %p124 = scmp.ne.s32.totalorder %s113, %s114
    %p125 = scmp.eq.s32.totalorder %s15, 0
    %p126 = por %p124, %p125
    %p127 = scmp.ne.s32.totalorder %s113, %s114
    %p128 = scmp.eq.s32.totalorder %s16, 3
    %p129 = por %p127, %p128
    %p131 = scmp.ne.s32.totalorder %s114, %s130
    %p132 = scmp.eq.s32.totalorder %s16, 0
    %p133 = por %p131, %p132
    %s134 = ssub.s32 %s17, %s43
    %s135 = ssub.s32 %s19, %s35
    %s136 = sor.u32 %s134, %s135
    %s137 = ssub.s32 %s18, %s39
    %s138 = sor.u32 %s136, %s137
    %p139 = scmp.eq.s32.totalorder %s138, 0
    %s141 = sadd.s32 %s140, 1
    %s142 = scalar_select %p139, %s140, %s141
    %p145 = pneg %p139
    %p146 = scmp.eq.s32.totalorder %s10, 3
    %p147 = por %p145, %p146
    %p148 = scmp.ne.s32.totalorder %s140, %s143
    %p149 = scmp.eq.s32.totalorder %s10, 0
    %p150 = por %p148, %p149
    %p151 = scmp.ne.s32.totalorder %s140, %s143
    %p152 = scmp.eq.s32.totalorder %s15, 3
    %p153 = por %p151, %p152
    %p154 = scmp.ne.s32.totalorder %s143, %s144
    %p155 = scmp.eq.s32.totalorder %s15, 0
    %p156 = por %p154, %p155
    %p157 = scmp.ne.s32.totalorder %s143, %s144
    %p158 = scmp.eq.s32.totalorder %s16, 3
    %p159 = por %p157, %p158
    %p161 = scmp.ne.s32.totalorder %s144, %s160
    %p162 = scmp.eq.s32.totalorder %s16, 0
    %p163 = por %p161, %p162
    %p164 = scmp.le.s32.totalorder 1, %s10
    %p165 = scmp.lt.s32.totalorder %s10, 5
    %p166 = pnand %p164, %p165
    %p167 = pneg %p166
    // Predicated region
    $region9: #{generator_forward.13} parent=5 // pred_check
      _
    $region10: #{generator_forward.13} parent=5 // pred_check_branch
      %169 = sbr.rel (%p166) target = $region12
    $region11: #{generator_forward.13} parent=5 // pred_region
      %s170 = ssub.s32 %s10, 1
    $region12: #{generator_forward.13} parent=5 // pred_fallthru
      _
    %p171 = scmp.lt.s32.totalorder %s10, 4
    // Predicated region
    $region13: #{generator_forward.13} parent=5 // pred_check
      %p172 = pneg %p171
    $region14: #{generator_forward.13} parent=5 // pred_check_branch
      %174 = sbr.rel (%p172) target = $region16
    $region15: #{generator_forward.13} parent=5 // pred_region
      // Predicated region
      $region17: #{generator_forward.13} parent=15 // pred_check
        %p175 = pneg %p60
      $region18: #{generator_forward.13} parent=15 // pred_check_branch
        %177 = sbr.rel (%p175) target = $region20
      $region19: #{generator_forward.13} parent=15 // pred_region
        %s178 = smul.u32 16, %s19
        %p179 = scmp.lt.s32.totalorder %s17, 3
        %s180 = scalar_select %p179, %s17, 3
        %p181 = scmp.lt.s32.totalorder %s178, 15
        %s182 = scalar_select %p181, %s178, 15
        %p183 = scmp.lt.s32.totalorder %s20, 0
        %s184 = scalar_select %p183, %s20, 0
        %s185 = sadd.s32 %s184, %s182
        %s186 = smul.addr %s180, 16
        %s187 = sadd.s32 %s185, %s186
        %s188 = smul.addr %s187, 4
        %s189 = scalar_lea.vmem %s0, %s188
        %s190 = smul.u32 16, %s19
      $region20: #{generator_forward.13} parent=15 // pred_fallthru
        _
      // Predicated region
      $region21: #{generator_forward.13} parent=15 // pred_check
        %p191 = pneg %p90
      $region22: #{generator_forward.13} parent=15 // pred_check_branch
        %193 = sbr.rel (%p191) target = $region24
      $region23: #{generator_forward.13} parent=15 // pred_region
        %s194 = smul.u32 16, %s20
        %p195 = scmp.lt.s32.totalorder %s17, 3
        %s196 = scalar_select %p195, %s17, 3
        %p197 = scmp.lt.s32.totalorder %s194, 15
        %s198 = scalar_select %p197, %s194, 15
        %p199 = scmp.lt.s32.totalorder %s18, 0
        %s200 = scalar_select %p199, %s18, 0
        %s201 = sadd.s32 %s200, %s198
        %s202 = smul.addr %s196, 16
        %s203 = sadd.s32 %s201, %s202
        %s204 = smul.addr %s203, 4
        %s205 = scalar_lea.vmem %s1, %s204
        %s206 = smul.u32 16, %s20
      $region24: #{generator_forward.13} parent=15 // pred_fallthru
        _
    $region16: #{generator_forward.13} parent=5 // pred_fallthru
      _
    %p207 = scmp.le.s32.totalorder 1, %s10
    %p208 = scmp.lt.s32.totalorder %s10, 5
    %p209 = pnand %p207, %p208
    %p210 = pneg %p209
    // Predicated region
    $region25: #{generator_forward.13} parent=5 // pred_check
      _
    $region26: #{generator_forward.13} parent=5 // pred_check_branch
      %212 = sbr.rel (%p209) target = $region28
    $region27: #{generator_forward.13} parent=5 // pred_region
      %s213 = ssub.s32 %s10, 1
      %s214 = smul.u32 16, %s23
      %p215 = scmp.lt.s32.totalorder %s21, 3
      %s216 = scalar_select %p215, %s21, 3
      %p217 = scmp.lt.s32.totalorder %s214, 15
      %s218 = scalar_select %p217, %s214, 15
      %p219 = scmp.lt.s32.totalorder %s24, 0
      %s220 = scalar_select %p219, %s24, 0
      %s221 = sadd.s32 %s220, %s218
      %s222 = smul.addr %s216, 16
      %s223 = sadd.s32 %s221, %s222
      %s224 = smul.addr %s223, 4
      %s225 = scalar_lea.vmem %s0, %s224
      %p226 = pneg %p66
      %p227 = pneg %p63
      %s228 = smul.u32 16, %s24
      %p229 = scmp.lt.s32.totalorder %s21, 3
      %s230 = scalar_select %p229, %s21, 3
      %p231 = scmp.lt.s32.totalorder %s228, 15
      %s232 = scalar_select %p231, %s228, 15
      %p233 = scmp.lt.s32.totalorder %s22, 0
      %s234 = scalar_select %p233, %s22, 0
      %s235 = sadd.s32 %s234, %s232
      %s236 = smul.addr %s230, 16
      %s237 = sadd.s32 %s235, %s236
      %s238 = smul.addr %s237, 4
      %s239 = scalar_lea.vmem %s1, %s238
      %p240 = pneg %p96
      %p241 = pneg %p93
      %p242 = pneg %p126
      %p243 = pneg %p123
      %s244 = smul.u32 16, %s23
      %p245 = scmp.lt.s32.totalorder %s21, 3
      %s246 = scalar_select %p245, %s21, 3
      %p247 = scmp.lt.s32.totalorder %s244, 15
      %s248 = scalar_select %p247, %s244, 15
      %p249 = scmp.lt.s32.totalorder %s22, 0
      %s250 = scalar_select %p249, %s22, 0
      %s251 = sadd.s32 %s250, %s248
      %s252 = smul.addr %s246, 16
      %s253 = sadd.s32 %s251, %s252
      %s254 = smul.addr %s253, 8
      %s255 = scalar_lea.vmem %s2, %s254
      %p256 = pneg %p156
      %p257 = pneg %p153
      %p258 = scmp.lt.s32.totalorder %s21, 3
      %s259 = scalar_select %p258, %s21, 3
      %p260 = scmp.lt.s32.totalorder %s23, 0
      %s261 = scalar_select %p260, %s23, 0
      %p262 = scmp.lt.s32.totalorder %s22, 0
      %s263 = scalar_select %p262, %s22, 0
      %s264 = sadd.s32 %s263, %s261
      %s265 = sadd.s32 %s264, %s259
      %s266 = smul.addr %s265, 8
      %s267 = scalar_lea.vmem %s3, %s266
      %s268 = smul.u32 16, %s23
      %p269 = scmp.lt.s32.totalorder %s21, 3
      %s270 = scalar_select %p269, %s21, 3
      %p271 = scmp.lt.s32.totalorder %s268, 15
      %s272 = scalar_select %p271, %s268, 15
      %p273 = scmp.lt.s32.totalorder %s24, 0
      %s274 = scalar_select %p273, %s24, 0
      %s275 = sadd.s32 %s274, %s272
      %s276 = smul.addr %s270, 16
      %s277 = sadd.s32 %s275, %s276
      %s278 = smul.addr %s277, 4
      %s279 = scalar_lea.vmem %s0, %s278
      %s280 = smul.u32 16, %s23
      %s281 = smul.u32 16, %s24
      %p282 = scmp.lt.s32.totalorder %s21, 3
      %s283 = scalar_select %p282, %s21, 3
      %p284 = scmp.lt.s32.totalorder %s281, 15
      %s285 = scalar_select %p284, %s281, 15
      %p286 = scmp.lt.s32.totalorder %s22, 0
      %s287 = scalar_select %p286, %s22, 0
      %s288 = sadd.s32 %s287, %s285
      %s289 = smul.addr %s283, 16
      %s290 = sadd.s32 %s288, %s289
      %s291 = smul.addr %s290, 4
      %s292 = scalar_lea.vmem %s1, %s291
      %s293 = smul.u32 16, %s24
      %s294 = smul.u32 16, %s23
      %p295 = scmp.lt.s32.totalorder %s21, 3
      %s296 = scalar_select %p295, %s21, 3
      %p297 = scmp.lt.s32.totalorder %s294, 15
      %s298 = scalar_select %p297, %s294, 15
      %p299 = scmp.lt.s32.totalorder %s22, 0
      %s300 = scalar_select %p299, %s22, 0
      %s301 = sadd.s32 %s300, %s298
      %s302 = smul.addr %s296, 16
      %s303 = sadd.s32 %s301, %s302
      %s304 = smul.addr %s303, 8
      %s305 = scalar_lea.vmem %s2, %s304
      %s306 = smul.u32 16, %s23
      %p307 = scmp.lt.s32.totalorder %s21, 3
      %s308 = scalar_select %p307, %s21, 3
      %p309 = scmp.lt.s32.totalorder %s23, 0
      %s310 = scalar_select %p309, %s23, 0
      %p311 = scmp.lt.s32.totalorder %s22, 0
      %s312 = scalar_select %p311, %s22, 0
      %s313 = sadd.s32 %s312, %s310
      %s314 = sadd.s32 %s313, %s308
      %s315 = smul.addr %s314, 8
      %s316 = scalar_lea.vmem %s3, %s315
      %v318 = vld [vmem:[%s279] sm:$0xf]
      %v319 = vld [vmem:[%s279 + $0x4] sm:$0xf]
      %v320 = vld [vmem:[%s279 + $0x8] sm:$0xf]
      %v321 = vld [vmem:[%s279 + $0xc] sm:$0xf]
      %v322 = vld [vmem:[%s279 + $0x10] sm:$0xf]
      %v323 = vld [vmem:[%s279 + $0x14] sm:$0xf]
      %v324 = vld [vmem:[%s279 + $0x18] sm:$0xf]
      %v325 = vld [vmem:[%s279 + $0x1c] sm:$0xf]
      %v326 = vld [vmem:[%s279 + $0x20] sm:$0xf]
      %v327 = vld [vmem:[%s279 + $0x24] sm:$0xf]
      %v328 = vld [vmem:[%s279 + $0x28] sm:$0xf]
      %v329 = vld [vmem:[%s279 + $0x2c] sm:$0xf]
      %v330 = vld [vmem:[%s279 + $0x30] sm:$0xf]
      %v331 = vld [vmem:[%s279 + $0x34] sm:$0xf]
      %v332 = vld [vmem:[%s279 + $0x38] sm:$0xf]
      %v333 = vld [vmem:[%s279 + $0x3c] sm:$0xf]
      %v334 = vld [vmem:[%s292] sm:$0xf]
      %v335 = vld [vmem:[%s292 + $0x4] sm:$0xf]
      %v336 = vld [vmem:[%s292 + $0x8] sm:$0xf]
      %v337 = vld [vmem:[%s292 + $0xc] sm:$0xf]
      %v338 = vld [vmem:[%s292 + $0x10] sm:$0xf]
      %v339 = vld [vmem:[%s292 + $0x14] sm:$0xf]
      %v340 = vld [vmem:[%s292 + $0x18] sm:$0xf]
      %v341 = vld [vmem:[%s292 + $0x1c] sm:$0xf]
      %v342 = vld [vmem:[%s292 + $0x20] sm:$0xf]
      %v343 = vld [vmem:[%s292 + $0x24] sm:$0xf]
      %v344 = vld [vmem:[%s292 + $0x28] sm:$0xf]
      %v345 = vld [vmem:[%s292 + $0x2c] sm:$0xf]
      %v346 = vld [vmem:[%s292 + $0x30] sm:$0xf]
      %v347 = vld [vmem:[%s292 + $0x34] sm:$0xf]
      %v348 = vld [vmem:[%s292 + $0x38] sm:$0xf]
      %v349 = vld [vmem:[%s292 + $0x3c] sm:$0xf]
      %v366 = vunpack.c.l.b16 %v318
      %v367 = vunpack.c.l.b16 %v319
      %v368 = vunpack.c.l.b16 %v320
      %v369 = vunpack.c.l.b16 %v321
      %v370 = vunpack.c.l.b16 %v322
      %v371 = vunpack.c.l.b16 %v323
      %v372 = vunpack.c.l.b16 %v324
      %v373 = vunpack.c.l.b16 %v325
      %v374 = vunpack.c.l.b16 %v326
      %v375 = vunpack.c.l.b16 %v327
      %v376 = vunpack.c.l.b16 %v328
      %v377 = vunpack.c.l.b16 %v329
      %v378 = vunpack.c.l.b16 %v330
      %v379 = vunpack.c.l.b16 %v331
      %v380 = vunpack.c.l.b16 %v332
      %v381 = vunpack.c.l.b16 %v333
      %v382 = vpack.c.b16 %v367, %v366
      %v383 = vpack.c.b16 %v369, %v368
      %v384 = vpack.c.b16 %v371, %v370
      %v385 = vpack.c.b16 %v373, %v372
      %v386 = vpack.c.b16 %v375, %v374
      %v387 = vpack.c.b16 %v377, %v376
      %v388 = vpack.c.b16 %v379, %v378
      %v389 = vpack.c.b16 %v381, %v380
      %v414 = vunpack.c.l.b16 %v334
      %v415 = vunpack.c.l.b16 %v335
      %v416 = vunpack.c.l.b16 %v336
      %v417 = vunpack.c.l.b16 %v337
      %v418 = vunpack.c.l.b16 %v338
      %v419 = vunpack.c.l.b16 %v339
      %v420 = vunpack.c.l.b16 %v340
      %v421 = vunpack.c.l.b16 %v341
      %v422 = vunpack.c.l.b16 %v342
      %v423 = vunpack.c.l.b16 %v343
      %v424 = vunpack.c.l.b16 %v344
      %v425 = vunpack.c.l.b16 %v345
      %v426 = vunpack.c.l.b16 %v346
      %v427 = vunpack.c.l.b16 %v347
      %v428 = vunpack.c.l.b16 %v348
      %v429 = vunpack.c.l.b16 %v349
      %v430 = vpack.c.b16 %v415, %v414
      %v431 = vpack.c.b16 %v417, %v416
      %v432 = vpack.c.b16 %v419, %v418
      %v433 = vpack.c.b16 %v421, %v420
      %v434 = vpack.c.b16 %v423, %v422
      %v435 = vpack.c.b16 %v425, %v424
      %v436 = vpack.c.b16 %v427, %v426
      %v437 = vpack.c.b16 %v429, %v428
      %446 = vmatprep.subr.bf16.mxu0 0
      %447 = vmatpush1.bf16.msra.mxu0 %v430
      %448 = vmatprep.subr.bf16.mxu0 0
      %449 = vmatpush1.bf16.msra.mxu0 %v431
      %450 = vmatprep.subr.bf16.mxu0 0
      %451 = vmatpush1.bf16.msra.mxu0 %v432
      %452 = vmatprep.subr.bf16.mxu0 0
      %453 = vmatpush1.bf16.msra.mxu0 %v433
      %454 = vmatprep.subr.bf16.mxu0 0
      %455 = vmatpush1.bf16.msra.mxu0 %v434
      %456 = vmatprep.subr.bf16.mxu0 0
      %457 = vmatpush1.bf16.msra.mxu0 %v435
      %458 = vmatprep.subr.bf16.mxu0 0
      %459 = vmatpush1.bf16.msra.mxu0 %v436
      %460 = vmatprep.subr.bf16.mxu0 0
      %461 = vmatpush1.bf16.msra.mxu0 %v437
      %462 = vmatprep.subr.bf16.mxu0 0
      %463 = vmatpush1.bf16.msra.mxu0 0
      %464 = vmatprep.subr.bf16.mxu0 0
      %465 = vmatpush1.bf16.msra.mxu0 0
      %466 = vmatprep.subr.bf16.mxu0 0
      %467 = vmatpush1.bf16.msra.mxu0 0
      %468 = vmatprep.subr.bf16.mxu0 0
      %469 = vmatpush1.bf16.msra.mxu0 0
      %470 = vmatprep.subr.bf16.mxu0 0
      %471 = vmatpush1.bf16.msra.mxu0 0
      %472 = vmatprep.subr.bf16.mxu0 0
      %473 = vmatpush1.bf16.msra.mxu0 0
      %474 = vmatprep.subr.bf16.mxu0 0
      %475 = vmatpush1.bf16.msra.mxu0 0
      %476 = vmatprep.subr.bf16.mxu0 0
      %477 = vmatpush1.bf16.msra.mxu0 0
      %478 = vmatprep.mubr.bf16.mxu0 0
      %479 = vmatmul.mubr.bf16.gmra.mrb[0].mxu0 %v382
      %v480 = vpop.f32.mrb[0].mxu0
      %v481 = vadd.f32 0.0, %v480
      %v482 = vpop.f32.mrb[0].mxu0
      %v483 = vpop.f32.mrb[0].mxu0
      %v484 = vadd.f32 0.0, %v483
      %v485 = vpop.f32.mrb[0].mxu0
      %486 = vmatprep.mubr.bf16.mxu0 0
      %487 = vmatmul.mubr.bf16.gmra.mrb[0].mxu0 %v383
      %v488 = vpop.f32.mrb[0].mxu0
      %v489 = vadd.f32 0.0, %v488
      %v490 = vpop.f32.mrb[0].mxu0
      %v491 = vpop.f32.mrb[0].mxu0
      %v492 = vadd.f32 0.0, %v491
      %v493 = vpop.f32.mrb[0].mxu0
      %494 = vmatprep.mubr.bf16.mxu0 0
      %495 = vmatmul.mubr.bf16.gmra.mrb[0].mxu0 %v384
      %v496 = vpop.f32.mrb[0].mxu0
      %v497 = vadd.f32 0.0, %v496
      %v498 = vpop.f32.mrb[0].mxu0
      %v499 = vpop.f32.mrb[0].mxu0
      %v500 = vadd.f32 0.0, %v499
      %v501 = vpop.f32.mrb[0].mxu0
      %502 = vmatprep.mubr.bf16.mxu0 0
      %503 = vmatmul.mubr.bf16.gmra.mrb[0].mxu0 %v385
      %v504 = vpop.f32.mrb[0].mxu0
      %v505 = vadd.f32 0.0, %v504
      %v506 = vpop.f32.mrb[0].mxu0
      %v507 = vpop.f32.mrb[0].mxu0
      %v508 = vadd.f32 0.0, %v507
      %v509 = vpop.f32.mrb[0].mxu0
      %510 = vmatprep.mubr.bf16.mxu0 0
      %511 = vmatmul.mubr.bf16.gmra.mrb[0].mxu0 %v386
      %v512 = vpop.f32.mrb[0].mxu0
      %v513 = vadd.f32 0.0, %v512
      %v514 = vpop.f32.mrb[0].mxu0
      %v515 = vpop.f32.mrb[0].mxu0
      %v516 = vadd.f32 0.0, %v515
      %v517 = vpop.f32.mrb[0].mxu0
      %518 = vmatprep.mubr.bf16.mxu0 0
      %519 = vmatmul.mubr.bf16.gmra.mrb[0].mxu0 %v387
      %v520 = vpop.f32.mrb[0].mxu0
      %v521 = vadd.f32 0.0, %v520
      %v522 = vpop.f32.mrb[0].mxu0
      %v523 = vpop.f32.mrb[0].mxu0
      %v524 = vadd.f32 0.0, %v523
      %v525 = vpop.f32.mrb[0].mxu0
      %526 = vmatprep.mubr.bf16.mxu0 0
      %527 = vmatmul.mubr.bf16.gmra.mrb[0].mxu0 %v388
      %v528 = vpop.f32.mrb[0].mxu0
      %v529 = vadd.f32 0.0, %v528
      %v530 = vpop.f32.mrb[0].mxu0
      %v531 = vpop.f32.mrb[0].mxu0
      %v532 = vadd.f32 0.0, %v531
      %v533 = vpop.f32.mrb[0].mxu0
      %534 = vmatprep.mubr.bf16.mxu0 0
      %535 = vmatmul.mubr.bf16.gmra.mrb[0].mxu0 %v389
      %v536 = vpop.f32.mrb[0].mxu0
      %v537 = vadd.f32 0.0, %v536
      %v538 = vpop.f32.mrb[0].mxu0
      %v539 = vpop.f32.mrb[0].mxu0
      %v540 = vadd.f32 0.0, %v539
      %v541 = vpop.f32.mrb[0].mxu0
      %542 = vdwg.mxu0
      %v543 = vadd.f32 %v481, %v484
      %v544 = vadd.f32 %v543, %v489
      %v545 = vadd.f32 %v544, %v492
      %v546 = vadd.f32 %v545, %v497
      %v547 = vadd.f32 %v546, %v500
      %v548 = vadd.f32 %v547, %v505
      %v549 = vadd.f32 %v548, %v508
      %v550 = vadd.f32 %v549, %v513
      %v551 = vadd.f32 %v550, %v516
      %v552 = vadd.f32 %v551, %v521
      %v553 = vadd.f32 %v552, %v524
      %v554 = vadd.f32 %v553, %v529
      %v555 = vadd.f32 %v554, %v532
      %v556 = vadd.f32 %v555, %v537
      %v557 = vadd.f32 %v556, %v540
      %v558 = vrot.slane %v557, 4
      %v559 = vadd.f32 %v557, %v558
      %v560 = vrot.slane %v559, 2
      %v561 = vadd.f32 %v559, %v560
      %v562 = vrot.slane %v561, 1
      %v563 = vadd.f32 %v561, %v562
      %v564 = vmul.f32 %v481, %v481
      %v565 = vmul.f32 %v484, %v484
      %v566 = vmul.f32 %v489, %v489
      %v567 = vmul.f32 %v492, %v492
      %v568 = vmul.f32 %v497, %v497
      %v569 = vmul.f32 %v500, %v500
      %v570 = vmul.f32 %v505, %v505
      %v571 = vmul.f32 %v508, %v508
      %v572 = vmul.f32 %v513, %v513
      %v573 = vmul.f32 %v516, %v516
      %v574 = vmul.f32 %v521, %v521
      %v575 = vmul.f32 %v524, %v524
      %v576 = vmul.f32 %v529, %v529
      %v577 = vmul.f32 %v532, %v532
      %v578 = vmul.f32 %v537, %v537
      %v579 = vmul.f32 %v540, %v540
      %v580 = vadd.f32 %v564, %v565
      %v581 = vadd.f32 %v580, %v566
      %v582 = vadd.f32 %v581, %v567
      %v583 = vadd.f32 %v582, %v568
      %v584 = vadd.f32 %v583, %v569
      %v585 = vadd.f32 %v584, %v570
      %v586 = vadd.f32 %v585, %v571
      %v587 = vadd.f32 %v586, %v572
      %v588 = vadd.f32 %v587, %v573
      %v589 = vadd.f32 %v588, %v574
      %v590 = vadd.f32 %v589, %v575
      %v591 = vadd.f32 %v590, %v576
      %v592 = vadd.f32 %v591, %v577
      %v593 = vadd.f32 %v592, %v578
      %v594 = vadd.f32 %v593, %v579
      %v595 = vrot.slane %v594, 4
      %v596 = vadd.f32 %v594, %v595
      %v597 = vrot.slane %v596, 2
      %v598 = vadd.f32 %v596, %v597
      %v599 = vrot.slane %v598, 1
      %v600 = vadd.f32 %v598, %v599
      %v601 = vlaneseq
      %v602 = vshrl.u32 %v601, 7
      %vm603 = vcmp.eq.s32.totalorder %v602, 0
      %vm604 = vcmp.eq.s32.totalorder %v602, 1
      %v605 = vsel %vm604, %v600, 0.0
      %v606 = vsel %vm603, %v563, %v605
      %607 = vst [vmem:[%s316] sm:$0xff] %v606
      %608 = vst [vmem:[%s305] sm:$0xff] %v481
      %609 = vst [vmem:[%s305 + $0x8] sm:$0xff] %v484
      %610 = vst [vmem:[%s305 + $0x10] sm:$0xff] %v489
      %611 = vst [vmem:[%s305 + $0x18] sm:$0xff] %v492
      %612 = vst [vmem:[%s305 + $0x20] sm:$0xff] %v497
      %613 = vst [vmem:[%s305 + $0x28] sm:$0xff] %v500
      %614 = vst [vmem:[%s305 + $0x30] sm:$0xff] %v505
      %615 = vst [vmem:[%s305 + $0x38] sm:$0xff] %v508
      %616 = vst [vmem:[%s305 + $0x40] sm:$0xff] %v513
      %617 = vst [vmem:[%s305 + $0x48] sm:$0xff] %v516
      %618 = vst [vmem:[%s305 + $0x50] sm:$0xff] %v521
      %619 = vst [vmem:[%s305 + $0x58] sm:$0xff] %v524
      %620 = vst [vmem:[%s305 + $0x60] sm:$0xff] %v529
      %621 = vst [vmem:[%s305 + $0x68] sm:$0xff] %v532
      %622 = vst [vmem:[%s305 + $0x70] sm:$0xff] %v537
      %623 = vst [vmem:[%s305 + $0x78] sm:$0xff] %v540
      %s624 = smul.u32 16, %s23
      %p625 = scmp.lt.s32.totalorder %s21, 3
      %s626 = scalar_select %p625, %s21, 3
      %p627 = scmp.lt.s32.totalorder %s624, 15
      %s628 = scalar_select %p627, %s624, 15
      %p629 = scmp.lt.s32.totalorder %s22, 0
      %s630 = scalar_select %p629, %s22, 0
      %s631 = sadd.s32 %s630, %s628
      %s632 = smul.addr %s626, 16
      %s633 = sadd.s32 %s631, %s632
      %s634 = smul.addr %s633, 8
      %s635 = scalar_lea.vmem %s2, %s634
      %p636 = scmp.lt.s32.totalorder %s21, 3
      %s637 = scalar_select %p636, %s21, 3
      %p638 = scmp.lt.s32.totalorder %s23, 0
      %s639 = scalar_select %p638, %s23, 0
      %p640 = scmp.lt.s32.totalorder %s22, 0
      %s641 = scalar_select %p640, %s22, 0
      %s642 = sadd.s32 %s641, %s639
      %s643 = sadd.s32 %s642, %s637
      %s644 = smul.addr %s643, 8
      %s645 = scalar_lea.vmem %s3, %s644
      // Predicated region
      $region29: #{generator_forward.13} parent=27 // pred_check
        %p646 = pneg %p123
      $region30: #{generator_forward.13} parent=27 // pred_check_branch
        %648 = sbr.rel (%p646) target = $region32
      $region31: #{generator_forward.13} parent=27 // pred_region
        %s649 = smul.u32 16, %s23
      $region32: #{generator_forward.13} parent=27 // pred_fallthru
        _
      // Predicated region
      $region33: #{generator_forward.13} parent=27 // pred_check
        %p650 = pneg %p153
      $region34: #{generator_forward.13} parent=27 // pred_check_branch
        %652 = sbr.rel (%p650) target = $region36
      $region35: #{generator_forward.13} parent=27 // pred_region
        _
      $region36: #{generator_forward.13} parent=27 // pred_fallthru
        _
    $region28: #{generator_forward.13} parent=5 // pred_fallthru
      _
    %p653 = scmp.le.s32.totalorder 2, %s10
    // Predicated region
    $region37: #{generator_forward.13} parent=5 // pred_check
      %p654 = pneg %p653
    $region38: #{generator_forward.13} parent=5 // pred_check_branch
      %656 = sbr.rel (%p654) target = $region40
    $region39: #{generator_forward.13} parent=5 // pred_region
      %s657 = ssub.s32 %s10, 2
      // Predicated region
      $region41: #{generator_forward.13} parent=39 // pred_check
        %p658 = pneg %p129
      $region42: #{generator_forward.13} parent=39 // pred_check_branch
        %660 = sbr.rel (%p658) target = $region44
      $region43: #{generator_forward.13} parent=39 // pred_region
        %s661 = smul.u32 16, %s27
        %p662 = scmp.lt.s32.totalorder %s25, 3
        %s663 = scalar_select %p662, %s25, 3
        %p664 = scmp.lt.s32.totalorder %s661, 15
        %s665 = scalar_select %p664, %s661, 15
        %p666 = scmp.lt.s32.totalorder %s26, 0
        %s667 = scalar_select %p666, %s26, 0
        %s668 = sadd.s32 %s667, %s665
        %s669 = smul.addr %s663, 16
        %s670 = sadd.s32 %s668, %s669
        %s671 = smul.addr %s670, 8
        %s672 = scalar_lea.vmem %s2, %s671
      $region44: #{generator_forward.13} parent=39 // pred_fallthru
        _
      // Predicated region
      $region45: #{generator_forward.13} parent=39 // pred_check
        %p673 = pneg %p159
      $region46: #{generator_forward.13} parent=39 // pred_check_branch
        %675 = sbr.rel (%p673) target = $region48
      $region47: #{generator_forward.13} parent=39 // pred_region
        %p676 = scmp.lt.s32.totalorder %s25, 3
        %s677 = scalar_select %p676, %s25, 3
        %p678 = scmp.lt.s32.totalorder %s27, 0
        %s679 = scalar_select %p678, %s27, 0
        %p680 = scmp.lt.s32.totalorder %s26, 0
        %s681 = scalar_select %p680, %s26, 0
        %s682 = sadd.s32 %s681, %s679
        %s683 = sadd.s32 %s682, %s677
        %s684 = smul.addr %s683, 8
        %s685 = scalar_lea.vmem %s3, %s684
      $region48: #{generator_forward.13} parent=39 // pred_fallthru
        _
    $region40: #{generator_forward.13} parent=5 // pred_fallthru
      _
  $region6: #{generator_forward.13} parent=0 // loop_footer
    %s14 = sadd.s32 1, %s10
  $region7: #{generator_forward.13} parent=0 // loop_footer_branch
    %9 = sbr.rel target = $region3
  $region8: #{generator_forward.13} parent=0 // loop_exit
    _

// kernel: generator_forward.14
$region0: #{generator_forward.14}
  #allocation0 [shape = 'u32[]', space=smem, size = 0x4, offset = 0x4, fixed_abs, tag = 'smem constant byte address 0x4 - core index']
  #allocation1 [shape = 'u32[144,128]{1,0:T(1,128)}', space=vmem, size = 0x12000, scoped, tag = 'internal scratch']
  %s0 = inlined_call_operand.vmem [shape: f32[128,512], index: 0, kind: input, shape index: {}]
  %s1 = inlined_call_operand.vmem [shape: f32[1,512], index: 1, kind: input, shape index: {}]
  %s2 = inlined_call_operand.vmem [shape: f32[1,512], index: 2, kind: input, shape index: {}]
  %s3 = inlined_call_operand.vmem [shape: bf16[128,512], index: 3, kind: output, shape index: {}]
  %s4 = sld [smem:[#allocation0]]
  $region22: #{generator_forward.14} parent=0
    _
  %s6 = ssub.s32 1, %s4
  %s7 = scalar_select 0, %s6, %s4
  // Predicated region
  $region2: #{generator_forward.14} parent=0 // pred_check
    _
  $region3: #{generator_forward.14} parent=0 // pred_check_branch
    %9 = sbr.rel (0) target = $region5
  $region4: #{generator_forward.14} parent=0 // pred_region
    _
  $region5: #{generator_forward.14} parent=0 // pred_fallthru
    _
  // Predicated region
  $region6: #{generator_forward.14} parent=0 // pred_check
    _
  $region7: #{generator_forward.14} parent=0 // pred_check_branch
    %11 = sbr.rel (0) target = $region9
  $region8: #{generator_forward.14} parent=0 // pred_region
    _
  $region9: #{generator_forward.14} parent=0 // pred_fallthru
    _
  // Predicated region
  $region10: #{generator_forward.14} parent=0 // pred_check
    _
  $region11: #{generator_forward.14} parent=0 // pred_check_branch
    %13 = sbr.rel (0) target = $region13
  $region12: #{generator_forward.14} parent=0 // pred_region
    _
  $region13: #{generator_forward.14} parent=0 // pred_fallthru
    _
  %v14 = vld [vmem:[%s0] sm:$0xff]
  %v15 = vld [vmem:[%s0 + $0x8] sm:$0xff]
  %v16 = vld [vmem:[%s0 + $0x10] sm:$0xff]
  %v17 = vld [vmem:[%s0 + $0x18] sm:$0xff]
  %v18 = vld [vmem:[%s0 + $0x20] sm:$0xff]
  %v19 = vld [vmem:[%s0 + $0x28] sm:$0xff]
  %v20 = vld [vmem:[%s0 + $0x30] sm:$0xff]
  %v21 = vld [vmem:[%s0 + $0x38] sm:$0xff]
  %v22 = vld [vmem:[%s0 + $0x40] sm:$0xff]
  %v23 = vld [vmem:[%s0 + $0x48] sm:$0xff]
  %v24 = vld [vmem:[%s0 + $0x50] sm:$0xff]
  %v25 = vld [vmem:[%s0 + $0x58] sm:$0xff]
  %v26 = vld [vmem:[%s0 + $0x60] sm:$0xff]
  %v27 = vld [vmem:[%s0 + $0x68] sm:$0xff]
  %v28 = vld [vmem:[%s0 + $0x70] sm:$0xff]
  %v29 = vld [vmem:[%s0 + $0x78] sm:$0xff]
  %v30 = vld [vmem:[%s0 + $0x80] sm:$0xff]
  %v31 = vld [vmem:[%s0 + $0x88] sm:$0xff]
  %v32 = vld [vmem:[%s0 + $0x90] sm:$0xff]
  %v33 = vld [vmem:[%s0 + $0x98] sm:$0xff]
  %v34 = vld [vmem:[%s0 + $0xa0] sm:$0xff]
  %v35 = vld [vmem:[%s0 + $0xa8] sm:$0xff]
  %v36 = vld [vmem:[%s0 + $0xb0] sm:$0xff]
  %v37 = vld [vmem:[%s0 + $0xb8] sm:$0xff]
  %v38 = vld [vmem:[%s0 + $0xc0] sm:$0xff]
  %v39 = vld [vmem:[%s0 + $0xc8] sm:$0xff]
  %v40 = vld [vmem:[%s0 + $0xd0] sm:$0xff]
  %v41 = vld [vmem:[%s0 + $0xd8] sm:$0xff]
  %v42 = vld [vmem:[%s0 + $0xe0] sm:$0xff]
  %v43 = vld [vmem:[%s0 + $0xe8] sm:$0xff]
  %v44 = vld [vmem:[%s0 + $0xf0] sm:$0xff]
  %v45 = vld [vmem:[%s0 + $0xf8] sm:$0xff]
  %v46 = vld [vmem:[%s0 + $0x100] sm:$0xff]
  %v47 = vld [vmem:[%s0 + $0x108] sm:$0xff]
  %v48 = vld [vmem:[%s0 + $0x110] sm:$0xff]
  %v49 = vld [vmem:[%s0 + $0x118] sm:$0xff]
  %v50 = vld [vmem:[%s0 + $0x120] sm:$0xff]
  %v51 = vld [vmem:[%s0 + $0x128] sm:$0xff]
  %v52 = vld [vmem:[%s0 + $0x130] sm:$0xff]
  %v53 = vld [vmem:[%s0 + $0x138] sm:$0xff]
  %v54 = vld [vmem:[%s0 + $0x140] sm:$0xff]
  %v55 = vld [vmem:[%s0 + $0x148] sm:$0xff]
  %v56 = vld [vmem:[%s0 + $0x150] sm:$0xff]
  %v57 = vld [vmem:[%s0 + $0x158] sm:$0xff]
  %v58 = vld [vmem:[%s0 + $0x160] sm:$0xff]
  %v59 = vld [vmem:[%s0 + $0x168] sm:$0xff]
  %v60 = vld [vmem:[%s0 + $0x170] sm:$0xff]
  %v61 = vld [vmem:[%s0 + $0x178] sm:$0xff]
  %v62 = vld [vmem:[%s0 + $0x180] sm:$0xff]
  %v63 = vld [vmem:[%s0 + $0x188] sm:$0xff]
  %v64 = vld [vmem:[%s0 + $0x190] sm:$0xff]
  %v65 = vld [vmem:[%s0 + $0x198] sm:$0xff]
  %v66 = vld [vmem:[%s0 + $0x1a0] sm:$0xff]
  %v67 = vld [vmem:[%s0 + $0x1a8] sm:$0xff]
  %v68 = vld [vmem:[%s0 + $0x1b0] sm:$0xff]
  %v69 = vld [vmem:[%s0 + $0x1b8] sm:$0xff]
  %v70 = vld [vmem:[%s0 + $0x1c0] sm:$0xff]
  %v71 = vld [vmem:[%s0 + $0x1c8] sm:$0xff]
  %v72 = vld [vmem:[%s0 + $0x1d0] sm:$0xff]
  %v73 = vld [vmem:[%s0 + $0x1d8] sm:$0xff]
  %v74 = vld [vmem:[%s0 + $0x1e0] sm:$0xff]
  %v75 = vld [vmem:[%s0 + $0x1e8] sm:$0xff]
  %v76 = vld [vmem:[%s0 + $0x1f0] sm:$0xff]
  %v77 = vld [vmem:[%s0 + $0x1f8] sm:$0xff]
  %v78 = vld [vmem:[%s1] sm:$0xf]
  %v80 = vlaneseq
  %v81 = vshrl.u32 %v80, 7
  %v82 = vsub.s32 0, %v81
  %v83 = vrot.slane %v78, %v82
  %v84 = vlaneseq
  %v85 = vshrl.u32 %v84, 7
  %v86 = vsub.s32 1, %v85
  %v87 = vrot.slane %v78, %v86
  %v88 = vlaneseq
  %v89 = vshrl.u32 %v88, 7
  %v90 = vsub.s32 2, %v89
  %v91 = vrot.slane %v78, %v90
  %v92 = vlaneseq
  %v93 = vshrl.u32 %v92, 7
  %v94 = vsub.s32 3, %v93
  %v95 = vrot.slane %v78, %v94
  %v100 = vmul.f32 %v14, %v83
  %v101 = vmul.f32 %v15, %v87
  %v102 = vmul.f32 %v16, %v91
  %v103 = vmul.f32 %v17, %v95
  %v104 = vmul.f32 %v18, %v83
  %v105 = vmul.f32 %v19, %v87
  %v106 = vmul.f32 %v20, %v91
  %v107 = vmul.f32 %v21, %v95
  %v108 = vmul.f32 %v22, %v83
  %v109 = vmul.f32 %v23, %v87
  %v110 = vmul.f32 %v24, %v91
  %v111 = vmul.f32 %v25, %v95
  %v112 = vmul.f32 %v26, %v83
  %v113 = vmul.f32 %v27, %v87
  %v114 = vmul.f32 %v28, %v91
  %v115 = vmul.f32 %v29, %v95
  %v116 = vmul.f32 %v30, %v83
  %v117 = vmul.f32 %v31, %v87
  %v118 = vmul.f32 %v32, %v91
  %v119 = vmul.f32 %v33, %v95
  %v120 = vmul.f32 %v34, %v83
  %v121 = vmul.f32 %v35, %v87
  %v122 = vmul.f32 %v36, %v91
  %v123 = vmul.f32 %v37, %v95
  %v124 = vmul.f32 %v38, %v83
  %v125 = vmul.f32 %v39, %v87
  %v126 = vmul.f32 %v40, %v91
  %v127 = vmul.f32 %v41, %v95
  %v128 = vmul.f32 %v42, %v83
  %v129 = vmul.f32 %v43, %v87
  %v130 = vmul.f32 %v44, %v91
  %v131 = vmul.f32 %v45, %v95
  %v132 = vmul.f32 %v46, %v83
  %v133 = vmul.f32 %v47, %v87
  %v134 = vmul.f32 %v48, %v91
  %v135 = vmul.f32 %v49, %v95
  %v136 = vmul.f32 %v50, %v83
  %v137 = vmul.f32 %v51, %v87
  %v138 = vmul.f32 %v52, %v91
  %v139 = vmul.f32 %v53, %v95
  %v140 = vmul.f32 %v54, %v83
  %v141 = vmul.f32 %v55, %v87
  %v142 = vmul.f32 %v56, %v91
  %v143 = vmul.f32 %v57, %v95
  %v144 = vmul.f32 %v58, %v83
  %v145 = vmul.f32 %v59, %v87
  %v146 = vmul.f32 %v60, %v91
  %v147 = vmul.f32 %v61, %v95
  %v148 = vmul.f32 %v62, %v83
  %v149 = vmul.f32 %v63, %v87
  %v150 = vmul.f32 %v64, %v91
  %v151 = vmul.f32 %v65, %v95
  %v152 = vmul.f32 %v66, %v83
  %v153 = vmul.f32 %v67, %v87
  %v154 = vmul.f32 %v68, %v91
  %v155 = vmul.f32 %v69, %v95
  %v156 = vmul.f32 %v70, %v83
  %v157 = vmul.f32 %v71, %v87
  %v158 = vmul.f32 %v72, %v91
  %v159 = vmul.f32 %v73, %v95
  %v160 = vmul.f32 %v74, %v83
  %v161 = vmul.f32 %v75, %v87
  %v162 = vmul.f32 %v76, %v91
  %v163 = vmul.f32 %v77, %v95
  %v164 = vld [vmem:[%s2] sm:$0xf]
  %v166 = vlaneseq
  %v167 = vshrl.u32 %v166, 7
  %v168 = vsub.s32 0, %v167
  %v169 = vrot.slane %v164, %v168
  %v170 = vlaneseq
  %v171 = vshrl.u32 %v170, 7
  %v172 = vsub.s32 1, %v171
  %v173 = vrot.slane %v164, %v172
  %v174 = vlaneseq
  %v175 = vshrl.u32 %v174, 7
  %v176 = vsub.s32 2, %v175
  %v177 = vrot.slane %v164, %v176
  %v178 = vlaneseq
  %v179 = vshrl.u32 %v178, 7
  %v180 = vsub.s32 3, %v179
  %v181 = vrot.slane %v164, %v180
  %v186 = vadd.f32 %v100, %v169
  %v187 = vadd.f32 %v101, %v173
  %v188 = vadd.f32 %v102, %v177
  %v189 = vadd.f32 %v103, %v181
  %v190 = vadd.f32 %v104, %v169
  %v191 = vadd.f32 %v105, %v173
  %v192 = vadd.f32 %v106, %v177
  %v193 = vadd.f32 %v107, %v181
  %v194 = vadd.f32 %v108, %v169
  %v195 = vadd.f32 %v109, %v173
  %v196 = vadd.f32 %v110, %v177
  %v197 = vadd.f32 %v111, %v181
  %v198 = vadd.f32 %v112, %v169
  %v199 = vadd.f32 %v113, %v173
  %v200 = vadd.f32 %v114, %v177
  %v201 = vadd.f32 %v115, %v181
  %v202 = vadd.f32 %v116, %v169
  %v203 = vadd.f32 %v117, %v173
  %v204 = vadd.f32 %v118, %v177
  %v205 = vadd.f32 %v119, %v181
  %v206 = vadd.f32 %v120, %v169
  %v207 = vadd.f32 %v121, %v173
  %v208 = vadd.f32 %v122, %v177
  %v209 = vadd.f32 %v123, %v181
  %v210 = vadd.f32 %v124, %v169
  %v211 = vadd.f32 %v125, %v173
  %v212 = vadd.f32 %v126, %v177
  %v213 = vadd.f32 %v127, %v181
  %v214 = vadd.f32 %v128, %v169
  %v215 = vadd.f32 %v129, %v173
  %v216 = vadd.f32 %v130, %v177
  %v217 = vadd.f32 %v131, %v181
  %v218 = vadd.f32 %v132, %v169
  %v219 = vadd.f32 %v133, %v173
  %v220 = vadd.f32 %v134, %v177
  %v221 = vadd.f32 %v135, %v181
  %v222 = vadd.f32 %v136, %v169
  %v223 = vadd.f32 %v137, %v173
  %v224 = vadd.f32 %v138, %v177
  %v225 = vadd.f32 %v139, %v181
  %v226 = vadd.f32 %v140, %v169
  %v227 = vadd.f32 %v141, %v173
  %v228 = vadd.f32 %v142, %v177
  %v229 = vadd.f32 %v143, %v181
  %v230 = vadd.f32 %v144, %v169
  %v231 = vadd.f32 %v145, %v173
  %v232 = vadd.f32 %v146, %v177
  %v233 = vadd.f32 %v147, %v181
  %v234 = vadd.f32 %v148, %v169
  %v235 = vadd.f32 %v149, %v173
  %v236 = vadd.f32 %v150, %v177
  %v237 = vadd.f32 %v151, %v181
  %v238 = vadd.f32 %v152, %v169
  %v239 = vadd.f32 %v153, %v173
  %v240 = vadd.f32 %v154, %v177
  %v241 = vadd.f32 %v155, %v181
  %v242 = vadd.f32 %v156, %v169
  %v243 = vadd.f32 %v157, %v173
  %v244 = vadd.f32 %v158, %v177
  %v245 = vadd.f32 %v159, %v181
  %v246 = vadd.f32 %v160, %v169
  %v247 = vadd.f32 %v161, %v173
  %v248 = vadd.f32 %v162, %v177
  %v249 = vadd.f32 %v163, %v181
  %v250 = vmax.f32 %v186, 0.0
  %v251 = vmax.f32 %v187, 0.0
  %v252 = vmax.f32 %v188, 0.0
  %v253 = vmax.f32 %v189, 0.0
  %v254 = vmax.f32 %v190, 0.0
  %v255 = vmax.f32 %v191, 0.0
  %v256 = vmax.f32 %v192, 0.0
  %v257 = vmax.f32 %v193, 0.0
  %v258 = vmax.f32 %v194, 0.0
  %v259 = vmax.f32 %v195, 0.0
  %v260 = vmax.f32 %v196, 0.0
  %v261 = vmax.f32 %v197, 0.0
  %v262 = vmax.f32 %v198, 0.0
  %v263 = vmax.f32 %v199, 0.0
  %v264 = vmax.f32 %v200, 0.0
  %v265 = vmax.f32 %v201, 0.0
  %v266 = vmax.f32 %v202, 0.0
  %v267 = vmax.f32 %v203, 0.0
  %v268 = vmax.f32 %v204, 0.0
  %v269 = vmax.f32 %v205, 0.0
  %v270 = vmax.f32 %v206, 0.0
  %v271 = vmax.f32 %v207, 0.0
  %v272 = vmax.f32 %v208, 0.0
  %v273 = vmax.f32 %v209, 0.0
  %v274 = vmax.f32 %v210, 0.0
  %v275 = vmax.f32 %v211, 0.0
  %v276 = vmax.f32 %v212, 0.0
  %v277 = vmax.f32 %v213, 0.0
  %v278 = vmax.f32 %v214, 0.0
  %v279 = vmax.f32 %v215, 0.0
  %v280 = vmax.f32 %v216, 0.0
  %v281 = vmax.f32 %v217, 0.0
  %v282 = vmax.f32 %v218, 0.0
  %v283 = vmax.f32 %v219, 0.0
  %v284 = vmax.f32 %v220, 0.0
  %v285 = vmax.f32 %v221, 0.0
  %v286 = vmax.f32 %v222, 0.0
  %v287 = vmax.f32 %v223, 0.0
  %v288 = vmax.f32 %v224, 0.0
  %v289 = vmax.f32 %v225, 0.0
  %v290 = vmax.f32 %v226, 0.0
  %v291 = vmax.f32 %v227, 0.0
  %v292 = vmax.f32 %v228, 0.0
  %v293 = vmax.f32 %v229, 0.0
  %v294 = vmax.f32 %v230, 0.0
  %v295 = vmax.f32 %v231, 0.0
  %v296 = vmax.f32 %v232, 0.0
  %v297 = vmax.f32 %v233, 0.0
  %v298 = vmax.f32 %v234, 0.0
  %v299 = vmax.f32 %v235, 0.0
  %v300 = vmax.f32 %v236, 0.0
  %v301 = vmax.f32 %v237, 0.0
  %v302 = vmax.f32 %v238, 0.0
  %v303 = vmax.f32 %v239, 0.0
  %v304 = vmax.f32 %v240, 0.0
  %v305 = vmax.f32 %v241, 0.0
  %v306 = vmax.f32 %v242, 0.0
  %v307 = vmax.f32 %v243, 0.0
  %v308 = vmax.f32 %v244, 0.0
  %v309 = vmax.f32 %v245, 0.0
  %v310 = vmax.f32 %v246, 0.0
  %v311 = vmax.f32 %v247, 0.0
  %v312 = vmax.f32 %v248, 0.0
  %v313 = vmax.f32 %v249, 0.0
  %v314 = vpack.c.bf16 %v254, %v250
  %v315 = vpack.c.bf16 %v255, %v251
  %v316 = vpack.c.bf16 %v256, %v252
  %v317 = vpack.c.bf16 %v257, %v253
  %v318 = vpack.c.bf16 %v262, %v258
  %v319 = vpack.c.bf16 %v263, %v259
  %v320 = vpack.c.bf16 %v264, %v260
  %v321 = vpack.c.bf16 %v265, %v261
  %v322 = vpack.c.bf16 %v270, %v266
  %v323 = vpack.c.bf16 %v271, %v267
  %v324 = vpack.c.bf16 %v272, %v268
  %v325 = vpack.c.bf16 %v273, %v269
  %v326 = vpack.c.bf16 %v278, %v274
  %v327 = vpack.c.bf16 %v279, %v275
  %v328 = vpack.c.bf16 %v280, %v276
  %v329 = vpack.c.bf16 %v281, %v277
  %v330 = vpack.c.bf16 %v286, %v282
  %v331 = vpack.c.bf16 %v287, %v283
  %v332 = vpack.c.bf16 %v288, %v284
  %v333 = vpack.c.bf16 %v289, %v285
  %v334 = vpack.c.bf16 %v294, %v290
  %v335 = vpack.c.bf16 %v295, %v291
  %v336 = vpack.c.bf16 %v296, %v292
  %v337 = vpack.c.bf16 %v297, %v293
  %v338 = vpack.c.bf16 %v302, %v298
  %v339 = vpack.c.bf16 %v303, %v299
  %v340 = vpack.c.bf16 %v304, %v300
  %v341 = vpack.c.bf16 %v305, %v301
  %v342 = vpack.c.bf16 %v310, %v306
  %v343 = vpack.c.bf16 %v311, %v307
  %v344 = vpack.c.bf16 %v312, %v308
  %v345 = vpack.c.bf16 %v313, %v309
  %v378 = vunpack.c.l.b16 %v314
  %v379 = vunpack.c.l.b16 %v315
  %v380 = vunpack.c.l.b16 %v316
  %v381 = vunpack.c.l.b16 %v317
  %v382 = vunpack.c.h.b16 %v314
  %v383 = vunpack.c.h.b16 %v315
  %v384 = vunpack.c.h.b16 %v316
  %v385 = vunpack.c.h.b16 %v317
  %v386 = vunpack.c.l.b16 %v318
  %v387 = vunpack.c.l.b16 %v319
  %v388 = vunpack.c.l.b16 %v320
  %v389 = vunpack.c.l.b16 %v321
  %v390 = vunpack.c.h.b16 %v318
  %v391 = vunpack.c.h.b16 %v319
  %v392 = vunpack.c.h.b16 %v320
  %v393 = vunpack.c.h.b16 %v321
  %v394 = vunpack.c.l.b16 %v322
  %v395 = vunpack.c.l.b16 %v323
  %v396 = vunpack.c.l.b16 %v324
  %v397 = vunpack.c.l.b16 %v325
  %v398 = vunpack.c.h.b16 %v322
  %v399 = vunpack.c.h.b16 %v323
  %v400 = vunpack.c.h.b16 %v324
  %v401 = vunpack.c.h.b16 %v325
  %v402 = vunpack.c.l.b16 %v326
  %v403 = vunpack.c.l.b16 %v327
  %v404 = vunpack.c.l.b16 %v328
  %v405 = vunpack.c.l.b16 %v329
  %v406 = vunpack.c.h.b16 %v326
  %v407 = vunpack.c.h.b16 %v327
  %v408 = vunpack.c.h.b16 %v328
  %v409 = vunpack.c.h.b16 %v329
  %v410 = vunpack.c.l.b16 %v330
  %v411 = vunpack.c.l.b16 %v331
  %v412 = vunpack.c.l.b16 %v332
  %v413 = vunpack.c.l.b16 %v333
  %v414 = vunpack.c.h.b16 %v330
  %v415 = vunpack.c.h.b16 %v331
  %v416 = vunpack.c.h.b16 %v332
  %v417 = vunpack.c.h.b16 %v333
  %v418 = vunpack.c.l.b16 %v334
  %v419 = vunpack.c.l.b16 %v335
  %v420 = vunpack.c.l.b16 %v336
  %v421 = vunpack.c.l.b16 %v337
  %v422 = vunpack.c.h.b16 %v334
  %v423 = vunpack.c.h.b16 %v335
  %v424 = vunpack.c.h.b16 %v336
  %v425 = vunpack.c.h.b16 %v337
  %v426 = vunpack.c.l.b16 %v338
  %v427 = vunpack.c.l.b16 %v339
  %v428 = vunpack.c.l.b16 %v340
  %v429 = vunpack.c.l.b16 %v341
  %v430 = vunpack.c.h.b16 %v338
  %v431 = vunpack.c.h.b16 %v339
  %v432 = vunpack.c.h.b16 %v340
  %v433 = vunpack.c.h.b16 %v341
  %v434 = vunpack.c.l.b16 %v342
  %v435 = vunpack.c.l.b16 %v343
  %v436 = vunpack.c.l.b16 %v344
  %v437 = vunpack.c.l.b16 %v345
  %v438 = vunpack.c.h.b16 %v342
  %v439 = vunpack.c.h.b16 %v343
  %v440 = vunpack.c.h.b16 %v344
  %v441 = vunpack.c.h.b16 %v345
  %v442 = vpack.c.b16 %v379, %v378
  %v443 = vpack.c.b16 %v381, %v380
  %v444 = vpack.c.b16 %v383, %v382
  %v445 = vpack.c.b16 %v385, %v384
  %v446 = vpack.c.b16 %v387, %v386
  %v447 = vpack.c.b16 %v389, %v388
  %v448 = vpack.c.b16 %v391, %v390
  %v449 = vpack.c.b16 %v393, %v392
  %v450 = vpack.c.b16 %v395, %v394
  %v451 = vpack.c.b16 %v397, %v396
  %v452 = vpack.c.b16 %v399, %v398
  %v453 = vpack.c.b16 %v401, %v400
  %v454 = vpack.c.b16 %v403, %v402
  %v455 = vpack.c.b16 %v405, %v404
  %v456 = vpack.c.b16 %v407, %v406
  %v457 = vpack.c.b16 %v409, %v408
  %v458 = vpack.c.b16 %v411, %v410
  %v459 = vpack.c.b16 %v413, %v412
  %v460 = vpack.c.b16 %v415, %v414
  %v461 = vpack.c.b16 %v417, %v416
  %v462 = vpack.c.b16 %v419, %v418
  %v463 = vpack.c.b16 %v421, %v420
  %v464 = vpack.c.b16 %v423, %v422
  %v465 = vpack.c.b16 %v425, %v424
  %v466 = vpack.c.b16 %v427, %v426
  %v467 = vpack.c.b16 %v429, %v428
  %v468 = vpack.c.b16 %v431, %v430
  %v469 = vpack.c.b16 %v433, %v432
  %v470 = vpack.c.b16 %v435, %v434
  %v471 = vpack.c.b16 %v437, %v436
  %v472 = vpack.c.b16 %v439, %v438
  %v473 = vpack.c.b16 %v441, %v440
  %506 = vst [vmem:[%s3] sm:$0xff] %v442
  %507 = vst [vmem:[%s3 + $0x8] sm:$0xff] %v443
  %508 = vst [vmem:[%s3 + $0x10] sm:$0xff] %v444
  %509 = vst [vmem:[%s3 + $0x18] sm:$0xff] %v445
  %510 = vst [vmem:[%s3 + $0x20] sm:$0xff] %v446
  %511 = vst [vmem:[%s3 + $0x28] sm:$0xff] %v447
  %512 = vst [vmem:[%s3 + $0x30] sm:$0xff] %v448
  %513 = vst [vmem:[%s3 + $0x38] sm:$0xff] %v449
  %514 = vst [vmem:[%s3 + $0x40] sm:$0xff] %v450
  %515 = vst [vmem:[%s3 + $0x48] sm:$0xff] %v451
  %516 = vst [vmem:[%s3 + $0x50] sm:$0xff] %v452
  %517 = vst [vmem:[%s3 + $0x58] sm:$0xff] %v453
  %518 = vst [vmem:[%s3 + $0x60] sm:$0xff] %v454
  %519 = vst [vmem:[%s3 + $0x68] sm:$0xff] %v455
  %520 = vst [vmem:[%s3 + $0x70] sm:$0xff] %v456
  %521 = vst [vmem:[%s3 + $0x78] sm:$0xff] %v457
  %522 = vst [vmem:[%s3 + $0x80] sm:$0xff] %v458
  %523 = vst [vmem:[%s3 + $0x88] sm:$0xff] %v459
  %524 = vst [vmem:[%s3 + $0x90] sm:$0xff] %v460
  %525 = vst [vmem:[%s3 + $0x98] sm:$0xff] %v461
  %526 = vst [vmem:[%s3 + $0xa0] sm:$0xff] %v462
  %527 = vst [vmem:[%s3 + $0xa8] sm:$0xff] %v463
  %528 = vst [vmem:[%s3 + $0xb0] sm:$0xff] %v464
  %529 = vst [vmem:[%s3 + $0xb8] sm:$0xff] %v465
  %530 = vst [vmem:[%s3 + $0xc0] sm:$0xff] %v466
  %531 = vst [vmem:[%s3 + $0xc8] sm:$0xff] %v467
  %532 = vst [vmem:[%s3 + $0xd0] sm:$0xff] %v468
  %533 = vst [vmem:[%s3 + $0xd8] sm:$0xff] %v469
  %534 = vst [vmem:[%s3 + $0xe0] sm:$0xff] %v470
  %535 = vst [vmem:[%s3 + $0xe8] sm:$0xff] %v471
  %536 = vst [vmem:[%s3 + $0xf0] sm:$0xff] %v472
  %537 = vst [vmem:[%s3 + $0xf8] sm:$0xff] %v473
  // Predicated region
  $region14: #{generator_forward.14} parent=0 // pred_check
    _
  $region15: #{generator_forward.14} parent=0 // pred_check_branch
    %539 = sbr.rel (0) target = $region17
  $region16: #{generator_forward.14} parent=0 // pred_region
    _
  $region17: #{generator_forward.14} parent=0 // pred_fallthru
    _
  // Predicated region
  $region18: #{generator_forward.14} parent=0 // pred_check
    _
  $region19: #{generator_forward.14} parent=0 // pred_check_branch
    %541 = sbr.rel (0) target = $region21
  $region20: #{generator_forward.14} parent=0 // pred_region
    _
  $region21: #{generator_forward.14} parent=0 // pred_fallthru
    _

// kernel: generator_forward.15
$region0: #{generator_forward.15}
  #allocation0 [shape = 'u32[]', space=smem, size = 0x4, offset = 0x4, fixed_abs, tag = 'smem constant byte address 0x4 - core index']
  #allocation1 [shape = 'u32[144,128]{1,0:T(1,128)}', space=vmem, size = 0x12000, scoped, tag = 'internal scratch']
  %s0 = inlined_call_operand.vmem [shape: bf16[4,512,128], index: 0, kind: input, shape index: {}]
  %s1 = inlined_call_operand.vmem [shape: bf16[4,128,128], index: 1, kind: input, shape index: {}]
  %s2 = inlined_call_operand.vmem [shape: f32[4,512,128], index: 2, kind: output, shape index: {0}]
  %s3 = inlined_call_operand.vmem [shape: f32[4,16,128], index: 3, kind: output, shape index: {1}]
  %4 = xla_tuple %s2, %s3
  %s5 = sld [smem:[#allocation0]]
  $region49: #{generator_forward.15} parent=0
    _
  %s7 = ssub.s32 1, %s5
  %s8 = scalar_select 0, %s7, %s5
  loop: start=0, step=1, limit=10
  $region2: #{generator_forward.15} parent=0 // loop_pre_header
    _
  $region3: #{generator_forward.15} parent=0 // loop_header
    %s10 = sphi 0, %s14
    %p11 = scmp.ge.s32.totalorder %s10, 10
    %s17 = sphi 0, %s43
    %s18 = sphi 0, %s39
    %s19 = sphi 0, %s35
    %s20 = sphi 0, %s31
    %s21 = sphi 0, %s17
    %s22 = sphi 0, %s18
    %s23 = sphi 0, %s19
    %s24 = sphi 0, %s20
    %s25 = sphi 0, %s21
    %s26 = sphi 0, %s22
    %s27 = sphi 0, %s23
    %s28 = sphi 0, %s24
    %s50 = sphi 0, %s52
    %s53 = sphi 0, %s50
    %s54 = sphi 0, %s53
    %s70 = sphi 0, %s54
    %s80 = sphi 0, %s82
    %s83 = sphi 0, %s80
    %s84 = sphi 0, %s83
    %s100 = sphi 0, %s84
    %s110 = sphi 0, %s112
    %s113 = sphi 0, %s110
    %s114 = sphi 0, %s113
    %s130 = sphi 0, %s114
    %s140 = sphi 0, %s142
    %s143 = sphi 0, %s140
    %s144 = sphi 0, %s143
    %s160 = sphi 0, %s144
  $region4: #{generator_forward.15} parent=0 // loop_header_branch
    %13 = sbr.rel (%p11) target = $region8
  $region5: #{generator_forward.15} parent=0 // loop_body
    %s15 = ssub.s32 %s10, 1
    %s16 = ssub.s32 %s10, 2
    %s29 = sadd.s32 1, %s20
    %p30 = scmp.ge.s32.totalorder %s29, 1
    %s31 = scalar_select %p30, 0, %s29
    %s32 = sadd.s32 1, %s19
    %s33 = scalar_select %p30, %s32, %s19
    %p34 = scmp.ge.s32.totalorder %s33, 2
    %s35 = scalar_select %p34, 0, %s33
    %s36 = sadd.s32 1, %s18
    %s37 = scalar_select %p34, %s36, %s18
    %p38 = scmp.ge.s32.totalorder %s37, 1
    %s39 = scalar_select %p38, 0, %s37
    %s40 = sadd.s32 1, %s17
    %s41 = scalar_select %p38, %s40, %s17
    %p42 = scmp.ge.s32.totalorder %s41, 4
    %s43 = scalar_select %p42, 0, %s41
    %s44 = ssub.s32 %s17, %s43
    %s45 = ssub.s32 %s19, %s35
    %s46 = sor.u32 %s44, %s45
    %s47 = ssub.s32 %s20, %s31
    %s48 = sor.u32 %s46, %s47
    %p49 = scmp.eq.s32.totalorder %s48, 0
    %s51 = sadd.s32 %s50, 1
    %s52 = scalar_select %p49, %s50, %s51
    %p55 = pneg %p49
    %p56 = scmp.eq.s32.totalorder %s10, 7
    %p57 = por %p55, %p56
    %p58 = scmp.ne.s32.totalorder %s50, %s53
    %p59 = scmp.eq.s32.totalorder %s10, 0
    %p60 = por %p58, %p59
    %p61 = scmp.ne.s32.totalorder %s50, %s53
    %p62 = scmp.eq.s32.totalorder %s15, 7
    %p63 = por %p61, %p62
    %p64 = scmp.ne.s32.totalorder %s53, %s54
    %p65 = scmp.eq.s32.totalorder %s15, 0
    %p66 = por %p64, %p65
    %p67 = scmp.ne.s32.totalorder %s53, %s54
    %p68 = scmp.eq.s32.totalorder %s16, 7
    %p69 = por %p67, %p68
    %p71 = scmp.ne.s32.totalorder %s54, %s70
    %p72 = scmp.eq.s32.totalorder %s16, 0
    %p73 = por %p71, %p72
    %s74 = ssub.s32 %s17, %s43
    %s75 = ssub.s32 %s20, %s31
    %s76 = sor.u32 %s74, %s75
    %s77 = ssub.s32 %s18, %s39
    %s78 = sor.u32 %s76, %s77
    %p79 = scmp.eq.s32.totalorder %s78, 0
    %s81 = sadd.s32 %s80, 1
    %s82 = scalar_select %p79, %s80, %s81
    %p85 = pneg %p79
    %p86 = scmp.eq.s32.totalorder %s10, 7
    %p87 = por %p85, %p86
    %p88 = scmp.ne.s32.totalorder %s80, %s83
    %p89 = scmp.eq.s32.totalorder %s10, 0
    %p90 = por %p88, %p89
    %p91 = scmp.ne.s32.totalorder %s80, %s83
    %p92 = scmp.eq.s32.totalorder %s15, 7
    %p93 = por %p91, %p92
    %p94 = scmp.ne.s32.totalorder %s83, %s84
    %p95 = scmp.eq.s32.totalorder %s15, 0
    %p96 = por %p94, %p95
    %p97 = scmp.ne.s32.totalorder %s83, %s84
    %p98 = scmp.eq.s32.totalorder %s16, 7
    %p99 = por %p97, %p98
    %p101 = scmp.ne.s32.totalorder %s84, %s100
    %p102 = scmp.eq.s32.totalorder %s16, 0
    %p103 = por %p101, %p102
    %s104 = ssub.s32 %s17, %s43
    %s105 = ssub.s32 %s19, %s35
    %s106 = sor.u32 %s104, %s105
    %s107 = ssub.s32 %s18, %s39
    %s108 = sor.u32 %s106, %s107
    %p109 = scmp.eq.s32.totalorder %s108, 0
    %s111 = sadd.s32 %s110, 1
    %s112 = scalar_select %p109, %s110, %s111
    %p115 = pneg %p109
    %p116 = scmp.eq.s32.totalorder %s10, 7
    %p117 = por %p115, %p116
    %p118 = scmp.ne.s32.totalorder %s110, %s113
    %p119 = scmp.eq.s32.totalorder %s10, 0
    %p120 = por %p118, %p119
    %p121 = scmp.ne.s32.totalorder %s110, %s113
    %p122 = scmp.eq.s32.totalorder %s15, 7
    %p123 = por %p121, %p122
    %p124 = scmp.ne.s32.totalorder %s113, %s114
    %p125 = scmp.eq.s32.totalorder %s15, 0
    %p126 = por %p124, %p125
    %p127 = scmp.ne.s32.totalorder %s113, %s114
    %p128 = scmp.eq.s32.totalorder %s16, 7
    %p129 = por %p127, %p128
    %p131 = scmp.ne.s32.totalorder %s114, %s130
    %p132 = scmp.eq.s32.totalorder %s16, 0
    %p133 = por %p131, %p132
    %s134 = ssub.s32 %s17, %s43
    %s135 = ssub.s32 %s19, %s35
    %s136 = sor.u32 %s134, %s135
    %s137 = ssub.s32 %s18, %s39
    %s138 = sor.u32 %s136, %s137
    %p139 = scmp.eq.s32.totalorder %s138, 0
    %s141 = sadd.s32 %s140, 1
    %s142 = scalar_select %p139, %s140, %s141
    %p145 = pneg %p139
    %p146 = scmp.eq.s32.totalorder %s10, 7
    %p147 = por %p145, %p146
    %p148 = scmp.ne.s32.totalorder %s140, %s143
    %p149 = scmp.eq.s32.totalorder %s10, 0
    %p150 = por %p148, %p149
    %p151 = scmp.ne.s32.totalorder %s140, %s143
    %p152 = scmp.eq.s32.totalorder %s15, 7
    %p153 = por %p151, %p152
    %p154 = scmp.ne.s32.totalorder %s143, %s144
    %p155 = scmp.eq.s32.totalorder %s15, 0
    %p156 = por %p154, %p155
    %p157 = scmp.ne.s32.totalorder %s143, %s144
    %p158 = scmp.eq.s32.totalorder %s16, 7
    %p159 = por %p157, %p158
    %p161 = scmp.ne.s32.totalorder %s144, %s160
    %p162 = scmp.eq.s32.totalorder %s16, 0
    %p163 = por %p161, %p162
    %p164 = scmp.le.s32.totalorder 1, %s10
    %p165 = scmp.lt.s32.totalorder %s10, 9
    %p166 = pnand %p164, %p165
    %p167 = pneg %p166
    // Predicated region
    $region9: #{generator_forward.15} parent=5 // pred_check
      _
    $region10: #{generator_forward.15} parent=5 // pred_check_branch
      %169 = sbr.rel (%p166) target = $region12
    $region11: #{generator_forward.15} parent=5 // pred_region
      %s170 = ssub.s32 %s10, 1
    $region12: #{generator_forward.15} parent=5 // pred_fallthru
      _
    %p171 = scmp.lt.s32.totalorder %s10, 8
    // Predicated region
    $region13: #{generator_forward.15} parent=5 // pred_check
      %p172 = pneg %p171
    $region14: #{generator_forward.15} parent=5 // pred_check_branch
      %174 = sbr.rel (%p172) target = $region16
    $region15: #{generator_forward.15} parent=5 // pred_region
      // Predicated region
      $region17: #{generator_forward.15} parent=15 // pred_check
        %p175 = pneg %p60
      $region18: #{generator_forward.15} parent=15 // pred_check_branch
        %177 = sbr.rel (%p175) target = $region20
      $region19: #{generator_forward.15} parent=15 // pred_region
        %s178 = smul.u32 32, %s19
        %p179 = scmp.lt.s32.totalorder %s17, 3
        %s180 = scalar_select %p179, %s17, 3
        %p181 = scmp.lt.s32.totalorder %s178, 63
        %s182 = scalar_select %p181, %s178, 63
        %p183 = scmp.lt.s32.totalorder %s20, 0
        %s184 = scalar_select %p183, %s20, 0
        %s185 = sadd.s32 %s184, %s182
        %s186 = smul.addr %s180, 64
        %s187 = sadd.s32 %s185, %s186
        %s188 = smul.addr %s187, 4
        %s189 = scalar_lea.vmem %s0, %s188
        %s190 = smul.u32 32, %s19
      $region20: #{generator_forward.15} parent=15 // pred_fallthru
        _
      // Predicated region
      $region21: #{generator_forward.15} parent=15 // pred_check
        %p191 = pneg %p90
      $region22: #{generator_forward.15} parent=15 // pred_check_branch
        %193 = sbr.rel (%p191) target = $region24
      $region23: #{generator_forward.15} parent=15 // pred_region
        %s194 = smul.u32 16, %s20
        %p195 = scmp.lt.s32.totalorder %s17, 3
        %s196 = scalar_select %p195, %s17, 3
        %p197 = scmp.lt.s32.totalorder %s194, 15
        %s198 = scalar_select %p197, %s194, 15
        %p199 = scmp.lt.s32.totalorder %s18, 0
        %s200 = scalar_select %p199, %s18, 0
        %s201 = sadd.s32 %s200, %s198
        %s202 = smul.addr %s196, 16
        %s203 = sadd.s32 %s201, %s202
        %s204 = smul.addr %s203, 4
        %s205 = scalar_lea.vmem %s1, %s204
        %s206 = smul.u32 16, %s20
      $region24: #{generator_forward.15} parent=15 // pred_fallthru
        _
    $region16: #{generator_forward.15} parent=5 // pred_fallthru
      _
    %p207 = scmp.le.s32.totalorder 1, %s10
    %p208 = scmp.lt.s32.totalorder %s10, 9
    %p209 = pnand %p207, %p208
    %p210 = pneg %p209
    // Predicated region
    $region25: #{generator_forward.15} parent=5 // pred_check
      _
    $region26: #{generator_forward.15} parent=5 // pred_check_branch
      %212 = sbr.rel (%p209) target = $region28
    $region27: #{generator_forward.15} parent=5 // pred_region
      %s213 = ssub.s32 %s10, 1
      %s214 = smul.u32 32, %s23
      %p215 = scmp.lt.s32.totalorder %s21, 3
      %s216 = scalar_select %p215, %s21, 3
      %p217 = scmp.lt.s32.totalorder %s214, 63
      %s218 = scalar_select %p217, %s214, 63
      %p219 = scmp.lt.s32.totalorder %s24, 0
      %s220 = scalar_select %p219, %s24, 0
      %s221 = sadd.s32 %s220, %s218
      %s222 = smul.addr %s216, 64
      %s223 = sadd.s32 %s221, %s222
      %s224 = smul.addr %s223, 4
      %s225 = scalar_lea.vmem %s0, %s224
      %p226 = pneg %p66
      %p227 = pneg %p63
      %s228 = smul.u32 16, %s24
      %p229 = scmp.lt.s32.totalorder %s21, 3
      %s230 = scalar_select %p229, %s21, 3
      %p231 = scmp.lt.s32.totalorder %s228, 15
      %s232 = scalar_select %p231, %s228, 15
      %p233 = scmp.lt.s32.totalorder %s22, 0
      %s234 = scalar_select %p233, %s22, 0
      %s235 = sadd.s32 %s234, %s232
      %s236 = smul.addr %s230, 16
      %s237 = sadd.s32 %s235, %s236
      %s238 = smul.addr %s237, 4
      %s239 = scalar_lea.vmem %s1, %s238
      %p240 = pneg %p96
      %p241 = pneg %p93
      %p242 = pneg %p126
      %p243 = pneg %p123
      %s244 = smul.u32 32, %s23
      %p245 = scmp.lt.s32.totalorder %s21, 3
      %s246 = scalar_select %p245, %s21, 3
      %p247 = scmp.lt.s32.totalorder %s244, 63
      %s248 = scalar_select %p247, %s244, 63
      %p249 = scmp.lt.s32.totalorder %s22, 0
      %s250 = scalar_select %p249, %s22, 0
      %s251 = sadd.s32 %s250, %s248
      %s252 = smul.addr %s246, 64
      %s253 = sadd.s32 %s251, %s252
      %s254 = smul.addr %s253, 8
      %s255 = scalar_lea.vmem %s2, %s254
      %p256 = pneg %p156
      %p257 = pneg %p153
      %p258 = scmp.lt.s32.totalorder %s21, 3
      %s259 = scalar_select %p258, %s21, 3
      %p260 = scmp.lt.s32.totalorder %s23, 1
      %s261 = scalar_select %p260, %s23, 1
      %p262 = scmp.lt.s32.totalorder %s22, 0
      %s263 = scalar_select %p262, %s22, 0
      %s264 = sadd.s32 %s263, %s261
      %s265 = smul.addr %s259, 2
      %s266 = sadd.s32 %s264, %s265
      %s267 = smul.addr %s266, 8
      %s268 = scalar_lea.vmem %s3, %s267
      %s269 = smul.u32 32, %s23
      %p270 = scmp.lt.s32.totalorder %s21, 3
      %s271 = scalar_select %p270, %s21, 3
      %p272 = scmp.lt.s32.totalorder %s269, 63
      %s273 = scalar_select %p272, %s269, 63
      %p274 = scmp.lt.s32.totalorder %s24, 0
      %s275 = scalar_select %p274, %s24, 0
      %s276 = sadd.s32 %s275, %s273
      %s277 = smul.addr %s271, 64
      %s278 = sadd.s32 %s276, %s277
      %s279 = smul.addr %s278, 4
      %s280 = scalar_lea.vmem %s0, %s279
      %s281 = smul.u32 32, %s23
      %s282 = smul.u32 16, %s24
      %p283 = scmp.lt.s32.totalorder %s21, 3
      %s284 = scalar_select %p283, %s21, 3
      %p285 = scmp.lt.s32.totalorder %s282, 15
      %s286 = scalar_select %p285, %s282, 15
      %p287 = scmp.lt.s32.totalorder %s22, 0
      %s288 = scalar_select %p287, %s22, 0
      %s289 = sadd.s32 %s288, %s286
      %s290 = smul.addr %s284, 16
      %s291 = sadd.s32 %s289, %s290
      %s292 = smul.addr %s291, 4
      %s293 = scalar_lea.vmem %s1, %s292
      %s294 = smul.u32 16, %s24
      %s295 = smul.u32 32, %s23
      %p296 = scmp.lt.s32.totalorder %s21, 3
      %s297 = scalar_select %p296, %s21, 3
      %p298 = scmp.lt.s32.totalorder %s295, 63
      %s299 = scalar_select %p298, %s295, 63
      %p300 = scmp.lt.s32.totalorder %s22, 0
      %s301 = scalar_select %p300, %s22, 0
      %s302 = sadd.s32 %s301, %s299
      %s303 = smul.addr %s297, 64
      %s304 = sadd.s32 %s302, %s303
      %s305 = smul.addr %s304, 8
      %s306 = scalar_lea.vmem %s2, %s305
      %s307 = smul.u32 32, %s23
      %p308 = scmp.lt.s32.totalorder %s21, 3
      %s309 = scalar_select %p308, %s21, 3
      %p310 = scmp.lt.s32.totalorder %s23, 1
      %s311 = scalar_select %p310, %s23, 1
      %p312 = scmp.lt.s32.totalorder %s22, 0
      %s313 = scalar_select %p312, %s22, 0
      %s314 = sadd.s32 %s313, %s311
      %s315 = smul.addr %s309, 2
      %s316 = sadd.s32 %s314, %s315
      %s317 = smul.addr %s316, 8
      %s318 = scalar_lea.vmem %s3, %s317
      %v320 = vld [vmem:[%s280] sm:$0xf]
      %v321 = vld [vmem:[%s280 + $0x4] sm:$0xf]
      %v322 = vld [vmem:[%s280 + $0x8] sm:$0xf]
      %v323 = vld [vmem:[%s280 + $0xc] sm:$0xf]
      %v324 = vld [vmem:[%s280 + $0x10] sm:$0xf]
      %v325 = vld [vmem:[%s280 + $0x14] sm:$0xf]
      %v326 = vld [vmem:[%s280 + $0x18] sm:$0xf]
      %v327 = vld [vmem:[%s280 + $0x1c] sm:$0xf]
      %v328 = vld [vmem:[%s280 + $0x20] sm:$0xf]
      %v329 = vld [vmem:[%s280 + $0x24] sm:$0xf]
      %v330 = vld [vmem:[%s280 + $0x28] sm:$0xf]
      %v331 = vld [vmem:[%s280 + $0x2c] sm:$0xf]
      %v332 = vld [vmem:[%s280 + $0x30] sm:$0xf]
      %v333 = vld [vmem:[%s280 + $0x34] sm:$0xf]
      %v334 = vld [vmem:[%s280 + $0x38] sm:$0xf]
      %v335 = vld [vmem:[%s280 + $0x3c] sm:$0xf]
      %v336 = vld [vmem:[%s280 + $0x40] sm:$0xf]
      %v337 = vld [vmem:[%s280 + $0x44] sm:$0xf]
      %v338 = vld [vmem:[%s280 + $0x48] sm:$0xf]
      %v339 = vld [vmem:[%s280 + $0x4c] sm:$0xf]
      %v340 = vld [vmem:[%s280 + $0x50] sm:$0xf]
      %v341 = vld [vmem:[%s280 + $0x54] sm:$0xf]
      %v342 = vld [vmem:[%s280 + $0x58] sm:$0xf]
      %v343 = vld [vmem:[%s280 + $0x5c] sm:$0xf]
      %v344 = vld [vmem:[%s280 + $0x60] sm:$0xf]
      %v345 = vld [vmem:[%s280 + $0x64] sm:$0xf]
      %v346 = vld [vmem:[%s280 + $0x68] sm:$0xf]
      %v347 = vld [vmem:[%s280 + $0x6c] sm:$0xf]
      %v348 = vld [vmem:[%s280 + $0x70] sm:$0xf]
      %v349 = vld [vmem:[%s280 + $0x74] sm:$0xf]
      %v350 = vld [vmem:[%s280 + $0x78] sm:$0xf]
      %v351 = vld [vmem:[%s280 + $0x7c] sm:$0xf]
      %v352 = vld [vmem:[%s293] sm:$0xf]
      %v353 = vld [vmem:[%s293 + $0x4] sm:$0xf]
      %v354 = vld [vmem:[%s293 + $0x8] sm:$0xf]
      %v355 = vld [vmem:[%s293 + $0xc] sm:$0xf]
      %v356 = vld [vmem:[%s293 + $0x10] sm:$0xf]
      %v357 = vld [vmem:[%s293 + $0x14] sm:$0xf]
      %v358 = vld [vmem:[%s293 + $0x18] sm:$0xf]
      %v359 = vld [vmem:[%s293 + $0x1c] sm:$0xf]
      %v360 = vld [vmem:[%s293 + $0x20] sm:$0xf]
      %v361 = vld [vmem:[%s293 + $0x24] sm:$0xf]
      %v362 = vld [vmem:[%s293 + $0x28] sm:$0xf]
      %v363 = vld [vmem:[%s293 + $0x2c] sm:$0xf]
      %v364 = vld [vmem:[%s293 + $0x30] sm:$0xf]
      %v365 = vld [vmem:[%s293 + $0x34] sm:$0xf]
      %v366 = vld [vmem:[%s293 + $0x38] sm:$0xf]
      %v367 = vld [vmem:[%s293 + $0x3c] sm:$0xf]
      %v400 = vunpack.c.l.b16 %v320
      %v401 = vunpack.c.l.b16 %v321
      %v402 = vunpack.c.l.b16 %v322
      %v403 = vunpack.c.l.b16 %v323
      %v404 = vunpack.c.l.b16 %v324
      %v405 = vunpack.c.l.b16 %v325
      %v406 = vunpack.c.l.b16 %v326
      %v407 = vunpack.c.l.b16 %v327
      %v408 = vunpack.c.l.b16 %v328
      %v409 = vunpack.c.l.b16 %v329
      %v410 = vunpack.c.l.b16 %v330
      %v411 = vunpack.c.l.b16 %v331
      %v412 = vunpack.c.l.b16 %v332
      %v413 = vunpack.c.l.b16 %v333
      %v414 = vunpack.c.l.b16 %v334
      %v415 = vunpack.c.l.b16 %v335
      %v416 = vunpack.c.l.b16 %v336
      %v417 = vunpack.c.l.b16 %v337
      %v418 = vunpack.c.l.b16 %v338
      %v419 = vunpack.c.l.b16 %v339
      %v420 = vunpack.c.l.b16 %v340
      %v421 = vunpack.c.l.b16 %v341
      %v422 = vunpack.c.l.b16 %v342
      %v423 = vunpack.c.l.b16 %v343
      %v424 = vunpack.c.l.b16 %v344
      %v425 = vunpack.c.l.b16 %v345
      %v426 = vunpack.c.l.b16 %v346
      %v427 = vunpack.c.l.b16 %v347
      %v428 = vunpack.c.l.b16 %v348
      %v429 = vunpack.c.l.b16 %v349
      %v430 = vunpack.c.l.b16 %v350
      %v431 = vunpack.c.l.b16 %v351
      %v432 = vpack.c.b16 %v401, %v400
      %v433 = vpack.c.b16 %v403, %v402
      %v434 = vpack.c.b16 %v405, %v404
      %v435 = vpack.c.b16 %v407, %v406
      %v436 = vpack.c.b16 %v409, %v408
      %v437 = vpack.c.b16 %v411, %v410
      %v438 = vpack.c.b16 %v413, %v412
      %v439 = vpack.c.b16 %v415, %v414
      %v440 = vpack.c.b16 %v417, %v416
      %v441 = vpack.c.b16 %v419, %v418
      %v442 = vpack.c.b16 %v421, %v420
      %v443 = vpack.c.b16 %v423, %v422
      %v444 = vpack.c.b16 %v425, %v424
      %v445 = vpack.c.b16 %v427, %v426
      %v446 = vpack.c.b16 %v429, %v428
      %v447 = vpack.c.b16 %v431, %v430
      %v480 = vunpack.c.l.b16 %v352
      %v481 = vunpack.c.l.b16 %v353
      %v482 = vunpack.c.l.b16 %v354
      %v483 = vunpack.c.l.b16 %v355
      %v484 = vunpack.c.l.b16 %v356
      %v485 = vunpack.c.l.b16 %v357
      %v486 = vunpack.c.l.b16 %v358
      %v487 = vunpack.c.l.b16 %v359
      %v488 = vunpack.c.l.b16 %v360
      %v489 = vunpack.c.l.b16 %v361
      %v490 = vunpack.c.l.b16 %v362
      %v491 = vunpack.c.l.b16 %v363
      %v492 = vunpack.c.l.b16 %v364
      %v493 = vunpack.c.l.b16 %v365
      %v494 = vunpack.c.l.b16 %v366
      %v495 = vunpack.c.l.b16 %v367
      %v496 = vpack.c.b16 %v481, %v480
      %v497 = vpack.c.b16 %v483, %v482
      %v498 = vpack.c.b16 %v485, %v484
      %v499 = vpack.c.b16 %v487, %v486
      %v500 = vpack.c.b16 %v489, %v488
      %v501 = vpack.c.b16 %v491, %v490
      %v502 = vpack.c.b16 %v493, %v492
      %v503 = vpack.c.b16 %v495, %v494
      %512 = vmatprep.subr.bf16.mxu0 0
      %513 = vmatpush1.bf16.msra.mxu0 %v496
      %514 = vmatprep.subr.bf16.mxu0 0
      %515 = vmatpush1.bf16.msra.mxu0 %v497
      %516 = vmatprep.subr.bf16.mxu0 0
      %517 = vmatpush1.bf16.msra.mxu0 %v498
      %518 = vmatprep.subr.bf16.mxu0 0
      %519 = vmatpush1.bf16.msra.mxu0 %v499
      %520 = vmatprep.subr.bf16.mxu0 0
      %521 = vmatpush1.bf16.msra.mxu0 %v500
      %522 = vmatprep.subr.bf16.mxu0 0
      %523 = vmatpush1.bf16.msra.mxu0 %v501
      %524 = vmatprep.subr.bf16.mxu0 0
      %525 = vmatpush1.bf16.msra.mxu0 %v502
      %526 = vmatprep.subr.bf16.mxu0 0
      %527 = vmatpush1.bf16.msra.mxu0 %v503
      %528 = vmatprep.subr.bf16.mxu0 0
      %529 = vmatpush1.bf16.msra.mxu0 0
      %530 = vmatprep.subr.bf16.mxu0 0
      %531 = vmatpush1.bf16.msra.mxu0 0
      %532 = vmatprep.subr.bf16.mxu0 0
      %533 = vmatpush1.bf16.msra.mxu0 0
      %534 = vmatprep.subr.bf16.mxu0 0
      %535 = vmatpush1.bf16.msra.mxu0 0
      %536 = vmatprep.subr.bf16.mxu0 0
      %537 = vmatpush1.bf16.msra.mxu0 0
      %538 = vmatprep.subr.bf16.mxu0 0
      %539 = vmatpush1.bf16.msra.mxu0 0
      %540 = vmatprep.subr.bf16.mxu0 0
      %541 = vmatpush1.bf16.msra.mxu0 0
      %542 = vmatprep.subr.bf16.mxu0 0
      %543 = vmatpush1.bf16.msra.mxu0 0
      %544 = vmatprep.mubr.bf16.mxu0 0
      %545 = vmatmul.mubr.bf16.gmra.mrb[0].mxu0 %v432
      %v546 = vpop.f32.mrb[0].mxu0
      %v547 = vadd.f32 0.0, %v546
      %v548 = vpop.f32.mrb[0].mxu0
      %v549 = vpop.f32.mrb[0].mxu0
      %v550 = vadd.f32 0.0, %v549
      %v551 = vpop.f32.mrb[0].mxu0
      %552 = vmatprep.mubr.bf16.mxu0 0
      %553 = vmatmul.mubr.bf16.gmra.mrb[0].mxu0 %v433
      %v554 = vpop.f32.mrb[0].mxu0
      %v555 = vadd.f32 0.0, %v554
      %v556 = vpop.f32.mrb[0].mxu0
      %v557 = vpop.f32.mrb[0].mxu0
      %v558 = vadd.f32 0.0, %v557
      %v559 = vpop.f32.mrb[0].mxu0
      %560 = vmatprep.mubr.bf16.mxu0 0
      %561 = vmatmul.mubr.bf16.gmra.mrb[0].mxu0 %v434
      %v562 = vpop.f32.mrb[0].mxu0
      %v563 = vadd.f32 0.0, %v562
      %v564 = vpop.f32.mrb[0].mxu0
      %v565 = vpop.f32.mrb[0].mxu0
      %v566 = vadd.f32 0.0, %v565
      %v567 = vpop.f32.mrb[0].mxu0
      %568 = vmatprep.mubr.bf16.mxu0 0
      %569 = vmatmul.mubr.bf16.gmra.mrb[0].mxu0 %v435
      %v570 = vpop.f32.mrb[0].mxu0
      %v571 = vadd.f32 0.0, %v570
      %v572 = vpop.f32.mrb[0].mxu0
      %v573 = vpop.f32.mrb[0].mxu0
      %v574 = vadd.f32 0.0, %v573
      %v575 = vpop.f32.mrb[0].mxu0
      %576 = vmatprep.mubr.bf16.mxu0 0
      %577 = vmatmul.mubr.bf16.gmra.mrb[0].mxu0 %v436
      %v578 = vpop.f32.mrb[0].mxu0
      %v579 = vadd.f32 0.0, %v578
      %v580 = vpop.f32.mrb[0].mxu0
      %v581 = vpop.f32.mrb[0].mxu0
      %v582 = vadd.f32 0.0, %v581
      %v583 = vpop.f32.mrb[0].mxu0
      %584 = vmatprep.mubr.bf16.mxu0 0
      %585 = vmatmul.mubr.bf16.gmra.mrb[0].mxu0 %v437
      %v586 = vpop.f32.mrb[0].mxu0
      %v587 = vadd.f32 0.0, %v586
      %v588 = vpop.f32.mrb[0].mxu0
      %v589 = vpop.f32.mrb[0].mxu0
      %v590 = vadd.f32 0.0, %v589
      %v591 = vpop.f32.mrb[0].mxu0
      %592 = vmatprep.mubr.bf16.mxu0 0
      %593 = vmatmul.mubr.bf16.gmra.mrb[0].mxu0 %v438
      %v594 = vpop.f32.mrb[0].mxu0
      %v595 = vadd.f32 0.0, %v594
      %v596 = vpop.f32.mrb[0].mxu0
      %v597 = vpop.f32.mrb[0].mxu0
      %v598 = vadd.f32 0.0, %v597
      %v599 = vpop.f32.mrb[0].mxu0
      %600 = vmatprep.mubr.bf16.mxu0 0
      %601 = vmatmul.mubr.bf16.gmra.mrb[0].mxu0 %v439
      %v602 = vpop.f32.mrb[0].mxu0
      %v603 = vadd.f32 0.0, %v602
      %v604 = vpop.f32.mrb[0].mxu0
      %v605 = vpop.f32.mrb[0].mxu0
      %v606 = vadd.f32 0.0, %v605
      %v607 = vpop.f32.mrb[0].mxu0
      %608 = vmatprep.mubr.bf16.mxu0 0
      %609 = vmatmul.mubr.bf16.gmra.mrb[0].mxu0 %v440
      %v610 = vpop.f32.mrb[0].mxu0
      %v611 = vadd.f32 0.0, %v610
      %v612 = vpop.f32.mrb[0].mxu0
      %v613 = vpop.f32.mrb[0].mxu0
      %v614 = vadd.f32 0.0, %v613
      %v615 = vpop.f32.mrb[0].mxu0
      %616 = vmatprep.mubr.bf16.mxu0 0
      %617 = vmatmul.mubr.bf16.gmra.mrb[0].mxu0 %v441
      %v618 = vpop.f32.mrb[0].mxu0
      %v619 = vadd.f32 0.0, %v618
      %v620 = vpop.f32.mrb[0].mxu0
      %v621 = vpop.f32.mrb[0].mxu0
      %v622 = vadd.f32 0.0, %v621
      %v623 = vpop.f32.mrb[0].mxu0
      %624 = vmatprep.mubr.bf16.mxu0 0
      %625 = vmatmul.mubr.bf16.gmra.mrb[0].mxu0 %v442
      %v626 = vpop.f32.mrb[0].mxu0
      %v627 = vadd.f32 0.0, %v626
      %v628 = vpop.f32.mrb[0].mxu0
      %v629 = vpop.f32.mrb[0].mxu0
      %v630 = vadd.f32 0.0, %v629
      %v631 = vpop.f32.mrb[0].mxu0
      %632 = vmatprep.mubr.bf16.mxu0 0
      %633 = vmatmul.mubr.bf16.gmra.mrb[0].mxu0 %v443
      %v634 = vpop.f32.mrb[0].mxu0
      %v635 = vadd.f32 0.0, %v634
      %v636 = vpop.f32.mrb[0].mxu0
      %v637 = vpop.f32.mrb[0].mxu0
      %v638 = vadd.f32 0.0, %v637
      %v639 = vpop.f32.mrb[0].mxu0
      %640 = vmatprep.mubr.bf16.mxu0 0
      %641 = vmatmul.mubr.bf16.gmra.mrb[0].mxu0 %v444
      %v642 = vpop.f32.mrb[0].mxu0
      %v643 = vadd.f32 0.0, %v642
      %v644 = vpop.f32.mrb[0].mxu0
      %v645 = vpop.f32.mrb[0].mxu0
      %v646 = vadd.f32 0.0, %v645
      %v647 = vpop.f32.mrb[0].mxu0
      %648 = vmatprep.mubr.bf16.mxu0 0
      %649 = vmatmul.mubr.bf16.gmra.mrb[0].mxu0 %v445
      %v650 = vpop.f32.mrb[0].mxu0
      %v651 = vadd.f32 0.0, %v650
      %v652 = vpop.f32.mrb[0].mxu0
      %v653 = vpop.f32.mrb[0].mxu0
      %v654 = vadd.f32 0.0, %v653
      %v655 = vpop.f32.mrb[0].mxu0
      %656 = vmatprep.mubr.bf16.mxu0 0
      %657 = vmatmul.mubr.bf16.gmra.mrb[0].mxu0 %v446
      %v658 = vpop.f32.mrb[0].mxu0
      %v659 = vadd.f32 0.0, %v658
      %v660 = vpop.f32.mrb[0].mxu0
      %v661 = vpop.f32.mrb[0].mxu0
      %v662 = vadd.f32 0.0, %v661
      %v663 = vpop.f32.mrb[0].mxu0
      %664 = vmatprep.mubr.bf16.mxu0 0
      %665 = vmatmul.mubr.bf16.gmra.mrb[0].mxu0 %v447
      %v666 = vpop.f32.mrb[0].mxu0
      %v667 = vadd.f32 0.0, %v666
      %v668 = vpop.f32.mrb[0].mxu0
      %v669 = vpop.f32.mrb[0].mxu0
      %v670 = vadd.f32 0.0, %v669
      %v671 = vpop.f32.mrb[0].mxu0
      %672 = vdwg.mxu0
      %v673 = vadd.f32 %v547, %v550
      %v674 = vadd.f32 %v673, %v555
      %v675 = vadd.f32 %v674, %v558
      %v676 = vadd.f32 %v675, %v563
      %v677 = vadd.f32 %v676, %v566
      %v678 = vadd.f32 %v677, %v571
      %v679 = vadd.f32 %v678, %v574
      %v680 = vadd.f32 %v679, %v579
      %v681 = vadd.f32 %v680, %v582
      %v682 = vadd.f32 %v681, %v587
      %v683 = vadd.f32 %v682, %v590
      %v684 = vadd.f32 %v683, %v595
      %v685 = vadd.f32 %v684, %v598
      %v686 = vadd.f32 %v685, %v603
      %v687 = vadd.f32 %v686, %v606
      %v688 = vadd.f32 %v687, %v611
      %v689 = vadd.f32 %v688, %v614
      %v690 = vadd.f32 %v689, %v619
      %v691 = vadd.f32 %v690, %v622
      %v692 = vadd.f32 %v691, %v627
      %v693 = vadd.f32 %v692, %v630
      %v694 = vadd.f32 %v693, %v635
      %v695 = vadd.f32 %v694, %v638
      %v696 = vadd.f32 %v695, %v643
      %v697 = vadd.f32 %v696, %v646
      %v698 = vadd.f32 %v697, %v651
      %v699 = vadd.f32 %v698, %v654
      %v700 = vadd.f32 %v699, %v659
      %v701 = vadd.f32 %v700, %v662
      %v702 = vadd.f32 %v701, %v667
      %v703 = vadd.f32 %v702, %v670
      %v704 = vrot.slane %v703, 4
      %v705 = vadd.f32 %v703, %v704
      %v706 = vrot.slane %v705, 2
      %v707 = vadd.f32 %v705, %v706
      %v708 = vrot.slane %v707, 1
      %v709 = vadd.f32 %v707, %v708
      %v710 = vmul.f32 %v547, %v547
      %v711 = vmul.f32 %v550, %v550
      %v712 = vmul.f32 %v555, %v555
      %v713 = vmul.f32 %v558, %v558
      %v714 = vmul.f32 %v563, %v563
      %v715 = vmul.f32 %v566, %v566
      %v716 = vmul.f32 %v571, %v571
      %v717 = vmul.f32 %v574, %v574
      %v718 = vmul.f32 %v579, %v579
      %v719 = vmul.f32 %v582, %v582
      %v720 = vmul.f32 %v587, %v587
      %v721 = vmul.f32 %v590, %v590
      %v722 = vmul.f32 %v595, %v595
      %v723 = vmul.f32 %v598, %v598
      %v724 = vmul.f32 %v603, %v603
      %v725 = vmul.f32 %v606, %v606
      %v726 = vmul.f32 %v611, %v611
      %v727 = vmul.f32 %v614, %v614
      %v728 = vmul.f32 %v619, %v619
      %v729 = vmul.f32 %v622, %v622
      %v730 = vmul.f32 %v627, %v627
      %v731 = vmul.f32 %v630, %v630
      %v732 = vmul.f32 %v635, %v635
      %v733 = vmul.f32 %v638, %v638
      %v734 = vmul.f32 %v643, %v643
      %v735 = vmul.f32 %v646, %v646
      %v736 = vmul.f32 %v651, %v651
      %v737 = vmul.f32 %v654, %v654
      %v738 = vmul.f32 %v659, %v659
      %v739 = vmul.f32 %v662, %v662
      %v740 = vmul.f32 %v667, %v667
      %v741 = vmul.f32 %v670, %v670
      %v742 = vadd.f32 %v710, %v711
      %v743 = vadd.f32 %v742, %v712
      %v744 = vadd.f32 %v743, %v713
      %v745 = vadd.f32 %v744, %v714
      %v746 = vadd.f32 %v745, %v715
      %v747 = vadd.f32 %v746, %v716
      %v748 = vadd.f32 %v747, %v717
      %v749 = vadd.f32 %v748, %v718
      %v750 = vadd.f32 %v749, %v719
      %v751 = vadd.f32 %v750, %v720
      %v752 = vadd.f32 %v751, %v721
      %v753 = vadd.f32 %v752, %v722
      %v754 = vadd.f32 %v753, %v723
      %v755 = vadd.f32 %v754, %v724
      %v756 = vadd.f32 %v755, %v725
      %v757 = vadd.f32 %v756, %v726
      %v758 = vadd.f32 %v757, %v727
      %v759 = vadd.f32 %v758, %v728
      %v760 = vadd.f32 %v759, %v729
      %v761 = vadd.f32 %v760, %v730
      %v762 = vadd.f32 %v761, %v731
      %v763 = vadd.f32 %v762, %v732
      %v764 = vadd.f32 %v763, %v733
      %v765 = vadd.f32 %v764, %v734
      %v766 = vadd.f32 %v765, %v735
      %v767 = vadd.f32 %v766, %v736
      %v768 = vadd.f32 %v767, %v737
      %v769 = vadd.f32 %v768, %v738
      %v770 = vadd.f32 %v769, %v739
      %v771 = vadd.f32 %v770, %v740
      %v772 = vadd.f32 %v771, %v741
      %v773 = vrot.slane %v772, 4
      %v774 = vadd.f32 %v772, %v773
      %v775 = vrot.slane %v774, 2
      %v776 = vadd.f32 %v774, %v775
      %v777 = vrot.slane %v776, 1
      %v778 = vadd.f32 %v776, %v777
      %v779 = vlaneseq
      %v780 = vshrl.u32 %v779, 7
      %vm781 = vcmp.eq.s32.totalorder %v780, 0
      %vm782 = vcmp.eq.s32.totalorder %v780, 1
      %v783 = vsel %vm782, %v778, 0.0
      %v784 = vsel %vm781, %v709, %v783
      %785 = vst [vmem:[%s318] sm:$0xff] %v784
      %786 = vst [vmem:[%s306] sm:$0xff] %v547
      %787 = vst [vmem:[%s306 + $0x8] sm:$0xff] %v550
      %788 = vst [vmem:[%s306 + $0x10] sm:$0xff] %v555
      %789 = vst [vmem:[%s306 + $0x18] sm:$0xff] %v558
      %790 = vst [vmem:[%s306 + $0x20] sm:$0xff] %v563
      %791 = vst [vmem:[%s306 + $0x28] sm:$0xff] %v566
      %792 = vst [vmem:[%s306 + $0x30] sm:$0xff] %v571
      %793 = vst [vmem:[%s306 + $0x38] sm:$0xff] %v574
      %794 = vst [vmem:[%s306 + $0x40] sm:$0xff] %v579
      %795 = vst [vmem:[%s306 + $0x48] sm:$0xff] %v582
      %796 = vst [vmem:[%s306 + $0x50] sm:$0xff] %v587
      %797 = vst [vmem:[%s306 + $0x58] sm:$0xff] %v590
      %798 = vst [vmem:[%s306 + $0x60] sm:$0xff] %v595
      %799 = vst [vmem:[%s306 + $0x68] sm:$0xff] %v598
      %800 = vst [vmem:[%s306 + $0x70] sm:$0xff] %v603
      %801 = vst [vmem:[%s306 + $0x78] sm:$0xff] %v606
      %802 = vst [vmem:[%s306 + $0x80] sm:$0xff] %v611
      %803 = vst [vmem:[%s306 + $0x88] sm:$0xff] %v614
      %804 = vst [vmem:[%s306 + $0x90] sm:$0xff] %v619
      %805 = vst [vmem:[%s306 + $0x98] sm:$0xff] %v622
      %806 = vst [vmem:[%s306 + $0xa0] sm:$0xff] %v627
      %807 = vst [vmem:[%s306 + $0xa8] sm:$0xff] %v630
      %808 = vst [vmem:[%s306 + $0xb0] sm:$0xff] %v635
      %809 = vst [vmem:[%s306 + $0xb8] sm:$0xff] %v638
      %810 = vst [vmem:[%s306 + $0xc0] sm:$0xff] %v643
      %811 = vst [vmem:[%s306 + $0xc8] sm:$0xff] %v646
      %812 = vst [vmem:[%s306 + $0xd0] sm:$0xff] %v651
      %813 = vst [vmem:[%s306 + $0xd8] sm:$0xff] %v654
      %814 = vst [vmem:[%s306 + $0xe0] sm:$0xff] %v659
      %815 = vst [vmem:[%s306 + $0xe8] sm:$0xff] %v662
      %816 = vst [vmem:[%s306 + $0xf0] sm:$0xff] %v667
      %817 = vst [vmem:[%s306 + $0xf8] sm:$0xff] %v670
      %s818 = smul.u32 32, %s23
      %p819 = scmp.lt.s32.totalorder %s21, 3
      %s820 = scalar_select %p819, %s21, 3
      %p821 = scmp.lt.s32.totalorder %s818, 63
      %s822 = scalar_select %p821, %s818, 63
      %p823 = scmp.lt.s32.totalorder %s22, 0
      %s824 = scalar_select %p823, %s22, 0
      %s825 = sadd.s32 %s824, %s822
      %s826 = smul.addr %s820, 64
      %s827 = sadd.s32 %s825, %s826
      %s828 = smul.addr %s827, 8
      %s829 = scalar_lea.vmem %s2, %s828
      %p830 = scmp.lt.s32.totalorder %s21, 3
      %s831 = scalar_select %p830, %s21, 3
      %p832 = scmp.lt.s32.totalorder %s23, 1
      %s833 = scalar_select %p832, %s23, 1
      %p834 = scmp.lt.s32.totalorder %s22, 0
      %s835 = scalar_select %p834, %s22, 0
      %s836 = sadd.s32 %s835, %s833
      %s837 = smul.addr %s831, 2
      %s838 = sadd.s32 %s836, %s837
      %s839 = smul.addr %s838, 8
      %s840 = scalar_lea.vmem %s3, %s839
      // Predicated region
      $region29: #{generator_forward.15} parent=27 // pred_check
        %p841 = pneg %p123
      $region30: #{generator_forward.15} parent=27 // pred_check_branch
        %843 = sbr.rel (%p841) target = $region32
      $region31: #{generator_forward.15} parent=27 // pred_region
        %s844 = smul.u32 32, %s23
      $region32: #{generator_forward.15} parent=27 // pred_fallthru
        _
      // Predicated region
      $region33: #{generator_forward.15} parent=27 // pred_check
        %p845 = pneg %p153
      $region34: #{generator_forward.15} parent=27 // pred_check_branch
        %847 = sbr.rel (%p845) target = $region36
      $region35: #{generator_forward.15} parent=27 // pred_region
        _
      $region36: #{generator_forward.15} parent=27 // pred_fallthru
        _
    $region28: #{generator_forward.15} parent=5 // pred_fallthru
      _
    %p848 = scmp.le.s32.totalorder 2, %s10
    // Predicated region
    $region37: #{generator_forward.15} parent=5 // pred_check
      %p849 = pneg %p848
    $region38: #{generator_forward.15} parent=5 // pred_check_branch
      %851 = sbr.rel (%p849) target = $region40
    $region39: #{generator_forward.15} parent=5 // pred_region
      %s852 = ssub.s32 %s10, 2
      // Predicated region
      $region41: #{generator_forward.15} parent=39 // pred_check
        %p853 = pneg %p129
      $region42: #{generator_forward.15} parent=39 // pred_check_branch
        %855 = sbr.rel (%p853) target = $region44
      $region43: #{generator_forward.15} parent=39 // pred_region
        %s856 = smul.u32 32, %s27
        %p857 = scmp.lt.s32.totalorder %s25, 3
        %s858 = scalar_select %p857, %s25, 3
        %p859 = scmp.lt.s32.totalorder %s856, 63
        %s860 = scalar_select %p859, %s856, 63
        %p861 = scmp.lt.s32.totalorder %s26, 0
        %s862 = scalar_select %p861, %s26, 0
        %s863 = sadd.s32 %s862, %s860
        %s864 = smul.addr %s858, 64
        %s865 = sadd.s32 %s863, %s864
        %s866 = smul.addr %s865, 8
        %s867 = scalar_lea.vmem %s2, %s866
      $region44: #{generator_forward.15} parent=39 // pred_fallthru
        _
      // Predicated region
      $region45: #{generator_forward.15} parent=39 // pred_check
        %p868 = pneg %p159
      $region46: #{generator_forward.15} parent=39 // pred_check_branch
        %870 = sbr.rel (%p868) target = $region48
      $region47: #{generator_forward.15} parent=39 // pred_region
        %p871 = scmp.lt.s32.totalorder %s25, 3
        %s872 = scalar_select %p871, %s25, 3
        %p873 = scmp.lt.s32.totalorder %s27, 1
        %s874 = scalar_select %p873, %s27, 1
        %p875 = scmp.lt.s32.totalorder %s26, 0
        %s876 = scalar_select %p875, %s26, 0
        %s877 = sadd.s32 %s876, %s874
        %s878 = smul.addr %s872, 2
        %s879 = sadd.s32 %s877, %s878
        %s880 = smul.addr %s879, 8
        %s881 = scalar_lea.vmem %s3, %s880
      $region48: #{generator_forward.15} parent=39 // pred_fallthru
        _
    $region40: #{generator_forward.15} parent=5 // pred_fallthru
      _
  $region6: #{generator_forward.15} parent=0 // loop_footer
    %s14 = sadd.s32 1, %s10
  $region7: #{generator_forward.15} parent=0 // loop_footer_branch
    %9 = sbr.rel target = $region3
  $region8: #{generator_forward.15} parent=0 // loop_exit
    _

// kernel: generator_forward.16
$region0: #{generator_forward.16}
  #allocation0 [shape = 'u32[]', space=smem, size = 0x4, offset = 0x4, fixed_abs, tag = 'smem constant byte address 0x4 - core index']
  #allocation1 [shape = 'u32[144,128]{1,0:T(1,128)}', space=vmem, size = 0x12000, scoped, tag = 'internal scratch']
  %s0 = inlined_call_operand.vmem [shape: f32[512,512], index: 0, kind: input, shape index: {}]
  %s1 = inlined_call_operand.vmem [shape: f32[1,512], index: 1, kind: input, shape index: {}]
  %s2 = inlined_call_operand.vmem [shape: f32[1,512], index: 2, kind: input, shape index: {}]
  %s3 = inlined_call_operand.vmem [shape: bf16[512,512], index: 3, kind: output, shape index: {}]
  %s4 = sld [smem:[#allocation0]]
  $region22: #{generator_forward.16} parent=0
    _
  %s6 = ssub.s32 1, %s4
  %s7 = scalar_select 0, %s6, %s4
  // Predicated region
  $region2: #{generator_forward.16} parent=0 // pred_check
    _
  $region3: #{generator_forward.16} parent=0 // pred_check_branch
    %9 = sbr.rel (0) target = $region5
  $region4: #{generator_forward.16} parent=0 // pred_region
    _
  $region5: #{generator_forward.16} parent=0 // pred_fallthru
    _
  // Predicated region
  $region6: #{generator_forward.16} parent=0 // pred_check
    _
  $region7: #{generator_forward.16} parent=0 // pred_check_branch
    %11 = sbr.rel (0) target = $region9
  $region8: #{generator_forward.16} parent=0 // pred_region
    _
  $region9: #{generator_forward.16} parent=0 // pred_fallthru
    _
  // Predicated region
  $region10: #{generator_forward.16} parent=0 // pred_check
    _
  $region11: #{generator_forward.16} parent=0 // pred_check_branch
    %13 = sbr.rel (0) target = $region13
  $region12: #{generator_forward.16} parent=0 // pred_region
    _
  $region13: #{generator_forward.16} parent=0 // pred_fallthru
    _
  %v14 = vld [vmem:[%s0] sm:$0xff]
  %v15 = vld [vmem:[%s0 + $0x8] sm:$0xff]
  %v16 = vld [vmem:[%s0 + $0x10] sm:$0xff]
  %v17 = vld [vmem:[%s0 + $0x18] sm:$0xff]
  %v18 = vld [vmem:[%s0 + $0x20] sm:$0xff]
  %v19 = vld [vmem:[%s0 + $0x28] sm:$0xff]
  %v20 = vld [vmem:[%s0 + $0x30] sm:$0xff]
  %v21 = vld [vmem:[%s0 + $0x38] sm:$0xff]
  %v22 = vld [vmem:[%s0 + $0x40] sm:$0xff]
  %v23 = vld [vmem:[%s0 + $0x48] sm:$0xff]
  %v24 = vld [vmem:[%s0 + $0x50] sm:$0xff]
  %v25 = vld [vmem:[%s0 + $0x58] sm:$0xff]
  %v26 = vld [vmem:[%s0 + $0x60] sm:$0xff]
  %v27 = vld [vmem:[%s0 + $0x68] sm:$0xff]
  %v28 = vld [vmem:[%s0 + $0x70] sm:$0xff]
  %v29 = vld [vmem:[%s0 + $0x78] sm:$0xff]
  %v30 = vld [vmem:[%s0 + $0x80] sm:$0xff]
  %v31 = vld [vmem:[%s0 + $0x88] sm:$0xff]
  %v32 = vld [vmem:[%s0 + $0x90] sm:$0xff]
  %v33 = vld [vmem:[%s0 + $0x98] sm:$0xff]
  %v34 = vld [vmem:[%s0 + $0xa0] sm:$0xff]
  %v35 = vld [vmem:[%s0 + $0xa8] sm:$0xff]
  %v36 = vld [vmem:[%s0 + $0xb0] sm:$0xff]
  %v37 = vld [vmem:[%s0 + $0xb8] sm:$0xff]
  %v38 = vld [vmem:[%s0 + $0xc0] sm:$0xff]
  %v39 = vld [vmem:[%s0 + $0xc8] sm:$0xff]
  %v40 = vld [vmem:[%s0 + $0xd0] sm:$0xff]
  %v41 = vld [vmem:[%s0 + $0xd8] sm:$0xff]
  %v42 = vld [vmem:[%s0 + $0xe0] sm:$0xff]
  %v43 = vld [vmem:[%s0 + $0xe8] sm:$0xff]
  %v44 = vld [vmem:[%s0 + $0xf0] sm:$0xff]
  %v45 = vld [vmem:[%s0 + $0xf8] sm:$0xff]
  %v46 = vld [vmem:[%s0 + $0x100] sm:$0xff]
  %v47 = vld [vmem:[%s0 + $0x108] sm:$0xff]
  %v48 = vld [vmem:[%s0 + $0x110] sm:$0xff]
  %v49 = vld [vmem:[%s0 + $0x118] sm:$0xff]
  %v50 = vld [vmem:[%s0 + $0x120] sm:$0xff]
  %v51 = vld [vmem:[%s0 + $0x128] sm:$0xff]
  %v52 = vld [vmem:[%s0 + $0x130] sm:$0xff]
  %v53 = vld [vmem:[%s0 + $0x138] sm:$0xff]
  %v54 = vld [vmem:[%s0 + $0x140] sm:$0xff]
  %v55 = vld [vmem:[%s0 + $0x148] sm:$0xff]
  %v56 = vld [vmem:[%s0 + $0x150] sm:$0xff]
  %v57 = vld [vmem:[%s0 + $0x158] sm:$0xff]
  %v58 = vld [vmem:[%s0 + $0x160] sm:$0xff]
  %v59 = vld [vmem:[%s0 + $0x168] sm:$0xff]
  %v60 = vld [vmem:[%s0 + $0x170] sm:$0xff]
  %v61 = vld [vmem:[%s0 + $0x178] sm:$0xff]
  %v62 = vld [vmem:[%s0 + $0x180] sm:$0xff]
  %v63 = vld [vmem:[%s0 + $0x188] sm:$0xff]
  %v64 = vld [vmem:[%s0 + $0x190] sm:$0xff]
  %v65 = vld [vmem:[%s0 + $0x198] sm:$0xff]
  %v66 = vld [vmem:[%s0 + $0x1a0] sm:$0xff]
  %v67 = vld [vmem:[%s0 + $0x1a8] sm:$0xff]
  %v68 = vld [vmem:[%s0 + $0x1b0] sm:$0xff]
  %v69 = vld [vmem:[%s0 + $0x1b8] sm:$0xff]
  %v70 = vld [vmem:[%s0 + $0x1c0] sm:$0xff]
  %v71 = vld [vmem:[%s0 + $0x1c8] sm:$0xff]
  %v72 = vld [vmem:[%s0 + $0x1d0] sm:$0xff]
  %v73 = vld [vmem:[%s0 + $0x1d8] sm:$0xff]
  %v74 = vld [vmem:[%s0 + $0x1e0] sm:$0xff]
  %v75 = vld [vmem:[%s0 + $0x1e8] sm:$0xff]
  %v76 = vld [vmem:[%s0 + $0x1f0] sm:$0xff]
  %v77 = vld [vmem:[%s0 + $0x1f8] sm:$0xff]
  %v78 = vld [vmem:[%s0 + $0x200] sm:$0xff]
  %v79 = vld [vmem:[%s0 + $0x208] sm:$0xff]
  %v80 = vld [vmem:[%s0 + $0x210] sm:$0xff]
  %v81 = vld [vmem:[%s0 + $0x218] sm:$0xff]
  %v82 = vld [vmem:[%s0 + $0x220] sm:$0xff]
  %v83 = vld [vmem:[%s0 + $0x228] sm:$0xff]
  %v84 = vld [vmem:[%s0 + $0x230] sm:$0xff]
  %v85 = vld [vmem:[%s0 + $0x238] sm:$0xff]
  %v86 = vld [vmem:[%s0 + $0x240] sm:$0xff]
  %v87 = vld [vmem:[%s0 + $0x248] sm:$0xff]
  %v88 = vld [vmem:[%s0 + $0x250] sm:$0xff]
  %v89 = vld [vmem:[%s0 + $0x258] sm:$0xff]
  %v90 = vld [vmem:[%s0 + $0x260] sm:$0xff]
  %v91 = vld [vmem:[%s0 + $0x268] sm:$0xff]
  %v92 = vld [vmem:[%s0 + $0x270] sm:$0xff]
  %v93 = vld [vmem:[%s0 + $0x278] sm:$0xff]
  %v94 = vld [vmem:[%s0 + $0x280] sm:$0xff]
  %v95 = vld [vmem:[%s0 + $0x288] sm:$0xff]
  %v96 = vld [vmem:[%s0 + $0x290] sm:$0xff]
  %v97 = vld [vmem:[%s0 + $0x298] sm:$0xff]
  %v98 = vld [vmem:[%s0 + $0x2a0] sm:$0xff]
  %v99 = vld [vmem:[%s0 + $0x2a8] sm:$0xff]
  %v100 = vld [vmem:[%s0 + $0x2b0] sm:$0xff]
  %v101 = vld [vmem:[%s0 + $0x2b8] sm:$0xff]
  %v102 = vld [vmem:[%s0 + $0x2c0] sm:$0xff]
  %v103 = vld [vmem:[%s0 + $0x2c8] sm:$0xff]
  %v104 = vld [vmem:[%s0 + $0x2d0] sm:$0xff]
  %v105 = vld [vmem:[%s0 + $0x2d8] sm:$0xff]
  %v106 = vld [vmem:[%s0 + $0x2e0] sm:$0xff]
  %v107 = vld [vmem:[%s0 + $0x2e8] sm:$0xff]
  %v108 = vld [vmem:[%s0 + $0x2f0] sm:$0xff]
  %v109 = vld [vmem:[%s0 + $0x2f8] sm:$0xff]
  %v110 = vld [vmem:[%s0 + $0x300] sm:$0xff]
  %v111 = vld [vmem:[%s0 + $0x308] sm:$0xff]
  %v112 = vld [vmem:[%s0 + $0x310] sm:$0xff]
  %v113 = vld [vmem:[%s0 + $0x318] sm:$0xff]
  %v114 = vld [vmem:[%s0 + $0x320] sm:$0xff]
  %v115 = vld [vmem:[%s0 + $0x328] sm:$0xff]
  %v116 = vld [vmem:[%s0 + $0x330] sm:$0xff]
  %v117 = vld [vmem:[%s0 + $0x338] sm:$0xff]
  %v118 = vld [vmem:[%s0 + $0x340] sm:$0xff]
  %v119 = vld [vmem:[%s0 + $0x348] sm:$0xff]
  %v120 = vld [vmem:[%s0 + $0x350] sm:$0xff]
  %v121 = vld [vmem:[%s0 + $0x358] sm:$0xff]
  %v122 = vld [vmem:[%s0 + $0x360] sm:$0xff]
  %v123 = vld [vmem:[%s0 + $0x368] sm:$0xff]
  %v124 = vld [vmem:[%s0 + $0x370] sm:$0xff]
  %v125 = vld [vmem:[%s0 + $0x378] sm:$0xff]
  %v126 = vld [vmem:[%s0 + $0x380] sm:$0xff]
  %v127 = vld [vmem:[%s0 + $0x388] sm:$0xff]
  %v128 = vld [vmem:[%s0 + $0x390] sm:$0xff]
  %v129 = vld [vmem:[%s0 + $0x398] sm:$0xff]
  %v130 = vld [vmem:[%s0 + $0x3a0] sm:$0xff]
  %v131 = vld [vmem:[%s0 + $0x3a8] sm:$0xff]
  %v132 = vld [vmem:[%s0 + $0x3b0] sm:$0xff]
  %v133 = vld [vmem:[%s0 + $0x3b8] sm:$0xff]
  %v134 = vld [vmem:[%s0 + $0x3c0] sm:$0xff]
  %v135 = vld [vmem:[%s0 + $0x3c8] sm:$0xff]
  %v136 = vld [vmem:[%s0 + $0x3d0] sm:$0xff]
  %v137 = vld [vmem:[%s0 + $0x3d8] sm:$0xff]
  %v138 = vld [vmem:[%s0 + $0x3e0] sm:$0xff]
  %v139 = vld [vmem:[%s0 + $0x3e8] sm:$0xff]
  %v140 = vld [vmem:[%s0 + $0x3f0] sm:$0xff]
  %v141 = vld [vmem:[%s0 + $0x3f8] sm:$0xff]
  %v142 = vld [vmem:[%s0 + $0x400] sm:$0xff]
  %v143 = vld [vmem:[%s0 + $0x408] sm:$0xff]
  %v144 = vld [vmem:[%s0 + $0x410] sm:$0xff]
  %v145 = vld [vmem:[%s0 + $0x418] sm:$0xff]
  %v146 = vld [vmem:[%s0 + $0x420] sm:$0xff]
  %v147 = vld [vmem:[%s0 + $0x428] sm:$0xff]
  %v148 = vld [vmem:[%s0 + $0x430] sm:$0xff]
  %v149 = vld [vmem:[%s0 + $0x438] sm:$0xff]
  %v150 = vld [vmem:[%s0 + $0x440] sm:$0xff]
  %v151 = vld [vmem:[%s0 + $0x448] sm:$0xff]
  %v152 = vld [vmem:[%s0 + $0x450] sm:$0xff]
  %v153 = vld [vmem:[%s0 + $0x458] sm:$0xff]
  %v154 = vld [vmem:[%s0 + $0x460] sm:$0xff]
  %v155 = vld [vmem:[%s0 + $0x468] sm:$0xff]
  %v156 = vld [vmem:[%s0 + $0x470] sm:$0xff]
  %v157 = vld [vmem:[%s0 + $0x478] sm:$0xff]
  %v158 = vld [vmem:[%s0 + $0x480] sm:$0xff]
  %v159 = vld [vmem:[%s0 + $0x488] sm:$0xff]
  %v160 = vld [vmem:[%s0 + $0x490] sm:$0xff]
  %v161 = vld [vmem:[%s0 + $0x498] sm:$0xff]
  %v162 = vld [vmem:[%s0 + $0x4a0] sm:$0xff]
  %v163 = vld [vmem:[%s0 + $0x4a8] sm:$0xff]
  %v164 = vld [vmem:[%s0 + $0x4b0] sm:$0xff]
  %v165 = vld [vmem:[%s0 + $0x4b8] sm:$0xff]
  %v166 = vld [vmem:[%s0 + $0x4c0] sm:$0xff]
  %v167 = vld [vmem:[%s0 + $0x4c8] sm:$0xff]
  %v168 = vld [vmem:[%s0 + $0x4d0] sm:$0xff]
  %v169 = vld [vmem:[%s0 + $0x4d8] sm:$0xff]
  %v170 = vld [vmem:[%s0 + $0x4e0] sm:$0xff]
  %v171 = vld [vmem:[%s0 + $0x4e8] sm:$0xff]
  %v172 = vld [vmem:[%s0 + $0x4f0] sm:$0xff]
  %v173 = vld [vmem:[%s0 + $0x4f8] sm:$0xff]
  %v174 = vld [vmem:[%s0 + $0x500] sm:$0xff]
  %v175 = vld [vmem:[%s0 + $0x508] sm:$0xff]
  %v176 = vld [vmem:[%s0 + $0x510] sm:$0xff]
  %v177 = vld [vmem:[%s0 + $0x518] sm:$0xff]
  %v178 = vld [vmem:[%s0 + $0x520] sm:$0xff]
  %v179 = vld [vmem:[%s0 + $0x528] sm:$0xff]
  %v180 = vld [vmem:[%s0 + $0x530] sm:$0xff]
  %v181 = vld [vmem:[%s0 + $0x538] sm:$0xff]
  %v182 = vld [vmem:[%s0 + $0x540] sm:$0xff]
  %v183 = vld [vmem:[%s0 + $0x548] sm:$0xff]
  %v184 = vld [vmem:[%s0 + $0x550] sm:$0xff]
  %v185 = vld [vmem:[%s0 + $0x558] sm:$0xff]
  %v186 = vld [vmem:[%s0 + $0x560] sm:$0xff]
  %v187 = vld [vmem:[%s0 + $0x568] sm:$0xff]
  %v188 = vld [vmem:[%s0 + $0x570] sm:$0xff]
  %v189 = vld [vmem:[%s0 + $0x578] sm:$0xff]
  %v190 = vld [vmem:[%s0 + $0x580] sm:$0xff]
  %v191 = vld [vmem:[%s0 + $0x588] sm:$0xff]
  %v192 = vld [vmem:[%s0 + $0x590] sm:$0xff]
  %v193 = vld [vmem:[%s0 + $0x598] sm:$0xff]
  %v194 = vld [vmem:[%s0 + $0x5a0] sm:$0xff]
  %v195 = vld [vmem:[%s0 + $0x5a8] sm:$0xff]
  %v196 = vld [vmem:[%s0 + $0x5b0] sm:$0xff]
  %v197 = vld [vmem:[%s0 + $0x5b8] sm:$0xff]
  %v198 = vld [vmem:[%s0 + $0x5c0] sm:$0xff]
  %v199 = vld [vmem:[%s0 + $0x5c8] sm:$0xff]
  %v200 = vld [vmem:[%s0 + $0x5d0] sm:$0xff]
  %v201 = vld [vmem:[%s0 + $0x5d8] sm:$0xff]
  %v202 = vld [vmem:[%s0 + $0x5e0] sm:$0xff]
  %v203 = vld [vmem:[%s0 + $0x5e8] sm:$0xff]
  %v204 = vld [vmem:[%s0 + $0x5f0] sm:$0xff]
  %v205 = vld [vmem:[%s0 + $0x5f8] sm:$0xff]
  %v206 = vld [vmem:[%s0 + $0x600] sm:$0xff]
  %v207 = vld [vmem:[%s0 + $0x608] sm:$0xff]
  %v208 = vld [vmem:[%s0 + $0x610] sm:$0xff]
  %v209 = vld [vmem:[%s0 + $0x618] sm:$0xff]
  %v210 = vld [vmem:[%s0 + $0x620] sm:$0xff]
  %v211 = vld [vmem:[%s0 + $0x628] sm:$0xff]
  %v212 = vld [vmem:[%s0 + $0x630] sm:$0xff]
  %v213 = vld [vmem:[%s0 + $0x638] sm:$0xff]
  %v214 = vld [vmem:[%s0 + $0x640] sm:$0xff]
  %v215 = vld [vmem:[%s0 + $0x648] sm:$0xff]
  %v216 = vld [vmem:[%s0 + $0x650] sm:$0xff]
  %v217 = vld [vmem:[%s0 + $0x658] sm:$0xff]
  %v218 = vld [vmem:[%s0 + $0x660] sm:$0xff]
  %v219 = vld [vmem:[%s0 + $0x668] sm:$0xff]
  %v220 = vld [vmem:[%s0 + $0x670] sm:$0xff]
  %v221 = vld [vmem:[%s0 + $0x678] sm:$0xff]
  %v222 = vld [vmem:[%s0 + $0x680] sm:$0xff]
  %v223 = vld [vmem:[%s0 + $0x688] sm:$0xff]
  %v224 = vld [vmem:[%s0 + $0x690] sm:$0xff]
  %v225 = vld [vmem:[%s0 + $0x698] sm:$0xff]
  %v226 = vld [vmem:[%s0 + $0x6a0] sm:$0xff]
  %v227 = vld [vmem:[%s0 + $0x6a8] sm:$0xff]
  %v228 = vld [vmem:[%s0 + $0x6b0] sm:$0xff]
  %v229 = vld [vmem:[%s0 + $0x6b8] sm:$0xff]
  %v230 = vld [vmem:[%s0 + $0x6c0] sm:$0xff]
  %v231 = vld [vmem:[%s0 + $0x6c8] sm:$0xff]
  %v232 = vld [vmem:[%s0 + $0x6d0] sm:$0xff]
  %v233 = vld [vmem:[%s0 + $0x6d8] sm:$0xff]
  %v234 = vld [vmem:[%s0 + $0x6e0] sm:$0xff]
  %v235 = vld [vmem:[%s0 + $0x6e8] sm:$0xff]
  %v236 = vld [vmem:[%s0 + $0x6f0] sm:$0xff]
  %v237 = vld [vmem:[%s0 + $0x6f8] sm:$0xff]
  %v238 = vld [vmem:[%s0 + $0x700] sm:$0xff]
  %v239 = vld [vmem:[%s0 + $0x708] sm:$0xff]
  %v240 = vld [vmem:[%s0 + $0x710] sm:$0xff]
  %v241 = vld [vmem:[%s0 + $0x718] sm:$0xff]
  %v242 = vld [vmem:[%s0 + $0x720] sm:$0xff]
  %v243 = vld [vmem:[%s0 + $0x728] sm:$0xff]
  %v244 = vld [vmem:[%s0 + $0x730] sm:$0xff]
  %v245 = vld [vmem:[%s0 + $0x738] sm:$0xff]
  %v246 = vld [vmem:[%s0 + $0x740] sm:$0xff]
  %v247 = vld [vmem:[%s0 + $0x748] sm:$0xff]
  %v248 = vld [vmem:[%s0 + $0x750] sm:$0xff]
  %v249 = vld [vmem:[%s0 + $0x758] sm:$0xff]
  %v250 = vld [vmem:[%s0 + $0x760] sm:$0xff]
  %v251 = vld [vmem:[%s0 + $0x768] sm:$0xff]
  %v252 = vld [vmem:[%s0 + $0x770] sm:$0xff]
  %v253 = vld [vmem:[%s0 + $0x778] sm:$0xff]
  %v254 = vld [vmem:[%s0 + $0x780] sm:$0xff]
  %v255 = vld [vmem:[%s0 + $0x788] sm:$0xff]
  %v256 = vld [vmem:[%s0 + $0x790] sm:$0xff]
  %v257 = vld [vmem:[%s0 + $0x798] sm:$0xff]
  %v258 = vld [vmem:[%s0 + $0x7a0] sm:$0xff]
  %v259 = vld [vmem:[%s0 + $0x7a8] sm:$0xff]
  %v260 = vld [vmem:[%s0 + $0x7b0] sm:$0xff]
  %v261 = vld [vmem:[%s0 + $0x7b8] sm:$0xff]
  %v262 = vld [vmem:[%s0 + $0x7c0] sm:$0xff]
  %v263 = vld [vmem:[%s0 + $0x7c8] sm:$0xff]
  %v264 = vld [vmem:[%s0 + $0x7d0] sm:$0xff]
  %v265 = vld [vmem:[%s0 + $0x7d8] sm:$0xff]
  %v266 = vld [vmem:[%s0 + $0x7e0] sm:$0xff]
  %v267 = vld [vmem:[%s0 + $0x7e8] sm:$0xff]
  %v268 = vld [vmem:[%s0 + $0x7f0] sm:$0xff]
  %v269 = vld [vmem:[%s0 + $0x7f8] sm:$0xff]
  %v270 = vld [vmem:[%s1] sm:$0xf]
  %v272 = vlaneseq
  %v273 = vshrl.u32 %v272, 7
  %v274 = vsub.s32 0, %v273
  %v275 = vrot.slane %v270, %v274
  %v276 = vlaneseq
  %v277 = vshrl.u32 %v276, 7
  %v278 = vsub.s32 1, %v277
  %v279 = vrot.slane %v270, %v278
  %v280 = vlaneseq
  %v281 = vshrl.u32 %v280, 7
  %v282 = vsub.s32 2, %v281
  %v283 = vrot.slane %v270, %v282
  %v284 = vlaneseq
  %v285 = vshrl.u32 %v284, 7
  %v286 = vsub.s32 3, %v285
  %v287 = vrot.slane %v270, %v286
  %v292 = vmul.f32 %v14, %v275
  %v293 = vmul.f32 %v15, %v279
  %v294 = vmul.f32 %v16, %v283
  %v295 = vmul.f32 %v17, %v287
  %v296 = vmul.f32 %v18, %v275
  %v297 = vmul.f32 %v19, %v279
  %v298 = vmul.f32 %v20, %v283
  %v299 = vmul.f32 %v21, %v287
  %v300 = vmul.f32 %v22, %v275
  %v301 = vmul.f32 %v23, %v279
  %v302 = vmul.f32 %v24, %v283
  %v303 = vmul.f32 %v25, %v287
  %v304 = vmul.f32 %v26, %v275
  %v305 = vmul.f32 %v27, %v279
  %v306 = vmul.f32 %v28, %v283
  %v307 = vmul.f32 %v29, %v287
  %v308 = vmul.f32 %v30, %v275
  %v309 = vmul.f32 %v31, %v279
  %v310 = vmul.f32 %v32, %v283
  %v311 = vmul.f32 %v33, %v287
  %v312 = vmul.f32 %v34, %v275
  %v313 = vmul.f32 %v35, %v279
  %v314 = vmul.f32 %v36, %v283
  %v315 = vmul.f32 %v37, %v287
  %v316 = vmul.f32 %v38, %v275
  %v317 = vmul.f32 %v39, %v279
  %v318 = vmul.f32 %v40, %v283
  %v319 = vmul.f32 %v41, %v287
  %v320 = vmul.f32 %v42, %v275
  %v321 = vmul.f32 %v43, %v279
  %v322 = vmul.f32 %v44, %v283
  %v323 = vmul.f32 %v45, %v287
  %v324 = vmul.f32 %v46, %v275
  %v325 = vmul.f32 %v47, %v279
  %v326 = vmul.f32 %v48, %v283
  %v327 = vmul.f32 %v49, %v287
  %v328 = vmul.f32 %v50, %v275
  %v329 = vmul.f32 %v51, %v279
  %v330 = vmul.f32 %v52, %v283
  %v331 = vmul.f32 %v53, %v287
  %v332 = vmul.f32 %v54, %v275
  %v333 = vmul.f32 %v55, %v279
  %v334 = vmul.f32 %v56, %v283
  %v335 = vmul.f32 %v57, %v287
  %v336 = vmul.f32 %v58, %v275
  %v337 = vmul.f32 %v59, %v279
  %v338 = vmul.f32 %v60, %v283
  %v339 = vmul.f32 %v61, %v287
  %v340 = vmul.f32 %v62, %v275
  %v341 = vmul.f32 %v63, %v279
  %v342 = vmul.f32 %v64, %v283
  %v343 = vmul.f32 %v65, %v287
  %v344 = vmul.f32 %v66, %v275
  %v345 = vmul.f32 %v67, %v279
  %v346 = vmul.f32 %v68, %v283
  %v347 = vmul.f32 %v69, %v287
  %v348 = vmul.f32 %v70, %v275
  %v349 = vmul.f32 %v71, %v279
  %v350 = vmul.f32 %v72, %v283
  %v351 = vmul.f32 %v73, %v287
  %v352 = vmul.f32 %v74, %v275
  %v353 = vmul.f32 %v75, %v279
  %v354 = vmul.f32 %v76, %v283
  %v355 = vmul.f32 %v77, %v287
  %v356 = vmul.f32 %v78, %v275
  %v357 = vmul.f32 %v79, %v279
  %v358 = vmul.f32 %v80, %v283
  %v359 = vmul.f32 %v81, %v287
  %v360 = vmul.f32 %v82, %v275
  %v361 = vmul.f32 %v83, %v279
  %v362 = vmul.f32 %v84, %v283
  %v363 = vmul.f32 %v85, %v287
  %v364 = vmul.f32 %v86, %v275
  %v365 = vmul.f32 %v87, %v279
  %v366 = vmul.f32 %v88, %v283
  %v367 = vmul.f32 %v89, %v287
  %v368 = vmul.f32 %v90, %v275
  %v369 = vmul.f32 %v91, %v279
  %v370 = vmul.f32 %v92, %v283
  %v371 = vmul.f32 %v93, %v287
  %v372 = vmul.f32 %v94, %v275
  %v373 = vmul.f32 %v95, %v279
  %v374 = vmul.f32 %v96, %v283
  %v375 = vmul.f32 %v97, %v287
  %v376 = vmul.f32 %v98, %v275
  %v377 = vmul.f32 %v99, %v279
  %v378 = vmul.f32 %v100, %v283
  %v379 = vmul.f32 %v101, %v287
  %v380 = vmul.f32 %v102, %v275
  %v381 = vmul.f32 %v103, %v279
  %v382 = vmul.f32 %v104, %v283
  %v383 = vmul.f32 %v105, %v287
  %v384 = vmul.f32 %v106, %v275
  %v385 = vmul.f32 %v107, %v279
  %v386 = vmul.f32 %v108, %v283
  %v387 = vmul.f32 %v109, %v287
  %v388 = vmul.f32 %v110, %v275
  %v389 = vmul.f32 %v111, %v279
  %v390 = vmul.f32 %v112, %v283
  %v391 = vmul.f32 %v113, %v287
  %v392 = vmul.f32 %v114, %v275
  %v393 = vmul.f32 %v115, %v279
  %v394 = vmul.f32 %v116, %v283
  %v395 = vmul.f32 %v117, %v287
  %v396 = vmul.f32 %v118, %v275
  %v397 = vmul.f32 %v119, %v279
  %v398 = vmul.f32 %v120, %v283
  %v399 = vmul.f32 %v121, %v287
  %v400 = vmul.f32 %v122, %v275
  %v401 = vmul.f32 %v123, %v279
  %v402 = vmul.f32 %v124, %v283
  %v403 = vmul.f32 %v125, %v287
  %v404 = vmul.f32 %v126, %v275
  %v405 = vmul.f32 %v127, %v279
  %v406 = vmul.f32 %v128, %v283
  %v407 = vmul.f32 %v129, %v287
  %v408 = vmul.f32 %v130, %v275
  %v409 = vmul.f32 %v131, %v279
  %v410 = vmul.f32 %v132, %v283
  %v411 = vmul.f32 %v133, %v287
  %v412 = vmul.f32 %v134, %v275
  %v413 = vmul.f32 %v135, %v279
  %v414 = vmul.f32 %v136, %v283
  %v415 = vmul.f32 %v137, %v287
  %v416 = vmul.f32 %v138, %v275
  %v417 = vmul.f32 %v139, %v279
  %v418 = vmul.f32 %v140, %v283
  %v419 = vmul.f32 %v141, %v287
  %v420 = vmul.f32 %v142, %v275
  %v421 = vmul.f32 %v143, %v279
  %v422 = vmul.f32 %v144, %v283
  %v423 = vmul.f32 %v145, %v287
  %v424 = vmul.f32 %v146, %v275
  %v425 = vmul.f32 %v147, %v279
  %v426 = vmul.f32 %v148, %v283
  %v427 = vmul.f32 %v149, %v287
  %v428 = vmul.f32 %v150, %v275
  %v429 = vmul.f32 %v151, %v279
  %v430 = vmul.f32 %v152, %v283
  %v431 = vmul.f32 %v153, %v287
  %v432 = vmul.f32 %v154, %v275
  %v433 = vmul.f32 %v155, %v279
  %v434 = vmul.f32 %v156, %v283
  %v435 = vmul.f32 %v157, %v287
  %v436 = vmul.f32 %v158, %v275
  %v437 = vmul.f32 %v159, %v279
  %v438 = vmul.f32 %v160, %v283
  %v439 = vmul.f32 %v161, %v287
  %v440 = vmul.f32 %v162, %v275
  %v441 = vmul.f32 %v163, %v279
  %v442 = vmul.f32 %v164, %v283
  %v443 = vmul.f32 %v165, %v287
  %v444 = vmul.f32 %v166, %v275
  %v445 = vmul.f32 %v167, %v279
  %v446 = vmul.f32 %v168, %v283
  %v447 = vmul.f32 %v169, %v287
  %v448 = vmul.f32 %v170, %v275
  %v449 = vmul.f32 %v171, %v279
  %v450 = vmul.f32 %v172, %v283
  %v451 = vmul.f32 %v173, %v287
  %v452 = vmul.f32 %v174, %v275
  %v453 = vmul.f32 %v175, %v279
  %v454 = vmul.f32 %v176, %v283
  %v455 = vmul.f32 %v177, %v287
  %v456 = vmul.f32 %v178, %v275
  %v457 = vmul.f32 %v179, %v279
  %v458 = vmul.f32 %v180, %v283
  %v459 = vmul.f32 %v181, %v287
  %v460 = vmul.f32 %v182, %v275
  %v461 = vmul.f32 %v183, %v279
  %v462 = vmul.f32 %v184, %v283
  %v463 = vmul.f32 %v185, %v287
  %v464 = vmul.f32 %v186, %v275
  %v465 = vmul.f32 %v187, %v279
  %v466 = vmul.f32 %v188, %v283
  %v467 = vmul.f32 %v189, %v287
  %v468 = vmul.f32 %v190, %v275
  %v469 = vmul.f32 %v191, %v279
  %v470 = vmul.f32 %v192, %v283
  %v471 = vmul.f32 %v193, %v287
  %v472 = vmul.f32 %v194, %v275
  %v473 = vmul.f32 %v195, %v279
  %v474 = vmul.f32 %v196, %v283
  %v475 = vmul.f32 %v197, %v287
  %v476 = vmul.f32 %v198, %v275
  %v477 = vmul.f32 %v199, %v279
  %v478 = vmul.f32 %v200, %v283
  %v479 = vmul.f32 %v201, %v287
  %v480 = vmul.f32 %v202, %v275
  %v481 = vmul.f32 %v203, %v279
  %v482 = vmul.f32 %v204, %v283
  %v483 = vmul.f32 %v205, %v287
  %v484 = vmul.f32 %v206, %v275
  %v485 = vmul.f32 %v207, %v279
  %v486 = vmul.f32 %v208, %v283
  %v487 = vmul.f32 %v209, %v287
  %v488 = vmul.f32 %v210, %v275
  %v489 = vmul.f32 %v211, %v279
  %v490 = vmul.f32 %v212, %v283
  %v491 = vmul.f32 %v213, %v287
  %v492 = vmul.f32 %v214, %v275
  %v493 = vmul.f32 %v215, %v279
  %v494 = vmul.f32 %v216, %v283
  %v495 = vmul.f32 %v217, %v287
  %v496 = vmul.f32 %v218, %v275
  %v497 = vmul.f32 %v219, %v279
  %v498 = vmul.f32 %v220, %v283
  %v499 = vmul.f32 %v221, %v287
  %v500 = vmul.f32 %v222, %v275
  %v501 = vmul.f32 %v223, %v279
  %v502 = vmul.f32 %v224, %v283
  %v503 = vmul.f32 %v225, %v287
  %v504 = vmul.f32 %v226, %v275
  %v505 = vmul.f32 %v227, %v279
  %v506 = vmul.f32 %v228, %v283
  %v507 = vmul.f32 %v229, %v287
  %v508 = vmul.f32 %v230, %v275
  %v509 = vmul.f32 %v231, %v279
  %v510 = vmul.f32 %v232, %v283
  %v511 = vmul.f32 %v233, %v287
  %v512 = vmul.f32 %v234, %v275
  %v513 = vmul.f32 %v235, %v279
  %v514 = vmul.f32 %v236, %v283
  %v515 = vmul.f32 %v237, %v287
  %v516 = vmul.f32 %v238, %v275
  %v517 = vmul.f32 %v239, %v279
  %v518 = vmul.f32 %v240, %v283
  %v519 = vmul.f32 %v241, %v287
  %v520 = vmul.f32 %v242, %v275
  %v521 = vmul.f32 %v243, %v279
  %v522 = vmul.f32 %v244, %v283
  %v523 = vmul.f32 %v245, %v287
  %v524 = vmul.f32 %v246, %v275
  %v525 = vmul.f32 %v247, %v279
  %v526 = vmul.f32 %v248, %v283
  %v527 = vmul.f32 %v249, %v287
  %v528 = vmul.f32 %v250, %v275
  %v529 = vmul.f32 %v251, %v279
  %v530 = vmul.f32 %v252, %v283
  %v531 = vmul.f32 %v253, %v287
  %v532 = vmul.f32 %v254, %v275
  %v533 = vmul.f32 %v255, %v279
  %v534 = vmul.f32 %v256, %v283
  %v535 = vmul.f32 %v257, %v287
  %v536 = vmul.f32 %v258, %v275
  %v537 = vmul.f32 %v259, %v279
  %v538 = vmul.f32 %v260, %v283
  %v539 = vmul.f32 %v261, %v287
  %v540 = vmul.f32 %v262, %v275
  %v541 = vmul.f32 %v263, %v279
  %v542 = vmul.f32 %v264, %v283
  %v543 = vmul.f32 %v265, %v287
  %v544 = vmul.f32 %v266, %v275
  %v545 = vmul.f32 %v267, %v279
  %v546 = vmul.f32 %v268, %v283
  %v547 = vmul.f32 %v269, %v287
  %v548 = vld [vmem:[%s2] sm:$0xf]
  %v550 = vlaneseq
  %v551 = vshrl.u32 %v550, 7
  %v552 = vsub.s32 0, %v551
  %v553 = vrot.slane %v548, %v552
  %v554 = vlaneseq
  %v555 = vshrl.u32 %v554, 7
  %v556 = vsub.s32 1, %v555
  %v557 = vrot.slane %v548, %v556
  %v558 = vlaneseq
  %v559 = vshrl.u32 %v558, 7
  %v560 = vsub.s32 2, %v559
  %v561 = vrot.slane %v548, %v560
  %v562 = vlaneseq
  %v563 = vshrl.u32 %v562, 7
  %v564 = vsub.s32 3, %v563
  %v565 = vrot.slane %v548, %v564
  %v570 = vadd.f32 %v292, %v553
  %v571 = vadd.f32 %v293, %v557
  %v572 = vadd.f32 %v294, %v561
  %v573 = vadd.f32 %v295, %v565
  %v574 = vadd.f32 %v296, %v553
  %v575 = vadd.f32 %v297, %v557
  %v576 = vadd.f32 %v298, %v561
  %v577 = vadd.f32 %v299, %v565
  %v578 = vadd.f32 %v300, %v553
  %v579 = vadd.f32 %v301, %v557
  %v580 = vadd.f32 %v302, %v561
  %v581 = vadd.f32 %v303, %v565
  %v582 = vadd.f32 %v304, %v553
  %v583 = vadd.f32 %v305, %v557
  %v584 = vadd.f32 %v306, %v561
  %v585 = vadd.f32 %v307, %v565
  %v586 = vadd.f32 %v308, %v553
  %v587 = vadd.f32 %v309, %v557
  %v588 = vadd.f32 %v310, %v561
  %v589 = vadd.f32 %v311, %v565
  %v590 = vadd.f32 %v312, %v553
  %v591 = vadd.f32 %v313, %v557
  %v592 = vadd.f32 %v314, %v561
  %v593 = vadd.f32 %v315, %v565
  %v594 = vadd.f32 %v316, %v553
  %v595 = vadd.f32 %v317, %v557
  %v596 = vadd.f32 %v318, %v561
  %v597 = vadd.f32 %v319, %v565
  %v598 = vadd.f32 %v320, %v553
  %v599 = vadd.f32 %v321, %v557
  %v600 = vadd.f32 %v322, %v561
  %v601 = vadd.f32 %v323, %v565
  %v602 = vadd.f32 %v324, %v553
  %v603 = vadd.f32 %v325, %v557
  %v604 = vadd.f32 %v326, %v561
  %v605 = vadd.f32 %v327, %v565
  %v606 = vadd.f32 %v328, %v553
  %v607 = vadd.f32 %v329, %v557
  %v608 = vadd.f32 %v330, %v561
  %v609 = vadd.f32 %v331, %v565
  %v610 = vadd.f32 %v332, %v553
  %v611 = vadd.f32 %v333, %v557
  %v612 = vadd.f32 %v334, %v561
  %v613 = vadd.f32 %v335, %v565
  %v614 = vadd.f32 %v336, %v553
  %v615 = vadd.f32 %v337, %v557
  %v616 = vadd.f32 %v338, %v561
  %v617 = vadd.f32 %v339, %v565
  %v618 = vadd.f32 %v340, %v553
  %v619 = vadd.f32 %v341, %v557
  %v620 = vadd.f32 %v342, %v561
  %v621 = vadd.f32 %v343, %v565
  %v622 = vadd.f32 %v344, %v553
  %v623 = vadd.f32 %v345, %v557
  %v624 = vadd.f32 %v346, %v561
  %v625 = vadd.f32 %v347, %v565
  %v626 = vadd.f32 %v348, %v553
  %v627 = vadd.f32 %v349, %v557
  %v628 = vadd.f32 %v350, %v561
  %v629 = vadd.f32 %v351, %v565
  %v630 = vadd.f32 %v352, %v553
  %v631 = vadd.f32 %v353, %v557
  %v632 = vadd.f32 %v354, %v561
  %v633 = vadd.f32 %v355, %v565
  %v634 = vadd.f32 %v356, %v553
  %v635 = vadd.f32 %v357, %v557
  %v636 = vadd.f32 %v358, %v561
  %v637 = vadd.f32 %v359, %v565
  %v638 = vadd.f32 %v360, %v553
  %v639 = vadd.f32 %v361, %v557
  %v640 = vadd.f32 %v362, %v561
  %v641 = vadd.f32 %v363, %v565
  %v642 = vadd.f32 %v364, %v553
  %v643 = vadd.f32 %v365, %v557
  %v644 = vadd.f32 %v366, %v561
  %v645 = vadd.f32 %v367, %v565
  %v646 = vadd.f32 %v368, %v553
  %v647 = vadd.f32 %v369, %v557
  %v648 = vadd.f32 %v370, %v561
  %v649 = vadd.f32 %v371, %v565
  %v650 = vadd.f32 %v372, %v553
  %v651 = vadd.f32 %v373, %v557
  %v652 = vadd.f32 %v374, %v561
  %v653 = vadd.f32 %v375, %v565
  %v654 = vadd.f32 %v376, %v553
  %v655 = vadd.f32 %v377, %v557
  %v656 = vadd.f32 %v378, %v561
  %v657 = vadd.f32 %v379, %v565
  %v658 = vadd.f32 %v380, %v553
  %v659 = vadd.f32 %v381, %v557
  %v660 = vadd.f32 %v382, %v561
  %v661 = vadd.f32 %v383, %v565
  %v662 = vadd.f32 %v384, %v553
  %v663 = vadd.f32 %v385, %v557
  %v664 = vadd.f32 %v386, %v561
  %v665 = vadd.f32 %v387, %v565
  %v666 = vadd.f32 %v388, %v553
  %v667 = vadd.f32 %v389, %v557
  %v668 = vadd.f32 %v390, %v561
  %v669 = vadd.f32 %v391, %v565
  %v670 = vadd.f32 %v392, %v553
  %v671 = vadd.f32 %v393, %v557
  %v672 = vadd.f32 %v394, %v561
  %v673 = vadd.f32 %v395, %v565
  %v674 = vadd.f32 %v396, %v553
  %v675 = vadd.f32 %v397, %v557
  %v676 = vadd.f32 %v398, %v561
  %v677 = vadd.f32 %v399, %v565
  %v678 = vadd.f32 %v400, %v553
  %v679 = vadd.f32 %v401, %v557
  %v680 = vadd.f32 %v402, %v561
  %v681 = vadd.f32 %v403, %v565
  %v682 = vadd.f32 %v404, %v553
  %v683 = vadd.f32 %v405, %v557
  %v684 = vadd.f32 %v406, %v561
  %v685 = vadd.f32 %v407, %v565
  %v686 = vadd.f32 %v408, %v553
  %v687 = vadd.f32 %v409, %v557
  %v688 = vadd.f32 %v410, %v561
  %v689 = vadd.f32 %v411, %v565
  %v690 = vadd.f32 %v412, %v553
  %v691 = vadd.f32 %v413, %v557
  %v692 = vadd.f32 %v414, %v561
  %v693 = vadd.f32 %v415, %v565
  %v694 = vadd.f32 %v416, %v553
  %v695 = vadd.f32 %v417, %v557
  %v696 = vadd.f32 %v418, %v561
  %v697 = vadd.f32 %v419, %v565
  %v698 = vadd.f32 %v420, %v553
  %v699 = vadd.f32 %v421, %v557
  %v700 = vadd.f32 %v422, %v561
  %v701 = vadd.f32 %v423, %v565
  %v702 = vadd.f32 %v424, %v553
  %v703 = vadd.f32 %v425, %v557
  %v704 = vadd.f32 %v426, %v561
  %v705 = vadd.f32 %v427, %v565
  %v706 = vadd.f32 %v428, %v553
  %v707 = vadd.f32 %v429, %v557
  %v708 = vadd.f32 %v430, %v561
  %v709 = vadd.f32 %v431, %v565
  %v710 = vadd.f32 %v432, %v553
  %v711 = vadd.f32 %v433, %v557
  %v712 = vadd.f32 %v434, %v561
  %v713 = vadd.f32 %v435, %v565
  %v714 = vadd.f32 %v436, %v553
  %v715 = vadd.f32 %v437, %v557
  %v716 = vadd.f32 %v438, %v561
  %v717 = vadd.f32 %v439, %v565
  %v718 = vadd.f32 %v440, %v553
  %v719 = vadd.f32 %v441, %v557
  %v720 = vadd.f32 %v442, %v561
  %v721 = vadd.f32 %v443, %v565
  %v722 = vadd.f32 %v444, %v553
  %v723 = vadd.f32 %v445, %v557
  %v724 = vadd.f32 %v446, %v561
  %v725 = vadd.f32 %v447, %v565
  %v726 = vadd.f32 %v448, %v553
  %v727 = vadd.f32 %v449, %v557
  %v728 = vadd.f32 %v450, %v561
  %v729 = vadd.f32 %v451, %v565
  %v730 = vadd.f32 %v452, %v553
  %v731 = vadd.f32 %v453, %v557
  %v732 = vadd.f32 %v454, %v561
  %v733 = vadd.f32 %v455, %v565
  %v734 = vadd.f32 %v456, %v553
  %v735 = vadd.f32 %v457, %v557
  %v736 = vadd.f32 %v458, %v561
  %v737 = vadd.f32 %v459, %v565
  %v738 = vadd.f32 %v460, %v553
  %v739 = vadd.f32 %v461, %v557
  %v740 = vadd.f32 %v462, %v561
  %v741 = vadd.f32 %v463, %v565
  %v742 = vadd.f32 %v464, %v553
  %v743 = vadd.f32 %v465, %v557
  %v744 = vadd.f32 %v466, %v561
  %v745 = vadd.f32 %v467, %v565
  %v746 = vadd.f32 %v468, %v553
  %v747 = vadd.f32 %v469, %v557
  %v748 = vadd.f32 %v470, %v561
  %v749 = vadd.f32 %v471, %v565
  %v750 = vadd.f32 %v472, %v553
  %v751 = vadd.f32 %v473, %v557
  %v752 = vadd.f32 %v474, %v561
  %v753 = vadd.f32 %v475, %v565
  %v754 = vadd.f32 %v476, %v553
  %v755 = vadd.f32 %v477, %v557
  %v756 = vadd.f32 %v478, %v561
  %v757 = vadd.f32 %v479, %v565
  %v758 = vadd.f32 %v480, %v553
  %v759 = vadd.f32 %v481, %v557
  %v760 = vadd.f32 %v482, %v561
  %v761 = vadd.f32 %v483, %v565
  %v762 = vadd.f32 %v484, %v553
  %v763 = vadd.f32 %v485, %v557
  %v764 = vadd.f32 %v486, %v561
  %v765 = vadd.f32 %v487, %v565
  %v766 = vadd.f32 %v488, %v553
  %v767 = vadd.f32 %v489, %v557
  %v768 = vadd.f32 %v490, %v561
  %v769 = vadd.f32 %v491, %v565
  %v770 = vadd.f32 %v492, %v553
  %v771 = vadd.f32 %v493, %v557
  %v772 = vadd.f32 %v494, %v561
  %v773 = vadd.f32 %v495, %v565
  %v774 = vadd.f32 %v496, %v553
  %v775 = vadd.f32 %v497, %v557
  %v776 = vadd.f32 %v498, %v561
  %v777 = vadd.f32 %v499, %v565
  %v778 = vadd.f32 %v500, %v553
  %v779 = vadd.f32 %v501, %v557
  %v780 = vadd.f32 %v502, %v561
  %v781 = vadd.f32 %v503, %v565
  %v782 = vadd.f32 %v504, %v553
  %v783 = vadd.f32 %v505, %v557
  %v784 = vadd.f32 %v506, %v561
  %v785 = vadd.f32 %v507, %v565
  %v786 = vadd.f32 %v508, %v553
  %v787 = vadd.f32 %v509, %v557
  %v788 = vadd.f32 %v510, %v561
  %v789 = vadd.f32 %v511, %v565
  %v790 = vadd.f32 %v512, %v553
  %v791 = vadd.f32 %v513, %v557
  %v792 = vadd.f32 %v514, %v561
  %v793 = vadd.f32 %v515, %v565
  %v794 = vadd.f32 %v516, %v553
  %v795 = vadd.f32 %v517, %v557
  %v796 = vadd.f32 %v518, %v561
  %v797 = vadd.f32 %v519, %v565
  %v798 = vadd.f32 %v520, %v553
  %v799 = vadd.f32 %v521, %v557
  %v800 = vadd.f32 %v522, %v561
  %v801 = vadd.f32 %v523, %v565
  %v802 = vadd.f32 %v524, %v553
  %v803 = vadd.f32 %v525, %v557
  %v804 = vadd.f32 %v526, %v561
  %v805 = vadd.f32 %v527, %v565
  %v806 = vadd.f32 %v528, %v553
  %v807 = vadd.f32 %v529, %v557
  %v808 = vadd.f32 %v530, %v561
  %v809 = vadd.f32 %v531, %v565
  %v810 = vadd.f32 %v532, %v553
  %v811 = vadd.f32 %v533, %v557
  %v812 = vadd.f32 %v534, %v561
  %v813 = vadd.f32 %v535, %v565
  %v814 = vadd.f32 %v536, %v553
  %v815 = vadd.f32 %v537, %v557
  %v816 = vadd.f32 %v538, %v561
  %v817 = vadd.f32 %v539, %v565
  %v818 = vadd.f32 %v540, %v553
  %v819 = vadd.f32 %v541, %v557
  %v820 = vadd.f32 %v542, %v561
  %v821 = vadd.f32 %v543, %v565
  %v822 = vadd.f32 %v544, %v553
  %v823 = vadd.f32 %v545, %v557
  %v824 = vadd.f32 %v546, %v561
  %v825 = vadd.f32 %v547, %v565
  %v826 = vmax.f32 %v570, 0.0
  %v827 = vmax.f32 %v571, 0.0
  %v828 = vmax.f32 %v572, 0.0
  %v829 = vmax.f32 %v573, 0.0
  %v830 = vmax.f32 %v574, 0.0
  %v831 = vmax.f32 %v575, 0.0
  %v832 = vmax.f32 %v576, 0.0
  %v833 = vmax.f32 %v577, 0.0
  %v834 = vmax.f32 %v578, 0.0
  %v835 = vmax.f32 %v579, 0.0
  %v836 = vmax.f32 %v580, 0.0
  %v837 = vmax.f32 %v581, 0.0
  %v838 = vmax.f32 %v582, 0.0
  %v839 = vmax.f32 %v583, 0.0
  %v840 = vmax.f32 %v584, 0.0
  %v841 = vmax.f32 %v585, 0.0
  %v842 = vmax.f32 %v586, 0.0
  %v843 = vmax.f32 %v587, 0.0
  %v844 = vmax.f32 %v588, 0.0
  %v845 = vmax.f32 %v589, 0.0
  %v846 = vmax.f32 %v590, 0.0
  %v847 = vmax.f32 %v591, 0.0
  %v848 = vmax.f32 %v592, 0.0
  %v849 = vmax.f32 %v593, 0.0
  %v850 = vmax.f32 %v594, 0.0
  %v851 = vmax.f32 %v595, 0.0
  %v852 = vmax.f32 %v596, 0.0
  %v853 = vmax.f32 %v597, 0.0
  %v854 = vmax.f32 %v598, 0.0
  %v855 = vmax.f32 %v599, 0.0
  %v856 = vmax.f32 %v600, 0.0
  %v857 = vmax.f32 %v601, 0.0
  %v858 = vmax.f32 %v602, 0.0
  %v859 = vmax.f32 %v603, 0.0
  %v860 = vmax.f32 %v604, 0.0
  %v861 = vmax.f32 %v605, 0.0
  %v862 = vmax.f32 %v606, 0.0
  %v863 = vmax.f32 %v607, 0.0
  %v864 = vmax.f32 %v608, 0.0
  %v865 = vmax.f32 %v609, 0.0
  %v866 = vmax.f32 %v610, 0.0
  %v867 = vmax.f32 %v611, 0.0
  %v868 = vmax.f32 %v612, 0.0
  %v869 = vmax.f32 %v613, 0.0
  %v870 = vmax.f32 %v614, 0.0
  %v871 = vmax.f32 %v615, 0.0
  %v872 = vmax.f32 %v616, 0.0
  %v873 = vmax.f32 %v617, 0.0
  %v874 = vmax.f32 %v618, 0.0
  %v875 = vmax.f32 %v619, 0.0
  %v876 = vmax.f32 %v620, 0.0
  %v877 = vmax.f32 %v621, 0.0
  %v878 = vmax.f32 %v622, 0.0
  %v879 = vmax.f32 %v623, 0.0
  %v880 = vmax.f32 %v624, 0.0
  %v881 = vmax.f32 %v625, 0.0
  %v882 = vmax.f32 %v626, 0.0
  %v883 = vmax.f32 %v627, 0.0
  %v884 = vmax.f32 %v628, 0.0
  %v885 = vmax.f32 %v629, 0.0
  %v886 = vmax.f32 %v630, 0.0
  %v887 = vmax.f32 %v631, 0.0
  %v888 = vmax.f32 %v632, 0.0
  %v889 = vmax.f32 %v633, 0.0
  %v890 = vmax.f32 %v634, 0.0
  %v891 = vmax.f32 %v635, 0.0
  %v892 = vmax.f32 %v636, 0.0
  %v893 = vmax.f32 %v637, 0.0
  %v894 = vmax.f32 %v638, 0.0
  %v895 = vmax.f32 %v639, 0.0
  %v896 = vmax.f32 %v640, 0.0
  %v897 = vmax.f32 %v641, 0.0
  %v898 = vmax.f32 %v642, 0.0
  %v899 = vmax.f32 %v643, 0.0
  %v900 = vmax.f32 %v644, 0.0
  %v901 = vmax.f32 %v645, 0.0
  %v902 = vmax.f32 %v646, 0.0
  %v903 = vmax.f32 %v647, 0.0
  %v904 = vmax.f32 %v648, 0.0
  %v905 = vmax.f32 %v649, 0.0
  %v906 = vmax.f32 %v650, 0.0
  %v907 = vmax.f32 %v651, 0.0
  %v908 = vmax.f32 %v652, 0.0
  %v909 = vmax.f32 %v653, 0.0
  %v910 = vmax.f32 %v654, 0.0
  %v911 = vmax.f32 %v655, 0.0
  %v912 = vmax.f32 %v656, 0.0
  %v913 = vmax.f32 %v657, 0.0
  %v914 = vmax.f32 %v658, 0.0
  %v915 = vmax.f32 %v659, 0.0
  %v916 = vmax.f32 %v660, 0.0
  %v917 = vmax.f32 %v661, 0.0
  %v918 = vmax.f32 %v662, 0.0
  %v919 = vmax.f32 %v663, 0.0
  %v920 = vmax.f32 %v664, 0.0
  %v921 = vmax.f32 %v665, 0.0
  %v922 = vmax.f32 %v666, 0.0
  %v923 = vmax.f32 %v667, 0.0
  %v924 = vmax.f32 %v668, 0.0
  %v925 = vmax.f32 %v669, 0.0
  %v926 = vmax.f32 %v670, 0.0
  %v927 = vmax.f32 %v671, 0.0
  %v928 = vmax.f32 %v672, 0.0
  %v929 = vmax.f32 %v673, 0.0
  %v930 = vmax.f32 %v674, 0.0
  %v931 = vmax.f32 %v675, 0.0
  %v932 = vmax.f32 %v676, 0.0
  %v933 = vmax.f32 %v677, 0.0
  %v934 = vmax.f32 %v678, 0.0
  %v935 = vmax.f32 %v679, 0.0
  %v936 = vmax.f32 %v680, 0.0
  %v937 = vmax.f32 %v681, 0.0
  %v938 = vmax.f32 %v682, 0.0
  %v939 = vmax.f32 %v683, 0.0
  %v940 = vmax.f32 %v684, 0.0
  %v941 = vmax.f32 %v685, 0.0
  %v942 = vmax.f32 %v686, 0.0
  %v943 = vmax.f32 %v687, 0.0
  %v944 = vmax.f32 %v688, 0.0
  %v945 = vmax.f32 %v689, 0.0
  %v946 = vmax.f32 %v690, 0.0
  %v947 = vmax.f32 %v691, 0.0
  %v948 = vmax.f32 %v692, 0.0
  %v949 = vmax.f32 %v693, 0.0
  %v950 = vmax.f32 %v694, 0.0
  %v951 = vmax.f32 %v695, 0.0
  %v952 = vmax.f32 %v696, 0.0
  %v953 = vmax.f32 %v697, 0.0
  %v954 = vmax.f32 %v698, 0.0
  %v955 = vmax.f32 %v699, 0.0
  %v956 = vmax.f32 %v700, 0.0
  %v957 = vmax.f32 %v701, 0.0
  %v958 = vmax.f32 %v702, 0.0
  %v959 = vmax.f32 %v703, 0.0
  %v960 = vmax.f32 %v704, 0.0
  %v961 = vmax.f32 %v705, 0.0
  %v962 = vmax.f32 %v706, 0.0
  %v963 = vmax.f32 %v707, 0.0
  %v964 = vmax.f32 %v708, 0.0
  %v965 = vmax.f32 %v709, 0.0
  %v966 = vmax.f32 %v710, 0.0
  %v967 = vmax.f32 %v711, 0.0
  %v968 = vmax.f32 %v712, 0.0
  %v969 = vmax.f32 %v713, 0.0
  %v970 = vmax.f32 %v714, 0.0
  %v971 = vmax.f32 %v715, 0.0
  %v972 = vmax.f32 %v716, 0.0
  %v973 = vmax.f32 %v717, 0.0
  %v974 = vmax.f32 %v718, 0.0
  %v975 = vmax.f32 %v719, 0.0
  %v976 = vmax.f32 %v720, 0.0
  %v977 = vmax.f32 %v721, 0.0
  %v978 = vmax.f32 %v722, 0.0
  %v979 = vmax.f32 %v723, 0.0
  %v980 = vmax.f32 %v724, 0.0
  %v981 = vmax.f32 %v725, 0.0
  %v982 = vmax.f32 %v726, 0.0
  %v983 = vmax.f32 %v727, 0.0
  %v984 = vmax.f32 %v728, 0.0
  %v985 = vmax.f32 %v729, 0.0
  %v986 = vmax.f32 %v730, 0.0
  %v987 = vmax.f32 %v731, 0.0
  %v988 = vmax.f32 %v732, 0.0
  %v989 = vmax.f32 %v733, 0.0
  %v990 = vmax.f32 %v734, 0.0
  %v991 = vmax.f32 %v735, 0.0
  %v992 = vmax.f32 %v736, 0.0
  %v993 = vmax.f32 %v737, 0.0
  %v994 = vmax.f32 %v738, 0.0
  %v995 = vmax.f32 %v739, 0.0
  %v996 = vmax.f32 %v740, 0.0
  %v997 = vmax.f32 %v741, 0.0
  %v998 = vmax.f32 %v742, 0.0
  %v999 = vmax.f32 %v743, 0.0
  %v1000 = vmax.f32 %v744, 0.0
  %v1001 = vmax.f32 %v745, 0.0
  %v1002 = vmax.f32 %v746, 0.0
  %v1003 = vmax.f32 %v747, 0.0
  %v1004 = vmax.f32 %v748, 0.0
  %v1005 = vmax.f32 %v749, 0.0
  %v1006 = vmax.f32 %v750, 0.0
  %v1007 = vmax.f32 %v751, 0.0
  %v1008 = vmax.f32 %v752, 0.0
  %v1009 = vmax.f32 %v753, 0.0
  %v1010 = vmax.f32 %v754, 0.0
  %v1011 = vmax.f32 %v755, 0.0
  %v1012 = vmax.f32 %v756, 0.0
  %v1013 = vmax.f32 %v757, 0.0
  %v1014 = vmax.f32 %v758, 0.0
  %v1015 = vmax.f32 %v759, 0.0
  %v1016 = vmax.f32 %v760, 0.0
  %v1017 = vmax.f32 %v761, 0.0
  %v1018 = vmax.f32 %v762, 0.0
  %v1019 = vmax.f32 %v763, 0.0
  %v1020 = vmax.f32 %v764, 0.0
  %v1021 = vmax.f32 %v765, 0.0
  %v1022 = vmax.f32 %v766, 0.0
  %v1023 = vmax.f32 %v767, 0.0
  %v1024 = vmax.f32 %v768, 0.0
  %v1025 = vmax.f32 %v769, 0.0
  %v1026 = vmax.f32 %v770, 0.0
  %v1027 = vmax.f32 %v771, 0.0
  %v1028 = vmax.f32 %v772, 0.0
  %v1029 = vmax.f32 %v773, 0.0
  %v1030 = vmax.f32 %v774, 0.0
  %v1031 = vmax.f32 %v775, 0.0
  %v1032 = vmax.f32 %v776, 0.0
  %v1033 = vmax.f32 %v777, 0.0
  %v1034 = vmax.f32 %v778, 0.0
  %v1035 = vmax.f32 %v779, 0.0
  %v1036 = vmax.f32 %v780, 0.0
  %v1037 = vmax.f32 %v781, 0.0
  %v1038 = vmax.f32 %v782, 0.0
  %v1039 = vmax.f32 %v783, 0.0
  %v1040 = vmax.f32 %v784, 0.0
  %v1041 = vmax.f32 %v785, 0.0
  %v1042 = vmax.f32 %v786, 0.0
  %v1043 = vmax.f32 %v787, 0.0
  %v1044 = vmax.f32 %v788, 0.0
  %v1045 = vmax.f32 %v789, 0.0
  %v1046 = vmax.f32 %v790, 0.0
  %v1047 = vmax.f32 %v791, 0.0
  %v1048 = vmax.f32 %v792, 0.0
  %v1049 = vmax.f32 %v793, 0.0
  %v1050 = vmax.f32 %v794, 0.0
  %v1051 = vmax.f32 %v795, 0.0
  %v1052 = vmax.f32 %v796, 0.0
  %v1053 = vmax.f32 %v797, 0.0
  %v1054 = vmax.f32 %v798, 0.0
  %v1055 = vmax.f32 %v799, 0.0
  %v1056 = vmax.f32 %v800, 0.0
  %v1057 = vmax.f32 %v801, 0.0
  %v1058 = vmax.f32 %v802, 0.0
  %v1059 = vmax.f32 %v803, 0.0
  %v1060 = vmax.f32 %v804, 0.0
  %v1061 = vmax.f32 %v805, 0.0
  %v1062 = vmax.f32 %v806, 0.0
  %v1063 = vmax.f32 %v807, 0.0
  %v1064 = vmax.f32 %v808, 0.0
  %v1065 = vmax.f32 %v809, 0.0
  %v1066 = vmax.f32 %v810, 0.0
  %v1067 = vmax.f32 %v811, 0.0
  %v1068 = vmax.f32 %v812, 0.0
  %v1069 = vmax.f32 %v813, 0.0
  %v1070 = vmax.f32 %v814, 0.0
  %v1071 = vmax.f32 %v815, 0.0
  %v1072 = vmax.f32 %v816, 0.0
  %v1073 = vmax.f32 %v817, 0.0
  %v1074 = vmax.f32 %v818, 0.0
  %v1075 = vmax.f32 %v819, 0.0
  %v1076 = vmax.f32 %v820, 0.0
  %v1077 = vmax.f32 %v821, 0.0
  %v1078 = vmax.f32 %v822, 0.0
  %v1079 = vmax.f32 %v823, 0.0
  %v1080 = vmax.f32 %v824, 0.0
  %v1081 = vmax.f32 %v825, 0.0
  %v1082 = vpack.c.bf16 %v830, %v826
  %v1083 = vpack.c.bf16 %v831, %v827
  %v1084 = vpack.c.bf16 %v832, %v828
  %v1085 = vpack.c.bf16 %v833, %v829
  %v1086 = vpack.c.bf16 %v838, %v834
  %v1087 = vpack.c.bf16 %v839, %v835
  %v1088 = vpack.c.bf16 %v840, %v836
  %v1089 = vpack.c.bf16 %v841, %v837
  %v1090 = vpack.c.bf16 %v846, %v842
  %v1091 = vpack.c.bf16 %v847, %v843
  %v1092 = vpack.c.bf16 %v848, %v844
  %v1093 = vpack.c.bf16 %v849, %v845
  %v1094 = vpack.c.bf16 %v854, %v850
  %v1095 = vpack.c.bf16 %v855, %v851
  %v1096 = vpack.c.bf16 %v856, %v852
  %v1097 = vpack.c.bf16 %v857, %v853
  %v1098 = vpack.c.bf16 %v862, %v858
  %v1099 = vpack.c.bf16 %v863, %v859
  %v1100 = vpack.c.bf16 %v864, %v860
  %v1101 = vpack.c.bf16 %v865, %v861
  %v1102 = vpack.c.bf16 %v870, %v866
  %v1103 = vpack.c.bf16 %v871, %v867
  %v1104 = vpack.c.bf16 %v872, %v868
  %v1105 = vpack.c.bf16 %v873, %v869
  %v1106 = vpack.c.bf16 %v878, %v874
  %v1107 = vpack.c.bf16 %v879, %v875
  %v1108 = vpack.c.bf16 %v880, %v876
  %v1109 = vpack.c.bf16 %v881, %v877
  %v1110 = vpack.c.bf16 %v886, %v882
  %v1111 = vpack.c.bf16 %v887, %v883
  %v1112 = vpack.c.bf16 %v888, %v884
  %v1113 = vpack.c.bf16 %v889, %v885
  %v1114 = vpack.c.bf16 %v894, %v890
  %v1115 = vpack.c.bf16 %v895, %v891
  %v1116 = vpack.c.bf16 %v896, %v892
  %v1117 = vpack.c.bf16 %v897, %v893
  %v1118 = vpack.c.bf16 %v902, %v898
  %v1119 = vpack.c.bf16 %v903, %v899
  %v1120 = vpack.c.bf16 %v904, %v900
  %v1121 = vpack.c.bf16 %v905, %v901
  %v1122 = vpack.c.bf16 %v910, %v906
  %v1123 = vpack.c.bf16 %v911, %v907
  %v1124 = vpack.c.bf16 %v912, %v908
  %v1125 = vpack.c.bf16 %v913, %v909
  %v1126 = vpack.c.bf16 %v918, %v914
  %v1127 = vpack.c.bf16 %v919, %v915
  %v1128 = vpack.c.bf16 %v920, %v916
  %v1129 = vpack.c.bf16 %v921, %v917
  %v1130 = vpack.c.bf16 %v926, %v922
  %v1131 = vpack.c.bf16 %v927, %v923
  %v1132 = vpack.c.bf16 %v928, %v924
  %v1133 = vpack.c.bf16 %v929, %v925
  %v1134 = vpack.c.bf16 %v934, %v930
  %v1135 = vpack.c.bf16 %v935, %v931
  %v1136 = vpack.c.bf16 %v936, %v932
  %v1137 = vpack.c.bf16 %v937, %v933
  %v1138 = vpack.c.bf16 %v942, %v938
  %v1139 = vpack.c.bf16 %v943, %v939
  %v1140 = vpack.c.bf16 %v944, %v940
  %v1141 = vpack.c.bf16 %v945, %v941
  %v1142 = vpack.c.bf16 %v950, %v946
  %v1143 = vpack.c.bf16 %v951, %v947
  %v1144 = vpack.c.bf16 %v952, %v948
  %v1145 = vpack.c.bf16 %v953, %v949
  %v1146 = vpack.c.bf16 %v958, %v954
  %v1147 = vpack.c.bf16 %v959, %v955
  %v1148 = vpack.c.bf16 %v960, %v956
  %v1149 = vpack.c.bf16 %v961, %v957
  %v1150 = vpack.c.bf16 %v966, %v962
  %v1151 = vpack.c.bf16 %v967, %v963
  %v1152 = vpack.c.bf16 %v968, %v964
  %v1153 = vpack.c.bf16 %v969, %v965
  %v1154 = vpack.c.bf16 %v974, %v970
  %v1155 = vpack.c.bf16 %v975, %v971
  %v1156 = vpack.c.bf16 %v976, %v972
  %v1157 = vpack.c.bf16 %v977, %v973
  %v1158 = vpack.c.bf16 %v982, %v978
  %v1159 = vpack.c.bf16 %v983, %v979
  %v1160 = vpack.c.bf16 %v984, %v980
  %v1161 = vpack.c.bf16 %v985, %v981
  %v1162 = vpack.c.bf16 %v990, %v986
  %v1163 = vpack.c.bf16 %v991, %v987
  %v1164 = vpack.c.bf16 %v992, %v988
  %v1165 = vpack.c.bf16 %v993, %v989
  %v1166 = vpack.c.bf16 %v998, %v994
  %v1167 = vpack.c.bf16 %v999, %v995
  %v1168 = vpack.c.bf16 %v1000, %v996
  %v1169 = vpack.c.bf16 %v1001, %v997
  %v1170 = vpack.c.bf16 %v1006, %v1002
  %v1171 = vpack.c.bf16 %v1007, %v1003
  %v1172 = vpack.c.bf16 %v1008, %v1004
  %v1173 = vpack.c.bf16 %v1009, %v1005
  %v1174 = vpack.c.bf16 %v1014, %v1010
  %v1175 = vpack.c.bf16 %v1015, %v1011
  %v1176 = vpack.c.bf16 %v1016, %v1012
  %v1177 = vpack.c.bf16 %v1017, %v1013
  %v1178 = vpack.c.bf16 %v1022, %v1018
  %v1179 = vpack.c.bf16 %v1023, %v1019
  %v1180 = vpack.c.bf16 %v1024, %v1020
  %v1181 = vpack.c.bf16 %v1025, %v1021
  %v1182 = vpack.c.bf16 %v1030, %v1026
  %v1183 = vpack.c.bf16 %v1031, %v1027
  %v1184 = vpack.c.bf16 %v1032, %v1028
  %v1185 = vpack.c.bf16 %v1033, %v1029
  %v1186 = vpack.c.bf16 %v1038, %v1034
  %v1187 = vpack.c.bf16 %v1039, %v1035
  %v1188 = vpack.c.bf16 %v1040, %v1036
  %v1189 = vpack.c.bf16 %v1041, %v1037
  %v1190 = vpack.c.bf16 %v1046, %v1042
  %v1191 = vpack.c.bf16 %v1047, %v1043
  %v1192 = vpack.c.bf16 %v1048, %v1044
  %v1193 = vpack.c.bf16 %v1049, %v1045
  %v1194 = vpack.c.bf16 %v1054, %v1050
  %v1195 = vpack.c.bf16 %v1055, %v1051
  %v1196 = vpack.c.bf16 %v1056, %v1052
  %v1197 = vpack.c.bf16 %v1057, %v1053
  %v1198 = vpack.c.bf16 %v1062, %v1058
  %v1199 = vpack.c.bf16 %v1063, %v1059
  %v1200 = vpack.c.bf16 %v1064, %v1060
  %v1201 = vpack.c.bf16 %v1065, %v1061
  %v1202 = vpack.c.bf16 %v1070, %v1066
  %v1203 = vpack.c.bf16 %v1071, %v1067
  %v1204 = vpack.c.bf16 %v1072, %v1068
  %v1205 = vpack.c.bf16 %v1073, %v1069
  %v1206 = vpack.c.bf16 %v1078, %v1074
  %v1207 = vpack.c.bf16 %v1079, %v1075
  %v1208 = vpack.c.bf16 %v1080, %v1076
  %v1209 = vpack.c.bf16 %v1081, %v1077
  %v1338 = vunpack.c.l.b16 %v1082
  %v1339 = vunpack.c.l.b16 %v1083
  %v1340 = vunpack.c.l.b16 %v1084
  %v1341 = vunpack.c.l.b16 %v1085
  %v1342 = vunpack.c.h.b16 %v1082
  %v1343 = vunpack.c.h.b16 %v1083
  %v1344 = vunpack.c.h.b16 %v1084
  %v1345 = vunpack.c.h.b16 %v1085
  %v1346 = vunpack.c.l.b16 %v1086
  %v1347 = vunpack.c.l.b16 %v1087
  %v1348 = vunpack.c.l.b16 %v1088
  %v1349 = vunpack.c.l.b16 %v1089
  %v1350 = vunpack.c.h.b16 %v1086
  %v1351 = vunpack.c.h.b16 %v1087
  %v1352 = vunpack.c.h.b16 %v1088
  %v1353 = vunpack.c.h.b16 %v1089
  %v1354 = vunpack.c.l.b16 %v1090
  %v1355 = vunpack.c.l.b16 %v1091
  %v1356 = vunpack.c.l.b16 %v1092
  %v1357 = vunpack.c.l.b16 %v1093
  %v1358 = vunpack.c.h.b16 %v1090
  %v1359 = vunpack.c.h.b16 %v1091
  %v1360 = vunpack.c.h.b16 %v1092
  %v1361 = vunpack.c.h.b16 %v1093
  %v1362 = vunpack.c.l.b16 %v1094
  %v1363 = vunpack.c.l.b16 %v1095
  %v1364 = vunpack.c.l.b16 %v1096
  %v1365 = vunpack.c.l.b16 %v1097
  %v1366 = vunpack.c.h.b16 %v1094
  %v1367 = vunpack.c.h.b16 %v1095
  %v1368 = vunpack.c.h.b16 %v1096
  %v1369 = vunpack.c.h.b16 %v1097
  %v1370 = vunpack.c.l.b16 %v1098
  %v1371 = vunpack.c.l.b16 %v1099
  %v1372 = vunpack.c.l.b16 %v1100
  %v1373 = vunpack.c.l.b16 %v1101
  %v1374 = vunpack.c.h.b16 %v1098
  %v1375 = vunpack.c.h.b16 %v1099
  %v1376 = vunpack.c.h.b16 %v1100
  %v1377 = vunpack.c.h.b16 %v1101
  %v1378 = vunpack.c.l.b16 %v1102
  %v1379 = vunpack.c.l.b16 %v1103
  %v1380 = vunpack.c.l.b16 %v1104
  %v1381 = vunpack.c.l.b16 %v1105
  %v1382 = vunpack.c.h.b16 %v1102
  %v1383 = vunpack.c.h.b16 %v1103
  %v1384 = vunpack.c.h.b16 %v1104
  %v1385 = vunpack.c.h.b16 %v1105
  %v1386 = vunpack.c.l.b16 %v1106
  %v1387 = vunpack.c.l.b16 %v1107
  %v1388 = vunpack.c.l.b16 %v1108
  %v1389 = vunpack.c.l.b16 %v1109
  %v1390 = vunpack.c.h.b16 %v1106
  %v1391 = vunpack.c.h.b16 %v1107
  %v1392 = vunpack.c.h.b16 %v1108
  %v1393 = vunpack.c.h.b16 %v1109
  %v1394 = vunpack.c.l.b16 %v1110
  %v1395 = vunpack.c.l.b16 %v1111
  %v1396 = vunpack.c.l.b16 %v1112
  %v1397 = vunpack.c.l.b16 %v1113
  %v1398 = vunpack.c.h.b16 %v1110
  %v1399 = vunpack.c.h.b16 %v1111
  %v1400 = vunpack.c.h.b16 %v1112
  %v1401 = vunpack.c.h.b16 %v1113
  %v1402 = vunpack.c.l.b16 %v1114
  %v1403 = vunpack.c.l.b16 %v1115
  %v1404 = vunpack.c.l.b16 %v1116
  %v1405 = vunpack.c.l.b16 %v1117
  %v1406 = vunpack.c.h.b16 %v1114
  %v1407 = vunpack.c.h.b16 %v1115
  %v1408 = vunpack.c.h.b16 %v1116
  %v1409 = vunpack.c.h.b16 %v1117
  %v1410 = vunpack.c.l.b16 %v1118
  %v1411 = vunpack.c.l.b16 %v1119
  %v1412 = vunpack.c.l.b16 %v1120
  %v1413 = vunpack.c.l.b16 %v1121
  %v1414 = vunpack.c.h.b16 %v1118
  %v1415 = vunpack.c.h.b16 %v1119
  %v1416 = vunpack.c.h.b16 %v1120
  %v1417 = vunpack.c.h.b16 %v1121
  %v1418 = vunpack.c.l.b16 %v1122
  %v1419 = vunpack.c.l.b16 %v1123
  %v1420 = vunpack.c.l.b16 %v1124
  %v1421 = vunpack.c.l.b16 %v1125
  %v1422 = vunpack.c.h.b16 %v1122
  %v1423 = vunpack.c.h.b16 %v1123
  %v1424 = vunpack.c.h.b16 %v1124
  %v1425 = vunpack.c.h.b16 %v1125
  %v1426 = vunpack.c.l.b16 %v1126
  %v1427 = vunpack.c.l.b16 %v1127
  %v1428 = vunpack.c.l.b16 %v1128
  %v1429 = vunpack.c.l.b16 %v1129
  %v1430 = vunpack.c.h.b16 %v1126
  %v1431 = vunpack.c.h.b16 %v1127
  %v1432 = vunpack.c.h.b16 %v1128
  %v1433 = vunpack.c.h.b16 %v1129
  %v1434 = vunpack.c.l.b16 %v1130
  %v1435 = vunpack.c.l.b16 %v1131
  %v1436 = vunpack.c.l.b16 %v1132
  %v1437 = vunpack.c.l.b16 %v1133
  %v1438 = vunpack.c.h.b16 %v1130
  %v1439 = vunpack.c.h.b16 %v1131
  %v1440 = vunpack.c.h.b16 %v1132
  %v1441 = vunpack.c.h.b16 %v1133
  %v1442 = vunpack.c.l.b16 %v1134
  %v1443 = vunpack.c.l.b16 %v1135
  %v1444 = vunpack.c.l.b16 %v1136
  %v1445 = vunpack.c.l.b16 %v1137
  %v1446 = vunpack.c.h.b16 %v1134
  %v1447 = vunpack.c.h.b16 %v1135
  %v1448 = vunpack.c.h.b16 %v1136
  %v1449 = vunpack.c.h.b16 %v1137
  %v1450 = vunpack.c.l.b16 %v1138
  %v1451 = vunpack.c.l.b16 %v1139
  %v1452 = vunpack.c.l.b16 %v1140
  %v1453 = vunpack.c.l.b16 %v1141
  %v1454 = vunpack.c.h.b16 %v1138
  %v1455 = vunpack.c.h.b16 %v1139
  %v1456 = vunpack.c.h.b16 %v1140
  %v1457 = vunpack.c.h.b16 %v1141
  %v1458 = vunpack.c.l.b16 %v1142
  %v1459 = vunpack.c.l.b16 %v1143
  %v1460 = vunpack.c.l.b16 %v1144
  %v1461 = vunpack.c.l.b16 %v1145
  %v1462 = vunpack.c.h.b16 %v1142
  %v1463 = vunpack.c.h.b16 %v1143
  %v1464 = vunpack.c.h.b16 %v1144
  %v1465 = vunpack.c.h.b16 %v1145
  %v1466 = vunpack.c.l.b16 %v1146
  %v1467 = vunpack.c.l.b16 %v1147
  %v1468 = vunpack.c.l.b16 %v1148
  %v1469 = vunpack.c.l.b16 %v1149
  %v1470 = vunpack.c.h.b16 %v1146
  %v1471 = vunpack.c.h.b16 %v1147
  %v1472 = vunpack.c.h.b16 %v1148
  %v1473 = vunpack.c.h.b16 %v1149
  %v1474 = vunpack.c.l.b16 %v1150
  %v1475 = vunpack.c.l.b16 %v1151
  %v1476 = vunpack.c.l.b16 %v1152
  %v1477 = vunpack.c.l.b16 %v1153
  %v1478 = vunpack.c.h.b16 %v1150
  %v1479 = vunpack.c.h.b16 %v1151
  %v1480 = vunpack.c.h.b16 %v1152
  %v1481 = vunpack.c.h.b16 %v1153
  %v1482 = vunpack.c.l.b16 %v1154
  %v1483 = vunpack.c.l.b16 %v1155
  %v1484 = vunpack.c.l.b16 %v1156
  %v1485 = vunpack.c.l.b16 %v1157
  %v1486 = vunpack.c.h.b16 %v1154
  %v1487 = vunpack.c.h.b16 %v1155
  %v1488 = vunpack.c.h.b16 %v1156
  %v1489 = vunpack.c.h.b16 %v1157
  %v1490 = vunpack.c.l.b16 %v1158
  %v1491 = vunpack.c.l.b16 %v1159
  %v1492 = vunpack.c.l.b16 %v1160
  %v1493 = vunpack.c.l.b16 %v1161
  %v1494 = vunpack.c.h.b16 %v1158
  %v1495 = vunpack.c.h.b16 %v1159
  %v1496 = vunpack.c.h.b16 %v1160
  %v1497 = vunpack.c.h.b16 %v1161
  %v1498 = vunpack.c.l.b16 %v1162
  %v1499 = vunpack.c.l.b16 %v1163
  %v1500 = vunpack.c.l.b16 %v1164
  %v1501 = vunpack.c.l.b16 %v1165
  %v1502 = vunpack.c.h.b16 %v1162
  %v1503 = vunpack.c.h.b16 %v1163
  %v1504 = vunpack.c.h.b16 %v1164
  %v1505 = vunpack.c.h.b16 %v1165
  %v1506 = vunpack.c.l.b16 %v1166
  %v1507 = vunpack.c.l.b16 %v1167
  %v1508 = vunpack.c.l.b16 %v1168
  %v1509 = vunpack.c.l.b16 %v1169
  %v1510 = vunpack.c.h.b16 %v1166
  %v1511 = vunpack.c.h.b16 %v1167
  %v1512 = vunpack.c.h.b16 %v1168
  %v1513 = vunpack.c.h.b16 %v1169
  %v1514 = vunpack.c.l.b16 %v1170
  %v1515 = vunpack.c.l.b16 %v1171
  %v1516 = vunpack.c.l.b16 %v1172
  %v1517 = vunpack.c.l.b16 %v1173
  %v1518 = vunpack.c.h.b16 %v1170
  %v1519 = vunpack.c.h.b16 %v1171
  %v1520 = vunpack.c.h.b16 %v1172
  %v1521 = vunpack.c.h.b16 %v1173
  %v1522 = vunpack.c.l.b16 %v1174
  %v1523 = vunpack.c.l.b16 %v1175
  %v1524 = vunpack.c.l.b16 %v1176
  %v1525 = vunpack.c.l.b16 %v1177
  %v1526 = vunpack.c.h.b16 %v1174
  %v1527 = vunpack.c.h.b16 %v1175
  %v1528 = vunpack.c.h.b16 %v1176
  %v1529 = vunpack.c.h.b16 %v1177
  %v1530 = vunpack.c.l.b16 %v1178
  %v1531 = vunpack.c.l.b16 %v1179
  %v1532 = vunpack.c.l.b16 %v1180
  %v1533 = vunpack.c.l.b16 %v1181
  %v1534 = vunpack.c.h.b16 %v1178
  %v1535 = vunpack.c.h.b16 %v1179
  %v1536 = vunpack.c.h.b16 %v1180
  %v1537 = vunpack.c.h.b16 %v1181
  %v1538 = vunpack.c.l.b16 %v1182
  %v1539 = vunpack.c.l.b16 %v1183
  %v1540 = vunpack.c.l.b16 %v1184
  %v1541 = vunpack.c.l.b16 %v1185
  %v1542 = vunpack.c.h.b16 %v1182
  %v1543 = vunpack.c.h.b16 %v1183
  %v1544 = vunpack.c.h.b16 %v1184
  %v1545 = vunpack.c.h.b16 %v1185
  %v1546 = vunpack.c.l.b16 %v1186
  %v1547 = vunpack.c.l.b16 %v1187
  %v1548 = vunpack.c.l.b16 %v1188
  %v1549 = vunpack.c.l.b16 %v1189
  %v1550 = vunpack.c.h.b16 %v1186
  %v1551 = vunpack.c.h.b16 %v1187
  %v1552 = vunpack.c.h.b16 %v1188
  %v1553 = vunpack.c.h.b16 %v1189
  %v1554 = vunpack.c.l.b16 %v1190
  %v1555 = vunpack.c.l.b16 %v1191
  %v1556 = vunpack.c.l.b16 %v1192
  %v1557 = vunpack.c.l.b16 %v1193
  %v1558 = vunpack.c.h.b16 %v1190
  %v1559 = vunpack.c.h.b16 %v1191
  %v1560 = vunpack.c.h.b16 %v1192
  %v1561 = vunpack.c.h.b16 %v1193
  %v1562 = vunpack.c.l.b16 %v1194
  %v1563 = vunpack.c.l.b16 %v1195
  %v1564 = vunpack.c.l.b16 %v1196
  %v1565 = vunpack.c.l.b16 %v1197
  %v1566 = vunpack.c.h.b16 %v1194
  %v1567 = vunpack.c.h.b16 %v1195
  %v1568 = vunpack.c.h.b16 %v1196
  %v1569 = vunpack.c.h.b16 %v1197
  %v1570 = vunpack.c.l.b16 %v1198
  %v1571 = vunpack.c.l.b16 %v1199
  %v1572 = vunpack.c.l.b16 %v1200
  %v1573 = vunpack.c.l.b16 %v1201
  %v1574 = vunpack.c.h.b16 %v1198
  %v1575 = vunpack.c.h.b16 %v1199
  %v1576 = vunpack.c.h.b16 %v1200
  %v1577 = vunpack.c.h.b16 %v1201
  %v1578 = vunpack.c.l.b16 %v1202
  %v1579 = vunpack.c.l.b16 %v1203
  %v1580 = vunpack.c.l.b16 %v1204
  %v1581 = vunpack.c.l.b16 %v1205
  %v1582 = vunpack.c.h.b16 %v1202
  %v1583 = vunpack.c.h.b16 %v1203
  %v1584 = vunpack.c.h.b16 %v1204
  %v1585 = vunpack.c.h.b16 %v1205
  %v1586 = vunpack.c.l.b16 %v1206
  %v1587 = vunpack.c.l.b16 %v1207
  %v1588 = vunpack.c.l.b16 %v1208
  %v1589 = vunpack.c.l.b16 %v1209
  %v1590 = vunpack.c.h.b16 %v1206
  %v1591 = vunpack.c.h.b16 %v1207
  %v1592 = vunpack.c.h.b16 %v1208
  %v1593 = vunpack.c.h.b16 %v1209
  %v1594 = vpack.c.b16 %v1339, %v1338
  %v1595 = vpack.c.b16 %v1341, %v1340
  %v1596 = vpack.c.b16 %v1343, %v1342
  %v1597 = vpack.c.b16 %v1345, %v1344
  %v1598 = vpack.c.b16 %v1347, %v1346
  %v1599 = vpack.c.b16 %v1349, %v1348
  %v1600 = vpack.c.b16 %v1351, %v1350
  %v1601 = vpack.c.b16 %v1353, %v1352
  %v1602 = vpack.c.b16 %v1355, %v1354
  %v1603 = vpack.c.b16 %v1357, %v1356
  %v1604 = vpack.c.b16 %v1359, %v1358
  %v1605 = vpack.c.b16 %v1361, %v1360
  %v1606 = vpack.c.b16 %v1363, %v1362
  %v1607 = vpack.c.b16 %v1365, %v1364
  %v1608 = vpack.c.b16 %v1367, %v1366
  %v1609 = vpack.c.b16 %v1369, %v1368
  %v1610 = vpack.c.b16 %v1371, %v1370
  %v1611 = vpack.c.b16 %v1373, %v1372
  %v1612 = vpack.c.b16 %v1375, %v1374
  %v1613 = vpack.c.b16 %v1377, %v1376
  %v1614 = vpack.c.b16 %v1379, %v1378
  %v1615 = vpack.c.b16 %v1381, %v1380
  %v1616 = vpack.c.b16 %v1383, %v1382
  %v1617 = vpack.c.b16 %v1385, %v1384
  %v1618 = vpack.c.b16 %v1387, %v1386
  %v1619 = vpack.c.b16 %v1389, %v1388
  %v1620 = vpack.c.b16 %v1391, %v1390
  %v1621 = vpack.c.b16 %v1393, %v1392
  %v1622 = vpack.c.b16 %v1395, %v1394
  %v1623 = vpack.c.b16 %v1397, %v1396
  %v1624 = vpack.c.b16 %v1399, %v1398
  %v1625 = vpack.c.b16 %v1401, %v1400
  %v1626 = vpack.c.b16 %v1403, %v1402
  %v1627 = vpack.c.b16 %v1405, %v1404
  %v1628 = vpack.c.b16 %v1407, %v1406
  %v1629 = vpack.c.b16 %v1409, %v1408
  %v1630 = vpack.c.b16 %v1411, %v1410
  %v1631 = vpack.c.b16 %v1413, %v1412
  %v1632 = vpack.c.b16 %v1415, %v1414
  %v1633 = vpack.c.b16 %v1417, %v1416
  %v1634 = vpack.c.b16 %v1419, %v1418
  %v1635 = vpack.c.b16 %v1421, %v1420
  %v1636 = vpack.c.b16 %v1423, %v1422
  %v1637 = vpack.c.b16 %v1425, %v1424
  %v1638 = vpack.c.b16 %v1427, %v1426
  %v1639 = vpack.c.b16 %v1429, %v1428
  %v1640 = vpack.c.b16 %v1431, %v1430
  %v1641 = vpack.c.b16 %v1433, %v1432
  %v1642 = vpack.c.b16 %v1435, %v1434
  %v1643 = vpack.c.b16 %v1437, %v1436
  %v1644 = vpack.c.b16 %v1439, %v1438
  %v1645 = vpack.c.b16 %v1441, %v1440
  %v1646 = vpack.c.b16 %v1443, %v1442
  %v1647 = vpack.c.b16 %v1445, %v1444
  %v1648 = vpack.c.b16 %v1447, %v1446
  %v1649 = vpack.c.b16 %v1449, %v1448
  %v1650 = vpack.c.b16 %v1451, %v1450
  %v1651 = vpack.c.b16 %v1453, %v1452
  %v1652 = vpack.c.b16 %v1455, %v1454
  %v1653 = vpack.c.b16 %v1457, %v1456
  %v1654 = vpack.c.b16 %v1459, %v1458
  %v1655 = vpack.c.b16 %v1461, %v1460
  %v1656 = vpack.c.b16 %v1463, %v1462
  %v1657 = vpack.c.b16 %v1465, %v1464
  %v1658 = vpack.c.b16 %v1467, %v1466
  %v1659 = vpack.c.b16 %v1469, %v1468
  %v1660 = vpack.c.b16 %v1471, %v1470
  %v1661 = vpack.c.b16 %v1473, %v1472
  %v1662 = vpack.c.b16 %v1475, %v1474
  %v1663 = vpack.c.b16 %v1477, %v1476
  %v1664 = vpack.c.b16 %v1479, %v1478
  %v1665 = vpack.c.b16 %v1481, %v1480
  %v1666 = vpack.c.b16 %v1483, %v1482
  %v1667 = vpack.c.b16 %v1485, %v1484
  %v1668 = vpack.c.b16 %v1487, %v1486
  %v1669 = vpack.c.b16 %v1489, %v1488
  %v1670 = vpack.c.b16 %v1491, %v1490
  %v1671 = vpack.c.b16 %v1493, %v1492
  %v1672 = vpack.c.b16 %v1495, %v1494
  %v1673 = vpack.c.b16 %v1497, %v1496
  %v1674 = vpack.c.b16 %v1499, %v1498
  %v1675 = vpack.c.b16 %v1501, %v1500
  %v1676 = vpack.c.b16 %v1503, %v1502
  %v1677 = vpack.c.b16 %v1505, %v1504
  %v1678 = vpack.c.b16 %v1507, %v1506
  %v1679 = vpack.c.b16 %v1509, %v1508
  %v1680 = vpack.c.b16 %v1511, %v1510
  %v1681 = vpack.c.b16 %v1513, %v1512
  %v1682 = vpack.c.b16 %v1515, %v1514
  %v1683 = vpack.c.b16 %v1517, %v1516
  %v1684 = vpack.c.b16 %v1519, %v1518
  %v1685 = vpack.c.b16 %v1521, %v1520
  %v1686 = vpack.c.b16 %v1523, %v1522
  %v1687 = vpack.c.b16 %v1525, %v1524
  %v1688 = vpack.c.b16 %v1527, %v1526
  %v1689 = vpack.c.b16 %v1529, %v1528
  %v1690 = vpack.c.b16 %v1531, %v1530
  %v1691 = vpack.c.b16 %v1533, %v1532
  %v1692 = vpack.c.b16 %v1535, %v1534
  %v1693 = vpack.c.b16 %v1537, %v1536
  %v1694 = vpack.c.b16 %v1539, %v1538
  %v1695 = vpack.c.b16 %v1541, %v1540
  %v1696 = vpack.c.b16 %v1543, %v1542
  %v1697 = vpack.c.b16 %v1545, %v1544
  %v1698 = vpack.c.b16 %v1547, %v1546
  %v1699 = vpack.c.b16 %v1549, %v1548
  %v1700 = vpack.c.b16 %v1551, %v1550
  %v1701 = vpack.c.b16 %v1553, %v1552
  %v1702 = vpack.c.b16 %v1555, %v1554
  %v1703 = vpack.c.b16 %v1557, %v1556
  %v1704 = vpack.c.b16 %v1559, %v1558
  %v1705 = vpack.c.b16 %v1561, %v1560
  %v1706 = vpack.c.b16 %v1563, %v1562
  %v1707 = vpack.c.b16 %v1565, %v1564
  %v1708 = vpack.c.b16 %v1567, %v1566
  %v1709 = vpack.c.b16 %v1569, %v1568
  %v1710 = vpack.c.b16 %v1571, %v1570
  %v1711 = vpack.c.b16 %v1573, %v1572
  %v1712 = vpack.c.b16 %v1575, %v1574
  %v1713 = vpack.c.b16 %v1577, %v1576
  %v1714 = vpack.c.b16 %v1579, %v1578
  %v1715 = vpack.c.b16 %v1581, %v1580
  %v1716 = vpack.c.b16 %v1583, %v1582
  %v1717 = vpack.c.b16 %v1585, %v1584
  %v1718 = vpack.c.b16 %v1587, %v1586
  %v1719 = vpack.c.b16 %v1589, %v1588
  %v1720 = vpack.c.b16 %v1591, %v1590
  %v1721 = vpack.c.b16 %v1593, %v1592
  %1850 = vst [vmem:[%s3] sm:$0xff] %v1594
  %1851 = vst [vmem:[%s3 + $0x8] sm:$0xff] %v1595
  %1852 = vst [vmem:[%s3 + $0x10] sm:$0xff] %v1596
  %1853 = vst [vmem:[%s3 + $0x18] sm:$0xff] %v1597
  %1854 = vst [vmem:[%s3 + $0x20] sm:$0xff] %v1598
  %1855 = vst [vmem:[%s3 + $0x28] sm:$0xff] %v1599
  %1856 = vst [vmem:[%s3 + $0x30] sm:$0xff] %v1600
  %1857 = vst [vmem:[%s3 + $0x38] sm:$0xff] %v1601
  %1858 = vst [vmem:[%s3 + $0x40] sm:$0xff] %v1602
  %1859 = vst [vmem:[%s3 + $0x48] sm:$0xff] %v1603
  %1860 = vst [vmem:[%s3 + $0x50] sm:$0xff] %v1604
  %1861 = vst [vmem:[%s3 + $0x58] sm:$0xff] %v1605
  %1862 = vst [vmem:[%s3 + $0x60] sm:$0xff] %v1606
  %1863 = vst [vmem:[%s3 + $0x68] sm:$0xff] %v1607
  %1864 = vst [vmem:[%s3 + $0x70] sm:$0xff] %v1608
  %1865 = vst [vmem:[%s3 + $0x78] sm:$0xff] %v1609
  %1866 = vst [vmem:[%s3 + $0x80] sm:$0xff] %v1610
  %1867 = vst [vmem:[%s3 + $0x88] sm:$0xff] %v1611
  %1868 = vst [vmem:[%s3 + $0x90] sm:$0xff] %v1612
  %1869 = vst [vmem:[%s3 + $0x98] sm:$0xff] %v1613
  %1870 = vst [vmem:[%s3 + $0xa0] sm:$0xff] %v1614
  %1871 = vst [vmem:[%s3 + $0xa8] sm:$0xff] %v1615
  %1872 = vst [vmem:[%s3 + $0xb0] sm:$0xff] %v1616
  %1873 = vst [vmem:[%s3 + $0xb8] sm:$0xff] %v1617
  %1874 = vst [vmem:[%s3 + $0xc0] sm:$0xff] %v1618
  %1875 = vst [vmem:[%s3 + $0xc8] sm:$0xff] %v1619
  %1876 = vst [vmem:[%s3 + $0xd0] sm:$0xff] %v1620
  %1877 = vst [vmem:[%s3 + $0xd8] sm:$0xff] %v1621
  %1878 = vst [vmem:[%s3 + $0xe0] sm:$0xff] %v1622
  %1879 = vst [vmem:[%s3 + $0xe8] sm:$0xff] %v1623
  %1880 = vst [vmem:[%s3 + $0xf0] sm:$0xff] %v1624
  %1881 = vst [vmem:[%s3 + $0xf8] sm:$0xff] %v1625
  %1882 = vst [vmem:[%s3 + $0x100] sm:$0xff] %v1626
  %1883 = vst [vmem:[%s3 + $0x108] sm:$0xff] %v1627
  %1884 = vst [vmem:[%s3 + $0x110] sm:$0xff] %v1628
  %1885 = vst [vmem:[%s3 + $0x118] sm:$0xff] %v1629
  %1886 = vst [vmem:[%s3 + $0x120] sm:$0xff] %v1630
  %1887 = vst [vmem:[%s3 + $0x128] sm:$0xff] %v1631
  %1888 = vst [vmem:[%s3 + $0x130] sm:$0xff] %v1632
  %1889 = vst [vmem:[%s3 + $0x138] sm:$0xff] %v1633
  %1890 = vst [vmem:[%s3 + $0x140] sm:$0xff] %v1634
  %1891 = vst [vmem:[%s3 + $0x148] sm:$0xff] %v1635
  %1892 = vst [vmem:[%s3 + $0x150] sm:$0xff] %v1636
  %1893 = vst [vmem:[%s3 + $0x158] sm:$0xff] %v1637
  %1894 = vst [vmem:[%s3 + $0x160] sm:$0xff] %v1638
  %1895 = vst [vmem:[%s3 + $0x168] sm:$0xff] %v1639
  %1896 = vst [vmem:[%s3 + $0x170] sm:$0xff] %v1640
  %1897 = vst [vmem:[%s3 + $0x178] sm:$0xff] %v1641
  %1898 = vst [vmem:[%s3 + $0x180] sm:$0xff] %v1642
  %1899 = vst [vmem:[%s3 + $0x188] sm:$0xff] %v1643
  %1900 = vst [vmem:[%s3 + $0x190] sm:$0xff] %v1644
  %1901 = vst [vmem:[%s3 + $0x198] sm:$0xff] %v1645
  %1902 = vst [vmem:[%s3 + $0x1a0] sm:$0xff] %v1646
  %1903 = vst [vmem:[%s3 + $0x1a8] sm:$0xff] %v1647
  %1904 = vst [vmem:[%s3 + $0x1b0] sm:$0xff] %v1648
  %1905 = vst [vmem:[%s3 + $0x1b8] sm:$0xff] %v1649
  %1906 = vst [vmem:[%s3 + $0x1c0] sm:$0xff] %v1650
  %1907 = vst [vmem:[%s3 + $0x1c8] sm:$0xff] %v1651
  %1908 = vst [vmem:[%s3 + $0x1d0] sm:$0xff] %v1652
  %1909 = vst [vmem:[%s3 + $0x1d8] sm:$0xff] %v1653
  %1910 = vst [vmem:[%s3 + $0x1e0] sm:$0xff] %v1654
  %1911 = vst [vmem:[%s3 + $0x1e8] sm:$0xff] %v1655
  %1912 = vst [vmem:[%s3 + $0x1f0] sm:$0xff] %v1656
  %1913 = vst [vmem:[%s3 + $0x1f8] sm:$0xff] %v1657
  %1914 = vst [vmem:[%s3 + $0x200] sm:$0xff] %v1658
  %1915 = vst [vmem:[%s3 + $0x208] sm:$0xff] %v1659
  %1916 = vst [vmem:[%s3 + $0x210] sm:$0xff] %v1660
  %1917 = vst [vmem:[%s3 + $0x218] sm:$0xff] %v1661
  %1918 = vst [vmem:[%s3 + $0x220] sm:$0xff] %v1662
  %1919 = vst [vmem:[%s3 + $0x228] sm:$0xff] %v1663
  %1920 = vst [vmem:[%s3 + $0x230] sm:$0xff] %v1664
  %1921 = vst [vmem:[%s3 + $0x238] sm:$0xff] %v1665
  %1922 = vst [vmem:[%s3 + $0x240] sm:$0xff] %v1666
  %1923 = vst [vmem:[%s3 + $0x248] sm:$0xff] %v1667
  %1924 = vst [vmem:[%s3 + $0x250] sm:$0xff] %v1668
  %1925 = vst [vmem:[%s3 + $0x258] sm:$0xff] %v1669
  %1926 = vst [vmem:[%s3 + $0x260] sm:$0xff] %v1670
  %1927 = vst [vmem:[%s3 + $0x268] sm:$0xff] %v1671
  %1928 = vst [vmem:[%s3 + $0x270] sm:$0xff] %v1672
  %1929 = vst [vmem:[%s3 + $0x278] sm:$0xff] %v1673
  %1930 = vst [vmem:[%s3 + $0x280] sm:$0xff] %v1674
  %1931 = vst [vmem:[%s3 + $0x288] sm:$0xff] %v1675
  %1932 = vst [vmem:[%s3 + $0x290] sm:$0xff] %v1676
  %1933 = vst [vmem:[%s3 + $0x298] sm:$0xff] %v1677
  %1934 = vst [vmem:[%s3 + $0x2a0] sm:$0xff] %v1678
  %1935 = vst [vmem:[%s3 + $0x2a8] sm:$0xff] %v1679
  %1936 = vst [vmem:[%s3 + $0x2b0] sm:$0xff] %v1680
  %1937 = vst [vmem:[%s3 + $0x2b8] sm:$0xff] %v1681
  %1938 = vst [vmem:[%s3 + $0x2c0] sm:$0xff] %v1682
  %1939 = vst [vmem:[%s3 + $0x2c8] sm:$0xff] %v1683
  %1940 = vst [vmem:[%s3 + $0x2d0] sm:$0xff] %v1684
  %1941 = vst [vmem:[%s3 + $0x2d8] sm:$0xff] %v1685
  %1942 = vst [vmem:[%s3 + $0x2e0] sm:$0xff] %v1686
  %1943 = vst [vmem:[%s3 + $0x2e8] sm:$0xff] %v1687
  %1944 = vst [vmem:[%s3 + $0x2f0] sm:$0xff] %v1688
  %1945 = vst [vmem:[%s3 + $0x2f8] sm:$0xff] %v1689
  %1946 = vst [vmem:[%s3 + $0x300] sm:$0xff] %v1690
  %1947 = vst [vmem:[%s3 + $0x308] sm:$0xff] %v1691
  %1948 = vst [vmem:[%s3 + $0x310] sm:$0xff] %v1692
  %1949 = vst [vmem:[%s3 + $0x318] sm:$0xff] %v1693
  %1950 = vst [vmem:[%s3 + $0x320] sm:$0xff] %v1694
  %1951 = vst [vmem:[%s3 + $0x328] sm:$0xff] %v1695
  %1952 = vst [vmem:[%s3 + $0x330] sm:$0xff] %v1696
  %1953 = vst [vmem:[%s3 + $0x338] sm:$0xff] %v1697
  %1954 = vst [vmem:[%s3 + $0x340] sm:$0xff] %v1698
  %1955 = vst [vmem:[%s3 + $0x348] sm:$0xff] %v1699
  %1956 = vst [vmem:[%s3 + $0x350] sm:$0xff] %v1700
  %1957 = vst [vmem:[%s3 + $0x358] sm:$0xff] %v1701
  %1958 = vst [vmem:[%s3 + $0x360] sm:$0xff] %v1702
  %1959 = vst [vmem:[%s3 + $0x368] sm:$0xff] %v1703
  %1960 = vst [vmem:[%s3 + $0x370] sm:$0xff] %v1704
  %1961 = vst [vmem:[%s3 + $0x378] sm:$0xff] %v1705
  %1962 = vst [vmem:[%s3 + $0x380] sm:$0xff] %v1706
  %1963 = vst [vmem:[%s3 + $0x388] sm:$0xff] %v1707
  %1964 = vst [vmem:[%s3 + $0x390] sm:$0xff] %v1708
  %1965 = vst [vmem:[%s3 + $0x398] sm:$0xff] %v1709
  %1966 = vst [vmem:[%s3 + $0x3a0] sm:$0xff] %v1710
  %1967 = vst [vmem:[%s3 + $0x3a8] sm:$0xff] %v1711
  %1968 = vst [vmem:[%s3 + $0x3b0] sm:$0xff] %v1712
  %1969 = vst [vmem:[%s3 + $0x3b8] sm:$0xff] %v1713
  %1970 = vst [vmem:[%s3 + $0x3c0] sm:$0xff] %v1714
  %1971 = vst [vmem:[%s3 + $0x3c8] sm:$0xff] %v1715
  %1972 = vst [vmem:[%s3 + $0x3d0] sm:$0xff] %v1716
  %1973 = vst [vmem:[%s3 + $0x3d8] sm:$0xff] %v1717
  %1974 = vst [vmem:[%s3 + $0x3e0] sm:$0xff] %v1718
  %1975 = vst [vmem:[%s3 + $0x3e8] sm:$0xff] %v1719
  %1976 = vst [vmem:[%s3 + $0x3f0] sm:$0xff] %v1720
  %1977 = vst [vmem:[%s3 + $0x3f8] sm:$0xff] %v1721
  // Predicated region
  $region14: #{generator_forward.16} parent=0 // pred_check
    _
  $region15: #{generator_forward.16} parent=0 // pred_check_branch
    %1979 = sbr.rel (0) target = $region17
  $region16: #{generator_forward.16} parent=0 // pred_region
    _
  $region17: #{generator_forward.16} parent=0 // pred_fallthru
    _
  // Predicated region
  $region18: #{generator_forward.16} parent=0 // pred_check
    _
  $region19: #{generator_forward.16} parent=0 // pred_check_branch
    %1981 = sbr.rel (0) target = $region21
  $region20: #{generator_forward.16} parent=0 // pred_region
    _
  $region21: #{generator_forward.16} parent=0 // pred_fallthru
    _

// kernel: generator_forward.17
$region0: #{generator_forward.17}
  #allocation0 [shape = 'u32[]', space=smem, size = 0x4, offset = 0x4, fixed_abs, tag = 'smem constant byte address 0x4 - core index']
  #allocation1 [shape = 'u32[144,128]{1,0:T(1,128)}', space=vmem, size = 0x12000, scoped, tag = 'internal scratch']
  %s0 = inlined_call_operand.vmem [shape: bf16[4,2048,128], index: 0, kind: input, shape index: {}]
  %s1 = inlined_call_operand.vmem [shape: bf16[4,128,128], index: 1, kind: input, shape index: {}]
  %s2 = inlined_call_operand.vmem [shape: f32[4,2048,128], index: 2, kind: output, shape index: {}]
  %s3 = sld [smem:[#allocation0]]
  $region41: #{generator_forward.17} parent=0
    _
  %s5 = ssub.s32 1, %s3
  %s6 = scalar_select 0, %s5, %s3
  loop: start=0, step=1, limit=34
  $region2: #{generator_forward.17} parent=0 // loop_pre_header
    _
  $region3: #{generator_forward.17} parent=0 // loop_header
    %s8 = sphi 0, %s12
    %p9 = scmp.ge.s32.totalorder %s8, 34
    %s15 = sphi 0, %s41
    %s16 = sphi 0, %s37
    %s17 = sphi 0, %s33
    %s18 = sphi 0, %s29
    %s19 = sphi 0, %s15
    %s20 = sphi 0, %s16
    %s21 = sphi 0, %s17
    %s22 = sphi 0, %s18
    %s23 = sphi 0, %s19
    %s24 = sphi 0, %s20
    %s25 = sphi 0, %s21
    %s26 = sphi 0, %s22
    %s48 = sphi 0, %s50
    %s51 = sphi 0, %s48
    %s52 = sphi 0, %s51
    %s68 = sphi 0, %s52
    %s78 = sphi 0, %s80
    %s81 = sphi 0, %s78
    %s82 = sphi 0, %s81
    %s98 = sphi 0, %s82
    %s108 = sphi 0, %s110
    %s111 = sphi 0, %s108
    %s112 = sphi 0, %s111
    %s128 = sphi 0, %s112
  $region4: #{generator_forward.17} parent=0 // loop_header_branch
    %11 = sbr.rel (%p9) target = $region8
  $region5: #{generator_forward.17} parent=0 // loop_body
    %s13 = ssub.s32 %s8, 1
    %s14 = ssub.s32 %s8, 2
    %s27 = sadd.s32 1, %s18
    %p28 = scmp.ge.s32.totalorder %s27, 1
    %s29 = scalar_select %p28, 0, %s27
    %s30 = sadd.s32 1, %s17
    %s31 = scalar_select %p28, %s30, %s17
    %p32 = scmp.ge.s32.totalorder %s31, 8
    %s33 = scalar_select %p32, 0, %s31
    %s34 = sadd.s32 1, %s16
    %s35 = scalar_select %p32, %s34, %s16
    %p36 = scmp.ge.s32.totalorder %s35, 1
    %s37 = scalar_select %p36, 0, %s35
    %s38 = sadd.s32 1, %s15
    %s39 = scalar_select %p36, %s38, %s15
    %p40 = scmp.ge.s32.totalorder %s39, 4
    %s41 = scalar_select %p40, 0, %s39
    %s42 = ssub.s32 %s15, %s41
    %s43 = ssub.s32 %s17, %s33
    %s44 = sor.u32 %s42, %s43
    %s45 = ssub.s32 %s18, %s29
    %s46 = sor.u32 %s44, %s45
    %p47 = scmp.eq.s32.totalorder %s46, 0
    %s49 = sadd.s32 %s48, 1
    %s50 = scalar_select %p47, %s48, %s49
    %p53 = pneg %p47
    %p54 = scmp.eq.s32.totalorder %s8, 31
    %p55 = por %p53, %p54
    %p56 = scmp.ne.s32.totalorder %s48, %s51
    %p57 = scmp.eq.s32.totalorder %s8, 0
    %p58 = por %p56, %p57
    %p59 = scmp.ne.s32.totalorder %s48, %s51
    %p60 = scmp.eq.s32.totalorder %s13, 31
    %p61 = por %p59, %p60
    %p62 = scmp.ne.s32.totalorder %s51, %s52
    %p63 = scmp.eq.s32.totalorder %s13, 0
    %p64 = por %p62, %p63
    %p65 = scmp.ne.s32.totalorder %s51, %s52
    %p66 = scmp.eq.s32.totalorder %s14, 31
    %p67 = por %p65, %p66
    %p69 = scmp.ne.s32.totalorder %s52, %s68
    %p70 = scmp.eq.s32.totalorder %s14, 0
    %p71 = por %p69, %p70
    %s72 = ssub.s32 %s15, %s41
    %s73 = ssub.s32 %s18, %s29
    %s74 = sor.u32 %s72, %s73
    %s75 = ssub.s32 %s16, %s37
    %s76 = sor.u32 %s74, %s75
    %p77 = scmp.eq.s32.totalorder %s76, 0
    %s79 = sadd.s32 %s78, 1
    %s80 = scalar_select %p77, %s78, %s79
    %p83 = pneg %p77
    %p84 = scmp.eq.s32.totalorder %s8, 31
    %p85 = por %p83, %p84
    %p86 = scmp.ne.s32.totalorder %s78, %s81
    %p87 = scmp.eq.s32.totalorder %s8, 0
    %p88 = por %p86, %p87
    %p89 = scmp.ne.s32.totalorder %s78, %s81
    %p90 = scmp.eq.s32.totalorder %s13, 31
    %p91 = por %p89, %p90
    %p92 = scmp.ne.s32.totalorder %s81, %s82
    %p93 = scmp.eq.s32.totalorder %s13, 0
    %p94 = por %p92, %p93
    %p95 = scmp.ne.s32.totalorder %s81, %s82
    %p96 = scmp.eq.s32.totalorder %s14, 31
    %p97 = por %p95, %p96
    %p99 = scmp.ne.s32.totalorder %s82, %s98
    %p100 = scmp.eq.s32.totalorder %s14, 0
    %p101 = por %p99, %p100
    %s102 = ssub.s32 %s15, %s41
    %s103 = ssub.s32 %s17, %s33
    %s104 = sor.u32 %s102, %s103
    %s105 = ssub.s32 %s16, %s37
    %s106 = sor.u32 %s104, %s105
    %p107 = scmp.eq.s32.totalorder %s106, 0
    %s109 = sadd.s32 %s108, 1
    %s110 = scalar_select %p107, %s108, %s109
    %p113 = pneg %p107
    %p114 = scmp.eq.s32.totalorder %s8, 31
    %p115 = por %p113, %p114
    %p116 = scmp.ne.s32.totalorder %s108, %s111
    %p117 = scmp.eq.s32.totalorder %s8, 0
    %p118 = por %p116, %p117
    %p119 = scmp.ne.s32.totalorder %s108, %s111
    %p120 = scmp.eq.s32.totalorder %s13, 31
    %p121 = por %p119, %p120
    %p122 = scmp.ne.s32.totalorder %s111, %s112
    %p123 = scmp.eq.s32.totalorder %s13, 0
    %p124 = por %p122, %p123
    %p125 = scmp.ne.s32.totalorder %s111, %s112
    %p126 = scmp.eq.s32.totalorder %s14, 31
    %p127 = por %p125, %p126
    %p129 = scmp.ne.s32.totalorder %s112, %s128
    %p130 = scmp.eq.s32.totalorder %s14, 0
    %p131 = por %p129, %p130
    %p132 = scmp.le.s32.totalorder 1, %s8
    %p133 = scmp.lt.s32.totalorder %s8, 33
    %p134 = pnand %p132, %p133
    %p135 = pneg %p134
    // Predicated region
    $region9: #{generator_forward.17} parent=5 // pred_check
      _
    $region10: #{generator_forward.17} parent=5 // pred_check_branch
      %137 = sbr.rel (%p134) target = $region12
    $region11: #{generator_forward.17} parent=5 // pred_region
      %s138 = ssub.s32 %s8, 1
    $region12: #{generator_forward.17} parent=5 // pred_fallthru
      _
    %p139 = scmp.lt.s32.totalorder %s8, 32
    // Predicated region
    $region13: #{generator_forward.17} parent=5 // pred_check
      %p140 = pneg %p139
    $region14: #{generator_forward.17} parent=5 // pred_check_branch
      %142 = sbr.rel (%p140) target = $region16
    $region15: #{generator_forward.17} parent=5 // pred_region
      // Predicated region
      $region17: #{generator_forward.17} parent=15 // pred_check
        %p143 = pneg %p58
      $region18: #{generator_forward.17} parent=15 // pred_check_branch
        %145 = sbr.rel (%p143) target = $region20
      $region19: #{generator_forward.17} parent=15 // pred_region
        %s146 = smul.u32 32, %s17
        %p147 = scmp.lt.s32.totalorder %s15, 3
        %s148 = scalar_select %p147, %s15, 3
        %p149 = scmp.lt.s32.totalorder %s146, 255
        %s150 = scalar_select %p149, %s146, 255
        %p151 = scmp.lt.s32.totalorder %s18, 0
        %s152 = scalar_select %p151, %s18, 0
        %s153 = sadd.s32 %s152, %s150
        %s154 = smul.addr %s148, 256
        %s155 = sadd.s32 %s153, %s154
        %s156 = smul.addr %s155, 4
        %s157 = scalar_lea.vmem %s0, %s156
        %s158 = smul.u32 32, %s17
      $region20: #{generator_forward.17} parent=15 // pred_fallthru
        _
      // Predicated region
      $region21: #{generator_forward.17} parent=15 // pred_check
        %p159 = pneg %p88
      $region22: #{generator_forward.17} parent=15 // pred_check_branch
        %161 = sbr.rel (%p159) target = $region24
      $region23: #{generator_forward.17} parent=15 // pred_region
        %s162 = smul.u32 16, %s18
        %p163 = scmp.lt.s32.totalorder %s15, 3
        %s164 = scalar_select %p163, %s15, 3
        %p165 = scmp.lt.s32.totalorder %s162, 15
        %s166 = scalar_select %p165, %s162, 15
        %p167 = scmp.lt.s32.totalorder %s16, 0
        %s168 = scalar_select %p167, %s16, 0
        %s169 = sadd.s32 %s168, %s166
        %s170 = smul.addr %s164, 16
        %s171 = sadd.s32 %s169, %s170
        %s172 = smul.addr %s171, 4
        %s173 = scalar_lea.vmem %s1, %s172
        %s174 = smul.u32 16, %s18
      $region24: #{generator_forward.17} parent=15 // pred_fallthru
        _
    $region16: #{generator_forward.17} parent=5 // pred_fallthru
      _
    %p175 = scmp.le.s32.totalorder 1, %s8
    %p176 = scmp.lt.s32.totalorder %s8, 33
    %p177 = pnand %p175, %p176
    %p178 = pneg %p177
    // Predicated region
    $region25: #{generator_forward.17} parent=5 // pred_check
      _
    $region26: #{generator_forward.17} parent=5 // pred_check_branch
      %180 = sbr.rel (%p177) target = $region28
    $region27: #{generator_forward.17} parent=5 // pred_region
      %s181 = ssub.s32 %s8, 1
      %s182 = smul.u32 32, %s21
      %p183 = scmp.lt.s32.totalorder %s19, 3
      %s184 = scalar_select %p183, %s19, 3
      %p185 = scmp.lt.s32.totalorder %s182, 255
      %s186 = scalar_select %p185, %s182, 255
      %p187 = scmp.lt.s32.totalorder %s22, 0
      %s188 = scalar_select %p187, %s22, 0
      %s189 = sadd.s32 %s188, %s186
      %s190 = smul.addr %s184, 256
      %s191 = sadd.s32 %s189, %s190
      %s192 = smul.addr %s191, 4
      %s193 = scalar_lea.vmem %s0, %s192
      %p194 = pneg %p64
      %p195 = pneg %p61
      %s196 = smul.u32 16, %s22
      %p197 = scmp.lt.s32.totalorder %s19, 3
      %s198 = scalar_select %p197, %s19, 3
      %p199 = scmp.lt.s32.totalorder %s196, 15
      %s200 = scalar_select %p199, %s196, 15
      %p201 = scmp.lt.s32.totalorder %s20, 0
      %s202 = scalar_select %p201, %s20, 0
      %s203 = sadd.s32 %s202, %s200
      %s204 = smul.addr %s198, 16
      %s205 = sadd.s32 %s203, %s204
      %s206 = smul.addr %s205, 4
      %s207 = scalar_lea.vmem %s1, %s206
      %p208 = pneg %p94
      %p209 = pneg %p91
      %p210 = pneg %p124
      %p211 = pneg %p121
      %s212 = smul.u32 32, %s21
      %p213 = scmp.lt.s32.totalorder %s19, 3
      %s214 = scalar_select %p213, %s19, 3
      %p215 = scmp.lt.s32.totalorder %s212, 255
      %s216 = scalar_select %p215, %s212, 255
      %p217 = scmp.lt.s32.totalorder %s20, 0
      %s218 = scalar_select %p217, %s20, 0
      %s219 = sadd.s32 %s218, %s216
      %s220 = smul.addr %s214, 256
      %s221 = sadd.s32 %s219, %s220
      %s222 = smul.addr %s221, 8
      %s223 = scalar_lea.vmem %s2, %s222
      %s224 = smul.u32 32, %s21
      %p225 = scmp.lt.s32.totalorder %s19, 3
      %s226 = scalar_select %p225, %s19, 3
      %p227 = scmp.lt.s32.totalorder %s224, 255
      %s228 = scalar_select %p227, %s224, 255
      %p229 = scmp.lt.s32.totalorder %s22, 0
      %s230 = scalar_select %p229, %s22, 0
      %s231 = sadd.s32 %s230, %s228
      %s232 = smul.addr %s226, 256
      %s233 = sadd.s32 %s231, %s232
      %s234 = smul.addr %s233, 4
      %s235 = scalar_lea.vmem %s0, %s234
      %s236 = smul.u32 32, %s21
      %s237 = smul.u32 16, %s22
      %p238 = scmp.lt.s32.totalorder %s19, 3
      %s239 = scalar_select %p238, %s19, 3
      %p240 = scmp.lt.s32.totalorder %s237, 15
      %s241 = scalar_select %p240, %s237, 15
      %p242 = scmp.lt.s32.totalorder %s20, 0
      %s243 = scalar_select %p242, %s20, 0
      %s244 = sadd.s32 %s243, %s241
      %s245 = smul.addr %s239, 16
      %s246 = sadd.s32 %s244, %s245
      %s247 = smul.addr %s246, 4
      %s248 = scalar_lea.vmem %s1, %s247
      %s249 = smul.u32 16, %s22
      %s250 = smul.u32 32, %s21
      %p251 = scmp.lt.s32.totalorder %s19, 3
      %s252 = scalar_select %p251, %s19, 3
      %p253 = scmp.lt.s32.totalorder %s250, 255
      %s254 = scalar_select %p253, %s250, 255
      %p255 = scmp.lt.s32.totalorder %s20, 0
      %s256 = scalar_select %p255, %s20, 0
      %s257 = sadd.s32 %s256, %s254
      %s258 = smul.addr %s252, 256
      %s259 = sadd.s32 %s257, %s258
      %s260 = smul.addr %s259, 8
      %s261 = scalar_lea.vmem %s2, %s260
      %s262 = smul.u32 32, %s21
      %v264 = vld [vmem:[%s235] sm:$0xf]
      %v265 = vld [vmem:[%s235 + $0x4] sm:$0xf]
      %v266 = vld [vmem:[%s235 + $0x8] sm:$0xf]
      %v267 = vld [vmem:[%s235 + $0xc] sm:$0xf]
      %v268 = vld [vmem:[%s235 + $0x10] sm:$0xf]
      %v269 = vld [vmem:[%s235 + $0x14] sm:$0xf]
      %v270 = vld [vmem:[%s235 + $0x18] sm:$0xf]
      %v271 = vld [vmem:[%s235 + $0x1c] sm:$0xf]
      %v272 = vld [vmem:[%s235 + $0x20] sm:$0xf]
      %v273 = vld [vmem:[%s235 + $0x24] sm:$0xf]
      %v274 = vld [vmem:[%s235 + $0x28] sm:$0xf]
      %v275 = vld [vmem:[%s235 + $0x2c] sm:$0xf]
      %v276 = vld [vmem:[%s235 + $0x30] sm:$0xf]
      %v277 = vld [vmem:[%s235 + $0x34] sm:$0xf]
      %v278 = vld [vmem:[%s235 + $0x38] sm:$0xf]
      %v279 = vld [vmem:[%s235 + $0x3c] sm:$0xf]
      %v280 = vld [vmem:[%s235 + $0x40] sm:$0xf]
      %v281 = vld [vmem:[%s235 + $0x44] sm:$0xf]
      %v282 = vld [vmem:[%s235 + $0x48] sm:$0xf]
      %v283 = vld [vmem:[%s235 + $0x4c] sm:$0xf]
      %v284 = vld [vmem:[%s235 + $0x50] sm:$0xf]
      %v285 = vld [vmem:[%s235 + $0x54] sm:$0xf]
      %v286 = vld [vmem:[%s235 + $0x58] sm:$0xf]
      %v287 = vld [vmem:[%s235 + $0x5c] sm:$0xf]
      %v288 = vld [vmem:[%s235 + $0x60] sm:$0xf]
      %v289 = vld [vmem:[%s235 + $0x64] sm:$0xf]
      %v290 = vld [vmem:[%s235 + $0x68] sm:$0xf]
      %v291 = vld [vmem:[%s235 + $0x6c] sm:$0xf]
      %v292 = vld [vmem:[%s235 + $0x70] sm:$0xf]
      %v293 = vld [vmem:[%s235 + $0x74] sm:$0xf]
      %v294 = vld [vmem:[%s235 + $0x78] sm:$0xf]
      %v295 = vld [vmem:[%s235 + $0x7c] sm:$0xf]
      %v296 = vld [vmem:[%s248] sm:$0xf]
      %v297 = vld [vmem:[%s248 + $0x4] sm:$0xf]
      %v298 = vld [vmem:[%s248 + $0x8] sm:$0xf]
      %v299 = vld [vmem:[%s248 + $0xc] sm:$0xf]
      %v300 = vld [vmem:[%s248 + $0x10] sm:$0xf]
      %v301 = vld [vmem:[%s248 + $0x14] sm:$0xf]
      %v302 = vld [vmem:[%s248 + $0x18] sm:$0xf]
      %v303 = vld [vmem:[%s248 + $0x1c] sm:$0xf]
      %v304 = vld [vmem:[%s248 + $0x20] sm:$0xf]
      %v305 = vld [vmem:[%s248 + $0x24] sm:$0xf]
      %v306 = vld [vmem:[%s248 + $0x28] sm:$0xf]
      %v307 = vld [vmem:[%s248 + $0x2c] sm:$0xf]
      %v308 = vld [vmem:[%s248 + $0x30] sm:$0xf]
      %v309 = vld [vmem:[%s248 + $0x34] sm:$0xf]
      %v310 = vld [vmem:[%s248 + $0x38] sm:$0xf]
      %v311 = vld [vmem:[%s248 + $0x3c] sm:$0xf]
      %v344 = vunpack.c.l.b16 %v264
      %v345 = vunpack.c.l.b16 %v265
      %v346 = vunpack.c.l.b16 %v266
      %v347 = vunpack.c.l.b16 %v267
      %v348 = vunpack.c.l.b16 %v268
      %v349 = vunpack.c.l.b16 %v269
      %v350 = vunpack.c.l.b16 %v270
      %v351 = vunpack.c.l.b16 %v271
      %v352 = vunpack.c.l.b16 %v272
      %v353 = vunpack.c.l.b16 %v273
      %v354 = vunpack.c.l.b16 %v274
      %v355 = vunpack.c.l.b16 %v275
      %v356 = vunpack.c.l.b16 %v276
      %v357 = vunpack.c.l.b16 %v277
      %v358 = vunpack.c.l.b16 %v278
      %v359 = vunpack.c.l.b16 %v279
      %v360 = vunpack.c.l.b16 %v280
      %v361 = vunpack.c.l.b16 %v281
      %v362 = vunpack.c.l.b16 %v282
      %v363 = vunpack.c.l.b16 %v283
      %v364 = vunpack.c.l.b16 %v284
      %v365 = vunpack.c.l.b16 %v285
      %v366 = vunpack.c.l.b16 %v286
      %v367 = vunpack.c.l.b16 %v287
      %v368 = vunpack.c.l.b16 %v288
      %v369 = vunpack.c.l.b16 %v289
      %v370 = vunpack.c.l.b16 %v290
      %v371 = vunpack.c.l.b16 %v291
      %v372 = vunpack.c.l.b16 %v292
      %v373 = vunpack.c.l.b16 %v293
      %v374 = vunpack.c.l.b16 %v294
      %v375 = vunpack.c.l.b16 %v295
      %v376 = vpack.c.b16 %v345, %v344
      %v377 = vpack.c.b16 %v347, %v346
      %v378 = vpack.c.b16 %v349, %v348
      %v379 = vpack.c.b16 %v351, %v350
      %v380 = vpack.c.b16 %v353, %v352
      %v381 = vpack.c.b16 %v355, %v354
      %v382 = vpack.c.b16 %v357, %v356
      %v383 = vpack.c.b16 %v359, %v358
      %v384 = vpack.c.b16 %v361, %v360
      %v385 = vpack.c.b16 %v363, %v362
      %v386 = vpack.c.b16 %v365, %v364
      %v387 = vpack.c.b16 %v367, %v366
      %v388 = vpack.c.b16 %v369, %v368
      %v389 = vpack.c.b16 %v371, %v370
      %v390 = vpack.c.b16 %v373, %v372
      %v391 = vpack.c.b16 %v375, %v374
      %v424 = vunpack.c.l.b16 %v296
      %v425 = vunpack.c.l.b16 %v297
      %v426 = vunpack.c.l.b16 %v298
      %v427 = vunpack.c.l.b16 %v299
      %v428 = vunpack.c.l.b16 %v300
      %v429 = vunpack.c.l.b16 %v301
      %v430 = vunpack.c.l.b16 %v302
      %v431 = vunpack.c.l.b16 %v303
      %v432 = vunpack.c.l.b16 %v304
      %v433 = vunpack.c.l.b16 %v305
      %v434 = vunpack.c.l.b16 %v306
      %v435 = vunpack.c.l.b16 %v307
      %v436 = vunpack.c.l.b16 %v308
      %v437 = vunpack.c.l.b16 %v309
      %v438 = vunpack.c.l.b16 %v310
      %v439 = vunpack.c.l.b16 %v311
      %v440 = vpack.c.b16 %v425, %v424
      %v441 = vpack.c.b16 %v427, %v426
      %v442 = vpack.c.b16 %v429, %v428
      %v443 = vpack.c.b16 %v431, %v430
      %v444 = vpack.c.b16 %v433, %v432
      %v445 = vpack.c.b16 %v435, %v434
      %v446 = vpack.c.b16 %v437, %v436
      %v447 = vpack.c.b16 %v439, %v438
      %456 = vmatprep.subr.bf16.mxu0 0
      %457 = vmatpush1.bf16.msra.mxu0 %v440
      %458 = vmatprep.subr.bf16.mxu0 0
      %459 = vmatpush1.bf16.msra.mxu0 %v441
      %460 = vmatprep.subr.bf16.mxu0 0
      %461 = vmatpush1.bf16.msra.mxu0 %v442
      %462 = vmatprep.subr.bf16.mxu0 0
      %463 = vmatpush1.bf16.msra.mxu0 %v443
      %464 = vmatprep.subr.bf16.mxu0 0
      %465 = vmatpush1.bf16.msra.mxu0 %v444
      %466 = vmatprep.subr.bf16.mxu0 0
      %467 = vmatpush1.bf16.msra.mxu0 %v445
      %468 = vmatprep.subr.bf16.mxu0 0
      %469 = vmatpush1.bf16.msra.mxu0 %v446
      %470 = vmatprep.subr.bf16.mxu0 0
      %471 = vmatpush1.bf16.msra.mxu0 %v447
      %472 = vmatprep.subr.bf16.mxu0 0
      %473 = vmatpush1.bf16.msra.mxu0 0
      %474 = vmatprep.subr.bf16.mxu0 0
      %475 = vmatpush1.bf16.msra.mxu0 0
      %476 = vmatprep.subr.bf16.mxu0 0
      %477 = vmatpush1.bf16.msra.mxu0 0
      %478 = vmatprep.subr.bf16.mxu0 0
      %479 = vmatpush1.bf16.msra.mxu0 0
      %480 = vmatprep.subr.bf16.mxu0 0
      %481 = vmatpush1.bf16.msra.mxu0 0
      %482 = vmatprep.subr.bf16.mxu0 0
      %483 = vmatpush1.bf16.msra.mxu0 0
      %484 = vmatprep.subr.bf16.mxu0 0
      %485 = vmatpush1.bf16.msra.mxu0 0
      %486 = vmatprep.subr.bf16.mxu0 0
      %487 = vmatpush1.bf16.msra.mxu0 0
      %488 = vmatprep.mubr.bf16.mxu0 0
      %489 = vmatmul.mubr.bf16.gmra.mrb[0].mxu0 %v376
      %v490 = vpop.f32.mrb[0].mxu0
      %v491 = vadd.f32 0.0, %v490
      %v492 = vpop.f32.mrb[0].mxu0
      %v493 = vpop.f32.mrb[0].mxu0
      %v494 = vadd.f32 0.0, %v493
      %v495 = vpop.f32.mrb[0].mxu0
      %496 = vmatprep.mubr.bf16.mxu0 0
      %497 = vmatmul.mubr.bf16.gmra.mrb[0].mxu0 %v377
      %v498 = vpop.f32.mrb[0].mxu0
      %v499 = vadd.f32 0.0, %v498
      %v500 = vpop.f32.mrb[0].mxu0
      %v501 = vpop.f32.mrb[0].mxu0
      %v502 = vadd.f32 0.0, %v501
      %v503 = vpop.f32.mrb[0].mxu0
      %504 = vmatprep.mubr.bf16.mxu0 0
      %505 = vmatmul.mubr.bf16.gmra.mrb[0].mxu0 %v378
      %v506 = vpop.f32.mrb[0].mxu0
      %v507 = vadd.f32 0.0, %v506
      %v508 = vpop.f32.mrb[0].mxu0
      %v509 = vpop.f32.mrb[0].mxu0
      %v510 = vadd.f32 0.0, %v509
      %v511 = vpop.f32.mrb[0].mxu0
      %512 = vmatprep.mubr.bf16.mxu0 0
      %513 = vmatmul.mubr.bf16.gmra.mrb[0].mxu0 %v379
      %v514 = vpop.f32.mrb[0].mxu0
      %v515 = vadd.f32 0.0, %v514
      %v516 = vpop.f32.mrb[0].mxu0
      %v517 = vpop.f32.mrb[0].mxu0
      %v518 = vadd.f32 0.0, %v517
      %v519 = vpop.f32.mrb[0].mxu0
      %520 = vmatprep.mubr.bf16.mxu0 0
      %521 = vmatmul.mubr.bf16.gmra.mrb[0].mxu0 %v380
      %v522 = vpop.f32.mrb[0].mxu0
      %v523 = vadd.f32 0.0, %v522
      %v524 = vpop.f32.mrb[0].mxu0
      %v525 = vpop.f32.mrb[0].mxu0
      %v526 = vadd.f32 0.0, %v525
      %v527 = vpop.f32.mrb[0].mxu0
      %528 = vmatprep.mubr.bf16.mxu0 0
      %529 = vmatmul.mubr.bf16.gmra.mrb[0].mxu0 %v381
      %v530 = vpop.f32.mrb[0].mxu0
      %v531 = vadd.f32 0.0, %v530
      %v532 = vpop.f32.mrb[0].mxu0
      %v533 = vpop.f32.mrb[0].mxu0
      %v534 = vadd.f32 0.0, %v533
      %v535 = vpop.f32.mrb[0].mxu0
      %536 = vmatprep.mubr.bf16.mxu0 0
      %537 = vmatmul.mubr.bf16.gmra.mrb[0].mxu0 %v382
      %v538 = vpop.f32.mrb[0].mxu0
      %v539 = vadd.f32 0.0, %v538
      %v540 = vpop.f32.mrb[0].mxu0
      %v541 = vpop.f32.mrb[0].mxu0
      %v542 = vadd.f32 0.0, %v541
      %v543 = vpop.f32.mrb[0].mxu0
      %544 = vmatprep.mubr.bf16.mxu0 0
      %545 = vmatmul.mubr.bf16.gmra.mrb[0].mxu0 %v383
      %v546 = vpop.f32.mrb[0].mxu0
      %v547 = vadd.f32 0.0, %v546
      %v548 = vpop.f32.mrb[0].mxu0
      %v549 = vpop.f32.mrb[0].mxu0
      %v550 = vadd.f32 0.0, %v549
      %v551 = vpop.f32.mrb[0].mxu0
      %552 = vmatprep.mubr.bf16.mxu0 0
      %553 = vmatmul.mubr.bf16.gmra.mrb[0].mxu0 %v384
      %v554 = vpop.f32.mrb[0].mxu0
      %v555 = vadd.f32 0.0, %v554
      %v556 = vpop.f32.mrb[0].mxu0
      %v557 = vpop.f32.mrb[0].mxu0
      %v558 = vadd.f32 0.0, %v557
      %v559 = vpop.f32.mrb[0].mxu0
      %560 = vmatprep.mubr.bf16.mxu0 0
      %561 = vmatmul.mubr.bf16.gmra.mrb[0].mxu0 %v385
      %v562 = vpop.f32.mrb[0].mxu0
      %v563 = vadd.f32 0.0, %v562
      %v564 = vpop.f32.mrb[0].mxu0
      %v565 = vpop.f32.mrb[0].mxu0
      %v566 = vadd.f32 0.0, %v565
      %v567 = vpop.f32.mrb[0].mxu0
      %568 = vmatprep.mubr.bf16.mxu0 0
      %569 = vmatmul.mubr.bf16.gmra.mrb[0].mxu0 %v386
      %v570 = vpop.f32.mrb[0].mxu0
      %v571 = vadd.f32 0.0, %v570
      %v572 = vpop.f32.mrb[0].mxu0
      %v573 = vpop.f32.mrb[0].mxu0
      %v574 = vadd.f32 0.0, %v573
      %v575 = vpop.f32.mrb[0].mxu0
      %576 = vmatprep.mubr.bf16.mxu0 0
      %577 = vmatmul.mubr.bf16.gmra.mrb[0].mxu0 %v387
      %v578 = vpop.f32.mrb[0].mxu0
      %v579 = vadd.f32 0.0, %v578
      %v580 = vpop.f32.mrb[0].mxu0
      %v581 = vpop.f32.mrb[0].mxu0
      %v582 = vadd.f32 0.0, %v581
      %v583 = vpop.f32.mrb[0].mxu0
      %584 = vmatprep.mubr.bf16.mxu0 0
      %585 = vmatmul.mubr.bf16.gmra.mrb[0].mxu0 %v388
      %v586 = vpop.f32.mrb[0].mxu0
      %v587 = vadd.f32 0.0, %v586
      %v588 = vpop.f32.mrb[0].mxu0
      %v589 = vpop.f32.mrb[0].mxu0
      %v590 = vadd.f32 0.0, %v589
      %v591 = vpop.f32.mrb[0].mxu0
      %592 = vmatprep.mubr.bf16.mxu0 0
      %593 = vmatmul.mubr.bf16.gmra.mrb[0].mxu0 %v389
      %v594 = vpop.f32.mrb[0].mxu0
      %v595 = vadd.f32 0.0, %v594
      %v596 = vpop.f32.mrb[0].mxu0
      %v597 = vpop.f32.mrb[0].mxu0
      %v598 = vadd.f32 0.0, %v597
      %v599 = vpop.f32.mrb[0].mxu0
      %600 = vmatprep.mubr.bf16.mxu0 0
      %601 = vmatmul.mubr.bf16.gmra.mrb[0].mxu0 %v390
      %v602 = vpop.f32.mrb[0].mxu0
      %v603 = vadd.f32 0.0, %v602
      %v604 = vpop.f32.mrb[0].mxu0
      %v605 = vpop.f32.mrb[0].mxu0
      %v606 = vadd.f32 0.0, %v605
      %v607 = vpop.f32.mrb[0].mxu0
      %608 = vmatprep.mubr.bf16.mxu0 0
      %609 = vmatmul.mubr.bf16.gmra.mrb[0].mxu0 %v391
      %v610 = vpop.f32.mrb[0].mxu0
      %v611 = vadd.f32 0.0, %v610
      %v612 = vpop.f32.mrb[0].mxu0
      %v613 = vpop.f32.mrb[0].mxu0
      %v614 = vadd.f32 0.0, %v613
      %v615 = vpop.f32.mrb[0].mxu0
      %616 = vdwg.mxu0
      %v617 = vtanh.pop %v491
      %v618 = vtanh.pop %v494
      %v619 = vtanh.pop %v499
      %v620 = vtanh.pop %v502
      %v621 = vtanh.pop %v507
      %v622 = vtanh.pop %v510
      %v623 = vtanh.pop %v515
      %v624 = vtanh.pop %v518
      %v625 = vtanh.pop %v523
      %v626 = vtanh.pop %v526
      %v627 = vtanh.pop %v531
      %v628 = vtanh.pop %v534
      %v629 = vtanh.pop %v539
      %v630 = vtanh.pop %v542
      %v631 = vtanh.pop %v547
      %v632 = vtanh.pop %v550
      %v633 = vtanh.pop %v555
      %v634 = vtanh.pop %v558
      %v635 = vtanh.pop %v563
      %v636 = vtanh.pop %v566
      %v637 = vtanh.pop %v571
      %v638 = vtanh.pop %v574
      %v639 = vtanh.pop %v579
      %v640 = vtanh.pop %v582
      %v641 = vtanh.pop %v587
      %v642 = vtanh.pop %v590
      %v643 = vtanh.pop %v595
      %v644 = vtanh.pop %v598
      %v645 = vtanh.pop %v603
      %v646 = vtanh.pop %v606
      %v647 = vtanh.pop %v611
      %v648 = vtanh.pop %v614
      %649 = vst [vmem:[%s261] sm:$0xff] %v617
      %650 = vst [vmem:[%s261 + $0x8] sm:$0xff] %v618
      %651 = vst [vmem:[%s261 + $0x10] sm:$0xff] %v619
      %652 = vst [vmem:[%s261 + $0x18] sm:$0xff] %v620
      %653 = vst [vmem:[%s261 + $0x20] sm:$0xff] %v621
      %654 = vst [vmem:[%s261 + $0x28] sm:$0xff] %v622
      %655 = vst [vmem:[%s261 + $0x30] sm:$0xff] %v623
      %656 = vst [vmem:[%s261 + $0x38] sm:$0xff] %v624
      %657 = vst [vmem:[%s261 + $0x40] sm:$0xff] %v625
      %658 = vst [vmem:[%s261 + $0x48] sm:$0xff] %v626
      %659 = vst [vmem:[%s261 + $0x50] sm:$0xff] %v627
      %660 = vst [vmem:[%s261 + $0x58] sm:$0xff] %v628
      %661 = vst [vmem:[%s261 + $0x60] sm:$0xff] %v629
      %662 = vst [vmem:[%s261 + $0x68] sm:$0xff] %v630
      %663 = vst [vmem:[%s261 + $0x70] sm:$0xff] %v631
      %664 = vst [vmem:[%s261 + $0x78] sm:$0xff] %v632
      %665 = vst [vmem:[%s261 + $0x80] sm:$0xff] %v633
      %666 = vst [vmem:[%s261 + $0x88] sm:$0xff] %v634
      %667 = vst [vmem:[%s261 + $0x90] sm:$0xff] %v635
      %668 = vst [vmem:[%s261 + $0x98] sm:$0xff] %v636
      %669 = vst [vmem:[%s261 + $0xa0] sm:$0xff] %v637
      %670 = vst [vmem:[%s261 + $0xa8] sm:$0xff] %v638
      %671 = vst [vmem:[%s261 + $0xb0] sm:$0xff] %v639
      %672 = vst [vmem:[%s261 + $0xb8] sm:$0xff] %v640
      %673 = vst [vmem:[%s261 + $0xc0] sm:$0xff] %v641
      %674 = vst [vmem:[%s261 + $0xc8] sm:$0xff] %v642
      %675 = vst [vmem:[%s261 + $0xd0] sm:$0xff] %v643
      %676 = vst [vmem:[%s261 + $0xd8] sm:$0xff] %v644
      %677 = vst [vmem:[%s261 + $0xe0] sm:$0xff] %v645
      %678 = vst [vmem:[%s261 + $0xe8] sm:$0xff] %v646
      %679 = vst [vmem:[%s261 + $0xf0] sm:$0xff] %v647
      %680 = vst [vmem:[%s261 + $0xf8] sm:$0xff] %v648
      %s681 = smul.u32 32, %s21
      %p682 = scmp.lt.s32.totalorder %s19, 3
      %s683 = scalar_select %p682, %s19, 3
      %p684 = scmp.lt.s32.totalorder %s681, 255
      %s685 = scalar_select %p684, %s681, 255
      %p686 = scmp.lt.s32.totalorder %s20, 0
      %s687 = scalar_select %p686, %s20, 0
      %s688 = sadd.s32 %s687, %s685
      %s689 = smul.addr %s683, 256
      %s690 = sadd.s32 %s688, %s689
      %s691 = smul.addr %s690, 8
      %s692 = scalar_lea.vmem %s2, %s691
      // Predicated region
      $region29: #{generator_forward.17} parent=27 // pred_check
        %p693 = pneg %p121
      $region30: #{generator_forward.17} parent=27 // pred_check_branch
        %695 = sbr.rel (%p693) target = $region32
      $region31: #{generator_forward.17} parent=27 // pred_region
        %s696 = smul.u32 32, %s21
      $region32: #{generator_forward.17} parent=27 // pred_fallthru
        _
    $region28: #{generator_forward.17} parent=5 // pred_fallthru
      _
    %p697 = scmp.le.s32.totalorder 2, %s8
    // Predicated region
    $region33: #{generator_forward.17} parent=5 // pred_check
      %p698 = pneg %p697
    $region34: #{generator_forward.17} parent=5 // pred_check_branch
      %700 = sbr.rel (%p698) target = $region36
    $region35: #{generator_forward.17} parent=5 // pred_region
      %s701 = ssub.s32 %s8, 2
      // Predicated region
      $region37: #{generator_forward.17} parent=35 // pred_check
        %p702 = pneg %p127
      $region38: #{generator_forward.17} parent=35 // pred_check_branch
        %704 = sbr.rel (%p702) target = $region40
      $region39: #{generator_forward.17} parent=35 // pred_region
        %s705 = smul.u32 32, %s25
        %p706 = scmp.lt.s32.totalorder %s23, 3
        %s707 = scalar_select %p706, %s23, 3
        %p708 = scmp.lt.s32.totalorder %s705, 255
        %s709 = scalar_select %p708, %s705, 255
        %p710 = scmp.lt.s32.totalorder %s24, 0
        %s711 = scalar_select %p710, %s24, 0
        %s712 = sadd.s32 %s711, %s709
        %s713 = smul.addr %s707, 256
        %s714 = sadd.s32 %s712, %s713
        %s715 = smul.addr %s714, 8
        %s716 = scalar_lea.vmem %s2, %s715
      $region40: #{generator_forward.17} parent=35 // pred_fallthru
        _
    $region36: #{generator_forward.17} parent=5 // pred_fallthru
      _
  $region6: #{generator_forward.17} parent=0 // loop_footer
    %s12 = sadd.s32 1, %s8
  $region7: #{generator_forward.17} parent=0 // loop_footer_branch
    %7 = sbr.rel target = $region3
  $region8: #{generator_forward.17} parent=0 // loop_exit
    _

</llo_original>
